<compile_context>
chip_gen: v5e
topology: v5e:2x2
jax: 0.10.0
libtpu: 0.0.40
codegen_flags: <defaults>
</compile_context>

<pallas_src>
import jax
import jax.numpy as jnp
from jax.experimental import pallas as pl
from jax.experimental.pallas import tpu as pltpu

EDGE_WIDTH = 32
NUM_HEADS = 4
DOT_DIM = EDGE_WIDTH // NUM_HEADS        # 8
CHUNK = 4 * DOT_DIM                      # [Q | K | V | E-replicated] -> 32
NUM_CH = 2 * NUM_HEADS * CHUNK           # 256 fused projection channels
LN_EPS = 1e-5
F32 = jnp.float32
BF16 = jnp.bfloat16
VMEM_LIMIT = 64 * 1024 * 1024


# ---------------- Kernel 1: LayerNorm + single fused projection ----------------
def _proj_kernel(x_ref, g_ref, b_ref, w_ref, bias_ref, o_ref):
    x = x_ref[...]                                             # (TR, W) f32
    mu = jnp.mean(x, axis=-1, keepdims=True)
    var = jnp.mean(jnp.square(x - mu), axis=-1, keepdims=True)
    xn = (x - mu) * jax.lax.rsqrt(var + LN_EPS)
    xn = xn * g_ref[...] + b_ref[...]                          # (1, W) broadcasts
    # bf16 operands at the MXU, f32 accumulation (fast path on v6e/v7x; the
    # LN statistics and the bias add stay in f32).
    y = jnp.dot(xn.astype(BF16), w_ref[...], preferred_element_type=F32)
    o_ref[...] = y + bias_ref[...]


def _proj_call(x2, ln_g, ln_b, w_fused_bf16, b_fused):
    R, W = x2.shape
    C = w_fused_bf16.shape[1]
    tr = R if R <= 1024 else 1024        # decouple tile rows from N*N, cap for VMEM
    return pl.pallas_call(
        _proj_kernel,
        grid=(pl.cdiv(R, tr),),
        in_specs=[
            pl.BlockSpec((tr, W), lambda i: (i, 0)),
            pl.BlockSpec((1, W), lambda i: (0, 0)),
            pl.BlockSpec((1, W), lambda i: (0, 0)),
            pl.BlockSpec((W, C), lambda i: (0, 0)),
            pl.BlockSpec((1, C), lambda i: (0, 0)),
        ],
        out_specs=pl.BlockSpec((tr, C), lambda i: (i, 0)),
        out_shape=jax.ShapeDtypeStruct((R, C), F32),
        compiler_params=pltpu.CompilerParams(
            dimension_semantics=("parallel",),
            vmem_limit_bytes=VMEM_LIMIT),
    )(x2, ln_g, ln_b, w_fused_bf16, b_fused)


# -------- Kernel 2: both attention directions, all heads, fused lin_O ----------
def _attn_kernel(slab_ref, slabT_ref, mask_ref, maskT_ref, wo_ref, bo_ref, out_ref):
    # slab_ref  : (1, N, N, C)  fused projection of cell (x, y)   -> [x, y, c]
    # slabT_ref : (1, N, N, C)  transposed view                   -> [y, x, c]
    # mask_ref  : (1, N, N)  additive mask; maskT_ref its transpose
    # wo_ref    : (2, H, D, W) per-(side, head) lin_O slabs (bf16)
    # bo_ref    : (1, W); out_ref : (1, N, N, W)
    N = out_ref.shape[1]
    W = out_ref.shape[3]
    D = DOT_DIM
    msk = mask_ref[0]                                    # used as [i, k]
    mskT = maskT_ref[0]
    acc = jnp.zeros((N * N, W), F32)                     # rows: j-major, i-minor
    for s in range(2):                                   # 0 = "in", 1 = "out"
        kv_src = slab_ref if s == 0 else slabT_ref
        m2 = msk if s == 0 else mskT
        for h in range(NUM_HEADS):
            c0 = (s * NUM_HEADS + h) * CHUNK
            # Q always from the transposed slab -> (j, i, d), leading batch j.
            qj = slabT_ref[0, :, :, c0:c0 + D]           # (j, i, d)
            kve = kv_src[0, :, :, c0 + D:c0 + CHUNK]     # K | V | E-replicated
            kj = kve[:, :, :D]                           # (j, k, d)
            vj = kve[:, :, D:2 * D]                      # (j, k, d)
            # E channel is replicated across D lanes -> lane-reduce to 2-D bias.
            bias = jnp.max(kve[:, :, 2 * D:], axis=-1) + m2      # used as [i, k]
            logits = jnp.einsum('jid,jkd->jik', qj, kj,
                                preferred_element_type=F32)
            logits = logits + bias[None, :, :]
            mx = jnp.max(logits, axis=-1, keepdims=True)
            p = jnp.exp(logits - mx)
            denom = jnp.sum(p, axis=-1, keepdims=True)
            a = p * pl.reciprocal(denom, approx=True)    # softmax over k (EUP)
            va = jnp.einsum('jik,jkd->jid', a, vj,
                            preferred_element_type=F32)  # (j, i, d)
            # fused lin_O: accumulate this (side, head) contribution in VMEM.
            acc = acc + jnp.dot(va.reshape(N * N, D).astype(BF16),
                                wo_ref[s, h],
                                preferred_element_type=F32)
    bo = bo_ref[...]                                     # (1, W)
    for j in range(N):                                   # acc row = j*N + i
        out_ref[0, :, j, :] = acc[j * N:(j + 1) * N, :] + bo


def _attn_call(slab, slab_t, m2, m2_t, wo_slabs, bo2):
    B, N, _, C = slab.shape
    W = bo2.shape[1]
    H = NUM_HEADS
    D = DOT_DIM
    return pl.pallas_call(
        _attn_kernel,
        grid=(B,),
        in_specs=[
            pl.BlockSpec((1, N, N, C), lambda b: (b, 0, 0, 0)),
            pl.BlockSpec((1, N, N, C), lambda b: (b, 0, 0, 0)),
            pl.BlockSpec((1, N, N), lambda b: (b, 0, 0)),
            pl.BlockSpec((1, N, N), lambda b: (b, 0, 0)),
            pl.BlockSpec((2, H, D, W), lambda b: (0, 0, 0, 0)),
            pl.BlockSpec((1, W), lambda b: (0, 0)),
        ],
        out_specs=pl.BlockSpec((1, N, N, W), lambda b: (b, 0, 0, 0)),
        out_shape=jax.ShapeDtypeStruct((B, N, N, W), F32),
        compiler_params=pltpu.CompilerParams(
            dimension_semantics=("parallel",),
            vmem_limit_bytes=VMEM_LIMIT),
    )(slab, slab_t, m2, m2_t, wo_slabs, bo2)


# ---------------- parameter fusion (one-time glue, no runtime cost) ------------
def _fuse_proj_params(wQKV_in, bQKV_in, wE_in, bE_in,
                      wQKV_out, bQKV_out, wE_out, bE_out, scale):
    """Fold the 4 Linears + Q scale into one (W, NUM_CH) weight.

    Column layout per (side, head): [Q*scale (D) | K (D) | V (D) | E x D].
    (E is replicated D times so kernel 2 can recover it with a lane reduce.)
    """
    W = wQKV_in.shape[1]
    H = NUM_HEADS
    D = DOT_DIM

    def one_side(wQKV, bQKV, wE, bE):
        w = wQKV.reshape(3, D, H, W)          # torch rows: t*W + d*H + h
        b = bQKV.reshape(3, D, H)
        w = w.at[0].multiply(scale)           # fold 1/sqrt(D) into Q weight+bias
        b = b.at[0].multiply(scale)
        w = jnp.transpose(w, (2, 0, 1, 3)).reshape(H, 3 * D, W)
        b = jnp.transpose(b, (2, 0, 1)).reshape(H, 3 * D)
        e_w = jnp.broadcast_to(wE[:, None, :], (H, D, W))
        e_b = jnp.broadcast_to(bE[:, None], (H, D))
        w = jnp.concatenate([w, e_w], axis=1)  # (H, CHUNK, W)
        b = jnp.concatenate([b, e_b], axis=1)  # (H, CHUNK)
        return w, b

    w_i, b_i = one_side(wQKV_in, bQKV_in, wE_in, bE_in)
    w_o, b_o = one_side(wQKV_out, bQKV_out, wE_out, bE_out)
    w_all = jnp.concatenate([w_i, w_o], axis=0).reshape(2 * H * CHUNK, W)
    b_all = jnp.concatenate([b_i, b_o], axis=0).reshape(2 * H * CHUNK)
    return w_all.T, b_all                      # (W, NUM_CH), (NUM_CH,)


# ---------------- full forward ----------------
def triplet_attention_ungated(e, mask, params):
    (ln_g, ln_b, wQKV_in, bQKV_in, wE_in, bE_in,
     wQKV_out, bQKV_out, wE_out, bE_out, wO, bO) = params
    B, N, _, W = e.shape
    H = NUM_HEADS
    D = DOT_DIM
    scale = float(D) ** -0.5

    w_fused, b_fused = _fuse_proj_params(wQKV_in, bQKV_in, wE_in, bE_in,
                                         wQKV_out, bQKV_out, wE_out, bE_out,
                                         scale)
    # lin_O split into per-(side, head) (D, W) slabs (bf16 at the MXU).
    wo_slabs = jnp.transpose(wO.T.reshape(D, 2, H, W), (1, 2, 0, 3)).astype(BF16)

    # Kernel 1: LayerNorm + fused projection (256-lane-dense output).
    x2 = e.reshape(B * N * N, W).astype(F32)
    slab = _proj_call(x2,
                      ln_g.reshape(1, W).astype(F32),
                      ln_b.reshape(1, W).astype(F32),
                      w_fused.astype(BF16),
                      b_fused.reshape(1, NUM_CH).astype(F32))
    slab = slab.reshape(B, N, N, NUM_CH)
    slab_t = jnp.transpose(slab, (0, 2, 1, 3))     # both edge orientations
    m2 = mask.reshape(B, N, N).astype(F32)
    m2_t = jnp.transpose(m2, (0, 2, 1))

    # Kernel 2: attention (in/out directions, all heads) + fused lin_O.
    return _attn_call(slab, slab_t, m2, m2_t, wo_slabs,
                      bO.reshape(1, W).astype(F32))


# ---------------- pure-JAX reference (mirrors the PyTorch forward) -------------
def reference(e, mask, params):
    (ln_g, ln_b, wQKV_in, bQKV_in, wE_in, bE_in,
     wQKV_out, bQKV_out, wE_out, bE_out, wO, bO) = params
    B, N, _, W = e.shape
    H = NUM_HEADS
    D = W // H
    scale = float(D) ** -0.5
    mu = jnp.mean(e, axis=-1, keepdims=True)
    var = jnp.mean(jnp.square(e - mu), axis=-1, keepdims=True)
    e_ln = (e - mu) / jnp.sqrt(var + LN_EPS) * ln_g + ln_b

    def side(wQKV, bQKV, wE, bE):
        qkv = e_ln @ wQKV.T + bQKV
        Q, K, V = jnp.split(qkv, 3, axis=-1)
        E = e_ln @ wE.T + bE
        Q = Q.reshape(B, N, N, D, H) * scale
        K = K.reshape(B, N, N, D, H)
        V = V.reshape(B, N, N, D, H)
        return Q, K, V, E

    Q_in, K_in, V_in, E_in = side(wQKV_in, bQKV_in, wE_in, bE_in)
    H_in = jnp.einsum('bijdh,bjkdh->bijkh', Q_in, K_in) + E_in[:, :, None, :, :]
    A_in = jax.nn.softmax(H_in + mask[:, :, None, :, :], axis=3)
    Va_in = jnp.einsum('bijkh,bjkdh->bijdh', A_in, V_in)

    Q_out, K_out, V_out, E_out = side(wQKV_out, bQKV_out, wE_out, bE_out)
    H_out = jnp.einsum('bijdh,bkjdh->bkijh', Q_out, K_out) + E_out[:, :, :, None, :]
    A_out = jax.nn.softmax(H_out + mask[:, :, :, None, :], axis=1)
    Va_out = jnp.einsum('bkijh,bkjdh->bijdh', A_out, V_out)

    Va = jnp.concatenate([Va_in, Va_out], axis=-1).reshape(B, N, N, 2 * W)
    return Va @ wO.T + bO


if __name__ == "__main__":
    B, N, W, H = 2, 8, EDGE_WIDTH, NUM_HEADS
    key = jax.random.PRNGKey(0)
    ks = jax.random.split(key, 16)

    # deterministic synthetic parameters (PyTorch nn.Linear stores W as (out, in))
    ln_g = 1.0 + 0.1 * jax.random.normal(ks[0], (W,), F32)
    ln_b = 0.1 * jax.random.normal(ks[1], (W,), F32)
    wQKV_in = 0.15 * jax.random.normal(ks[2], (3 * W, W), F32)
    bQKV_in = 0.1 * jax.random.normal(ks[3], (3 * W,), F32)
    wE_in = 0.15 * jax.random.normal(ks[4], (H, W), F32)
    bE_in = 0.1 * jax.random.normal(ks[5], (H,), F32)
    wQKV_out = 0.15 * jax.random.normal(ks[6], (3 * W, W), F32)
    bQKV_out = 0.1 * jax.random.normal(ks[7], (3 * W,), F32)
    wE_out = 0.15 * jax.random.normal(ks[8], (H, W), F32)
    bE_out = 0.1 * jax.random.normal(ks[9], (H,), F32)
    wO = 0.1 * jax.random.normal(ks[10], (W, 2 * W), F32)
    bO = 0.1 * jax.random.normal(ks[11], (W,), F32)
    params = (ln_g, ln_b, wQKV_in, bQKV_in, wE_in, bE_in,
              wQKV_out, bQKV_out, wE_out, bE_out, wO, bO)

    e = jax.random.normal(ks[12], (B, N, N, W), F32)
    mask = jnp.where(jax.random.bernoulli(ks[13], 0.2, (B, N, N, 1)),
                     -1e9, 0.0).astype(F32)

    out = jax.jit(triplet_attention_ungated)(e, mask, params)
    out = jax.block_until_ready(out)

    ref = reference(e, mask, params)
    assert out.shape == (B, N, N, W)
    max_err = float(jnp.max(jnp.abs(out - ref)))
    assert jnp.allclose(out, ref, rtol=2e-2, atol=2e-2), max_err
    print("KERNEL_OK")
</pallas_src>

<mosaic_0001>
module attributes {stable_mosaic.version = 11 : i64} {
  func.func @_proj_kernel(%arg0: i32, %arg1: memref<128x32xf32, #tpu.memory_space<vmem>>, %arg2: memref<1x32xf32, #tpu.memory_space<vmem>>, %arg3: memref<1x32xf32, #tpu.memory_space<vmem>>, %arg4: memref<32x256xbf16, #tpu.memory_space<vmem>>, %arg5: memref<1x256xf32, #tpu.memory_space<vmem>>, %arg6: memref<128x256xf32, #tpu.memory_space<vmem>>) attributes {dimension_semantics = [#tpu.dimension_semantics<parallel>], iteration_bounds = array<i64: 1>, scalar_prefetch = 0 : i64, scratch_operands = 0 : i64, tpu.core_type = #tpu.core_type<tc>, window_params = [{transform_indices = @transform_0, window_bounds = array<i64: 128, 32>}, {pipeline_mode = #tpu.pipeline_mode<synchronous>, transform_indices = @transform_1, window_bounds = array<i64: 1, 32>}, {pipeline_mode = #tpu.pipeline_mode<synchronous>, transform_indices = @transform_2, window_bounds = array<i64: 1, 32>}, {pipeline_mode = #tpu.pipeline_mode<synchronous>, transform_indices = @transform_3, window_bounds = array<i64: 32, 256>}, {pipeline_mode = #tpu.pipeline_mode<synchronous>, transform_indices = @transform_4, window_bounds = array<i64: 1, 256>}, {transform_indices = @transform_5, window_bounds = array<i64: 128, 256>}]} {
    %c0 = arith.constant 0 : index
    %c0_0 = arith.constant 0 : index
    %0 = vector.load %arg1[%c0, %c0_0] : memref<128x32xf32, #tpu.memory_space<vmem>>, vector<128x32xf32>
    %cst = arith.constant dense<0.000000e+00> : vector<128xf32>
    %1 = vector.multi_reduction <add>, %0, %cst [1] : vector<128x32xf32> to vector<128xf32>
    %2 = vector.shape_cast %1 : vector<128xf32> to vector<128x1xf32>
    %cst_1 = arith.constant 3.200000e+01 : f32
    %3 = vector.broadcast %cst_1 : f32 to vector<128x1xf32>
    %4 = arith.divf %2, %3 : vector<128x1xf32>
    %5 = vector.broadcast %4 : vector<128x1xf32> to vector<128x32xf32>
    %6 = arith.subf %0, %5 : vector<128x32xf32>
    %7 = arith.mulf %6, %6 : vector<128x32xf32>
    %cst_2 = arith.constant dense<0.000000e+00> : vector<128xf32>
    %8 = vector.multi_reduction <add>, %7, %cst_2 [1] : vector<128x32xf32> to vector<128xf32>
    %9 = vector.shape_cast %8 : vector<128xf32> to vector<128x1xf32>
    %cst_3 = arith.constant 3.200000e+01 : f32
    %10 = vector.broadcast %cst_3 : f32 to vector<128x1xf32>
    %11 = arith.divf %9, %10 : vector<128x1xf32>
    %12 = vector.broadcast %4 : vector<128x1xf32> to vector<128x32xf32>
    %13 = arith.subf %0, %12 : vector<128x32xf32>
    %cst_4 = arith.constant 9.99999974E-6 : f32
    %14 = vector.broadcast %cst_4 : f32 to vector<128x1xf32>
    %15 = arith.addf %11, %14 : vector<128x1xf32>
    %16 = math.rsqrt %15 : vector<128x1xf32>
    %17 = vector.broadcast %16 : vector<128x1xf32> to vector<128x32xf32>
    %18 = arith.mulf %13, %17 : vector<128x32xf32>
    %c0_5 = arith.constant 0 : index
    %c0_6 = arith.constant 0 : index
    %19 = vector.load %arg2[%c0_5, %c0_6] : memref<1x32xf32, #tpu.memory_space<vmem>>, vector<1x32xf32>
    %20 = vector.broadcast %19 : vector<1x32xf32> to vector<128x32xf32>
    %21 = arith.mulf %18, %20 : vector<128x32xf32>
    %c0_7 = arith.constant 0 : index
    %c0_8 = arith.constant 0 : index
    %22 = vector.load %arg3[%c0_7, %c0_8] : memref<1x32xf32, #tpu.memory_space<vmem>>, vector<1x32xf32>
    %23 = vector.broadcast %22 : vector<1x32xf32> to vector<128x32xf32>
    %24 = arith.addf %21, %23 : vector<128x32xf32>
    %25 = arith.truncf %24 : vector<128x32xf32> to vector<128x32xbf16>
    %c0_9 = arith.constant 0 : index
    %c0_10 = arith.constant 0 : index
    %26 = vector.load %arg4[%c0_9, %c0_10] : memref<32x256xbf16, #tpu.memory_space<vmem>>, vector<32x256xbf16>
    %cst_11 = arith.constant dense<0.000000e+00> : vector<128x256xf32>
    %27 = tpu.matmul %25, %26, %cst_11 {dimension_numbers = #tpu.dot_dimension_numbers<[1], [0], [0], [1], [0, 0, 1, 1], [], []>} : vector<128x32xbf16>, vector<32x256xbf16>, vector<128x256xf32> -> vector<128x256xf32>
    %c0_12 = arith.constant 0 : index
    %c0_13 = arith.constant 0 : index
    %28 = vector.load %arg5[%c0_12, %c0_13] : memref<1x256xf32, #tpu.memory_space<vmem>>, vector<1x256xf32>
    %29 = vector.broadcast %28 : vector<1x256xf32> to vector<128x256xf32>
    %30 = arith.addf %27, %29 : vector<128x256xf32>
    %c0_14 = arith.constant 0 : index
    %c0_15 = arith.constant 0 : index
    %31 = vector.load %arg6[%c0_14, %c0_15] : memref<128x256xf32, #tpu.memory_space<vmem>>, vector<128x256xf32>
    tpu.vector_store %arg6[%c0_14, %c0_15], %30 {strides = array<i32>} : memref<128x256xf32, #tpu.memory_space<vmem>>, vector<128x256xf32>,
    return
  }
  func.func @transform_0(%arg0: i32) -> (i32, i32) {
    %c0_i32 = arith.constant 0 : i32
    %c0_i32_0 = arith.constant 0 : i32
    return %arg0, %c0_i32 : i32, i32
  }
  func.func @transform_1(%arg0: i32) -> (i32, i32) {
    %c0_i32 = arith.constant 0 : i32
    %c0_i32_0 = arith.constant 0 : i32
    %c0_i32_1 = arith.constant 0 : i32
    return %c0_i32, %c0_i32_0 : i32, i32
  }
  func.func @transform_2(%arg0: i32) -> (i32, i32) {
    %c0_i32 = arith.constant 0 : i32
    %c0_i32_0 = arith.constant 0 : i32
    %c0_i32_1 = arith.constant 0 : i32
    return %c0_i32, %c0_i32_0 : i32, i32
  }
  func.func @transform_3(%arg0: i32) -> (i32, i32) {
    %c0_i32 = arith.constant 0 : i32
    %c0_i32_0 = arith.constant 0 : i32
    %c0_i32_1 = arith.constant 0 : i32
    return %c0_i32, %c0_i32_0 : i32, i32
  }
  func.func @transform_4(%arg0: i32) -> (i32, i32) {
    %c0_i32 = arith.constant 0 : i32
    %c0_i32_0 = arith.constant 0 : i32
    %c0_i32_1 = arith.constant 0 : i32
    return %c0_i32, %c0_i32_0 : i32, i32
  }
  func.func @transform_5(%arg0: i32) -> (i32, i32) {
    %c0_i32 = arith.constant 0 : i32
    %c0_i32_0 = arith.constant 0 : i32
    return %arg0, %c0_i32 : i32, i32
  }
}

module attributes {stable_mosaic.version = 11 : i64} {
  func.func @_attn_kernel(%arg0: i32, %arg1: memref<1x8x8x256xf32, #tpu.memory_space<vmem>>, %arg2: memref<1x8x8x256xf32, #tpu.memory_space<vmem>>, %arg3: memref<1x8x8xf32, #tpu.memory_space<vmem>>, %arg4: memref<1x8x8xf32, #tpu.memory_space<vmem>>, %arg5: memref<2x4x8x32xbf16, #tpu.memory_space<vmem>>, %arg6: memref<1x32xf32, #tpu.memory_space<vmem>>, %arg7: memref<1x8x8x32xf32, #tpu.memory_space<vmem>>) attributes {dimension_semantics = [#tpu.dimension_semantics<parallel>], iteration_bounds = array<i64: 2>, scalar_prefetch = 0 : i64, scratch_operands = 0 : i64, tpu.core_type = #tpu.core_type<tc>, window_params = [{transform_indices = @transform_0, window_bounds = array<i64: 1, 8, 8, 256>}, {transform_indices = @transform_1, window_bounds = array<i64: 1, 8, 8, 256>}, {transform_indices = @transform_2, window_bounds = array<i64: 1, 8, 8>}, {transform_indices = @transform_3, window_bounds = array<i64: 1, 8, 8>}, {pipeline_mode = #tpu.pipeline_mode<synchronous>, transform_indices = @transform_4, window_bounds = array<i64: 2, 4, 8, 32>}, {pipeline_mode = #tpu.pipeline_mode<synchronous>, transform_indices = @transform_5, window_bounds = array<i64: 1, 32>}, {transform_indices = @transform_6, window_bounds = array<i64: 1, 8, 8, 32>}]} {
    %c0 = arith.constant 0 : index
    %c0_0 = arith.constant 0 : index
    %c0_1 = arith.constant 0 : index
    %0 = vector.load %arg3[%c0, %c0_0, %c0_1] : memref<1x8x8xf32, #tpu.memory_space<vmem>>, vector<1x8x8xf32>
    %1 = vector.shape_cast %0 : vector<1x8x8xf32> to vector<8x8xf32>
    %c0_2 = arith.constant 0 : index
    %c0_3 = arith.constant 0 : index
    %c0_4 = arith.constant 0 : index
    %2 = vector.load %arg4[%c0_2, %c0_3, %c0_4] : memref<1x8x8xf32, #tpu.memory_space<vmem>>, vector<1x8x8xf32>
    %3 = vector.shape_cast %2 : vector<1x8x8xf32> to vector<8x8xf32>
    %cst = arith.constant 0.000000e+00 : f32
    %4 = vector.broadcast %cst : f32 to vector<64x32xf32>
    %c0_5 = arith.constant 0 : index
    %c0_6 = arith.constant 0 : index
    %c0_7 = arith.constant 0 : index
    %c0_8 = arith.constant 0 : index
    %5 = vector.load %arg2[%c0_5, %c0_6, %c0_7, %c0_8] : memref<1x8x8x256xf32, #tpu.memory_space<vmem>>, vector<1x8x8x8xf32>
    %6 = vector.shape_cast %5 : vector<1x8x8x8xf32> to vector<8x8x8xf32>
    %c0_9 = arith.constant 0 : index
    %c0_10 = arith.constant 0 : index
    %c0_11 = arith.constant 0 : index
    %c8 = arith.constant 8 : index
    %7 = vector.load %arg1[%c0_9, %c0_10, %c0_11, %c8] : memref<1x8x8x256xf32, #tpu.memory_space<vmem>>, vector<1x8x8x24xf32>
    %8 = vector.shape_cast %7 : vector<1x8x8x24xf32> to vector<8x8x24xf32>
    %9 = vector.extract_strided_slice %8 {offsets = [0, 0, 0], sizes = [8, 8, 8], strides = [1, 1, 1]} : vector<8x8x24xf32> to vector<8x8x8xf32>
    %10 = vector.extract_strided_slice %8 {offsets = [0, 0, 8], sizes = [8, 8, 8], strides = [1, 1, 1]} : vector<8x8x24xf32> to vector<8x8x8xf32>
    %11 = vector.extract_strided_slice %8 {offsets = [0, 0, 16], sizes = [8, 8, 8], strides = [1, 1, 1]} : vector<8x8x24xf32> to vector<8x8x8xf32>
    %cst_12 = arith.constant dense<0xFF800000> : vector<8x8xf32>
    %12 = vector.multi_reduction <maximumf>, %11, %cst_12 [2] : vector<8x8x8xf32> to vector<8x8xf32>
    %13 = arith.addf %12, %1 : vector<8x8xf32>
    "tpu.trace_start"() <{level = 10 : i32, message = "jid,jkd->jik"}> : () -> ()
    %cst_13 = arith.constant dense<0.000000e+00> : vector<8x8x8xf32>
    %14 = tpu.matmul %6, %9, %cst_13 {dimension_numbers = #tpu.dot_dimension_numbers<[2], [2], [1], [1], [0, 0, 0, 1, 1, 1], [0], [0]>} : vector<8x8x8xf32>, vector<8x8x8xf32>, vector<8x8x8xf32> -> vector<8x8x8xf32>
    "tpu.trace_stop"() : () -> ()
    %15 = vector.shape_cast %13 : vector<8x8xf32> to vector<1x8x8xf32>
    %16 = vector.broadcast %15 : vector<1x8x8xf32> to vector<8x8x8xf32>
    %17 = arith.addf %14, %16 : vector<8x8x8xf32>
    %cst_14 = arith.constant dense<0xFF800000> : vector<8x8xf32>
    %18 = vector.multi_reduction <maximumf>, %17, %cst_14 [2] : vector<8x8x8xf32> to vector<8x8xf32>
    %19 = vector.shape_cast %18 : vector<8x8xf32> to vector<8x8x1xf32>
    %20 = vector.broadcast %19 : vector<8x8x1xf32> to vector<8x8x8xf32>
    %21 = arith.subf %17, %20 : vector<8x8x8xf32>
    %22 = math.exp %21 : vector<8x8x8xf32>
    %cst_15 = arith.constant dense<0.000000e+00> : vector<8x8xf32>
    %23 = vector.multi_reduction <add>, %22, %cst_15 [2] : vector<8x8x8xf32> to vector<8x8xf32>
    %24 = vector.shape_cast %23 : vector<8x8xf32> to vector<8x8x1xf32>
    %25 = tpu.reciprocal %24 {approx = true} : vector<8x8x1xf32> -> vector<8x8x1xf32>
    %26 = vector.broadcast %25 : vector<8x8x1xf32> to vector<8x8x8xf32>
    %27 = arith.mulf %22, %26 : vector<8x8x8xf32>
    "tpu.trace_start"() <{level = 10 : i32, message = "jik,jkd->jid"}> : () -> ()
    %cst_16 = arith.constant dense<0.000000e+00> : vector<8x8x8xf32>
    %28 = tpu.matmul %27, %10, %cst_16 {dimension_numbers = #tpu.dot_dimension_numbers<[2], [1], [1], [2], [0, 0, 0, 1, 1, 2], [0], [0]>} : vector<8x8x8xf32>, vector<8x8x8xf32>, vector<8x8x8xf32> -> vector<8x8x8xf32>
    "tpu.trace_stop"() : () -> ()
    %29 = vector.shape_cast %28 : vector<8x8x8xf32> to vector<64x8xf32>
    %30 = arith.truncf %29 : vector<64x8xf32> to vector<64x8xbf16>
    %c0_17 = arith.constant 0 : index
    %c0_18 = arith.constant 0 : index
    %c0_19 = arith.constant 0 : index
    %c0_20 = arith.constant 0 : index
    %31 = vector.load %arg5[%c0_17, %c0_18, %c0_19, %c0_20] : memref<2x4x8x32xbf16, #tpu.memory_space<vmem>>, vector<1x1x8x32xbf16>
    %32 = vector.shape_cast %31 : vector<1x1x8x32xbf16> to vector<8x32xbf16>
    %cst_21 = arith.constant dense<0.000000e+00> : vector<64x32xf32>
    %33 = tpu.matmul %30, %32, %cst_21 {dimension_numbers = #tpu.dot_dimension_numbers<[1], [0], [0], [1], [0, 0, 1, 1], [], []>} : vector<64x8xbf16>, vector<8x32xbf16>, vector<64x32xf32> -> vector<64x32xf32>
    %34 = arith.addf %4, %33 : vector<64x32xf32>
    %c0_22 = arith.constant 0 : index
    %c0_23 = arith.constant 0 : index
    %c0_24 = arith.constant 0 : index
    %c32 = arith.constant 32 : index
    %35 = vector.load %arg2[%c0_22, %c0_23, %c0_24, %c32] : memref<1x8x8x256xf32, #tpu.memory_space<vmem>>, vector<1x8x8x8xf32>
    %36 = vector.shape_cast %35 : vector<1x8x8x8xf32> to vector<8x8x8xf32>
    %c0_25 = arith.constant 0 : index
    %c0_26 = arith.constant 0 : index
    %c0_27 = arith.constant 0 : index
    %c40 = arith.constant 40 : index
    %37 = vector.load %arg1[%c0_25, %c0_26, %c0_27, %c40] : memref<1x8x8x256xf32, #tpu.memory_space<vmem>>, vector<1x8x8x24xf32>
    %38 = vector.shape_cast %37 : vector<1x8x8x24xf32> to vector<8x8x24xf32>
    %39 = vector.extract_strided_slice %38 {offsets = [0, 0, 0], sizes = [8, 8, 8], strides = [1, 1, 1]} : vector<8x8x24xf32> to vector<8x8x8xf32>
    %40 = vector.extract_strided_slice %38 {offsets = [0, 0, 8], sizes = [8, 8, 8], strides = [1, 1, 1]} : vector<8x8x24xf32> to vector<8x8x8xf32>
    %41 = vector.extract_strided_slice %38 {offsets = [0, 0, 16], sizes = [8, 8, 8], strides = [1, 1, 1]} : vector<8x8x24xf32> to vector<8x8x8xf32>
    %cst_28 = arith.constant dense<0xFF800000> : vector<8x8xf32>
    %42 = vector.multi_reduction <maximumf>, %41, %cst_28 [2] : vector<8x8x8xf32> to vector<8x8xf32>
    %43 = arith.addf %42, %1 : vector<8x8xf32>
    "tpu.trace_start"() <{level = 10 : i32, message = "jid,jkd->jik"}> : () -> ()
    %cst_29 = arith.constant dense<0.000000e+00> : vector<8x8x8xf32>
    %44 = tpu.matmul %36, %39, %cst_29 {dimension_numbers = #tpu.dot_dimension_numbers<[2], [2], [1], [1], [0, 0, 0, 1, 1, 1], [0], [0]>} : vector<8x8x8xf32>, vector<8x8x8xf32>, vector<8x8x8xf32> -> vector<8x8x8xf32>
    "tpu.trace_stop"() : () -> ()
    %45 = vector.shape_cast %43 : vector<8x8xf32> to vector<1x8x8xf32>
    %46 = vector.broadcast %45 : vector<1x8x8xf32> to vector<8x8x8xf32>
    %47 = arith.addf %44, %46 : vector<8x8x8xf32>
    %cst_30 = arith.constant dense<0xFF800000> : vector<8x8xf32>
    %48 = vector.multi_reduction <maximumf>, %47, %cst_30 [2] : vector<8x8x8xf32> to vector<8x8xf32>
    %49 = vector.shape_cast %48 : vector<8x8xf32> to vector<8x8x1xf32>
    %50 = vector.broadcast %49 : vector<8x8x1xf32> to vector<8x8x8xf32>
    %51 = arith.subf %47, %50 : vector<8x8x8xf32>
    %52 = math.exp %51 : vector<8x8x8xf32>
    %cst_31 = arith.constant dense<0.000000e+00> : vector<8x8xf32>
    %53 = vector.multi_reduction <add>, %52, %cst_31 [2] : vector<8x8x8xf32> to vector<8x8xf32>
    %54 = vector.shape_cast %53 : vector<8x8xf32> to vector<8x8x1xf32>
    %55 = tpu.reciprocal %54 {approx = true} : vector<8x8x1xf32> -> vector<8x8x1xf32>
    %56 = vector.broadcast %55 : vector<8x8x1xf32> to vector<8x8x8xf32>
    %57 = arith.mulf %52, %56 : vector<8x8x8xf32>
    "tpu.trace_start"() <{level = 10 : i32, message = "jik,jkd->jid"}> : () -> ()
    %cst_32 = arith.constant dense<0.000000e+00> : vector<8x8x8xf32>
    %58 = tpu.matmul %57, %40, %cst_32 {dimension_numbers = #tpu.dot_dimension_numbers<[2], [1], [1], [2], [0, 0, 0, 1, 1, 2], [0], [0]>} : vector<8x8x8xf32>, vector<8x8x8xf32>, vector<8x8x8xf32> -> vector<8x8x8xf32>
    "tpu.trace_stop"() : () -> ()
    %59 = vector.shape_cast %58 : vector<8x8x8xf32> to vector<64x8xf32>
    %60 = arith.truncf %59 : vector<64x8xf32> to vector<64x8xbf16>
    %c0_33 = arith.constant 0 : index
    %c1 = arith.constant 1 : index
    %c0_34 = arith.constant 0 : index
    %c0_35 = arith.constant 0 : index
    %61 = vector.load %arg5[%c0_33, %c1, %c0_34, %c0_35] : memref<2x4x8x32xbf16, #tpu.memory_space<vmem>>, vector<1x1x8x32xbf16>
    %62 = vector.shape_cast %61 : vector<1x1x8x32xbf16> to vector<8x32xbf16>
    %cst_36 = arith.constant dense<0.000000e+00> : vector<64x32xf32>
    %63 = tpu.matmul %60, %62, %cst_36 {dimension_numbers = #tpu.dot_dimension_numbers<[1], [0], [0], [1], [0, 0, 1, 1], [], []>} : vector<64x8xbf16>, vector<8x32xbf16>, vector<64x32xf32> -> vector<64x32xf32>
    %64 = arith.addf %34, %63 : vector<64x32xf32>
    %c0_37 = arith.constant 0 : index
    %c0_38 = arith.constant 0 : index
    %c0_39 = arith.constant 0 : index
    %c64 = arith.constant 64 : index
    %65 = vector.load %arg2[%c0_37, %c0_38, %c0_39, %c64] : memref<1x8x8x256xf32, #tpu.memory_space<vmem>>, vector<1x8x8x8xf32>
    %66 = vector.shape_cast %65 : vector<1x8x8x8xf32> to vector<8x8x8xf32>
    %c0_40 = arith.constant 0 : index
    %c0_41 = arith.constant 0 : index
    %c0_42 = arith.constant 0 : index
    %c72 = arith.constant 72 : index
    %67 = vector.load %arg1[%c0_40, %c0_41, %c0_42, %c72] : memref<1x8x8x256xf32, #tpu.memory_space<vmem>>, vector<1x8x8x24xf32>
    %68 = vector.shape_cast %67 : vector<1x8x8x24xf32> to vector<8x8x24xf32>
    %69 = vector.extract_strided_slice %68 {offsets = [0, 0, 0], sizes = [8, 8, 8], strides = [1, 1, 1]} : vector<8x8x24xf32> to vector<8x8x8xf32>
    %70 = vector.extract_strided_slice %68 {offsets = [0, 0, 8], sizes = [8, 8, 8], strides = [1, 1, 1]} : vector<8x8x24xf32> to vector<8x8x8xf32>
    %71 = vector.extract_strided_slice %68 {offsets = [0, 0, 16], sizes = [8, 8, 8], strides = [1, 1, 1]} : vector<8x8x24xf32> to vector<8x8x8xf32>
    %cst_43 = arith.constant dense<0xFF800000> : vector<8x8xf32>
    %72 = vector.multi_reduction <maximumf>, %71, %cst_43 [2] : vector<8x8x8xf32> to vector<8x8xf32>
    %73 = arith.addf %72, %1 : vector<8x8xf32>
    "tpu.trace_start"() <{level = 10 : i32, message = "jid,jkd->jik"}> : () -> ()
    %cst_44 = arith.constant dense<0.000000e+00> : vector<8x8x8xf32>
    %74 = tpu.matmul %66, %69, %cst_44 {dimension_numbers = #tpu.dot_dimension_numbers<[2], [2], [1], [1], [0, 0, 0, 1, 1, 1], [0], [0]>} : vector<8x8x8xf32>, vector<8x8x8xf32>, vector<8x8x8xf32> -> vector<8x8x8xf32>
    "tpu.trace_stop"() : () -> ()
    %75 = vector.shape_cast %73 : vector<8x8xf32> to vector<1x8x8xf32>
    %76 = vector.broadcast %75 : vector<1x8x8xf32> to vector<8x8x8xf32>
    %77 = arith.addf %74, %76 : vector<8x8x8xf32>
    %cst_45 = arith.constant dense<0xFF800000> : vector<8x8xf32>
    %78 = vector.multi_reduction <maximumf>, %77, %cst_45 [2] : vector<8x8x8xf32> to vector<8x8xf32>
    %79 = vector.shape_cast %78 : vector<8x8xf32> to vector<8x8x1xf32>
    %80 = vector.broadcast %79 : vector<8x8x1xf32> to vector<8x8x8xf32>
    %81 = arith.subf %77, %80 : vector<8x8x8xf32>
    %82 = math.exp %81 : vector<8x8x8xf32>
    %cst_46 = arith.constant dense<0.000000e+00> : vector<8x8xf32>
    %83 = vector.multi_reduction <add>, %82, %cst_46 [2] : vector<8x8x8xf32> to vector<8x8xf32>
    %84 = vector.shape_cast %83 : vector<8x8xf32> to vector<8x8x1xf32>
    %85 = tpu.reciprocal %84 {approx = true} : vector<8x8x1xf32> -> vector<8x8x1xf32>
    %86 = vector.broadcast %85 : vector<8x8x1xf32> to vector<8x8x8xf32>
    %87 = arith.mulf %82, %86 : vector<8x8x8xf32>
    "tpu.trace_start"() <{level = 10 : i32, message = "jik,jkd->jid"}> : () -> ()
    %cst_47 = arith.constant dense<0.000000e+00> : vector<8x8x8xf32>
    %88 = tpu.matmul %87, %70, %cst_47 {dimension_numbers = #tpu.dot_dimension_numbers<[2], [1], [1], [2], [0, 0, 0, 1, 1, 2], [0], [0]>} : vector<8x8x8xf32>, vector<8x8x8xf32>, vector<8x8x8xf32> -> vector<8x8x8xf32>
    "tpu.trace_stop"() : () -> ()
    %89 = vector.shape_cast %88 : vector<8x8x8xf32> to vector<64x8xf32>
    %90 = arith.truncf %89 : vector<64x8xf32> to vector<64x8xbf16>
    %c0_48 = arith.constant 0 : index
    %c2 = arith.constant 2 : index
    %c0_49 = arith.constant 0 : index
    %c0_50 = arith.constant 0 : index
    %91 = vector.load %arg5[%c0_48, %c2, %c0_49, %c0_50] : memref<2x4x8x32xbf16, #tpu.memory_space<vmem>>, vector<1x1x8x32xbf16>
    %92 = vector.shape_cast %91 : vector<1x1x8x32xbf16> to vector<8x32xbf16>
    %cst_51 = arith.constant dense<0.000000e+00> : vector<64x32xf32>
    %93 = tpu.matmul %90, %92, %cst_51 {dimension_numbers = #tpu.dot_dimension_numbers<[1], [0], [0], [1], [0, 0, 1, 1], [], []>} : vector<64x8xbf16>, vector<8x32xbf16>, vector<64x32xf32> -> vector<64x32xf32>
    %94 = arith.addf %64, %93 : vector<64x32xf32>
    %c0_52 = arith.constant 0 : index
    %c0_53 = arith.constant 0 : index
    %c0_54 = arith.constant 0 : index
    %c96 = arith.constant 96 : index
    %95 = vector.load %arg2[%c0_52, %c0_53, %c0_54, %c96] : memref<1x8x8x256xf32, #tpu.memory_space<vmem>>, vector<1x8x8x8xf32>
    %96 = vector.shape_cast %95 : vector<1x8x8x8xf32> to vector<8x8x8xf32>
    %c0_55 = arith.constant 0 : index
    %c0_56 = arith.constant 0 : index
    %c0_57 = arith.constant 0 : index
    %c104 = arith.constant 104 : index
    %97 = vector.load %arg1[%c0_55, %c0_56, %c0_57, %c104] : memref<1x8x8x256xf32, #tpu.memory_space<vmem>>, vector<1x8x8x24xf32>
    %98 = vector.shape_cast %97 : vector<1x8x8x24xf32> to vector<8x8x24xf32>
    %99 = vector.extract_strided_slice %98 {offsets = [0, 0, 0], sizes = [8, 8, 8], strides = [1, 1, 1]} : vector<8x8x24xf32> to vector<8x8x8xf32>
    %100 = vector.extract_strided_slice %98 {offsets = [0, 0, 8], sizes = [8, 8, 8], strides = [1, 1, 1]} : vector<8x8x24xf32> to vector<8x8x8xf32>
    %101 = vector.extract_strided_slice %98 {offsets = [0, 0, 16], sizes = [8, 8, 8], strides = [1, 1, 1]} : vector<8x8x24xf32> to vector<8x8x8xf32>
    %cst_58 = arith.constant dense<0xFF800000> : vector<8x8xf32>
    %102 = vector.multi_reduction <maximumf>, %101, %cst_58 [2] : vector<8x8x8xf32> to vector<8x8xf32>
    %103 = arith.addf %102, %1 : vector<8x8xf32>
    "tpu.trace_start"() <{level = 10 : i32, message = "jid,jkd->jik"}> : () -> ()
    %cst_59 = arith.constant dense<0.000000e+00> : vector<8x8x8xf32>
    %104 = tpu.matmul %96, %99, %cst_59 {dimension_numbers = #tpu.dot_dimension_numbers<[2], [2], [1], [1], [0, 0, 0, 1, 1, 1], [0], [0]>} : vector<8x8x8xf32>, vector<8x8x8xf32>, vector<8x8x8xf32> -> vector<8x8x8xf32>
    "tpu.trace_stop"() : () -> ()
    %105 = vector.shape_cast %103 : vector<8x8xf32> to vector<1x8x8xf32>
    %106 = vector.broadcast %105 : vector<1x8x8xf32> to vector<8x8x8xf32>
    %107 = arith.addf %104, %106 : vector<8x8x8xf32>
    %cst_60 = arith.constant dense<0xFF800000> : vector<8x8xf32>
    %108 = vector.multi_reduction <maximumf>, %107, %cst_60 [2] : vector<8x8x8xf32> to vector<8x8xf32>
    %109 = vector.shape_cast %108 : vector<8x8xf32> to vector<8x8x1xf32>
    %110 = vector.broadcast %109 : vector<8x8x1xf32> to vector<8x8x8xf32>
    %111 = arith.subf %107, %110 : vector<8x8x8xf32>
    %112 = math.exp %111 : vector<8x8x8xf32>
    %cst_61 = arith.constant dense<0.000000e+00> : vector<8x8xf32>
    %113 = vector.multi_reduction <add>, %112, %cst_61 [2] : vector<8x8x8xf32> to vector<8x8xf32>
    %114 = vector.shape_cast %113 : vector<8x8xf32> to vector<8x8x1xf32>
    %115 = tpu.reciprocal %114 {approx = true} : vector<8x8x1xf32> -> vector<8x8x1xf32>
    %116 = vector.broadcast %115 : vector<8x8x1xf32> to vector<8x8x8xf32>
    %117 = arith.mulf %112, %116 : vector<8x8x8xf32>
    "tpu.trace_start"() <{level = 10 : i32, message = "jik,jkd->jid"}> : () -> ()
    %cst_62 = arith.constant dense<0.000000e+00> : vector<8x8x8xf32>
    %118 = tpu.matmul %117, %100, %cst_62 {dimension_numbers = #tpu.dot_dimension_numbers<[2], [1], [1], [2], [0, 0, 0, 1, 1, 2], [0], [0]>} : vector<8x8x8xf32>, vector<8x8x8xf32>, vector<8x8x8xf32> -> vector<8x8x8xf32>
    "tpu.trace_stop"() : () -> ()
    %119 = vector.shape_cast %118 : vector<8x8x8xf32> to vector<64x8xf32>
    %120 = arith.truncf %119 : vector<64x8xf32> to vector<64x8xbf16>
    %c0_63 = arith.constant 0 : index
    %c3 = arith.constant 3 : index
    %c0_64 = arith.constant 0 : index
    %c0_65 = arith.constant 0 : index
    %121 = vector.load %arg5[%c0_63, %c3, %c0_64, %c0_65] : memref<2x4x8x32xbf16, #tpu.memory_space<vmem>>, vector<1x1x8x32xbf16>
    %122 = vector.shape_cast %121 : vector<1x1x8x32xbf16> to vector<8x32xbf16>
    %cst_66 = arith.constant dense<0.000000e+00> : vector<64x32xf32>
    %123 = tpu.matmul %120, %122, %cst_66 {dimension_numbers = #tpu.dot_dimension_numbers<[1], [0], [0], [1], [0, 0, 1, 1], [], []>} : vector<64x8xbf16>, vector<8x32xbf16>, vector<64x32xf32> -> vector<64x32xf32>
    %124 = arith.addf %94, %123 : vector<64x32xf32>
    %c0_67 = arith.constant 0 : index
    %c0_68 = arith.constant 0 : index
    %c0_69 = arith.constant 0 : index
    %c128 = arith.constant 128 : index
    %125 = vector.load %arg2[%c0_67, %c0_68, %c0_69, %c128] : memref<1x8x8x256xf32, #tpu.memory_space<vmem>>, vector<1x8x8x8xf32>
    %126 = vector.shape_cast %125 : vector<1x8x8x8xf32> to vector<8x8x8xf32>
    %c0_70 = arith.constant 0 : index
    %c0_71 = arith.constant 0 : index
    %c0_72 = arith.constant 0 : index
    %c136 = arith.constant 136 : index
    %127 = vector.load %arg2[%c0_70, %c0_71, %c0_72, %c136] : memref<1x8x8x256xf32, #tpu.memory_space<vmem>>, vector<1x8x8x24xf32>
    %128 = vector.shape_cast %127 : vector<1x8x8x24xf32> to vector<8x8x24xf32>
    %129 = vector.extract_strided_slice %128 {offsets = [0, 0, 0], sizes = [8, 8, 8], strides = [1, 1, 1]} : vector<8x8x24xf32> to vector<8x8x8xf32>
    %130 = vector.extract_strided_slice %128 {offsets = [0, 0, 8], sizes = [8, 8, 8], strides = [1, 1, 1]} : vector<8x8x24xf32> to vector<8x8x8xf32>
    %131 = vector.extract_strided_slice %128 {offsets = [0, 0, 16], sizes = [8, 8, 8], strides = [1, 1, 1]} : vector<8x8x24xf32> to vector<8x8x8xf32>
    %cst_73 = arith.constant dense<0xFF800000> : vector<8x8xf32>
    %132 = vector.multi_reduction <maximumf>, %131, %cst_73 [2] : vector<8x8x8xf32> to vector<8x8xf32>
    %133 = arith.addf %132, %3 : vector<8x8xf32>
    "tpu.trace_start"() <{level = 10 : i32, message = "jid,jkd->jik"}> : () -> ()
    %cst_74 = arith.constant dense<0.000000e+00> : vector<8x8x8xf32>
    %134 = tpu.matmul %126, %129, %cst_74 {dimension_numbers = #tpu.dot_dimension_numbers<[2], [2], [1], [1], [0, 0, 0, 1, 1, 1], [0], [0]>} : vector<8x8x8xf32>, vector<8x8x8xf32>, vector<8x8x8xf32> -> vector<8x8x8xf32>
    "tpu.trace_stop"() : () -> ()
    %135 = vector.shape_cast %133 : vector<8x8xf32> to vector<1x8x8xf32>
    %136 = vector.broadcast %135 : vector<1x8x8xf32> to vector<8x8x8xf32>
    %137 = arith.addf %134, %136 : vector<8x8x8xf32>
    %cst_75 = arith.constant dense<0xFF800000> : vector<8x8xf32>
    %138 = vector.multi_reduction <maximumf>, %137, %cst_75 [2] : vector<8x8x8xf32> to vector<8x8xf32>
    %139 = vector.shape_cast %138 : vector<8x8xf32> to vector<8x8x1xf32>
    %140 = vector.broadcast %139 : vector<8x8x1xf32> to vector<8x8x8xf32>
    %141 = arith.subf %137, %140 : vector<8x8x8xf32>
    %142 = math.exp %141 : vector<8x8x8xf32>
    %cst_76 = arith.constant dense<0.000000e+00> : vector<8x8xf32>
    %143 = vector.multi_reduction <add>, %142, %cst_76 [2] : vector<8x8x8xf32> to vector<8x8xf32>
    %144 = vector.shape_cast %143 : vector<8x8xf32> to vector<8x8x1xf32>
    %145 = tpu.reciprocal %144 {approx = true} : vector<8x8x1xf32> -> vector<8x8x1xf32>
    %146 = vector.broadcast %145 : vector<8x8x1xf32> to vector<8x8x8xf32>
    %147 = arith.mulf %142, %146 : vector<8x8x8xf32>
    "tpu.trace_start"() <{level = 10 : i32, message = "jik,jkd->jid"}> : () -> ()
    %cst_77 = arith.constant dense<0.000000e+00> : vector<8x8x8xf32>
    %148 = tpu.matmul %147, %130, %cst_77 {dimension_numbers = #tpu.dot_dimension_numbers<[2], [1], [1], [2], [0, 0, 0, 1, 1, 2], [0], [0]>} : vector<8x8x8xf32>, vector<8x8x8xf32>, vector<8x8x8xf32> -> vector<8x8x8xf32>
    "tpu.trace_stop"() : () -> ()
    %149 = vector.shape_cast %148 : vector<8x8x8xf32> to vector<64x8xf32>
    %150 = arith.truncf %149 : vector<64x8xf32> to vector<64x8xbf16>
    %c1_78 = arith.constant 1 : index
    %c0_79 = arith.constant 0 : index
    %c0_80 = arith.constant 0 : index
    %c0_81 = arith.constant 0 : index
    %151 = vector.load %arg5[%c1_78, %c0_79, %c0_80, %c0_81] : memref<2x4x8x32xbf16, #tpu.memory_space<vmem>>, vector<1x1x8x32xbf16>
    %152 = vector.shape_cast %151 : vector<1x1x8x32xbf16> to vector<8x32xbf16>
    %cst_82 = arith.constant dense<0.000000e+00> : vector<64x32xf32>
    %153 = tpu.matmul %150, %152, %cst_82 {dimension_numbers = #tpu.dot_dimension_numbers<[1], [0], [0], [1], [0, 0, 1, 1], [], []>} : vector<64x8xbf16>, vector<8x32xbf16>, vector<64x32xf32> -> vector<64x32xf32>
    %154 = arith.addf %124, %153 : vector<64x32xf32>
    %c0_83 = arith.constant 0 : index
    %c0_84 = arith.constant 0 : index
    %c0_85 = arith.constant 0 : index
    %c160 = arith.constant 160 : index
    %155 = vector.load %arg2[%c0_83, %c0_84, %c0_85, %c160] : memref<1x8x8x256xf32, #tpu.memory_space<vmem>>, vector<1x8x8x8xf32>
    %156 = vector.shape_cast %155 : vector<1x8x8x8xf32> to vector<8x8x8xf32>
    %c0_86 = arith.constant 0 : index
    %c0_87 = arith.constant 0 : index
    %c0_88 = arith.constant 0 : index
    %c168 = arith.constant 168 : index
    %157 = vector.load %arg2[%c0_86, %c0_87, %c0_88, %c168] : memref<1x8x8x256xf32, #tpu.memory_space<vmem>>, vector<1x8x8x24xf32>
    %158 = vector.shape_cast %157 : vector<1x8x8x24xf32> to vector<8x8x24xf32>
    %159 = vector.extract_strided_slice %158 {offsets = [0, 0, 0], sizes = [8, 8, 8], strides = [1, 1, 1]} : vector<8x8x24xf32> to vector<8x8x8xf32>
    %160 = vector.extract_strided_slice %158 {offsets = [0, 0, 8], sizes = [8, 8, 8], strides = [1, 1, 1]} : vector<8x8x24xf32> to vector<8x8x8xf32>
    %161 = vector.extract_strided_slice %158 {offsets = [0, 0, 16], sizes = [8, 8, 8], strides = [1, 1, 1]} : vector<8x8x24xf32> to vector<8x8x8xf32>
    %cst_89 = arith.constant dense<0xFF800000> : vector<8x8xf32>
    %162 = vector.multi_reduction <maximumf>, %161, %cst_89 [2] : vector<8x8x8xf32> to vector<8x8xf32>
    %163 = arith.addf %162, %3 : vector<8x8xf32>
    "tpu.trace_start"() <{level = 10 : i32, message = "jid,jkd->jik"}> : () -> ()
    %cst_90 = arith.constant dense<0.000000e+00> : vector<8x8x8xf32>
    %164 = tpu.matmul %156, %159, %cst_90 {dimension_numbers = #tpu.dot_dimension_numbers<[2], [2], [1], [1], [0, 0, 0, 1, 1, 1], [0], [0]>} : vector<8x8x8xf32>, vector<8x8x8xf32>, vector<8x8x8xf32> -> vector<8x8x8xf32>
    "tpu.trace_stop"() : () -> ()
    %165 = vector.shape_cast %163 : vector<8x8xf32> to vector<1x8x8xf32>
    %166 = vector.broadcast %165 : vector<1x8x8xf32> to vector<8x8x8xf32>
    %167 = arith.addf %164, %166 : vector<8x8x8xf32>
    %cst_91 = arith.constant dense<0xFF800000> : vector<8x8xf32>
    %168 = vector.multi_reduction <maximumf>, %167, %cst_91 [2] : vector<8x8x8xf32> to vector<8x8xf32>
    %169 = vector.shape_cast %168 : vector<8x8xf32> to vector<8x8x1xf32>
    %170 = vector.broadcast %169 : vector<8x8x1xf32> to vector<8x8x8xf32>
    %171 = arith.subf %167, %170 : vector<8x8x8xf32>
    %172 = math.exp %171 : vector<8x8x8xf32>
    %cst_92 = arith.constant dense<0.000000e+00> : vector<8x8xf32>
    %173 = vector.multi_reduction <add>, %172, %cst_92 [2] : vector<8x8x8xf32> to vector<8x8xf32>
    %174 = vector.shape_cast %173 : vector<8x8xf32> to vector<8x8x1xf32>
    %175 = tpu.reciprocal %174 {approx = true} : vector<8x8x1xf32> -> vector<8x8x1xf32>
    %176 = vector.broadcast %175 : vector<8x8x1xf32> to vector<8x8x8xf32>
    %177 = arith.mulf %172, %176 : vector<8x8x8xf32>
    "tpu.trace_start"() <{level = 10 : i32, message = "jik,jkd->jid"}> : () -> ()
    %cst_93 = arith.constant dense<0.000000e+00> : vector<8x8x8xf32>
    %178 = tpu.matmul %177, %160, %cst_93 {dimension_numbers = #tpu.dot_dimension_numbers<[2], [1], [1], [2], [0, 0, 0, 1, 1, 2], [0], [0]>} : vector<8x8x8xf32>, vector<8x8x8xf32>, vector<8x8x8xf32> -> vector<8x8x8xf32>
    "tpu.trace_stop"() : () -> ()
    %179 = vector.shape_cast %178 : vector<8x8x8xf32> to vector<64x8xf32>
    %180 = arith.truncf %179 : vector<64x8xf32> to vector<64x8xbf16>
    %c1_94 = arith.constant 1 : index
    %c1_95 = arith.constant 1 : index
    %c0_96 = arith.constant 0 : index
    %c0_97 = arith.constant 0 : index
    %181 = vector.load %arg5[%c1_94, %c1_95, %c0_96, %c0_97] : memref<2x4x8x32xbf16, #tpu.memory_space<vmem>>, vector<1x1x8x32xbf16>
    %182 = vector.shape_cast %181 : vector<1x1x8x32xbf16> to vector<8x32xbf16>
    %cst_98 = arith.constant dense<0.000000e+00> : vector<64x32xf32>
    %183 = tpu.matmul %180, %182, %cst_98 {dimension_numbers = #tpu.dot_dimension_numbers<[1], [0], [0], [1], [0, 0, 1, 1], [], []>} : vector<64x8xbf16>, vector<8x32xbf16>, vector<64x32xf32> -> vector<64x32xf32>
    %184 = arith.addf %154, %183 : vector<64x32xf32>
    %c0_99 = arith.constant 0 : index
    %c0_100 = arith.constant 0 : index
    %c0_101 = arith.constant 0 : index
    %c192 = arith.constant 192 : index
    %185 = vector.load %arg2[%c0_99, %c0_100, %c0_101, %c192] : memref<1x8x8x256xf32, #tpu.memory_space<vmem>>, vector<1x8x8x8xf32>
    %186 = vector.shape_cast %185 : vector<1x8x8x8xf32> to vector<8x8x8xf32>
    %c0_102 = arith.constant 0 : index
    %c0_103 = arith.constant 0 : index
    %c0_104 = arith.constant 0 : index
    %c200 = arith.constant 200 : index
    %187 = vector.load %arg2[%c0_102, %c0_103, %c0_104, %c200] : memref<1x8x8x256xf32, #tpu.memory_space<vmem>>, vector<1x8x8x24xf32>
    %188 = vector.shape_cast %187 : vector<1x8x8x24xf32> to vector<8x8x24xf32>
    %189 = vector.extract_strided_slice %188 {offsets = [0, 0, 0], sizes = [8, 8, 8], strides = [1, 1, 1]} : vector<8x8x24xf32> to vector<8x8x8xf32>
    %190 = vector.extract_strided_slice %188 {offsets = [0, 0, 8], sizes = [8, 8, 8], strides = [1, 1, 1]} : vector<8x8x24xf32> to vector<8x8x8xf32>
    %191 = vector.extract_strided_slice %188 {offsets = [0, 0, 16], sizes = [8, 8, 8], strides = [1, 1, 1]} : vector<8x8x24xf32> to vector<8x8x8xf32>
    %cst_105 = arith.constant dense<0xFF800000> : vector<8x8xf32>
    %192 = vector.multi_reduction <maximumf>, %191, %cst_105 [2] : vector<8x8x8xf32> to vector<8x8xf32>
    %193 = arith.addf %192, %3 : vector<8x8xf32>
    "tpu.trace_start"() <{level = 10 : i32, message = "jid,jkd->jik"}> : () -> ()
    %cst_106 = arith.constant dense<0.000000e+00> : vector<8x8x8xf32>
    %194 = tpu.matmul %186, %189, %cst_106 {dimension_numbers = #tpu.dot_dimension_numbers<[2], [2], [1], [1], [0, 0, 0, 1, 1, 1], [0], [0]>} : vector<8x8x8xf32>, vector<8x8x8xf32>, vector<8x8x8xf32> -> vector<8x8x8xf32>
    "tpu.trace_stop"() : () -> ()
    %195 = vector.shape_cast %193 : vector<8x8xf32> to vector<1x8x8xf32>
    %196 = vector.broadcast %195 : vector<1x8x8xf32> to vector<8x8x8xf32>
    %197 = arith.addf %194, %196 : vector<8x8x8xf32>
    %cst_107 = arith.constant dense<0xFF800000> : vector<8x8xf32>
    %198 = vector.multi_reduction <maximumf>, %197, %cst_107 [2] : vector<8x8x8xf32> to vector<8x8xf32>
    %199 = vector.shape_cast %198 : vector<8x8xf32> to vector<8x8x1xf32>
    %200 = vector.broadcast %199 : vector<8x8x1xf32> to vector<8x8x8xf32>
    %201 = arith.subf %197, %200 : vector<8x8x8xf32>
    %202 = math.exp %201 : vector<8x8x8xf32>
    %cst_108 = arith.constant dense<0.000000e+00> : vector<8x8xf32>
    %203 = vector.multi_reduction <add>, %202, %cst_108 [2] : vector<8x8x8xf32> to vector<8x8xf32>
    %204 = vector.shape_cast %203 : vector<8x8xf32> to vector<8x8x1xf32>
    %205 = tpu.reciprocal %204 {approx = true} : vector<8x8x1xf32> -> vector<8x8x1xf32>
    %206 = vector.broadcast %205 : vector<8x8x1xf32> to vector<8x8x8xf32>
    %207 = arith.mulf %202, %206 : vector<8x8x8xf32>
    "tpu.trace_start"() <{level = 10 : i32, message = "jik,jkd->jid"}> : () -> ()
    %cst_109 = arith.constant dense<0.000000e+00> : vector<8x8x8xf32>
    %208 = tpu.matmul %207, %190, %cst_109 {dimension_numbers = #tpu.dot_dimension_numbers<[2], [1], [1], [2], [0, 0, 0, 1, 1, 2], [0], [0]>} : vector<8x8x8xf32>, vector<8x8x8xf32>, vector<8x8x8xf32> -> vector<8x8x8xf32>
    "tpu.trace_stop"() : () -> ()
    %209 = vector.shape_cast %208 : vector<8x8x8xf32> to vector<64x8xf32>
    %210 = arith.truncf %209 : vector<64x8xf32> to vector<64x8xbf16>
    %c1_110 = arith.constant 1 : index
    %c2_111 = arith.constant 2 : index
    %c0_112 = arith.constant 0 : index
    %c0_113 = arith.constant 0 : index
    %211 = vector.load %arg5[%c1_110, %c2_111, %c0_112, %c0_113] : memref<2x4x8x32xbf16, #tpu.memory_space<vmem>>, vector<1x1x8x32xbf16>
    %212 = vector.shape_cast %211 : vector<1x1x8x32xbf16> to vector<8x32xbf16>
    %cst_114 = arith.constant dense<0.000000e+00> : vector<64x32xf32>
    %213 = tpu.matmul %210, %212, %cst_114 {dimension_numbers = #tpu.dot_dimension_numbers<[1], [0], [0], [1], [0, 0, 1, 1], [], []>} : vector<64x8xbf16>, vector<8x32xbf16>, vector<64x32xf32> -> vector<64x32xf32>
    %214 = arith.addf %184, %213 : vector<64x32xf32>
    %c0_115 = arith.constant 0 : index
    %c0_116 = arith.constant 0 : index
    %c0_117 = arith.constant 0 : index
    %c224 = arith.constant 224 : index
    %215 = vector.load %arg2[%c0_115, %c0_116, %c0_117, %c224] : memref<1x8x8x256xf32, #tpu.memory_space<vmem>>, vector<1x8x8x8xf32>
    %216 = vector.shape_cast %215 : vector<1x8x8x8xf32> to vector<8x8x8xf32>
    %c0_118 = arith.constant 0 : index
    %c0_119 = arith.constant 0 : index
    %c0_120 = arith.constant 0 : index
    %c232 = arith.constant 232 : index
    %217 = vector.load %arg2[%c0_118, %c0_119, %c0_120, %c232] : memref<1x8x8x256xf32, #tpu.memory_space<vmem>>, vector<1x8x8x24xf32>
    %218 = vector.shape_cast %217 : vector<1x8x8x24xf32> to vector<8x8x24xf32>
    %219 = vector.extract_strided_slice %218 {offsets = [0, 0, 0], sizes = [8, 8, 8], strides = [1, 1, 1]} : vector<8x8x24xf32> to vector<8x8x8xf32>
    %220 = vector.extract_strided_slice %218 {offsets = [0, 0, 8], sizes = [8, 8, 8], strides = [1, 1, 1]} : vector<8x8x24xf32> to vector<8x8x8xf32>
    %221 = vector.extract_strided_slice %218 {offsets = [0, 0, 16], sizes = [8, 8, 8], strides = [1, 1, 1]} : vector<8x8x24xf32> to vector<8x8x8xf32>
    %cst_121 = arith.constant dense<0xFF800000> : vector<8x8xf32>
    %222 = vector.multi_reduction <maximumf>, %221, %cst_121 [2] : vector<8x8x8xf32> to vector<8x8xf32>
    %223 = arith.addf %222, %3 : vector<8x8xf32>
    "tpu.trace_start"() <{level = 10 : i32, message = "jid,jkd->jik"}> : () -> ()
    %cst_122 = arith.constant dense<0.000000e+00> : vector<8x8x8xf32>
    %224 = tpu.matmul %216, %219, %cst_122 {dimension_numbers = #tpu.dot_dimension_numbers<[2], [2], [1], [1], [0, 0, 0, 1, 1, 1], [0], [0]>} : vector<8x8x8xf32>, vector<8x8x8xf32>, vector<8x8x8xf32> -> vector<8x8x8xf32>
    "tpu.trace_stop"() : () -> ()
    %225 = vector.shape_cast %223 : vector<8x8xf32> to vector<1x8x8xf32>
    %226 = vector.broadcast %225 : vector<1x8x8xf32> to vector<8x8x8xf32>
    %227 = arith.addf %224, %226 : vector<8x8x8xf32>
    %cst_123 = arith.constant dense<0xFF800000> : vector<8x8xf32>
    %228 = vector.multi_reduction <maximumf>, %227, %cst_123 [2] : vector<8x8x8xf32> to vector<8x8xf32>
    %229 = vector.shape_cast %228 : vector<8x8xf32> to vector<8x8x1xf32>
    %230 = vector.broadcast %229 : vector<8x8x1xf32> to vector<8x8x8xf32>
    %231 = arith.subf %227, %230 : vector<8x8x8xf32>
    %232 = math.exp %231 : vector<8x8x8xf32>
    %cst_124 = arith.constant dense<0.000000e+00> : vector<8x8xf32>
    %233 = vector.multi_reduction <add>, %232, %cst_124 [2] : vector<8x8x8xf32> to vector<8x8xf32>
    %234 = vector.shape_cast %233 : vector<8x8xf32> to vector<8x8x1xf32>
    %235 = tpu.reciprocal %234 {approx = true} : vector<8x8x1xf32> -> vector<8x8x1xf32>
    %236 = vector.broadcast %235 : vector<8x8x1xf32> to vector<8x8x8xf32>
    %237 = arith.mulf %232, %236 : vector<8x8x8xf32>
    "tpu.trace_start"() <{level = 10 : i32, message = "jik,jkd->jid"}> : () -> ()
    %cst_125 = arith.constant dense<0.000000e+00> : vector<8x8x8xf32>
    %238 = tpu.matmul %237, %220, %cst_125 {dimension_numbers = #tpu.dot_dimension_numbers<[2], [1], [1], [2], [0, 0, 0, 1, 1, 2], [0], [0]>} : vector<8x8x8xf32>, vector<8x8x8xf32>, vector<8x8x8xf32> -> vector<8x8x8xf32>
    "tpu.trace_stop"() : () -> ()
    %239 = vector.shape_cast %238 : vector<8x8x8xf32> to vector<64x8xf32>
    %240 = arith.truncf %239 : vector<64x8xf32> to vector<64x8xbf16>
    %c1_126 = arith.constant 1 : index
    %c3_127 = arith.constant 3 : index
    %c0_128 = arith.constant 0 : index
    %c0_129 = arith.constant 0 : index
    %241 = vector.load %arg5[%c1_126, %c3_127, %c0_128, %c0_129] : memref<2x4x8x32xbf16, #tpu.memory_space<vmem>>, vector<1x1x8x32xbf16>
    %242 = vector.shape_cast %241 : vector<1x1x8x32xbf16> to vector<8x32xbf16>
    %cst_130 = arith.constant dense<0.000000e+00> : vector<64x32xf32>
    %243 = tpu.matmul %240, %242, %cst_130 {dimension_numbers = #tpu.dot_dimension_numbers<[1], [0], [0], [1], [0, 0, 1, 1], [], []>} : vector<64x8xbf16>, vector<8x32xbf16>, vector<64x32xf32> -> vector<64x32xf32>
    %244 = arith.addf %214, %243 : vector<64x32xf32>
    %c0_131 = arith.constant 0 : index
    %c0_132 = arith.constant 0 : index
    %245 = vector.load %arg6[%c0_131, %c0_132] : memref<1x32xf32, #tpu.memory_space<vmem>>, vector<1x32xf32>
    %246 = vector.extract_strided_slice %244 {offsets = [0, 0], sizes = [8, 32], strides = [1, 1]} : vector<64x32xf32> to vector<8x32xf32>
    %247 = vector.broadcast %245 : vector<1x32xf32> to vector<8x32xf32>
    %248 = arith.addf %246, %247 : vector<8x32xf32>
    %c0_133 = arith.constant 0 : index
    %c0_134 = arith.constant 0 : index
    %c0_135 = arith.constant 0 : index
    %c0_136 = arith.constant 0 : index
    %249 = vector.load %arg7[%c0_133, %c0_134, %c0_135, %c0_136] : memref<1x8x8x32xf32, #tpu.memory_space<vmem>>, vector<1x8x1x32xf32>
    %250 = vector.shape_cast %249 : vector<1x8x1x32xf32> to vector<8x32xf32>
    %251 = vector.shape_cast %248 : vector<8x32xf32> to vector<1x8x1x32xf32>
    tpu.vector_store %arg7[%c0_133, %c0_134, %c0_135, %c0_136], %251 {strides = array<i32>} : memref<1x8x8x32xf32, #tpu.memory_space<vmem>>, vector<1x8x1x32xf32>,
    %252 = vector.extract_strided_slice %244 {offsets = [8, 0], sizes = [8, 32], strides = [1, 1]} : vector<64x32xf32> to vector<8x32xf32>
    %253 = vector.broadcast %245 : vector<1x32xf32> to vector<8x32xf32>
    %254 = arith.addf %252, %253 : vector<8x32xf32>
    %c0_137 = arith.constant 0 : index
    %c0_138 = arith.constant 0 : index
    %c1_139 = arith.constant 1 : index
    %c0_140 = arith.constant 0 : index
    %255 = vector.load %arg7[%c0_137, %c0_138, %c1_139, %c0_140] : memref<1x8x8x32xf32, #tpu.memory_space<vmem>>, vector<1x8x1x32xf32>
    %256 = vector.shape_cast %255 : vector<1x8x1x32xf32> to vector<8x32xf32>
    %257 = vector.shape_cast %254 : vector<8x32xf32> to vector<1x8x1x32xf32>
    tpu.vector_store %arg7[%c0_137, %c0_138, %c1_139, %c0_140], %257 {strides = array<i32>} : memref<1x8x8x32xf32, #tpu.memory_space<vmem>>, vector<1x8x1x32xf32>,
    %258 = vector.extract_strided_slice %244 {offsets = [16, 0], sizes = [8, 32], strides = [1, 1]} : vector<64x32xf32> to vector<8x32xf32>
    %259 = vector.broadcast %245 : vector<1x32xf32> to vector<8x32xf32>
    %260 = arith.addf %258, %259 : vector<8x32xf32>
    %c0_141 = arith.constant 0 : index
    %c0_142 = arith.constant 0 : index
    %c2_143 = arith.constant 2 : index
    %c0_144 = arith.constant 0 : index
    %261 = vector.load %arg7[%c0_141, %c0_142, %c2_143, %c0_144] : memref<1x8x8x32xf32, #tpu.memory_space<vmem>>, vector<1x8x1x32xf32>
    %262 = vector.shape_cast %261 : vector<1x8x1x32xf32> to vector<8x32xf32>
    %263 = vector.shape_cast %260 : vector<8x32xf32> to vector<1x8x1x32xf32>
    tpu.vector_store %arg7[%c0_141, %c0_142, %c2_143, %c0_144], %263 {strides = array<i32>} : memref<1x8x8x32xf32, #tpu.memory_space<vmem>>, vector<1x8x1x32xf32>,
    %264 = vector.extract_strided_slice %244 {offsets = [24, 0], sizes = [8, 32], strides = [1, 1]} : vector<64x32xf32> to vector<8x32xf32>
    %265 = vector.broadcast %245 : vector<1x32xf32> to vector<8x32xf32>
    %266 = arith.addf %264, %265 : vector<8x32xf32>
    %c0_145 = arith.constant 0 : index
    %c0_146 = arith.constant 0 : index
    %c3_147 = arith.constant 3 : index
    %c0_148 = arith.constant 0 : index
    %267 = vector.load %arg7[%c0_145, %c0_146, %c3_147, %c0_148] : memref<1x8x8x32xf32, #tpu.memory_space<vmem>>, vector<1x8x1x32xf32>
    %268 = vector.shape_cast %267 : vector<1x8x1x32xf32> to vector<8x32xf32>
    %269 = vector.shape_cast %266 : vector<8x32xf32> to vector<1x8x1x32xf32>
    tpu.vector_store %arg7[%c0_145, %c0_146, %c3_147, %c0_148], %269 {strides = array<i32>} : memref<1x8x8x32xf32, #tpu.memory_space<vmem>>, vector<1x8x1x32xf32>,
    %270 = vector.extract_strided_slice %244 {offsets = [32, 0], sizes = [8, 32], strides = [1, 1]} : vector<64x32xf32> to vector<8x32xf32>
    %271 = vector.broadcast %245 : vector<1x32xf32> to vector<8x32xf32>
    %272 = arith.addf %270, %271 : vector<8x32xf32>
    %c0_149 = arith.constant 0 : index
    %c0_150 = arith.constant 0 : index
    %c4 = arith.constant 4 : index
    %c0_151 = arith.constant 0 : index
    %273 = vector.load %arg7[%c0_149, %c0_150, %c4, %c0_151] : memref<1x8x8x32xf32, #tpu.memory_space<vmem>>, vector<1x8x1x32xf32>
    %274 = vector.shape_cast %273 : vector<1x8x1x32xf32> to vector<8x32xf32>
    %275 = vector.shape_cast %272 : vector<8x32xf32> to vector<1x8x1x32xf32>
    tpu.vector_store %arg7[%c0_149, %c0_150, %c4, %c0_151], %275 {strides = array<i32>} : memref<1x8x8x32xf32, #tpu.memory_space<vmem>>, vector<1x8x1x32xf32>,
    %276 = vector.extract_strided_slice %244 {offsets = [40, 0], sizes = [8, 32], strides = [1, 1]} : vector<64x32xf32> to vector<8x32xf32>
    %277 = vector.broadcast %245 : vector<1x32xf32> to vector<8x32xf32>
    %278 = arith.addf %276, %277 : vector<8x32xf32>
    %c0_152 = arith.constant 0 : index
    %c0_153 = arith.constant 0 : index
    %c5 = arith.constant 5 : index
    %c0_154 = arith.constant 0 : index
    %279 = vector.load %arg7[%c0_152, %c0_153, %c5, %c0_154] : memref<1x8x8x32xf32, #tpu.memory_space<vmem>>, vector<1x8x1x32xf32>
    %280 = vector.shape_cast %279 : vector<1x8x1x32xf32> to vector<8x32xf32>
    %281 = vector.shape_cast %278 : vector<8x32xf32> to vector<1x8x1x32xf32>
    tpu.vector_store %arg7[%c0_152, %c0_153, %c5, %c0_154], %281 {strides = array<i32>} : memref<1x8x8x32xf32, #tpu.memory_space<vmem>>, vector<1x8x1x32xf32>,
    %282 = vector.extract_strided_slice %244 {offsets = [48, 0], sizes = [8, 32], strides = [1, 1]} : vector<64x32xf32> to vector<8x32xf32>
    %283 = vector.broadcast %245 : vector<1x32xf32> to vector<8x32xf32>
    %284 = arith.addf %282, %283 : vector<8x32xf32>
    %c0_155 = arith.constant 0 : index
    %c0_156 = arith.constant 0 : index
    %c6 = arith.constant 6 : index
    %c0_157 = arith.constant 0 : index
    %285 = vector.load %arg7[%c0_155, %c0_156, %c6, %c0_157] : memref<1x8x8x32xf32, #tpu.memory_space<vmem>>, vector<1x8x1x32xf32>
    %286 = vector.shape_cast %285 : vector<1x8x1x32xf32> to vector<8x32xf32>
    %287 = vector.shape_cast %284 : vector<8x32xf32> to vector<1x8x1x32xf32>
    tpu.vector_store %arg7[%c0_155, %c0_156, %c6, %c0_157], %287 {strides = array<i32>} : memref<1x8x8x32xf32, #tpu.memory_space<vmem>>, vector<1x8x1x32xf32>,
    %288 = vector.extract_strided_slice %244 {offsets = [56, 0], sizes = [8, 32], strides = [1, 1]} : vector<64x32xf32> to vector<8x32xf32>
    %289 = vector.broadcast %245 : vector<1x32xf32> to vector<8x32xf32>
    %290 = arith.addf %288, %289 : vector<8x32xf32>
    %c0_158 = arith.constant 0 : index
    %c0_159 = arith.constant 0 : index
    %c7 = arith.constant 7 : index
    %c0_160 = arith.constant 0 : index
    %291 = vector.load %arg7[%c0_158, %c0_159, %c7, %c0_160] : memref<1x8x8x32xf32, #tpu.memory_space<vmem>>, vector<1x8x1x32xf32>
    %292 = vector.shape_cast %291 : vector<1x8x1x32xf32> to vector<8x32xf32>
    %293 = vector.shape_cast %290 : vector<8x32xf32> to vector<1x8x1x32xf32>
    tpu.vector_store %arg7[%c0_158, %c0_159, %c7, %c0_160], %293 {strides = array<i32>} : memref<1x8x8x32xf32, #tpu.memory_space<vmem>>, vector<1x8x1x32xf32>,
    return
  }
  func.func @transform_0(%arg0: i32) -> (i32, i32, i32, i32) {
    %c0_i32 = arith.constant 0 : i32
    %c0_i32_0 = arith.constant 0 : i32
    %c0_i32_1 = arith.constant 0 : i32
    %c0_i32_2 = arith.constant 0 : i32
    return %arg0, %c0_i32, %c0_i32_0, %c0_i32_1 : i32, i32, i32, i32
  }
  func.func @transform_1(%arg0: i32) -> (i32, i32, i32, i32) {
    %c0_i32 = arith.constant 0 : i32
    %c0_i32_0 = arith.constant 0 : i32
    %c0_i32_1 = arith.constant 0 : i32
    %c0_i32_2 = arith.constant 0 : i32
    return %arg0, %c0_i32, %c0_i32_0, %c0_i32_1 : i32, i32, i32, i32
  }
  func.func @transform_2(%arg0: i32) -> (i32, i32, i32) {
    %c0_i32 = arith.constant 0 : i32
    %c0_i32_0 = arith.constant 0 : i32
    %c0_i32_1 = arith.constant 0 : i32
    return %arg0, %c0_i32, %c0_i32_0 : i32, i32, i32
  }
  func.func @transform_3(%arg0: i32) -> (i32, i32, i32) {
    %c0_i32 = arith.constant 0 : i32
    %c0_i32_0 = arith.constant 0 : i32
    %c0_i32_1 = arith.constant 0 : i32
    return %arg0, %c0_i32, %c0_i32_0 : i32, i32, i32
  }
  func.func @transform_4(%arg0: i32) -> (i32, i32, i32, i32) {
    %c0_i32 = arith.constant 0 : i32
    %c0_i32_0 = arith.constant 0 : i32
    %c0_i32_1 = arith.constant 0 : i32
    %c0_i32_2 = arith.constant 0 : i32
    %c0_i32_3 = arith.constant 0 : i32
    return %c0_i32, %c0_i32_0, %c0_i32_1, %c0_i32_2 : i32, i32, i32, i32
  }
  func.func @transform_5(%arg0: i32) -> (i32, i32) {
    %c0_i32 = arith.constant 0 : i32
    %c0_i32_0 = arith.constant 0 : i32
    %c0_i32_1 = arith.constant 0 : i32
    return %c0_i32, %c0_i32_0 : i32, i32
  }
  func.func @transform_6(%arg0: i32) -> (i32, i32, i32, i32) {
    %c0_i32 = arith.constant 0 : i32
    %c0_i32_0 = arith.constant 0 : i32
    %c0_i32_1 = arith.constant 0 : i32
    %c0_i32_2 = arith.constant 0 : i32
    return %arg0, %c0_i32, %c0_i32_0, %c0_i32_1 : i32, i32, i32, i32
  }
}

</mosaic_0001>

<llo_original>
// kernel: triplet_attention_ungated.2
$region0: #{triplet_attention_ungated.2}
  #allocation0 [shape = 'u32[]', space=smem, size = 0x4, offset = 0x4, fixed_abs, tag = 'smem constant byte address 0x4 - core index']
  #allocation1 [shape = 'u32[72,128]{1,0:T(1,128)}', space=vmem, size = 0x9000, scoped, tag = 'internal scratch']
  %s0 = inlined_call_operand.vmem [shape: f32[128,32], index: 0, kind: input, shape index: {}]
  %s1 = inlined_call_operand.vmem [shape: f32[1,32], index: 1, kind: input, shape index: {}]
  %s2 = inlined_call_operand.vmem [shape: f32[1,32], index: 2, kind: input, shape index: {}]
  %s3 = inlined_call_operand.vmem [shape: bf16[32,256], index: 3, kind: input, shape index: {}]
  %s4 = inlined_call_operand.vmem [shape: f32[1,256], index: 4, kind: input, shape index: {}]
  %s5 = inlined_call_operand.vmem [shape: f32[128,256], index: 5, kind: output, shape index: {}]
  %s6 = sld [smem:[#allocation0]]
  $region30: #{triplet_attention_ungated.2} parent=0
    _
  %s8 = ssub.s32 1, %s6
  %s9 = scalar_select 0, %s8, %s6
  // Predicated region
  $region2: #{triplet_attention_ungated.2} parent=0 // pred_check
    _
  $region3: #{triplet_attention_ungated.2} parent=0 // pred_check_branch
    %11 = sbr.rel (0) target = $region5
  $region4: #{triplet_attention_ungated.2} parent=0 // pred_region
    _
  $region5: #{triplet_attention_ungated.2} parent=0 // pred_fallthru
    _
  // Predicated region
  $region6: #{triplet_attention_ungated.2} parent=0 // pred_check
    _
  $region7: #{triplet_attention_ungated.2} parent=0 // pred_check_branch
    %13 = sbr.rel (0) target = $region9
  $region8: #{triplet_attention_ungated.2} parent=0 // pred_region
    _
  $region9: #{triplet_attention_ungated.2} parent=0 // pred_fallthru
    _
  // Predicated region
  $region10: #{triplet_attention_ungated.2} parent=0 // pred_check
    _
  $region11: #{triplet_attention_ungated.2} parent=0 // pred_check_branch
    %15 = sbr.rel (0) target = $region13
  $region12: #{triplet_attention_ungated.2} parent=0 // pred_region
    _
  $region13: #{triplet_attention_ungated.2} parent=0 // pred_fallthru
    _
  // Predicated region
  $region14: #{triplet_attention_ungated.2} parent=0 // pred_check
    _
  $region15: #{triplet_attention_ungated.2} parent=0 // pred_check_branch
    %17 = sbr.rel (0) target = $region17
  $region16: #{triplet_attention_ungated.2} parent=0 // pred_region
    _
  $region17: #{triplet_attention_ungated.2} parent=0 // pred_fallthru
    _
  // Predicated region
  $region18: #{triplet_attention_ungated.2} parent=0 // pred_check
    _
  $region19: #{triplet_attention_ungated.2} parent=0 // pred_check_branch
    %19 = sbr.rel (0) target = $region21
  $region20: #{triplet_attention_ungated.2} parent=0 // pred_region
    _
  $region21: #{triplet_attention_ungated.2} parent=0 // pred_fallthru
    _
  %v21 = vld [vmem:[%s0] sm:$0xff]
  %v22 = vld [vmem:[%s0 + $0x8] sm:$0xff]
  %v23 = vld [vmem:[%s0 + $0x10] sm:$0xff]
  %v24 = vld [vmem:[%s0 + $0x18] sm:$0xff]
  %v25 = vld [vmem:[%s0 + $0x20] sm:$0xff]
  %v26 = vld [vmem:[%s0 + $0x28] sm:$0xff]
  %v27 = vld [vmem:[%s0 + $0x30] sm:$0xff]
  %v28 = vld [vmem:[%s0 + $0x38] sm:$0xff]
  %v29 = vld [vmem:[%s0 + $0x40] sm:$0xff]
  %v30 = vld [vmem:[%s0 + $0x48] sm:$0xff]
  %v31 = vld [vmem:[%s0 + $0x50] sm:$0xff]
  %v32 = vld [vmem:[%s0 + $0x58] sm:$0xff]
  %v33 = vld [vmem:[%s0 + $0x60] sm:$0xff]
  %v34 = vld [vmem:[%s0 + $0x68] sm:$0xff]
  %v35 = vld [vmem:[%s0 + $0x70] sm:$0xff]
  %v36 = vld [vmem:[%s0 + $0x78] sm:$0xff]
  %vm37 = vcmask 261120
  %v38 = vsel %vm37, %v21, 0.0
  %39 = vadd.xlane.f32.xlu0 %v38
  %v40 = vpop.xlane.xlu0 %39
  %v41 = vsel %vm37, %v22, 0.0
  %42 = vadd.xlane.f32.xlu0 %v41
  %v43 = vpop.xlane.xlu0 %42
  %v44 = vsel %vm37, %v23, 0.0
  %45 = vadd.xlane.f32.xlu0 %v44
  %v46 = vpop.xlane.xlu0 %45
  %v47 = vsel %vm37, %v24, 0.0
  %48 = vadd.xlane.f32.xlu0 %v47
  %v49 = vpop.xlane.xlu0 %48
  %v50 = vsel %vm37, %v25, 0.0
  %51 = vadd.xlane.f32.xlu0 %v50
  %v52 = vpop.xlane.xlu0 %51
  %v53 = vsel %vm37, %v26, 0.0
  %54 = vadd.xlane.f32.xlu0 %v53
  %v55 = vpop.xlane.xlu0 %54
  %v56 = vsel %vm37, %v27, 0.0
  %57 = vadd.xlane.f32.xlu0 %v56
  %v58 = vpop.xlane.xlu0 %57
  %v59 = vsel %vm37, %v28, 0.0
  %60 = vadd.xlane.f32.xlu0 %v59
  %v61 = vpop.xlane.xlu0 %60
  %v62 = vsel %vm37, %v29, 0.0
  %63 = vadd.xlane.f32.xlu0 %v62
  %v64 = vpop.xlane.xlu0 %63
  %v65 = vsel %vm37, %v30, 0.0
  %66 = vadd.xlane.f32.xlu0 %v65
  %v67 = vpop.xlane.xlu0 %66
  %v68 = vsel %vm37, %v31, 0.0
  %69 = vadd.xlane.f32.xlu0 %v68
  %v70 = vpop.xlane.xlu0 %69
  %v71 = vsel %vm37, %v32, 0.0
  %72 = vadd.xlane.f32.xlu0 %v71
  %v73 = vpop.xlane.xlu0 %72
  %v74 = vsel %vm37, %v33, 0.0
  %75 = vadd.xlane.f32.xlu0 %v74
  %v76 = vpop.xlane.xlu0 %75
  %v77 = vsel %vm37, %v34, 0.0
  %78 = vadd.xlane.f32.xlu0 %v77
  %v79 = vpop.xlane.xlu0 %78
  %v80 = vsel %vm37, %v35, 0.0
  %81 = vadd.xlane.f32.xlu0 %v80
  %v82 = vpop.xlane.xlu0 %81
  %v83 = vsel %vm37, %v36, 0.0
  %84 = vadd.xlane.f32.xlu0 %v83
  %v85 = vpop.xlane.xlu0 %84
  %v86 = vrcp.pop 32.0
  %v87 = vmul.f32 32.0, %v86
  %v88 = vsub.f32 1.0, %v87
  %v89 = vmul.f32 %v86, %v88
  %v90 = vadd.f32 %v86, %v89
  %vm91 = vweird.f32 %v86
  %v92 = vsel %vm91, %v86, %v90
  %v93 = vmul.f32 %v40, %v92
  %v94 = vmul.f32 %v43, %v92
  %v95 = vmul.f32 %v46, %v92
  %v96 = vmul.f32 %v49, %v92
  %v97 = vmul.f32 %v52, %v92
  %v98 = vmul.f32 %v55, %v92
  %v99 = vmul.f32 %v58, %v92
  %v100 = vmul.f32 %v61, %v92
  %v101 = vmul.f32 %v64, %v92
  %v102 = vmul.f32 %v67, %v92
  %v103 = vmul.f32 %v70, %v92
  %v104 = vmul.f32 %v73, %v92
  %v105 = vmul.f32 %v76, %v92
  %v106 = vmul.f32 %v79, %v92
  %v107 = vmul.f32 %v82, %v92
  %v108 = vmul.f32 %v85, %v92
  %v109 = vsub.f32 %v21, %v93
  %v110 = vsub.f32 %v22, %v94
  %v111 = vsub.f32 %v23, %v95
  %v112 = vsub.f32 %v24, %v96
  %v113 = vsub.f32 %v25, %v97
  %v114 = vsub.f32 %v26, %v98
  %v115 = vsub.f32 %v27, %v99
  %v116 = vsub.f32 %v28, %v100
  %v117 = vsub.f32 %v29, %v101
  %v118 = vsub.f32 %v30, %v102
  %v119 = vsub.f32 %v31, %v103
  %v120 = vsub.f32 %v32, %v104
  %v121 = vsub.f32 %v33, %v105
  %v122 = vsub.f32 %v34, %v106
  %v123 = vsub.f32 %v35, %v107
  %v124 = vsub.f32 %v36, %v108
  %v125 = vmul.f32 %v109, %v109
  %v126 = vmul.f32 %v110, %v110
  %v127 = vmul.f32 %v111, %v111
  %v128 = vmul.f32 %v112, %v112
  %v129 = vmul.f32 %v113, %v113
  %v130 = vmul.f32 %v114, %v114
  %v131 = vmul.f32 %v115, %v115
  %v132 = vmul.f32 %v116, %v116
  %v133 = vmul.f32 %v117, %v117
  %v134 = vmul.f32 %v118, %v118
  %v135 = vmul.f32 %v119, %v119
  %v136 = vmul.f32 %v120, %v120
  %v137 = vmul.f32 %v121, %v121
  %v138 = vmul.f32 %v122, %v122
  %v139 = vmul.f32 %v123, %v123
  %v140 = vmul.f32 %v124, %v124
  %v141 = vsel %vm37, %v125, 0.0
  %142 = vadd.xlane.f32.xlu0 %v141
  %v143 = vpop.xlane.xlu0 %142
  %v144 = vsel %vm37, %v126, 0.0
  %145 = vadd.xlane.f32.xlu0 %v144
  %v146 = vpop.xlane.xlu0 %145
  %v147 = vsel %vm37, %v127, 0.0
  %148 = vadd.xlane.f32.xlu0 %v147
  %v149 = vpop.xlane.xlu0 %148
  %v150 = vsel %vm37, %v128, 0.0
  %151 = vadd.xlane.f32.xlu0 %v150
  %v152 = vpop.xlane.xlu0 %151
  %v153 = vsel %vm37, %v129, 0.0
  %154 = vadd.xlane.f32.xlu0 %v153
  %v155 = vpop.xlane.xlu0 %154
  %v156 = vsel %vm37, %v130, 0.0
  %157 = vadd.xlane.f32.xlu0 %v156
  %v158 = vpop.xlane.xlu0 %157
  %v159 = vsel %vm37, %v131, 0.0
  %160 = vadd.xlane.f32.xlu0 %v159
  %v161 = vpop.xlane.xlu0 %160
  %v162 = vsel %vm37, %v132, 0.0
  %163 = vadd.xlane.f32.xlu0 %v162
  %v164 = vpop.xlane.xlu0 %163
  %v165 = vsel %vm37, %v133, 0.0
  %166 = vadd.xlane.f32.xlu0 %v165
  %v167 = vpop.xlane.xlu0 %166
  %v168 = vsel %vm37, %v134, 0.0
  %169 = vadd.xlane.f32.xlu0 %v168
  %v170 = vpop.xlane.xlu0 %169
  %v171 = vsel %vm37, %v135, 0.0
  %172 = vadd.xlane.f32.xlu0 %v171
  %v173 = vpop.xlane.xlu0 %172
  %v174 = vsel %vm37, %v136, 0.0
  %175 = vadd.xlane.f32.xlu0 %v174
  %v176 = vpop.xlane.xlu0 %175
  %v177 = vsel %vm37, %v137, 0.0
  %178 = vadd.xlane.f32.xlu0 %v177
  %v179 = vpop.xlane.xlu0 %178
  %v180 = vsel %vm37, %v138, 0.0
  %181 = vadd.xlane.f32.xlu0 %v180
  %v182 = vpop.xlane.xlu0 %181
  %v183 = vsel %vm37, %v139, 0.0
  %184 = vadd.xlane.f32.xlu0 %v183
  %v185 = vpop.xlane.xlu0 %184
  %v186 = vsel %vm37, %v140, 0.0
  %187 = vadd.xlane.f32.xlu0 %v186
  %v188 = vpop.xlane.xlu0 %187
  %v189 = vmul.f32 %v143, %v92
  %v190 = vmul.f32 %v146, %v92
  %v191 = vmul.f32 %v149, %v92
  %v192 = vmul.f32 %v152, %v92
  %v193 = vmul.f32 %v155, %v92
  %v194 = vmul.f32 %v158, %v92
  %v195 = vmul.f32 %v161, %v92
  %v196 = vmul.f32 %v164, %v92
  %v197 = vmul.f32 %v167, %v92
  %v198 = vmul.f32 %v170, %v92
  %v199 = vmul.f32 %v173, %v92
  %v200 = vmul.f32 %v176, %v92
  %v201 = vmul.f32 %v179, %v92
  %v202 = vmul.f32 %v182, %v92
  %v203 = vmul.f32 %v185, %v92
  %v204 = vmul.f32 %v188, %v92
  %v205 = vadd.f32 %v189, 1e-05
  %v206 = vadd.f32 %v190, 1e-05
  %v207 = vadd.f32 %v191, 1e-05
  %v208 = vadd.f32 %v192, 1e-05
  %v209 = vadd.f32 %v193, 1e-05
  %v210 = vadd.f32 %v194, 1e-05
  %v211 = vadd.f32 %v195, 1e-05
  %v212 = vadd.f32 %v196, 1e-05
  %v213 = vadd.f32 %v197, 1e-05
  %v214 = vadd.f32 %v198, 1e-05
  %v215 = vadd.f32 %v199, 1e-05
  %v216 = vadd.f32 %v200, 1e-05
  %v217 = vadd.f32 %v201, 1e-05
  %v218 = vadd.f32 %v202, 1e-05
  %v219 = vadd.f32 %v203, 1e-05
  %v220 = vadd.f32 %v204, 1e-05
  %v221 = vrsqrt.pop %v205
  %v222 = vmul.f32 %v221, %v205
  %v223 = vmul.f32 %v222, %v221
  %v224 = vmul.f32 0.5, %v223
  %v225 = vsub.f32 1.5, %v224
  %v226 = vmul.f32 %v221, %v225
  %vm227 = vweird.f32 %v205
  %vm228 = vweird.f32 %v221
  %vm229 = vmor %vm227, %vm228
  %v230 = vsel %vm229, %v221, %v226
  %v231 = vrsqrt.pop %v206
  %v232 = vmul.f32 %v231, %v206
  %v233 = vmul.f32 %v232, %v231
  %v234 = vmul.f32 0.5, %v233
  %v235 = vsub.f32 1.5, %v234
  %v236 = vmul.f32 %v231, %v235
  %vm237 = vweird.f32 %v206
  %vm238 = vweird.f32 %v231
  %vm239 = vmor %vm237, %vm238
  %v240 = vsel %vm239, %v231, %v236
  %v241 = vrsqrt.pop %v207
  %v242 = vmul.f32 %v241, %v207
  %v243 = vmul.f32 %v242, %v241
  %v244 = vmul.f32 0.5, %v243
  %v245 = vsub.f32 1.5, %v244
  %v246 = vmul.f32 %v241, %v245
  %vm247 = vweird.f32 %v207
  %vm248 = vweird.f32 %v241
  %vm249 = vmor %vm247, %vm248
  %v250 = vsel %vm249, %v241, %v246
  %v251 = vrsqrt.pop %v208
  %v252 = vmul.f32 %v251, %v208
  %v253 = vmul.f32 %v252, %v251
  %v254 = vmul.f32 0.5, %v253
  %v255 = vsub.f32 1.5, %v254
  %v256 = vmul.f32 %v251, %v255
  %vm257 = vweird.f32 %v208
  %vm258 = vweird.f32 %v251
  %vm259 = vmor %vm257, %vm258
  %v260 = vsel %vm259, %v251, %v256
  %v261 = vrsqrt.pop %v209
  %v262 = vmul.f32 %v261, %v209
  %v263 = vmul.f32 %v262, %v261
  %v264 = vmul.f32 0.5, %v263
  %v265 = vsub.f32 1.5, %v264
  %v266 = vmul.f32 %v261, %v265
  %vm267 = vweird.f32 %v209
  %vm268 = vweird.f32 %v261
  %vm269 = vmor %vm267, %vm268
  %v270 = vsel %vm269, %v261, %v266
  %v271 = vrsqrt.pop %v210
  %v272 = vmul.f32 %v271, %v210
  %v273 = vmul.f32 %v272, %v271
  %v274 = vmul.f32 0.5, %v273
  %v275 = vsub.f32 1.5, %v274
  %v276 = vmul.f32 %v271, %v275
  %vm277 = vweird.f32 %v210
  %vm278 = vweird.f32 %v271
  %vm279 = vmor %vm277, %vm278
  %v280 = vsel %vm279, %v271, %v276
  %v281 = vrsqrt.pop %v211
  %v282 = vmul.f32 %v281, %v211
  %v283 = vmul.f32 %v282, %v281
  %v284 = vmul.f32 0.5, %v283
  %v285 = vsub.f32 1.5, %v284
  %v286 = vmul.f32 %v281, %v285
  %vm287 = vweird.f32 %v211
  %vm288 = vweird.f32 %v281
  %vm289 = vmor %vm287, %vm288
  %v290 = vsel %vm289, %v281, %v286
  %v291 = vrsqrt.pop %v212
  %v292 = vmul.f32 %v291, %v212
  %v293 = vmul.f32 %v292, %v291
  %v294 = vmul.f32 0.5, %v293
  %v295 = vsub.f32 1.5, %v294
  %v296 = vmul.f32 %v291, %v295
  %vm297 = vweird.f32 %v212
  %vm298 = vweird.f32 %v291
  %vm299 = vmor %vm297, %vm298
  %v300 = vsel %vm299, %v291, %v296
  %v301 = vrsqrt.pop %v213
  %v302 = vmul.f32 %v301, %v213
  %v303 = vmul.f32 %v302, %v301
  %v304 = vmul.f32 0.5, %v303
  %v305 = vsub.f32 1.5, %v304
  %v306 = vmul.f32 %v301, %v305
  %vm307 = vweird.f32 %v213
  %vm308 = vweird.f32 %v301
  %vm309 = vmor %vm307, %vm308
  %v310 = vsel %vm309, %v301, %v306
  %v311 = vrsqrt.pop %v214
  %v312 = vmul.f32 %v311, %v214
  %v313 = vmul.f32 %v312, %v311
  %v314 = vmul.f32 0.5, %v313
  %v315 = vsub.f32 1.5, %v314
  %v316 = vmul.f32 %v311, %v315
  %vm317 = vweird.f32 %v214
  %vm318 = vweird.f32 %v311
  %vm319 = vmor %vm317, %vm318
  %v320 = vsel %vm319, %v311, %v316
  %v321 = vrsqrt.pop %v215
  %v322 = vmul.f32 %v321, %v215
  %v323 = vmul.f32 %v322, %v321
  %v324 = vmul.f32 0.5, %v323
  %v325 = vsub.f32 1.5, %v324
  %v326 = vmul.f32 %v321, %v325
  %vm327 = vweird.f32 %v215
  %vm328 = vweird.f32 %v321
  %vm329 = vmor %vm327, %vm328
  %v330 = vsel %vm329, %v321, %v326
  %v331 = vrsqrt.pop %v216
  %v332 = vmul.f32 %v331, %v216
  %v333 = vmul.f32 %v332, %v331
  %v334 = vmul.f32 0.5, %v333
  %v335 = vsub.f32 1.5, %v334
  %v336 = vmul.f32 %v331, %v335
  %vm337 = vweird.f32 %v216
  %vm338 = vweird.f32 %v331
  %vm339 = vmor %vm337, %vm338
  %v340 = vsel %vm339, %v331, %v336
  %v341 = vrsqrt.pop %v217
  %v342 = vmul.f32 %v341, %v217
  %v343 = vmul.f32 %v342, %v341
  %v344 = vmul.f32 0.5, %v343
  %v345 = vsub.f32 1.5, %v344
  %v346 = vmul.f32 %v341, %v345
  %vm347 = vweird.f32 %v217
  %vm348 = vweird.f32 %v341
  %vm349 = vmor %vm347, %vm348
  %v350 = vsel %vm349, %v341, %v346
  %v351 = vrsqrt.pop %v218
  %v352 = vmul.f32 %v351, %v218
  %v353 = vmul.f32 %v352, %v351
  %v354 = vmul.f32 0.5, %v353
  %v355 = vsub.f32 1.5, %v354
  %v356 = vmul.f32 %v351, %v355
  %vm357 = vweird.f32 %v218
  %vm358 = vweird.f32 %v351
  %vm359 = vmor %vm357, %vm358
  %v360 = vsel %vm359, %v351, %v356
  %v361 = vrsqrt.pop %v219
  %v362 = vmul.f32 %v361, %v219
  %v363 = vmul.f32 %v362, %v361
  %v364 = vmul.f32 0.5, %v363
  %v365 = vsub.f32 1.5, %v364
  %v366 = vmul.f32 %v361, %v365
  %vm367 = vweird.f32 %v219
  %vm368 = vweird.f32 %v361
  %vm369 = vmor %vm367, %vm368
  %v370 = vsel %vm369, %v361, %v366
  %v371 = vrsqrt.pop %v220
  %v372 = vmul.f32 %v371, %v220
  %v373 = vmul.f32 %v372, %v371
  %v374 = vmul.f32 0.5, %v373
  %v375 = vsub.f32 1.5, %v374
  %v376 = vmul.f32 %v371, %v375
  %vm377 = vweird.f32 %v220
  %vm378 = vweird.f32 %v371
  %vm379 = vmor %vm377, %vm378
  %v380 = vsel %vm379, %v371, %v376
  %v381 = vmul.f32 %v109, %v230
  %v382 = vmul.f32 %v110, %v240
  %v383 = vmul.f32 %v111, %v250
  %v384 = vmul.f32 %v112, %v260
  %v385 = vmul.f32 %v113, %v270
  %v386 = vmul.f32 %v114, %v280
  %v387 = vmul.f32 %v115, %v290
  %v388 = vmul.f32 %v116, %v300
  %v389 = vmul.f32 %v117, %v310
  %v390 = vmul.f32 %v118, %v320
  %v391 = vmul.f32 %v119, %v330
  %v392 = vmul.f32 %v120, %v340
  %v393 = vmul.f32 %v121, %v350
  %v394 = vmul.f32 %v122, %v360
  %v395 = vmul.f32 %v123, %v370
  %v396 = vmul.f32 %v124, %v380
  %v397 = vld [vmem:[%s1] sm:$0x1]
  %v399 = vperm.slane %v397, 0
  %v401 = vmul.f32 %v381, %v399
  %v402 = vmul.f32 %v382, %v399
  %v403 = vmul.f32 %v383, %v399
  %v404 = vmul.f32 %v384, %v399
  %v405 = vmul.f32 %v385, %v399
  %v406 = vmul.f32 %v386, %v399
  %v407 = vmul.f32 %v387, %v399
  %v408 = vmul.f32 %v388, %v399
  %v409 = vmul.f32 %v389, %v399
  %v410 = vmul.f32 %v390, %v399
  %v411 = vmul.f32 %v391, %v399
  %v412 = vmul.f32 %v392, %v399
  %v413 = vmul.f32 %v393, %v399
  %v414 = vmul.f32 %v394, %v399
  %v415 = vmul.f32 %v395, %v399
  %v416 = vmul.f32 %v396, %v399
  %v417 = vld [vmem:[%s2] sm:$0x1]
  %v419 = vperm.slane %v417, 0
  %v421 = vadd.f32 %v401, %v419
  %v422 = vadd.f32 %v402, %v419
  %v423 = vadd.f32 %v403, %v419
  %v424 = vadd.f32 %v404, %v419
  %v425 = vadd.f32 %v405, %v419
  %v426 = vadd.f32 %v406, %v419
  %v427 = vadd.f32 %v407, %v419
  %v428 = vadd.f32 %v408, %v419
  %v429 = vadd.f32 %v409, %v419
  %v430 = vadd.f32 %v410, %v419
  %v431 = vadd.f32 %v411, %v419
  %v432 = vadd.f32 %v412, %v419
  %v433 = vadd.f32 %v413, %v419
  %v434 = vadd.f32 %v414, %v419
  %v435 = vadd.f32 %v415, %v419
  %v436 = vadd.f32 %v416, %v419
  %v437 = vpack.c.bf16 %v422, %v421
  %v438 = vpack.c.bf16 %v424, %v423
  %v439 = vpack.c.bf16 %v426, %v425
  %v440 = vpack.c.bf16 %v428, %v427
  %v441 = vpack.c.bf16 %v430, %v429
  %v442 = vpack.c.bf16 %v432, %v431
  %v443 = vpack.c.bf16 %v434, %v433
  %v444 = vpack.c.bf16 %v436, %v435
  %v445 = vld [vmem:[%s3] sm:$0xff]
  %v446 = vld [vmem:[%s3 + $0x8] sm:$0xff]
  %v447 = vld [vmem:[%s3 + $0x10] sm:$0xff]
  %v448 = vld [vmem:[%s3 + $0x18] sm:$0xff]
  %v449 = vld [vmem:[%s4] sm:$0x3]
  %v451 = vperm.slane %v449, 0
  %v452 = vperm.slane %v449, 1
  %v459 = vunpack.c.l.b16 %v445
  %v460 = vunpack.c.h.b16 %v445
  %v461 = vunpack.c.l.b16 %v446
  %v462 = vunpack.c.h.b16 %v446
  %v463 = vunpack.c.l.b16 %v447
  %v464 = vunpack.c.h.b16 %v447
  %v465 = vunpack.c.l.b16 %v448
  %v466 = vunpack.c.h.b16 %v448
  %v467 = vpack.c.b16 %v461, %v459
  %v468 = vpack.c.b16 %v462, %v460
  %v469 = vpack.c.b16 %v465, %v463
  %v470 = vpack.c.b16 %v466, %v464
  %v476 = vsel %vm37, %v437, 0
  %v479 = vsel %vm37, %v438, 0
  %v482 = vsel %vm37, %v439, 0
  %v485 = vsel %vm37, %v440, 0
  %v488 = vsel %vm37, %v441, 0
  %v491 = vsel %vm37, %v442, 0
  %v494 = vsel %vm37, %v443, 0
  %v497 = vsel %vm37, %v444, 0
  %499 = vmatpush.bf16.msra.mxu0 0
  %500 = vmatpush.bf16.msra.mxu0 0
  %501 = vmatpush.bf16.msra.mxu0 0
  %502 = vmatpush.bf16.msra.mxu0 0
  %503 = vmatpush.bf16.msra.mxu0 0
  %504 = vmatpush.bf16.msra.mxu0 0
  %505 = vmatpush.bf16.msra.mxu0 %v469
  %506 = vmatpush.bf16.msra.mxu0 %v467
  %507 = vmatmul.bf16.gmra.mxu0 %v476
  %v508 = vpop.f32.mrf.mxu0
  %v509 = vadd.f32 %v451, %v508
  %v510 = vpop.f32.mrf.mxu0
  %v511 = vadd.f32 %v451, %v510
  %512 = vmatmul.bf16.gmra.mxu0 %v479
  %v513 = vpop.f32.mrf.mxu0
  %v514 = vadd.f32 %v451, %v513
  %v515 = vpop.f32.mrf.mxu0
  %v516 = vadd.f32 %v451, %v515
  %517 = vmatmul.bf16.gmra.mxu0 %v482
  %v518 = vpop.f32.mrf.mxu0
  %v519 = vadd.f32 %v451, %v518
  %v520 = vpop.f32.mrf.mxu0
  %v521 = vadd.f32 %v451, %v520
  %522 = vmatmul.bf16.gmra.mxu0 %v485
  %v523 = vpop.f32.mrf.mxu0
  %v524 = vadd.f32 %v451, %v523
  %v525 = vpop.f32.mrf.mxu0
  %v526 = vadd.f32 %v451, %v525
  %527 = vmatmul.bf16.gmra.mxu0 %v488
  %v528 = vpop.f32.mrf.mxu0
  %v529 = vadd.f32 %v451, %v528
  %v530 = vpop.f32.mrf.mxu0
  %v531 = vadd.f32 %v451, %v530
  %532 = vmatmul.bf16.gmra.mxu0 %v491
  %v533 = vpop.f32.mrf.mxu0
  %v534 = vadd.f32 %v451, %v533
  %v535 = vpop.f32.mrf.mxu0
  %v536 = vadd.f32 %v451, %v535
  %537 = vmatmul.bf16.gmra.mxu0 %v494
  %v538 = vpop.f32.mrf.mxu0
  %v539 = vadd.f32 %v451, %v538
  %v540 = vpop.f32.mrf.mxu0
  %v541 = vadd.f32 %v451, %v540
  %542 = vmatmul.bf16.gmra.mxu0 %v497
  %v543 = vpop.f32.mrf.mxu0
  %v544 = vadd.f32 %v451, %v543
  %v545 = vpop.f32.mrf.mxu0
  %v546 = vadd.f32 %v451, %v545
  %547 = vdwg.mxu0
  %548 = vmatpush.bf16.msra.mxu0 0
  %549 = vmatpush.bf16.msra.mxu0 0
  %550 = vmatpush.bf16.msra.mxu0 0
  %551 = vmatpush.bf16.msra.mxu0 0
  %552 = vmatpush.bf16.msra.mxu0 0
  %553 = vmatpush.bf16.msra.mxu0 0
  %554 = vmatpush.bf16.msra.mxu0 %v470
  %555 = vmatpush.bf16.msra.mxu0 %v468
  %556 = vmatmul.bf16.gmra.mxu0 %v476
  %v557 = vpop.f32.mrf.mxu0
  %v558 = vadd.f32 %v452, %v557
  %v559 = vpop.f32.mrf.mxu0
  %v560 = vadd.f32 %v452, %v559
  %561 = vmatmul.bf16.gmra.mxu0 %v479
  %v562 = vpop.f32.mrf.mxu0
  %v563 = vadd.f32 %v452, %v562
  %v564 = vpop.f32.mrf.mxu0
  %v565 = vadd.f32 %v452, %v564
  %566 = vmatmul.bf16.gmra.mxu0 %v482
  %v567 = vpop.f32.mrf.mxu0
  %v568 = vadd.f32 %v452, %v567
  %v569 = vpop.f32.mrf.mxu0
  %v570 = vadd.f32 %v452, %v569
  %571 = vmatmul.bf16.gmra.mxu0 %v485
  %v572 = vpop.f32.mrf.mxu0
  %v573 = vadd.f32 %v452, %v572
  %v574 = vpop.f32.mrf.mxu0
  %v575 = vadd.f32 %v452, %v574
  %576 = vmatmul.bf16.gmra.mxu0 %v488
  %v577 = vpop.f32.mrf.mxu0
  %v578 = vadd.f32 %v452, %v577
  %v579 = vpop.f32.mrf.mxu0
  %v580 = vadd.f32 %v452, %v579
  %581 = vmatmul.bf16.gmra.mxu0 %v491
  %v582 = vpop.f32.mrf.mxu0
  %v583 = vadd.f32 %v452, %v582
  %v584 = vpop.f32.mrf.mxu0
  %v585 = vadd.f32 %v452, %v584
  %586 = vmatmul.bf16.gmra.mxu0 %v494
  %v587 = vpop.f32.mrf.mxu0
  %v588 = vadd.f32 %v452, %v587
  %v589 = vpop.f32.mrf.mxu0
  %v590 = vadd.f32 %v452, %v589
  %591 = vmatmul.bf16.gmra.mxu0 %v497
  %v592 = vpop.f32.mrf.mxu0
  %v593 = vadd.f32 %v452, %v592
  %v594 = vpop.f32.mrf.mxu0
  %v595 = vadd.f32 %v452, %v594
  %596 = vdwg.mxu0
  %597 = vst [vmem:[%s5] sm:$0xff] %v509
  %598 = vst [vmem:[%s5 + $0x8] sm:$0xff] %v558
  %599 = vst [vmem:[%s5 + $0x10] sm:$0xff] %v511
  %600 = vst [vmem:[%s5 + $0x18] sm:$0xff] %v560
  %601 = vst [vmem:[%s5 + $0x20] sm:$0xff] %v514
  %602 = vst [vmem:[%s5 + $0x28] sm:$0xff] %v563
  %603 = vst [vmem:[%s5 + $0x30] sm:$0xff] %v516
  %604 = vst [vmem:[%s5 + $0x38] sm:$0xff] %v565
  %605 = vst [vmem:[%s5 + $0x40] sm:$0xff] %v519
  %606 = vst [vmem:[%s5 + $0x48] sm:$0xff] %v568
  %607 = vst [vmem:[%s5 + $0x50] sm:$0xff] %v521
  %608 = vst [vmem:[%s5 + $0x58] sm:$0xff] %v570
  %609 = vst [vmem:[%s5 + $0x60] sm:$0xff] %v524
  %610 = vst [vmem:[%s5 + $0x68] sm:$0xff] %v573
  %611 = vst [vmem:[%s5 + $0x70] sm:$0xff] %v526
  %612 = vst [vmem:[%s5 + $0x78] sm:$0xff] %v575
  %613 = vst [vmem:[%s5 + $0x80] sm:$0xff] %v529
  %614 = vst [vmem:[%s5 + $0x88] sm:$0xff] %v578
  %615 = vst [vmem:[%s5 + $0x90] sm:$0xff] %v531
  %616 = vst [vmem:[%s5 + $0x98] sm:$0xff] %v580
  %617 = vst [vmem:[%s5 + $0xa0] sm:$0xff] %v534
  %618 = vst [vmem:[%s5 + $0xa8] sm:$0xff] %v583
  %619 = vst [vmem:[%s5 + $0xb0] sm:$0xff] %v536
  %620 = vst [vmem:[%s5 + $0xb8] sm:$0xff] %v585
  %621 = vst [vmem:[%s5 + $0xc0] sm:$0xff] %v539
  %622 = vst [vmem:[%s5 + $0xc8] sm:$0xff] %v588
  %623 = vst [vmem:[%s5 + $0xd0] sm:$0xff] %v541
  %624 = vst [vmem:[%s5 + $0xd8] sm:$0xff] %v590
  %625 = vst [vmem:[%s5 + $0xe0] sm:$0xff] %v544
  %626 = vst [vmem:[%s5 + $0xe8] sm:$0xff] %v593
  %627 = vst [vmem:[%s5 + $0xf0] sm:$0xff] %v546
  %628 = vst [vmem:[%s5 + $0xf8] sm:$0xff] %v595
  // Predicated region
  $region22: #{triplet_attention_ungated.2} parent=0 // pred_check
    _
  $region23: #{triplet_attention_ungated.2} parent=0 // pred_check_branch
    %630 = sbr.rel (0) target = $region25
  $region24: #{triplet_attention_ungated.2} parent=0 // pred_region
    _
  $region25: #{triplet_attention_ungated.2} parent=0 // pred_fallthru
    _
  // Predicated region
  $region26: #{triplet_attention_ungated.2} parent=0 // pred_check
    _
  $region27: #{triplet_attention_ungated.2} parent=0 // pred_check_branch
    %632 = sbr.rel (0) target = $region29
  $region28: #{triplet_attention_ungated.2} parent=0 // pred_region
    _
  $region29: #{triplet_attention_ungated.2} parent=0 // pred_fallthru
    _

// kernel: triplet_attention_ungated.3
$region0: #{triplet_attention_ungated.3}
  #allocation0 [shape = 'u32[]', space=smem, size = 0x4, offset = 0x4, fixed_abs, tag = 'smem constant byte address 0x4 - core index']
  #allocation1 [shape = 'u32[72,128]{1,0:T(1,128)}', space=vmem, size = 0x9000, scoped, tag = 'internal scratch']
  %s0 = inlined_call_operand.vmem [shape: f32[2,8,8,256], index: 0, kind: input, shape index: {}]
  %s1 = inlined_call_operand.vmem [shape: f32[2,8,8,256], index: 1, kind: input, shape index: {}]
  %s2 = inlined_call_operand.vmem [shape: f32[2,8,8], index: 2, kind: input, shape index: {}]
  %s3 = inlined_call_operand.vmem [shape: f32[2,8,8], index: 3, kind: input, shape index: {}]
  %s4 = inlined_call_operand.vmem [shape: bf16[2,4,8,32], index: 4, kind: input, shape index: {}]
  %s5 = inlined_call_operand.vmem [shape: f32[1,32], index: 5, kind: input, shape index: {}]
  %s6 = inlined_call_operand.hbm [shape: f32[2,8,8,32], index: 6, kind: output, shape index: {}]
  %s7 = sld [smem:[#allocation0]]
  $region57: #{triplet_attention_ungated.3} parent=0
    _
  %s9 = ssub.s32 1, %s7
  %s10 = scalar_select 0, %s9, %s7
  $region1: #{triplet_attention_ungated.3} parent=0
    #allocation2 [shape = 'u8[65536]{0}', space=vmem, size = 0x10000, scoped, tag = 'output window, operand 0']
    #allocation3 [shape = 's32[2]{0}', space=sflag, size = 0x8, scoped, tag = 'scoped memory for triplet_attention_ungated.3']
    %11 = vsyncpa [#allocation3], 0
    %s12 = scalar_lea.sflag [#allocation3], 1
    %13 = vsyncpa %s12, 0
    loop: start=0, step=1, limit=4
    $region2: #{triplet_attention_ungated.3} parent=1 // loop_pre_header
      _
    $region3: #{triplet_attention_ungated.3} parent=1 // loop_header
      %s15 = sphi 0, %s19
      %p16 = scmp.ge.s32.totalorder %s15, 4
      %s25 = sphi 0, %s27
      %s28 = sphi 0, %s25
      %s29 = sphi 0, %s28
      %s45 = sphi 0, %s29
      %s51 = sphi 0, %s53
      %s54 = sphi 0, %s51
      %s55 = sphi 0, %s54
      %s71 = sphi 0, %s55
      %s77 = sphi 0, %s79
      %s80 = sphi 0, %s77
      %s81 = sphi 0, %s80
      %s97 = sphi 0, %s81
      %s103 = sphi 0, %s105
      %s106 = sphi 0, %s103
      %s107 = sphi 0, %s106
      %s123 = sphi 0, %s107
      %s127 = sphi 0, %s127
      %s129 = sphi 0, %s127
      %s130 = sphi 0, %s129
      %s144 = sphi 0, %s130
      %s148 = sphi 0, %s148
      %s150 = sphi 0, %s148
      %s151 = sphi 0, %s150
      %s165 = sphi 0, %s151
      %s171 = sphi 0, %s173
      %s174 = sphi 0, %s171
      %s175 = sphi 0, %s174
      %s191 = sphi 0, %s175
    $region4: #{triplet_attention_ungated.3} parent=1 // loop_header_branch
      %18 = sbr.rel (%p16) target = $region8
    $region5: #{triplet_attention_ungated.3} parent=1 // loop_body
      %s20 = ssub.s32 %s15, 1
      %s21 = ssub.s32 %s15, 2
      %s22 = sadd.s32 %s15, 1
      %s23 = ssub.s32 %s15, %s22
      %p24 = scmp.eq.s32.totalorder %s23, 0
      %s26 = sadd.s32 %s25, 1
      %s27 = scalar_select %p24, %s25, %s26
      %p30 = pneg %p24
      %p31 = scmp.eq.s32.totalorder %s15, 1
      %p32 = por %p30, %p31
      %p33 = scmp.ne.s32.totalorder %s25, %s28
      %p34 = scmp.eq.s32.totalorder %s15, 0
      %p35 = por %p33, %p34
      %p36 = scmp.ne.s32.totalorder %s25, %s28
      %p37 = scmp.eq.s32.totalorder %s20, 1
      %p38 = por %p36, %p37
      %p39 = scmp.ne.s32.totalorder %s28, %s29
      %p40 = scmp.eq.s32.totalorder %s20, 0
      %p41 = por %p39, %p40
      %p42 = scmp.ne.s32.totalorder %s28, %s29
      %p43 = scmp.eq.s32.totalorder %s21, 1
      %p44 = por %p42, %p43
      %p46 = scmp.ne.s32.totalorder %s29, %s45
      %p47 = scmp.eq.s32.totalorder %s21, 0
      %p48 = por %p46, %p47
      %s49 = ssub.s32 %s15, %s22
      %p50 = scmp.eq.s32.totalorder %s49, 0
      %s52 = sadd.s32 %s51, 1
      %s53 = scalar_select %p50, %s51, %s52
      %p56 = pneg %p50
      %p57 = scmp.eq.s32.totalorder %s15, 1
      %p58 = por %p56, %p57
      %p59 = scmp.ne.s32.totalorder %s51, %s54
      %p60 = scmp.eq.s32.totalorder %s15, 0
      %p61 = por %p59, %p60
      %p62 = scmp.ne.s32.totalorder %s51, %s54
      %p63 = scmp.eq.s32.totalorder %s20, 1
      %p64 = por %p62, %p63
      %p65 = scmp.ne.s32.totalorder %s54, %s55
      %p66 = scmp.eq.s32.totalorder %s20, 0
      %p67 = por %p65, %p66
      %p68 = scmp.ne.s32.totalorder %s54, %s55
      %p69 = scmp.eq.s32.totalorder %s21, 1
      %p70 = por %p68, %p69
      %p72 = scmp.ne.s32.totalorder %s55, %s71
      %p73 = scmp.eq.s32.totalorder %s21, 0
      %p74 = por %p72, %p73
      %s75 = ssub.s32 %s15, %s22
      %p76 = scmp.eq.s32.totalorder %s75, 0
      %s78 = sadd.s32 %s77, 1
      %s79 = scalar_select %p76, %s77, %s78
      %p82 = pneg %p76
      %p83 = scmp.eq.s32.totalorder %s15, 1
      %p84 = por %p82, %p83
      %p85 = scmp.ne.s32.totalorder %s77, %s80
      %p86 = scmp.eq.s32.totalorder %s15, 0
      %p87 = por %p85, %p86
      %p88 = scmp.ne.s32.totalorder %s77, %s80
      %p89 = scmp.eq.s32.totalorder %s20, 1
      %p90 = por %p88, %p89
      %p91 = scmp.ne.s32.totalorder %s80, %s81
      %p92 = scmp.eq.s32.totalorder %s20, 0
      %p93 = por %p91, %p92
      %p94 = scmp.ne.s32.totalorder %s80, %s81
      %p95 = scmp.eq.s32.totalorder %s21, 1
      %p96 = por %p94, %p95
      %p98 = scmp.ne.s32.totalorder %s81, %s97
      %p99 = scmp.eq.s32.totalorder %s21, 0
      %p100 = por %p98, %p99
      %s101 = ssub.s32 %s15, %s22
      %p102 = scmp.eq.s32.totalorder %s101, 0
      %s104 = sadd.s32 %s103, 1
      %s105 = scalar_select %p102, %s103, %s104
      %p108 = pneg %p102
      %p109 = scmp.eq.s32.totalorder %s15, 1
      %p110 = por %p108, %p109
      %p111 = scmp.ne.s32.totalorder %s103, %s106
      %p112 = scmp.eq.s32.totalorder %s15, 0
      %p113 = por %p111, %p112
      %p114 = scmp.ne.s32.totalorder %s103, %s106
      %p115 = scmp.eq.s32.totalorder %s20, 1
      %p116 = por %p114, %p115
      %p117 = scmp.ne.s32.totalorder %s106, %s107
      %p118 = scmp.eq.s32.totalorder %s20, 0
      %p119 = por %p117, %p118
      %p120 = scmp.ne.s32.totalorder %s106, %s107
      %p121 = scmp.eq.s32.totalorder %s21, 1
      %p122 = por %p120, %p121
      %p124 = scmp.ne.s32.totalorder %s107, %s123
      %p125 = scmp.eq.s32.totalorder %s21, 0
      %p126 = por %p124, %p125
      %s128 = sadd.s32 %s127, 1
      %p131 = scmp.eq.s32.totalorder %s15, 1
      %p132 = scmp.ne.s32.totalorder %s127, %s129
      %p133 = scmp.eq.s32.totalorder %s15, 0
      %p134 = por %p132, %p133
      %p135 = scmp.ne.s32.totalorder %s127, %s129
      %p136 = scmp.eq.s32.totalorder %s20, 1
      %p137 = por %p135, %p136
      %p138 = scmp.ne.s32.totalorder %s129, %s130
      %p139 = scmp.eq.s32.totalorder %s20, 0
      %p140 = por %p138, %p139
      %p141 = scmp.ne.s32.totalorder %s129, %s130
      %p142 = scmp.eq.s32.totalorder %s21, 1
      %p143 = por %p141, %p142
      %p145 = scmp.ne.s32.totalorder %s130, %s144
      %p146 = scmp.eq.s32.totalorder %s21, 0
      %p147 = por %p145, %p146
      %s149 = sadd.s32 %s148, 1
      %p152 = scmp.eq.s32.totalorder %s15, 1
      %p153 = scmp.ne.s32.totalorder %s148, %s150
      %p154 = scmp.eq.s32.totalorder %s15, 0
      %p155 = por %p153, %p154
      %p156 = scmp.ne.s32.totalorder %s148, %s150
      %p157 = scmp.eq.s32.totalorder %s20, 1
      %p158 = por %p156, %p157
      %p159 = scmp.ne.s32.totalorder %s150, %s151
      %p160 = scmp.eq.s32.totalorder %s20, 0
      %p161 = por %p159, %p160
      %p162 = scmp.ne.s32.totalorder %s150, %s151
      %p163 = scmp.eq.s32.totalorder %s21, 1
      %p164 = por %p162, %p163
      %p166 = scmp.ne.s32.totalorder %s151, %s165
      %p167 = scmp.eq.s32.totalorder %s21, 0
      %p168 = por %p166, %p167
      %s169 = ssub.s32 %s15, %s22
      %p170 = scmp.eq.s32.totalorder %s169, 0
      %s172 = sadd.s32 %s171, 1
      %s173 = scalar_select %p170, %s171, %s172
      %p176 = pneg %p170
      %p177 = scmp.eq.s32.totalorder %s15, 1
      %p178 = por %p176, %p177
      %p179 = scmp.ne.s32.totalorder %s171, %s174
      %p180 = scmp.eq.s32.totalorder %s15, 0
      %p181 = por %p179, %p180
      %p182 = scmp.ne.s32.totalorder %s171, %s174
      %p183 = scmp.eq.s32.totalorder %s20, 1
      %p184 = por %p182, %p183
      %p185 = scmp.ne.s32.totalorder %s174, %s175
      %p186 = scmp.eq.s32.totalorder %s20, 0
      %p187 = por %p185, %p186
      %p188 = scmp.ne.s32.totalorder %s174, %s175
      %p189 = scmp.eq.s32.totalorder %s21, 1
      %p190 = por %p188, %p189
      %p192 = scmp.ne.s32.totalorder %s175, %s191
      %p193 = scmp.eq.s32.totalorder %s21, 0
      %p194 = por %p192, %p193
      %p195 = scmp.le.s32.totalorder 1, %s15
      %p196 = scmp.lt.s32.totalorder %s15, 3
      %p197 = pnand %p195, %p196
      %p198 = pneg %p197
      // Predicated region
      $region9: #{triplet_attention_ungated.3} parent=5 // pred_check
        _
      $region10: #{triplet_attention_ungated.3} parent=5 // pred_check_branch
        %200 = sbr.rel (%p197) target = $region12
      $region11: #{triplet_attention_ungated.3} parent=5 // pred_region
        %s201 = ssub.s32 %s15, 1
        // Predicated region
        $region13: #{triplet_attention_ungated.3} parent=11 // pred_check
          %p202 = pneg %p140
        $region14: #{triplet_attention_ungated.3} parent=11 // pred_check_branch
          %204 = sbr.rel (%p202) target = $region16
        $region15: #{triplet_attention_ungated.3} parent=11 // pred_region
          _
        $region16: #{triplet_attention_ungated.3} parent=11 // pred_fallthru
          _
        // Predicated region
        $region17: #{triplet_attention_ungated.3} parent=11 // pred_check
          %p205 = pneg %p161
        $region18: #{triplet_attention_ungated.3} parent=11 // pred_check_branch
          %207 = sbr.rel (%p205) target = $region20
        $region19: #{triplet_attention_ungated.3} parent=11 // pred_region
          _
        $region20: #{triplet_attention_ungated.3} parent=11 // pred_fallthru
          _
      $region12: #{triplet_attention_ungated.3} parent=5 // pred_fallthru
        _
      %p208 = scmp.lt.s32.totalorder %s15, 2
      // Predicated region
      $region21: #{triplet_attention_ungated.3} parent=5 // pred_check
        %p209 = pneg %p208
      $region22: #{triplet_attention_ungated.3} parent=5 // pred_check_branch
        %211 = sbr.rel (%p209) target = $region24
      $region23: #{triplet_attention_ungated.3} parent=5 // pred_region
        // Predicated region
        $region25: #{triplet_attention_ungated.3} parent=23 // pred_check
          %p212 = pneg %p35
        $region26: #{triplet_attention_ungated.3} parent=23 // pred_check_branch
          %214 = sbr.rel (%p212) target = $region28
        $region27: #{triplet_attention_ungated.3} parent=23 // pred_region
          %p215 = scmp.lt.s32.totalorder %s15, 1
          %s216 = scalar_select %p215, %s15, 1
          %s217 = smul.addr %s216, 16
          %s218 = smul.addr %s217, 8
          %s219 = scalar_lea.vmem %s0, %s218
        $region28: #{triplet_attention_ungated.3} parent=23 // pred_fallthru
          _
        // Predicated region
        $region29: #{triplet_attention_ungated.3} parent=23 // pred_check
          %p220 = pneg %p61
        $region30: #{triplet_attention_ungated.3} parent=23 // pred_check_branch
          %222 = sbr.rel (%p220) target = $region32
        $region31: #{triplet_attention_ungated.3} parent=23 // pred_region
          %p223 = scmp.lt.s32.totalorder %s15, 1
          %s224 = scalar_select %p223, %s15, 1
          %s225 = smul.addr %s224, 16
          %s226 = smul.addr %s225, 8
          %s227 = scalar_lea.vmem %s1, %s226
        $region32: #{triplet_attention_ungated.3} parent=23 // pred_fallthru
          _
        // Predicated region
        $region33: #{triplet_attention_ungated.3} parent=23 // pred_check
          %p228 = pneg %p87
        $region34: #{triplet_attention_ungated.3} parent=23 // pred_check_branch
          %230 = sbr.rel (%p228) target = $region36
        $region35: #{triplet_attention_ungated.3} parent=23 // pred_region
          %p231 = scmp.lt.s32.totalorder %s15, 1
          %s232 = scalar_select %p231, %s15, 1
          %s233 = smul.addr %s232, 8
          %s234 = scalar_lea.vmem %s2, %s233
        $region36: #{triplet_attention_ungated.3} parent=23 // pred_fallthru
          _
        // Predicated region
        $region37: #{triplet_attention_ungated.3} parent=23 // pred_check
          %p235 = pneg %p113
        $region38: #{triplet_attention_ungated.3} parent=23 // pred_check_branch
          %237 = sbr.rel (%p235) target = $region40
        $region39: #{triplet_attention_ungated.3} parent=23 // pred_region
          %p238 = scmp.lt.s32.totalorder %s15, 1
          %s239 = scalar_select %p238, %s15, 1
          %s240 = smul.addr %s239, 8
          %s241 = scalar_lea.vmem %s3, %s240
        $region40: #{triplet_attention_ungated.3} parent=23 // pred_fallthru
          _
      $region24: #{triplet_attention_ungated.3} parent=5 // pred_fallthru
        _
      %p242 = scmp.le.s32.totalorder 1, %s15
      %p243 = scmp.lt.s32.totalorder %s15, 3
      %p244 = pnand %p242, %p243
      %p245 = pneg %p244
      // Predicated region
      $region41: #{triplet_attention_ungated.3} parent=5 // pred_check
        _
      $region42: #{triplet_attention_ungated.3} parent=5 // pred_check_branch
        %247 = sbr.rel (%p244) target = $region44
      $region43: #{triplet_attention_ungated.3} parent=5 // pred_region
        %s248 = ssub.s32 %s15, 1
        %p249 = scmp.lt.s32.totalorder %s20, 1
        %s250 = scalar_select %p249, %s20, 1
        %s251 = smul.addr %s250, 16
        %s252 = smul.addr %s251, 8
        %s253 = scalar_lea.vmem %s0, %s252
        %p254 = pneg %p41
        %p255 = pneg %p38
        %p256 = scmp.lt.s32.totalorder %s20, 1
        %s257 = scalar_select %p256, %s20, 1
        %s258 = smul.addr %s257, 16
        %s259 = smul.addr %s258, 8
        %s260 = scalar_lea.vmem %s1, %s259
        %p261 = pneg %p67
        %p262 = pneg %p64
        %p263 = scmp.lt.s32.totalorder %s20, 1
        %s264 = scalar_select %p263, %s20, 1
        %s265 = smul.addr %s264, 8
        %s266 = scalar_lea.vmem %s2, %s265
        %p267 = pneg %p93
        %p268 = pneg %p90
        %p269 = scmp.lt.s32.totalorder %s20, 1
        %s270 = scalar_select %p269, %s20, 1
        %s271 = smul.addr %s270, 8
        %s272 = scalar_lea.vmem %s3, %s271
        %p273 = pneg %p119
        %p274 = pneg %p116
        %p275 = pneg %p140
        %p276 = pneg %p137
        %p277 = pneg %p161
        %p278 = pneg %p158
        %p279 = pneg %p187
        %p280 = pneg %p184
        %s281 = sand.u32 %s174, 1
        %s282 = scalar_lea.sflag [#allocation3], %s281
        %s283 = sand.u32 %s174, 1
        %s284 = smul.addr %s283, 64
        %s285 = scalar_lea.vmem [#allocation2], %s284
        %p286 = scmp.lt.s32.totalorder %s20, 1
        %s287 = scalar_select %p286, %s20, 1
        %s288 = smul.addr %s287, 16
        %s289 = smul.addr %s288, 8
        %s290 = scalar_lea.vmem %s0, %s289
        %p291 = scmp.lt.s32.totalorder %s20, 1
        %s292 = scalar_select %p291, %s20, 1
        %s293 = smul.addr %s292, 16
        %s294 = smul.addr %s293, 8
        %s295 = scalar_lea.vmem %s1, %s294
        %p296 = scmp.lt.s32.totalorder %s20, 1
        %s297 = scalar_select %p296, %s20, 1
        %s298 = smul.addr %s297, 8
        %s299 = scalar_lea.vmem %s2, %s298
        %p300 = scmp.lt.s32.totalorder %s20, 1
        %s301 = scalar_select %p300, %s20, 1
        %s302 = smul.addr %s301, 8
        %s303 = scalar_lea.vmem %s3, %s302
        %v305 = vld [vmem:[%s299] sm:$0xff]
        %v306 = vld [vmem:[%s303] sm:$0xff]
        %v307 = vld [vmem:[%s295] sm:$0xff]
        %v308 = vld [vmem:[%s295 + $0x10] sm:$0xff]
        %v309 = vld [vmem:[%s295 + $0x20] sm:$0xff]
        %v310 = vld [vmem:[%s295 + $0x30] sm:$0xff]
        %v311 = vld [vmem:[%s295 + $0x40] sm:$0xff]
        %v312 = vld [vmem:[%s295 + $0x50] sm:$0xff]
        %v313 = vld [vmem:[%s295 + $0x60] sm:$0xff]
        %v314 = vld [vmem:[%s295 + $0x70] sm:$0xff]
        %v315 = vld [vmem:[%s290] sm:$0xff]
        %v316 = vld [vmem:[%s290 + $0x10] sm:$0xff]
        %v317 = vld [vmem:[%s290 + $0x20] sm:$0xff]
        %v318 = vld [vmem:[%s290 + $0x30] sm:$0xff]
        %v319 = vld [vmem:[%s290 + $0x40] sm:$0xff]
        %v320 = vld [vmem:[%s290 + $0x50] sm:$0xff]
        %v321 = vld [vmem:[%s290 + $0x60] sm:$0xff]
        %v322 = vld [vmem:[%s290 + $0x70] sm:$0xff]
        %vm323 = vcmask 261312
        %v324 = vsel %vm323, %v315, -inf
        %325 = vmax.xlane.f32.xlu0 %v324
        %v326 = vpop.xlane.xlu0 %325
        %v327 = vsel %vm323, %v316, -inf
        %328 = vmax.xlane.f32.xlu0 %v327
        %v329 = vpop.xlane.xlu0 %328
        %v330 = vsel %vm323, %v317, -inf
        %331 = vmax.xlane.f32.xlu0 %v330
        %v332 = vpop.xlane.xlu0 %331
        %v333 = vsel %vm323, %v318, -inf
        %334 = vmax.xlane.f32.xlu0 %v333
        %v335 = vpop.xlane.xlu0 %334
        %v336 = vsel %vm323, %v319, -inf
        %337 = vmax.xlane.f32.xlu0 %v336
        %v338 = vpop.xlane.xlu0 %337
        %v339 = vsel %vm323, %v320, -inf
        %340 = vmax.xlane.f32.xlu0 %v339
        %v341 = vpop.xlane.xlu0 %340
        %v342 = vsel %vm323, %v321, -inf
        %343 = vmax.xlane.f32.xlu0 %v342
        %v344 = vpop.xlane.xlu0 %343
        %v345 = vsel %vm323, %v322, -inf
        %346 = vmax.xlane.f32.xlu0 %v345
        %v347 = vpop.xlane.xlu0 %346
        %v349 = vperm.slane %v305, 0
        %v350 = vlaneseq
        %v351 = vshrl.u32 %v350, 7
        %353 = vset.pattern.permute.xlu0 %v351
        %354 = vperm.xlu0 %353, %v349
        %v355 = vpop.permute.xlu0 %354
        %v356 = vperm.slane %v305, 1
        %v357 = vlaneseq
        %v358 = vshrl.u32 %v357, 7
        %360 = vset.pattern.permute.xlu0 %v358
        %361 = vperm.xlu0 %360, %v356
        %v362 = vpop.permute.xlu0 %361
        %v363 = vperm.slane %v305, 2
        %v364 = vlaneseq
        %v365 = vshrl.u32 %v364, 7
        %367 = vset.pattern.permute.xlu0 %v365
        %368 = vperm.xlu0 %367, %v363
        %v369 = vpop.permute.xlu0 %368
        %v370 = vperm.slane %v305, 3
        %v371 = vlaneseq
        %v372 = vshrl.u32 %v371, 7
        %374 = vset.pattern.permute.xlu0 %v372
        %375 = vperm.xlu0 %374, %v370
        %v376 = vpop.permute.xlu0 %375
        %v377 = vperm.slane %v305, 4
        %v378 = vlaneseq
        %v379 = vshrl.u32 %v378, 7
        %381 = vset.pattern.permute.xlu0 %v379
        %382 = vperm.xlu0 %381, %v377
        %v383 = vpop.permute.xlu0 %382
        %v384 = vperm.slane %v305, 5
        %v385 = vlaneseq
        %v386 = vshrl.u32 %v385, 7
        %388 = vset.pattern.permute.xlu0 %v386
        %389 = vperm.xlu0 %388, %v384
        %v390 = vpop.permute.xlu0 %389
        %v391 = vperm.slane %v305, 6
        %v392 = vlaneseq
        %v393 = vshrl.u32 %v392, 7
        %395 = vset.pattern.permute.xlu0 %v393
        %396 = vperm.xlu0 %395, %v391
        %v397 = vpop.permute.xlu0 %396
        %v398 = vperm.slane %v305, 7
        %v399 = vlaneseq
        %v400 = vshrl.u32 %v399, 7
        %402 = vset.pattern.permute.xlu0 %v400
        %403 = vperm.xlu0 %402, %v398
        %v404 = vpop.permute.xlu0 %403
        %v413 = vadd.f32 %v326, %v355
        %v414 = vadd.f32 %v329, %v362
        %v415 = vadd.f32 %v332, %v369
        %v416 = vadd.f32 %v335, %v376
        %v417 = vadd.f32 %v338, %v383
        %v418 = vadd.f32 %v341, %v390
        %v419 = vadd.f32 %v344, %v397
        %v420 = vadd.f32 %v347, %v404
        %422 = vrot.lane.b32.xlu0 %v315, 120
        %v423 = vpop.permute.xlu0 %422
        %432 = vset.pattern.permute.xlu0 0
        %433 = vperm.xlu0 %432, %v413
        %v434 = vpop.permute.xlu0 %433
        %435 = vset.pattern.permute.xlu0 0
        %436 = vperm.xlu0 %435, %v414
        %v437 = vpop.permute.xlu0 %436
        %438 = vset.pattern.permute.xlu0 0
        %439 = vperm.xlu0 %438, %v415
        %v440 = vpop.permute.xlu0 %439
        %441 = vset.pattern.permute.xlu0 0
        %442 = vperm.xlu0 %441, %v416
        %v443 = vpop.permute.xlu0 %442
        %444 = vset.pattern.permute.xlu0 0
        %445 = vperm.xlu0 %444, %v417
        %v446 = vpop.permute.xlu0 %445
        %447 = vset.pattern.permute.xlu0 0
        %448 = vperm.xlu0 %447, %v418
        %v449 = vpop.permute.xlu0 %448
        %450 = vset.pattern.permute.xlu0 0
        %451 = vperm.xlu0 %450, %v419
        %v452 = vpop.permute.xlu0 %451
        %453 = vset.pattern.permute.xlu0 0
        %454 = vperm.xlu0 %453, %v420
        %v455 = vpop.permute.xlu0 %454
        %v456 = vlaneseq
        %v457 = vand.u32 %v456, 127
        %v458 = vperm.slane %v434, %v457
        %v459 = vperm.slane %v437, %v457
        %v460 = vperm.slane %v440, %v457
        %v461 = vperm.slane %v443, %v457
        %v462 = vperm.slane %v446, %v457
        %v463 = vperm.slane %v449, %v457
        %v464 = vperm.slane %v452, %v457
        %v465 = vperm.slane %v455, %v457
        %vm466 = vcmask 1041409
        %v467 = vsel %vm466, %v459, %v458
        %vm468 = vcmask 1042434
        %v469 = vsel %vm468, %v460, %v467
        %vm470 = vcmask 1043459
        %v471 = vsel %vm470, %v461, %v469
        %vm472 = vcmask 1044484
        %v473 = vsel %vm472, %v462, %v471
        %vm474 = vcmask 1045509
        %v475 = vsel %vm474, %v463, %v473
        %vm476 = vcmask 1046534
        %v477 = vsel %vm476, %v464, %v475
        %vm478 = vcmask 1047559
        %v479 = vsel %vm478, %v465, %v477
        %vm481 = vcmask 64512
        %v483 = vsel %vm481, %v307, 0
        %v485 = vsel %vm481, %v423, 0
        %487 = vmatpush.xpose.msra.mxu0 0.0
        %488 = vmatpush.xpose.msra.mxu0 0.0
        %489 = vmatpush.xpose.msra.mxu0 0.0
        %490 = vmatpush.xpose.msra.mxu0 0.0
        %491 = vmatpush.xpose.msra.mxu0 0.0
        %492 = vmatpush.xpose.msra.mxu0 0.0
        %493 = vmatpush.xpose.msra.mxu0 0.0
        %494 = vmatpush.xpose.msra.mxu0 0.0
        %495 = vmatpush.xpose.msra.mxu0 0.0
        %496 = vmatpush.xpose.msra.mxu0 0.0
        %497 = vmatpush.xpose.msra.mxu0 0.0
        %498 = vmatpush.xpose.msra.mxu0 0.0
        %499 = vmatpush.xpose.msra.mxu0 0.0
        %500 = vmatpush.xpose.msra.mxu0 0.0
        %501 = vmatpush.xpose.msra.mxu0 0.0
        %502 = vmatpush.xpose.msra.mxu0 %v485
        %503 = vmatmul.f32.gmra.mxu0 %v483
        %v504 = vpop.f32.mrf.mxu0
        %v505 = vadd.f32 %v479, %v504
        %506 = vdwg.mxu0
        %508 = vrot.lane.b32.xlu0 %v316, 120
        %v509 = vpop.permute.xlu0 %508
        %v511 = vsel %vm481, %v308, 0
        %v513 = vsel %vm481, %v509, 0
        %515 = vmatpush.xpose.msra.mxu0 0.0
        %516 = vmatpush.xpose.msra.mxu0 0.0
        %517 = vmatpush.xpose.msra.mxu0 0.0
        %518 = vmatpush.xpose.msra.mxu0 0.0
        %519 = vmatpush.xpose.msra.mxu0 0.0
        %520 = vmatpush.xpose.msra.mxu0 0.0
        %521 = vmatpush.xpose.msra.mxu0 0.0
        %522 = vmatpush.xpose.msra.mxu0 0.0
        %523 = vmatpush.xpose.msra.mxu0 0.0
        %524 = vmatpush.xpose.msra.mxu0 0.0
        %525 = vmatpush.xpose.msra.mxu0 0.0
        %526 = vmatpush.xpose.msra.mxu0 0.0
        %527 = vmatpush.xpose.msra.mxu0 0.0
        %528 = vmatpush.xpose.msra.mxu0 0.0
        %529 = vmatpush.xpose.msra.mxu0 0.0
        %530 = vmatpush.xpose.msra.mxu0 %v513
        %531 = vmatmul.f32.gmra.mxu0 %v511
        %v532 = vpop.f32.mrf.mxu0
        %v533 = vadd.f32 %v479, %v532
        %534 = vdwg.mxu0
        %536 = vrot.lane.b32.xlu0 %v317, 120
        %v537 = vpop.permute.xlu0 %536
        %v539 = vsel %vm481, %v309, 0
        %v541 = vsel %vm481, %v537, 0
        %543 = vmatpush.xpose.msra.mxu0 0.0
        %544 = vmatpush.xpose.msra.mxu0 0.0
        %545 = vmatpush.xpose.msra.mxu0 0.0
        %546 = vmatpush.xpose.msra.mxu0 0.0
        %547 = vmatpush.xpose.msra.mxu0 0.0
        %548 = vmatpush.xpose.msra.mxu0 0.0
        %549 = vmatpush.xpose.msra.mxu0 0.0
        %550 = vmatpush.xpose.msra.mxu0 0.0
        %551 = vmatpush.xpose.msra.mxu0 0.0
        %552 = vmatpush.xpose.msra.mxu0 0.0
        %553 = vmatpush.xpose.msra.mxu0 0.0
        %554 = vmatpush.xpose.msra.mxu0 0.0
        %555 = vmatpush.xpose.msra.mxu0 0.0
        %556 = vmatpush.xpose.msra.mxu0 0.0
        %557 = vmatpush.xpose.msra.mxu0 0.0
        %558 = vmatpush.xpose.msra.mxu0 %v541
        %559 = vmatmul.f32.gmra.mxu0 %v539
        %v560 = vpop.f32.mrf.mxu0
        %v561 = vadd.f32 %v479, %v560
        %562 = vdwg.mxu0
        %564 = vrot.lane.b32.xlu0 %v318, 120
        %v565 = vpop.permute.xlu0 %564
        %v567 = vsel %vm481, %v310, 0
        %v569 = vsel %vm481, %v565, 0
        %571 = vmatpush.xpose.msra.mxu0 0.0
        %572 = vmatpush.xpose.msra.mxu0 0.0
        %573 = vmatpush.xpose.msra.mxu0 0.0
        %574 = vmatpush.xpose.msra.mxu0 0.0
        %575 = vmatpush.xpose.msra.mxu0 0.0
        %576 = vmatpush.xpose.msra.mxu0 0.0
        %577 = vmatpush.xpose.msra.mxu0 0.0
        %578 = vmatpush.xpose.msra.mxu0 0.0
        %579 = vmatpush.xpose.msra.mxu0 0.0
        %580 = vmatpush.xpose.msra.mxu0 0.0
        %581 = vmatpush.xpose.msra.mxu0 0.0
        %582 = vmatpush.xpose.msra.mxu0 0.0
        %583 = vmatpush.xpose.msra.mxu0 0.0
        %584 = vmatpush.xpose.msra.mxu0 0.0
        %585 = vmatpush.xpose.msra.mxu0 0.0
        %586 = vmatpush.xpose.msra.mxu0 %v569
        %587 = vmatmul.f32.gmra.mxu0 %v567
        %v588 = vpop.f32.mrf.mxu0
        %v589 = vadd.f32 %v479, %v588
        %590 = vdwg.mxu0
        %592 = vrot.lane.b32.xlu0 %v319, 120
        %v593 = vpop.permute.xlu0 %592
        %v595 = vsel %vm481, %v311, 0
        %v597 = vsel %vm481, %v593, 0
        %599 = vmatpush.xpose.msra.mxu0 0.0
        %600 = vmatpush.xpose.msra.mxu0 0.0
        %601 = vmatpush.xpose.msra.mxu0 0.0
        %602 = vmatpush.xpose.msra.mxu0 0.0
        %603 = vmatpush.xpose.msra.mxu0 0.0
        %604 = vmatpush.xpose.msra.mxu0 0.0
        %605 = vmatpush.xpose.msra.mxu0 0.0
        %606 = vmatpush.xpose.msra.mxu0 0.0
        %607 = vmatpush.xpose.msra.mxu0 0.0
        %608 = vmatpush.xpose.msra.mxu0 0.0
        %609 = vmatpush.xpose.msra.mxu0 0.0
        %610 = vmatpush.xpose.msra.mxu0 0.0
        %611 = vmatpush.xpose.msra.mxu0 0.0
        %612 = vmatpush.xpose.msra.mxu0 0.0
        %613 = vmatpush.xpose.msra.mxu0 0.0
        %614 = vmatpush.xpose.msra.mxu0 %v597
        %615 = vmatmul.f32.gmra.mxu0 %v595
        %v616 = vpop.f32.mrf.mxu0
        %v617 = vadd.f32 %v479, %v616
        %618 = vdwg.mxu0
        %620 = vrot.lane.b32.xlu0 %v320, 120
        %v621 = vpop.permute.xlu0 %620
        %v623 = vsel %vm481, %v312, 0
        %v625 = vsel %vm481, %v621, 0
        %627 = vmatpush.xpose.msra.mxu0 0.0
        %628 = vmatpush.xpose.msra.mxu0 0.0
        %629 = vmatpush.xpose.msra.mxu0 0.0
        %630 = vmatpush.xpose.msra.mxu0 0.0
        %631 = vmatpush.xpose.msra.mxu0 0.0
        %632 = vmatpush.xpose.msra.mxu0 0.0
        %633 = vmatpush.xpose.msra.mxu0 0.0
        %634 = vmatpush.xpose.msra.mxu0 0.0
        %635 = vmatpush.xpose.msra.mxu0 0.0
        %636 = vmatpush.xpose.msra.mxu0 0.0
        %637 = vmatpush.xpose.msra.mxu0 0.0
        %638 = vmatpush.xpose.msra.mxu0 0.0
        %639 = vmatpush.xpose.msra.mxu0 0.0
        %640 = vmatpush.xpose.msra.mxu0 0.0
        %641 = vmatpush.xpose.msra.mxu0 0.0
        %642 = vmatpush.xpose.msra.mxu0 %v625
        %643 = vmatmul.f32.gmra.mxu0 %v623
        %v644 = vpop.f32.mrf.mxu0
        %v645 = vadd.f32 %v479, %v644
        %646 = vdwg.mxu0
        %648 = vrot.lane.b32.xlu0 %v321, 120
        %v649 = vpop.permute.xlu0 %648
        %v651 = vsel %vm481, %v313, 0
        %v653 = vsel %vm481, %v649, 0
        %655 = vmatpush.xpose.msra.mxu0 0.0
        %656 = vmatpush.xpose.msra.mxu0 0.0
        %657 = vmatpush.xpose.msra.mxu0 0.0
        %658 = vmatpush.xpose.msra.mxu0 0.0
        %659 = vmatpush.xpose.msra.mxu0 0.0
        %660 = vmatpush.xpose.msra.mxu0 0.0
        %661 = vmatpush.xpose.msra.mxu0 0.0
        %662 = vmatpush.xpose.msra.mxu0 0.0
        %663 = vmatpush.xpose.msra.mxu0 0.0
        %664 = vmatpush.xpose.msra.mxu0 0.0
        %665 = vmatpush.xpose.msra.mxu0 0.0
        %666 = vmatpush.xpose.msra.mxu0 0.0
        %667 = vmatpush.xpose.msra.mxu0 0.0
        %668 = vmatpush.xpose.msra.mxu0 0.0
        %669 = vmatpush.xpose.msra.mxu0 0.0
        %670 = vmatpush.xpose.msra.mxu0 %v653
        %671 = vmatmul.f32.gmra.mxu0 %v651
        %v672 = vpop.f32.mrf.mxu0
        %v673 = vadd.f32 %v479, %v672
        %674 = vdwg.mxu0
        %676 = vrot.lane.b32.xlu0 %v322, 120
        %v677 = vpop.permute.xlu0 %676
        %v679 = vsel %vm481, %v314, 0
        %v681 = vsel %vm481, %v677, 0
        %683 = vmatpush.xpose.msra.mxu0 0.0
        %684 = vmatpush.xpose.msra.mxu0 0.0
        %685 = vmatpush.xpose.msra.mxu0 0.0
        %686 = vmatpush.xpose.msra.mxu0 0.0
        %687 = vmatpush.xpose.msra.mxu0 0.0
        %688 = vmatpush.xpose.msra.mxu0 0.0
        %689 = vmatpush.xpose.msra.mxu0 0.0
        %690 = vmatpush.xpose.msra.mxu0 0.0
        %691 = vmatpush.xpose.msra.mxu0 0.0
        %692 = vmatpush.xpose.msra.mxu0 0.0
        %693 = vmatpush.xpose.msra.mxu0 0.0
        %694 = vmatpush.xpose.msra.mxu0 0.0
        %695 = vmatpush.xpose.msra.mxu0 0.0
        %696 = vmatpush.xpose.msra.mxu0 0.0
        %697 = vmatpush.xpose.msra.mxu0 0.0
        %698 = vmatpush.xpose.msra.mxu0 %v681
        %699 = vmatmul.f32.gmra.mxu0 %v679
        %v700 = vpop.f32.mrf.mxu0
        %v701 = vadd.f32 %v479, %v700
        %702 = vdwg.mxu0
        %v703 = vsel %vm481, %v505, -inf
        %704 = vmax.xlane.f32.xlu0 %v703
        %v705 = vpop.xlane.xlu0 %704
        %v706 = vsel %vm481, %v533, -inf
        %707 = vmax.xlane.f32.xlu0 %v706
        %v708 = vpop.xlane.xlu0 %707
        %v709 = vsel %vm481, %v561, -inf
        %710 = vmax.xlane.f32.xlu0 %v709
        %v711 = vpop.xlane.xlu0 %710
        %v712 = vsel %vm481, %v589, -inf
        %713 = vmax.xlane.f32.xlu0 %v712
        %v714 = vpop.xlane.xlu0 %713
        %v715 = vsel %vm481, %v617, -inf
        %716 = vmax.xlane.f32.xlu0 %v715
        %v717 = vpop.xlane.xlu0 %716
        %v718 = vsel %vm481, %v645, -inf
        %719 = vmax.xlane.f32.xlu0 %v718
        %v720 = vpop.xlane.xlu0 %719
        %v721 = vsel %vm481, %v673, -inf
        %722 = vmax.xlane.f32.xlu0 %v721
        %v723 = vpop.xlane.xlu0 %722
        %v724 = vsel %vm481, %v701, -inf
        %725 = vmax.xlane.f32.xlu0 %v724
        %v726 = vpop.xlane.xlu0 %725
        %v727 = vsub.f32 %v505, %v705
        %v728 = vsub.f32 %v533, %v708
        %v729 = vsub.f32 %v561, %v711
        %v730 = vsub.f32 %v589, %v714
        %v731 = vsub.f32 %v617, %v717
        %v732 = vsub.f32 %v645, %v720
        %v733 = vsub.f32 %v673, %v723
        %v734 = vsub.f32 %v701, %v726
        %v735 = vmul.f32 %v727, 1.442695
        %v736 = vpow.pop %v735
        %v737 = vmul.f32 %v728, 1.442695
        %v738 = vpow.pop %v737
        %v739 = vmul.f32 %v729, 1.442695
        %v740 = vpow.pop %v739
        %v741 = vmul.f32 %v730, 1.442695
        %v742 = vpow.pop %v741
        %v743 = vmul.f32 %v731, 1.442695
        %v744 = vpow.pop %v743
        %v745 = vmul.f32 %v732, 1.442695
        %v746 = vpow.pop %v745
        %v747 = vmul.f32 %v733, 1.442695
        %v748 = vpow.pop %v747
        %v749 = vmul.f32 %v734, 1.442695
        %v750 = vpow.pop %v749
        %v751 = vsel %vm481, %v736, 0.0
        %752 = vadd.xlane.f32.xlu0 %v751
        %v753 = vpop.xlane.xlu0 %752
        %v754 = vsel %vm481, %v738, 0.0
        %755 = vadd.xlane.f32.xlu0 %v754
        %v756 = vpop.xlane.xlu0 %755
        %v757 = vsel %vm481, %v740, 0.0
        %758 = vadd.xlane.f32.xlu0 %v757
        %v759 = vpop.xlane.xlu0 %758
        %v760 = vsel %vm481, %v742, 0.0
        %761 = vadd.xlane.f32.xlu0 %v760
        %v762 = vpop.xlane.xlu0 %761
        %v763 = vsel %vm481, %v744, 0.0
        %764 = vadd.xlane.f32.xlu0 %v763
        %v765 = vpop.xlane.xlu0 %764
        %v766 = vsel %vm481, %v746, 0.0
        %767 = vadd.xlane.f32.xlu0 %v766
        %v768 = vpop.xlane.xlu0 %767
        %v769 = vsel %vm481, %v748, 0.0
        %770 = vadd.xlane.f32.xlu0 %v769
        %v771 = vpop.xlane.xlu0 %770
        %v772 = vsel %vm481, %v750, 0.0
        %773 = vadd.xlane.f32.xlu0 %v772
        %v774 = vpop.xlane.xlu0 %773
        %v775 = vrcp.pop %v753
        %v776 = vrcp.pop %v756
        %v777 = vrcp.pop %v759
        %v778 = vrcp.pop %v762
        %v779 = vrcp.pop %v765
        %v780 = vrcp.pop %v768
        %v781 = vrcp.pop %v771
        %v782 = vrcp.pop %v774
        %v783 = vmul.f32 %v736, %v775
        %v784 = vmul.f32 %v738, %v776
        %v785 = vmul.f32 %v740, %v777
        %v786 = vmul.f32 %v742, %v778
        %v787 = vmul.f32 %v744, %v779
        %v788 = vmul.f32 %v746, %v780
        %v789 = vmul.f32 %v748, %v781
        %v790 = vmul.f32 %v750, %v782
        %791 = vrot.lane.b32.xlu0 %v315, 112
        %v792 = vpop.permute.xlu0 %791
        %v795 = vsel %vm481, %v783, 0
        %797 = vmatpush.msra.mxu0 0.0
        %798 = vmatpush.msra.mxu0 0.0
        %799 = vmatpush.msra.mxu0 0.0
        %800 = vmatpush.msra.mxu0 0.0
        %801 = vmatpush.msra.mxu0 0.0
        %802 = vmatpush.msra.mxu0 0.0
        %803 = vmatpush.msra.mxu0 0.0
        %804 = vmatpush.msra.mxu0 0.0
        %805 = vmatpush.msra.mxu0 0.0
        %806 = vmatpush.msra.mxu0 0.0
        %807 = vmatpush.msra.mxu0 0.0
        %808 = vmatpush.msra.mxu0 0.0
        %809 = vmatpush.msra.mxu0 0.0
        %810 = vmatpush.msra.mxu0 0.0
        %811 = vmatpush.msra.mxu0 0.0
        %812 = vmatpush.msra.mxu0 %v792
        %813 = vmatmul.f32.gmra.mxu0 %v795
        %v814 = vpop.f32.mrf.mxu0
        %v815 = vadd.f32 0.0, %v814
        %816 = vdwg.mxu0
        %817 = vrot.lane.b32.xlu0 %v316, 112
        %v818 = vpop.permute.xlu0 %817
        %v821 = vsel %vm481, %v784, 0
        %823 = vmatpush.msra.mxu0 0.0
        %824 = vmatpush.msra.mxu0 0.0
        %825 = vmatpush.msra.mxu0 0.0
        %826 = vmatpush.msra.mxu0 0.0
        %827 = vmatpush.msra.mxu0 0.0
        %828 = vmatpush.msra.mxu0 0.0
        %829 = vmatpush.msra.mxu0 0.0
        %830 = vmatpush.msra.mxu0 0.0
        %831 = vmatpush.msra.mxu0 0.0
        %832 = vmatpush.msra.mxu0 0.0
        %833 = vmatpush.msra.mxu0 0.0
        %834 = vmatpush.msra.mxu0 0.0
        %835 = vmatpush.msra.mxu0 0.0
        %836 = vmatpush.msra.mxu0 0.0
        %837 = vmatpush.msra.mxu0 0.0
        %838 = vmatpush.msra.mxu0 %v818
        %839 = vmatmul.f32.gmra.mxu0 %v821
        %v840 = vpop.f32.mrf.mxu0
        %v841 = vadd.f32 0.0, %v840
        %842 = vdwg.mxu0
        %843 = vrot.lane.b32.xlu0 %v317, 112
        %v844 = vpop.permute.xlu0 %843
        %v847 = vsel %vm481, %v785, 0
        %849 = vmatpush.msra.mxu0 0.0
        %850 = vmatpush.msra.mxu0 0.0
        %851 = vmatpush.msra.mxu0 0.0
        %852 = vmatpush.msra.mxu0 0.0
        %853 = vmatpush.msra.mxu0 0.0
        %854 = vmatpush.msra.mxu0 0.0
        %855 = vmatpush.msra.mxu0 0.0
        %856 = vmatpush.msra.mxu0 0.0
        %857 = vmatpush.msra.mxu0 0.0
        %858 = vmatpush.msra.mxu0 0.0
        %859 = vmatpush.msra.mxu0 0.0
        %860 = vmatpush.msra.mxu0 0.0
        %861 = vmatpush.msra.mxu0 0.0
        %862 = vmatpush.msra.mxu0 0.0
        %863 = vmatpush.msra.mxu0 0.0
        %864 = vmatpush.msra.mxu0 %v844
        %865 = vmatmul.f32.gmra.mxu0 %v847
        %v866 = vpop.f32.mrf.mxu0
        %v867 = vadd.f32 0.0, %v866
        %868 = vdwg.mxu0
        %869 = vrot.lane.b32.xlu0 %v318, 112
        %v870 = vpop.permute.xlu0 %869
        %v873 = vsel %vm481, %v786, 0
        %875 = vmatpush.msra.mxu0 0.0
        %876 = vmatpush.msra.mxu0 0.0
        %877 = vmatpush.msra.mxu0 0.0
        %878 = vmatpush.msra.mxu0 0.0
        %879 = vmatpush.msra.mxu0 0.0
        %880 = vmatpush.msra.mxu0 0.0
        %881 = vmatpush.msra.mxu0 0.0
        %882 = vmatpush.msra.mxu0 0.0
        %883 = vmatpush.msra.mxu0 0.0
        %884 = vmatpush.msra.mxu0 0.0
        %885 = vmatpush.msra.mxu0 0.0
        %886 = vmatpush.msra.mxu0 0.0
        %887 = vmatpush.msra.mxu0 0.0
        %888 = vmatpush.msra.mxu0 0.0
        %889 = vmatpush.msra.mxu0 0.0
        %890 = vmatpush.msra.mxu0 %v870
        %891 = vmatmul.f32.gmra.mxu0 %v873
        %v892 = vpop.f32.mrf.mxu0
        %v893 = vadd.f32 0.0, %v892
        %894 = vdwg.mxu0
        %895 = vrot.lane.b32.xlu0 %v319, 112
        %v896 = vpop.permute.xlu0 %895
        %v899 = vsel %vm481, %v787, 0
        %901 = vmatpush.msra.mxu0 0.0
        %902 = vmatpush.msra.mxu0 0.0
        %903 = vmatpush.msra.mxu0 0.0
        %904 = vmatpush.msra.mxu0 0.0
        %905 = vmatpush.msra.mxu0 0.0
        %906 = vmatpush.msra.mxu0 0.0
        %907 = vmatpush.msra.mxu0 0.0
        %908 = vmatpush.msra.mxu0 0.0
        %909 = vmatpush.msra.mxu0 0.0
        %910 = vmatpush.msra.mxu0 0.0
        %911 = vmatpush.msra.mxu0 0.0
        %912 = vmatpush.msra.mxu0 0.0
        %913 = vmatpush.msra.mxu0 0.0
        %914 = vmatpush.msra.mxu0 0.0
        %915 = vmatpush.msra.mxu0 0.0
        %916 = vmatpush.msra.mxu0 %v896
        %917 = vmatmul.f32.gmra.mxu0 %v899
        %v918 = vpop.f32.mrf.mxu0
        %v919 = vadd.f32 0.0, %v918
        %920 = vdwg.mxu0
        %921 = vrot.lane.b32.xlu0 %v320, 112
        %v922 = vpop.permute.xlu0 %921
        %v925 = vsel %vm481, %v788, 0
        %927 = vmatpush.msra.mxu0 0.0
        %928 = vmatpush.msra.mxu0 0.0
        %929 = vmatpush.msra.mxu0 0.0
        %930 = vmatpush.msra.mxu0 0.0
        %931 = vmatpush.msra.mxu0 0.0
        %932 = vmatpush.msra.mxu0 0.0
        %933 = vmatpush.msra.mxu0 0.0
        %934 = vmatpush.msra.mxu0 0.0
        %935 = vmatpush.msra.mxu0 0.0
        %936 = vmatpush.msra.mxu0 0.0
        %937 = vmatpush.msra.mxu0 0.0
        %938 = vmatpush.msra.mxu0 0.0
        %939 = vmatpush.msra.mxu0 0.0
        %940 = vmatpush.msra.mxu0 0.0
        %941 = vmatpush.msra.mxu0 0.0
        %942 = vmatpush.msra.mxu0 %v922
        %943 = vmatmul.f32.gmra.mxu0 %v925
        %v944 = vpop.f32.mrf.mxu0
        %v945 = vadd.f32 0.0, %v944
        %946 = vdwg.mxu0
        %947 = vrot.lane.b32.xlu0 %v321, 112
        %v948 = vpop.permute.xlu0 %947
        %v951 = vsel %vm481, %v789, 0
        %953 = vmatpush.msra.mxu0 0.0
        %954 = vmatpush.msra.mxu0 0.0
        %955 = vmatpush.msra.mxu0 0.0
        %956 = vmatpush.msra.mxu0 0.0
        %957 = vmatpush.msra.mxu0 0.0
        %958 = vmatpush.msra.mxu0 0.0
        %959 = vmatpush.msra.mxu0 0.0
        %960 = vmatpush.msra.mxu0 0.0
        %961 = vmatpush.msra.mxu0 0.0
        %962 = vmatpush.msra.mxu0 0.0
        %963 = vmatpush.msra.mxu0 0.0
        %964 = vmatpush.msra.mxu0 0.0
        %965 = vmatpush.msra.mxu0 0.0
        %966 = vmatpush.msra.mxu0 0.0
        %967 = vmatpush.msra.mxu0 0.0
        %968 = vmatpush.msra.mxu0 %v948
        %969 = vmatmul.f32.gmra.mxu0 %v951
        %v970 = vpop.f32.mrf.mxu0
        %v971 = vadd.f32 0.0, %v970
        %972 = vdwg.mxu0
        %973 = vrot.lane.b32.xlu0 %v322, 112
        %v974 = vpop.permute.xlu0 %973
        %v977 = vsel %vm481, %v790, 0
        %979 = vmatpush.msra.mxu0 0.0
        %980 = vmatpush.msra.mxu0 0.0
        %981 = vmatpush.msra.mxu0 0.0
        %982 = vmatpush.msra.mxu0 0.0
        %983 = vmatpush.msra.mxu0 0.0
        %984 = vmatpush.msra.mxu0 0.0
        %985 = vmatpush.msra.mxu0 0.0
        %986 = vmatpush.msra.mxu0 0.0
        %987 = vmatpush.msra.mxu0 0.0
        %988 = vmatpush.msra.mxu0 0.0
        %989 = vmatpush.msra.mxu0 0.0
        %990 = vmatpush.msra.mxu0 0.0
        %991 = vmatpush.msra.mxu0 0.0
        %992 = vmatpush.msra.mxu0 0.0
        %993 = vmatpush.msra.mxu0 0.0
        %994 = vmatpush.msra.mxu0 %v974
        %995 = vmatmul.f32.gmra.mxu0 %v977
        %v996 = vpop.f32.mrf.mxu0
        %v997 = vadd.f32 0.0, %v996
        %998 = vdwg.mxu0
        %v999 = vpack.c.bf16 %v841, %v815
        %v1000 = vpack.c.bf16 %v893, %v867
        %v1001 = vpack.c.bf16 %v945, %v919
        %v1002 = vpack.c.bf16 %v997, %v971
        %v1003 = vld [vmem:[%s4] sm:$0xf]
        %v1004 = vld [vmem:[%s295] sm:$0xff]
        %v1005 = vld [vmem:[%s295 + $0x10] sm:$0xff]
        %v1006 = vld [vmem:[%s295 + $0x20] sm:$0xff]
        %v1007 = vld [vmem:[%s295 + $0x30] sm:$0xff]
        %v1008 = vld [vmem:[%s295 + $0x40] sm:$0xff]
        %v1009 = vld [vmem:[%s295 + $0x50] sm:$0xff]
        %v1010 = vld [vmem:[%s295 + $0x60] sm:$0xff]
        %v1011 = vld [vmem:[%s295 + $0x70] sm:$0xff]
        %v1012 = vld [vmem:[%s290] sm:$0xff]
        %v1013 = vld [vmem:[%s290 + $0x10] sm:$0xff]
        %v1014 = vld [vmem:[%s290 + $0x20] sm:$0xff]
        %v1015 = vld [vmem:[%s290 + $0x30] sm:$0xff]
        %v1016 = vld [vmem:[%s290 + $0x40] sm:$0xff]
        %v1017 = vld [vmem:[%s290 + $0x50] sm:$0xff]
        %v1018 = vld [vmem:[%s290 + $0x60] sm:$0xff]
        %v1019 = vld [vmem:[%s290 + $0x70] sm:$0xff]
        %vm1020 = vcmask 523712
        %v1021 = vsel %vm1020, %v1012, -inf
        %1022 = vmax.xlane.f32.xlu0 %v1021
        %v1023 = vpop.xlane.xlu0 %1022
        %v1024 = vsel %vm1020, %v1013, -inf
        %1025 = vmax.xlane.f32.xlu0 %v1024
        %v1026 = vpop.xlane.xlu0 %1025
        %v1027 = vsel %vm1020, %v1014, -inf
        %1028 = vmax.xlane.f32.xlu0 %v1027
        %v1029 = vpop.xlane.xlu0 %1028
        %v1030 = vsel %vm1020, %v1015, -inf
        %1031 = vmax.xlane.f32.xlu0 %v1030
        %v1032 = vpop.xlane.xlu0 %1031
        %v1033 = vsel %vm1020, %v1016, -inf
        %1034 = vmax.xlane.f32.xlu0 %v1033
        %v1035 = vpop.xlane.xlu0 %1034
        %v1036 = vsel %vm1020, %v1017, -inf
        %1037 = vmax.xlane.f32.xlu0 %v1036
        %v1038 = vpop.xlane.xlu0 %1037
        %v1039 = vsel %vm1020, %v1018, -inf
        %1040 = vmax.xlane.f32.xlu0 %v1039
        %v1041 = vpop.xlane.xlu0 %1040
        %v1042 = vsel %vm1020, %v1019, -inf
        %1043 = vmax.xlane.f32.xlu0 %v1042
        %v1044 = vpop.xlane.xlu0 %1043
        %v1045 = vadd.f32 %v1023, %v355
        %v1046 = vadd.f32 %v1026, %v362
        %v1047 = vadd.f32 %v1029, %v369
        %v1048 = vadd.f32 %v1032, %v376
        %v1049 = vadd.f32 %v1035, %v383
        %v1050 = vadd.f32 %v1038, %v390
        %v1051 = vadd.f32 %v1041, %v397
        %v1052 = vadd.f32 %v1044, %v404
        %1054 = vrot.lane.b32.xlu0 %v1004, 96
        %v1055 = vpop.permute.xlu0 %1054
        %1057 = vrot.lane.b32.xlu0 %v1012, 88
        %v1058 = vpop.permute.xlu0 %1057
        %1067 = vset.pattern.permute.xlu0 0
        %1068 = vperm.xlu0 %1067, %v1045
        %v1069 = vpop.permute.xlu0 %1068
        %1070 = vset.pattern.permute.xlu0 0
        %1071 = vperm.xlu0 %1070, %v1046
        %v1072 = vpop.permute.xlu0 %1071
        %1073 = vset.pattern.permute.xlu0 0
        %1074 = vperm.xlu0 %1073, %v1047
        %v1075 = vpop.permute.xlu0 %1074
        %1076 = vset.pattern.permute.xlu0 0
        %1077 = vperm.xlu0 %1076, %v1048
        %v1078 = vpop.permute.xlu0 %1077
        %1079 = vset.pattern.permute.xlu0 0
        %1080 = vperm.xlu0 %1079, %v1049
        %v1081 = vpop.permute.xlu0 %1080
        %1082 = vset.pattern.permute.xlu0 0
        %1083 = vperm.xlu0 %1082, %v1050
        %v1084 = vpop.permute.xlu0 %1083
        %1085 = vset.pattern.permute.xlu0 0
        %1086 = vperm.xlu0 %1085, %v1051
        %v1087 = vpop.permute.xlu0 %1086
        %1088 = vset.pattern.permute.xlu0 0
        %1089 = vperm.xlu0 %1088, %v1052
        %v1090 = vpop.permute.xlu0 %1089
        %v1091 = vperm.slane %v1069, %v457
        %v1092 = vperm.slane %v1072, %v457
        %v1093 = vperm.slane %v1075, %v457
        %v1094 = vperm.slane %v1078, %v457
        %v1095 = vperm.slane %v1081, %v457
        %v1096 = vperm.slane %v1084, %v457
        %v1097 = vperm.slane %v1087, %v457
        %v1098 = vperm.slane %v1090, %v457
        %v1099 = vsel %vm466, %v1092, %v1091
        %v1100 = vsel %vm468, %v1093, %v1099
        %v1101 = vsel %vm470, %v1094, %v1100
        %v1102 = vsel %vm472, %v1095, %v1101
        %v1103 = vsel %vm474, %v1096, %v1102
        %v1104 = vsel %vm476, %v1097, %v1103
        %v1105 = vsel %vm478, %v1098, %v1104
        %v1107 = vsel %vm481, %v1055, 0
        %v1109 = vsel %vm481, %v1058, 0
        %1111 = vmatpush.xpose.msra.mxu0 0.0
        %1112 = vmatpush.xpose.msra.mxu0 0.0
        %1113 = vmatpush.xpose.msra.mxu0 0.0
        %1114 = vmatpush.xpose.msra.mxu0 0.0
        %1115 = vmatpush.xpose.msra.mxu0 0.0
        %1116 = vmatpush.xpose.msra.mxu0 0.0
        %1117 = vmatpush.xpose.msra.mxu0 0.0
        %1118 = vmatpush.xpose.msra.mxu0 0.0
        %1119 = vmatpush.xpose.msra.mxu0 0.0
        %1120 = vmatpush.xpose.msra.mxu0 0.0
        %1121 = vmatpush.xpose.msra.mxu0 0.0
        %1122 = vmatpush.xpose.msra.mxu0 0.0
        %1123 = vmatpush.xpose.msra.mxu0 0.0
        %1124 = vmatpush.xpose.msra.mxu0 0.0
        %1125 = vmatpush.xpose.msra.mxu0 0.0
        %1126 = vmatpush.xpose.msra.mxu0 %v1109
        %1127 = vmatmul.f32.gmra.mxu0 %v1107
        %v1128 = vpop.f32.mrf.mxu0
        %v1129 = vadd.f32 %v1105, %v1128
        %1130 = vdwg.mxu0
        %1132 = vrot.lane.b32.xlu0 %v1005, 96
        %v1133 = vpop.permute.xlu0 %1132
        %1135 = vrot.lane.b32.xlu0 %v1013, 88
        %v1136 = vpop.permute.xlu0 %1135
        %v1137 = vsel %vm481, %v1133, 0
        %v1139 = vsel %vm481, %v1136, 0
        %1141 = vmatpush.xpose.msra.mxu0 0.0
        %1142 = vmatpush.xpose.msra.mxu0 0.0
        %1143 = vmatpush.xpose.msra.mxu0 0.0
        %1144 = vmatpush.xpose.msra.mxu0 0.0
        %1145 = vmatpush.xpose.msra.mxu0 0.0
        %1146 = vmatpush.xpose.msra.mxu0 0.0
        %1147 = vmatpush.xpose.msra.mxu0 0.0
        %1148 = vmatpush.xpose.msra.mxu0 0.0
        %1149 = vmatpush.xpose.msra.mxu0 0.0
        %1150 = vmatpush.xpose.msra.mxu0 0.0
        %1151 = vmatpush.xpose.msra.mxu0 0.0
        %1152 = vmatpush.xpose.msra.mxu0 0.0
        %1153 = vmatpush.xpose.msra.mxu0 0.0
        %1154 = vmatpush.xpose.msra.mxu0 0.0
        %1155 = vmatpush.xpose.msra.mxu0 0.0
        %1156 = vmatpush.xpose.msra.mxu0 %v1139
        %1157 = vmatmul.f32.gmra.mxu0 %v1137
        %v1158 = vpop.f32.mrf.mxu0
        %v1159 = vadd.f32 %v1105, %v1158
        %1160 = vdwg.mxu0
        %1162 = vrot.lane.b32.xlu0 %v1006, 96
        %v1163 = vpop.permute.xlu0 %1162
        %1165 = vrot.lane.b32.xlu0 %v1014, 88
        %v1166 = vpop.permute.xlu0 %1165
        %v1167 = vsel %vm481, %v1163, 0
        %v1169 = vsel %vm481, %v1166, 0
        %1171 = vmatpush.xpose.msra.mxu0 0.0
        %1172 = vmatpush.xpose.msra.mxu0 0.0
        %1173 = vmatpush.xpose.msra.mxu0 0.0
        %1174 = vmatpush.xpose.msra.mxu0 0.0
        %1175 = vmatpush.xpose.msra.mxu0 0.0
        %1176 = vmatpush.xpose.msra.mxu0 0.0
        %1177 = vmatpush.xpose.msra.mxu0 0.0
        %1178 = vmatpush.xpose.msra.mxu0 0.0
        %1179 = vmatpush.xpose.msra.mxu0 0.0
        %1180 = vmatpush.xpose.msra.mxu0 0.0
        %1181 = vmatpush.xpose.msra.mxu0 0.0
        %1182 = vmatpush.xpose.msra.mxu0 0.0
        %1183 = vmatpush.xpose.msra.mxu0 0.0
        %1184 = vmatpush.xpose.msra.mxu0 0.0
        %1185 = vmatpush.xpose.msra.mxu0 0.0
        %1186 = vmatpush.xpose.msra.mxu0 %v1169
        %1187 = vmatmul.f32.gmra.mxu0 %v1167
        %v1188 = vpop.f32.mrf.mxu0
        %v1189 = vadd.f32 %v1105, %v1188
        %1190 = vdwg.mxu0
        %1192 = vrot.lane.b32.xlu0 %v1007, 96
        %v1193 = vpop.permute.xlu0 %1192
        %1195 = vrot.lane.b32.xlu0 %v1015, 88
        %v1196 = vpop.permute.xlu0 %1195
        %v1197 = vsel %vm481, %v1193, 0
        %v1199 = vsel %vm481, %v1196, 0
        %1201 = vmatpush.xpose.msra.mxu0 0.0
        %1202 = vmatpush.xpose.msra.mxu0 0.0
        %1203 = vmatpush.xpose.msra.mxu0 0.0
        %1204 = vmatpush.xpose.msra.mxu0 0.0
        %1205 = vmatpush.xpose.msra.mxu0 0.0
        %1206 = vmatpush.xpose.msra.mxu0 0.0
        %1207 = vmatpush.xpose.msra.mxu0 0.0
        %1208 = vmatpush.xpose.msra.mxu0 0.0
        %1209 = vmatpush.xpose.msra.mxu0 0.0
        %1210 = vmatpush.xpose.msra.mxu0 0.0
        %1211 = vmatpush.xpose.msra.mxu0 0.0
        %1212 = vmatpush.xpose.msra.mxu0 0.0
        %1213 = vmatpush.xpose.msra.mxu0 0.0
        %1214 = vmatpush.xpose.msra.mxu0 0.0
        %1215 = vmatpush.xpose.msra.mxu0 0.0
        %1216 = vmatpush.xpose.msra.mxu0 %v1199
        %1217 = vmatmul.f32.gmra.mxu0 %v1197
        %v1218 = vpop.f32.mrf.mxu0
        %v1219 = vadd.f32 %v1105, %v1218
        %1220 = vdwg.mxu0
        %1222 = vrot.lane.b32.xlu0 %v1008, 96
        %v1223 = vpop.permute.xlu0 %1222
        %1225 = vrot.lane.b32.xlu0 %v1016, 88
        %v1226 = vpop.permute.xlu0 %1225
        %v1227 = vsel %vm481, %v1223, 0
        %v1229 = vsel %vm481, %v1226, 0
        %1231 = vmatpush.xpose.msra.mxu0 0.0
        %1232 = vmatpush.xpose.msra.mxu0 0.0
        %1233 = vmatpush.xpose.msra.mxu0 0.0
        %1234 = vmatpush.xpose.msra.mxu0 0.0
        %1235 = vmatpush.xpose.msra.mxu0 0.0
        %1236 = vmatpush.xpose.msra.mxu0 0.0
        %1237 = vmatpush.xpose.msra.mxu0 0.0
        %1238 = vmatpush.xpose.msra.mxu0 0.0
        %1239 = vmatpush.xpose.msra.mxu0 0.0
        %1240 = vmatpush.xpose.msra.mxu0 0.0
        %1241 = vmatpush.xpose.msra.mxu0 0.0
        %1242 = vmatpush.xpose.msra.mxu0 0.0
        %1243 = vmatpush.xpose.msra.mxu0 0.0
        %1244 = vmatpush.xpose.msra.mxu0 0.0
        %1245 = vmatpush.xpose.msra.mxu0 0.0
        %1246 = vmatpush.xpose.msra.mxu0 %v1229
        %1247 = vmatmul.f32.gmra.mxu0 %v1227
        %v1248 = vpop.f32.mrf.mxu0
        %v1249 = vadd.f32 %v1105, %v1248
        %1250 = vdwg.mxu0
        %1252 = vrot.lane.b32.xlu0 %v1009, 96
        %v1253 = vpop.permute.xlu0 %1252
        %1255 = vrot.lane.b32.xlu0 %v1017, 88
        %v1256 = vpop.permute.xlu0 %1255
        %v1257 = vsel %vm481, %v1253, 0
        %v1259 = vsel %vm481, %v1256, 0
        %1261 = vmatpush.xpose.msra.mxu0 0.0
        %1262 = vmatpush.xpose.msra.mxu0 0.0
        %1263 = vmatpush.xpose.msra.mxu0 0.0
        %1264 = vmatpush.xpose.msra.mxu0 0.0
        %1265 = vmatpush.xpose.msra.mxu0 0.0
        %1266 = vmatpush.xpose.msra.mxu0 0.0
        %1267 = vmatpush.xpose.msra.mxu0 0.0
        %1268 = vmatpush.xpose.msra.mxu0 0.0
        %1269 = vmatpush.xpose.msra.mxu0 0.0
        %1270 = vmatpush.xpose.msra.mxu0 0.0
        %1271 = vmatpush.xpose.msra.mxu0 0.0
        %1272 = vmatpush.xpose.msra.mxu0 0.0
        %1273 = vmatpush.xpose.msra.mxu0 0.0
        %1274 = vmatpush.xpose.msra.mxu0 0.0
        %1275 = vmatpush.xpose.msra.mxu0 0.0
        %1276 = vmatpush.xpose.msra.mxu0 %v1259
        %1277 = vmatmul.f32.gmra.mxu0 %v1257
        %v1278 = vpop.f32.mrf.mxu0
        %v1279 = vadd.f32 %v1105, %v1278
        %1280 = vdwg.mxu0
        %1282 = vrot.lane.b32.xlu0 %v1010, 96
        %v1283 = vpop.permute.xlu0 %1282
        %1285 = vrot.lane.b32.xlu0 %v1018, 88
        %v1286 = vpop.permute.xlu0 %1285
        %v1287 = vsel %vm481, %v1283, 0
        %v1289 = vsel %vm481, %v1286, 0
        %1291 = vmatpush.xpose.msra.mxu0 0.0
        %1292 = vmatpush.xpose.msra.mxu0 0.0
        %1293 = vmatpush.xpose.msra.mxu0 0.0
        %1294 = vmatpush.xpose.msra.mxu0 0.0
        %1295 = vmatpush.xpose.msra.mxu0 0.0
        %1296 = vmatpush.xpose.msra.mxu0 0.0
        %1297 = vmatpush.xpose.msra.mxu0 0.0
        %1298 = vmatpush.xpose.msra.mxu0 0.0
        %1299 = vmatpush.xpose.msra.mxu0 0.0
        %1300 = vmatpush.xpose.msra.mxu0 0.0
        %1301 = vmatpush.xpose.msra.mxu0 0.0
        %1302 = vmatpush.xpose.msra.mxu0 0.0
        %1303 = vmatpush.xpose.msra.mxu0 0.0
        %1304 = vmatpush.xpose.msra.mxu0 0.0
        %1305 = vmatpush.xpose.msra.mxu0 0.0
        %1306 = vmatpush.xpose.msra.mxu0 %v1289
        %1307 = vmatmul.f32.gmra.mxu0 %v1287
        %v1308 = vpop.f32.mrf.mxu0
        %v1309 = vadd.f32 %v1105, %v1308
        %1310 = vdwg.mxu0
        %1312 = vrot.lane.b32.xlu0 %v1011, 96
        %v1313 = vpop.permute.xlu0 %1312
        %1315 = vrot.lane.b32.xlu0 %v1019, 88
        %v1316 = vpop.permute.xlu0 %1315
        %v1317 = vsel %vm481, %v1313, 0
        %v1319 = vsel %vm481, %v1316, 0
        %1321 = vmatpush.xpose.msra.mxu0 0.0
        %1322 = vmatpush.xpose.msra.mxu0 0.0
        %1323 = vmatpush.xpose.msra.mxu0 0.0
        %1324 = vmatpush.xpose.msra.mxu0 0.0
        %1325 = vmatpush.xpose.msra.mxu0 0.0
        %1326 = vmatpush.xpose.msra.mxu0 0.0
        %1327 = vmatpush.xpose.msra.mxu0 0.0
        %1328 = vmatpush.xpose.msra.mxu0 0.0
        %1329 = vmatpush.xpose.msra.mxu0 0.0
        %1330 = vmatpush.xpose.msra.mxu0 0.0
        %1331 = vmatpush.xpose.msra.mxu0 0.0
        %1332 = vmatpush.xpose.msra.mxu0 0.0
        %1333 = vmatpush.xpose.msra.mxu0 0.0
        %1334 = vmatpush.xpose.msra.mxu0 0.0
        %1335 = vmatpush.xpose.msra.mxu0 0.0
        %1336 = vmatpush.xpose.msra.mxu0 %v1319
        %1337 = vmatmul.f32.gmra.mxu0 %v1317
        %v1338 = vpop.f32.mrf.mxu0
        %v1339 = vadd.f32 %v1105, %v1338
        %1340 = vdwg.mxu0
        %v1341 = vsel %vm481, %v1129, -inf
        %1342 = vmax.xlane.f32.xlu0 %v1341
        %v1343 = vpop.xlane.xlu0 %1342
        %v1344 = vsel %vm481, %v1159, -inf
        %1345 = vmax.xlane.f32.xlu0 %v1344
        %v1346 = vpop.xlane.xlu0 %1345
        %v1347 = vsel %vm481, %v1189, -inf
        %1348 = vmax.xlane.f32.xlu0 %v1347
        %v1349 = vpop.xlane.xlu0 %1348
        %v1350 = vsel %vm481, %v1219, -inf
        %1351 = vmax.xlane.f32.xlu0 %v1350
        %v1352 = vpop.xlane.xlu0 %1351
        %v1353 = vsel %vm481, %v1249, -inf
        %1354 = vmax.xlane.f32.xlu0 %v1353
        %v1355 = vpop.xlane.xlu0 %1354
        %v1356 = vsel %vm481, %v1279, -inf
        %1357 = vmax.xlane.f32.xlu0 %v1356
        %v1358 = vpop.xlane.xlu0 %1357
        %v1359 = vsel %vm481, %v1309, -inf
        %1360 = vmax.xlane.f32.xlu0 %v1359
        %v1361 = vpop.xlane.xlu0 %1360
        %v1362 = vsel %vm481, %v1339, -inf
        %1363 = vmax.xlane.f32.xlu0 %v1362
        %v1364 = vpop.xlane.xlu0 %1363
        %v1365 = vsub.f32 %v1129, %v1343
        %v1366 = vsub.f32 %v1159, %v1346
        %v1367 = vsub.f32 %v1189, %v1349
        %v1368 = vsub.f32 %v1219, %v1352
        %v1369 = vsub.f32 %v1249, %v1355
        %v1370 = vsub.f32 %v1279, %v1358
        %v1371 = vsub.f32 %v1309, %v1361
        %v1372 = vsub.f32 %v1339, %v1364
        %v1373 = vmul.f32 %v1365, 1.442695
        %v1374 = vpow.pop %v1373
        %v1375 = vmul.f32 %v1366, 1.442695
        %v1376 = vpow.pop %v1375
        %v1377 = vmul.f32 %v1367, 1.442695
        %v1378 = vpow.pop %v1377
        %v1379 = vmul.f32 %v1368, 1.442695
        %v1380 = vpow.pop %v1379
        %v1381 = vmul.f32 %v1369, 1.442695
        %v1382 = vpow.pop %v1381
        %v1383 = vmul.f32 %v1370, 1.442695
        %v1384 = vpow.pop %v1383
        %v1385 = vmul.f32 %v1371, 1.442695
        %v1386 = vpow.pop %v1385
        %v1387 = vmul.f32 %v1372, 1.442695
        %v1388 = vpow.pop %v1387
        %v1389 = vsel %vm481, %v1374, 0.0
        %1390 = vadd.xlane.f32.xlu0 %v1389
        %v1391 = vpop.xlane.xlu0 %1390
        %v1392 = vsel %vm481, %v1376, 0.0
        %1393 = vadd.xlane.f32.xlu0 %v1392
        %v1394 = vpop.xlane.xlu0 %1393
        %v1395 = vsel %vm481, %v1378, 0.0
        %1396 = vadd.xlane.f32.xlu0 %v1395
        %v1397 = vpop.xlane.xlu0 %1396
        %v1398 = vsel %vm481, %v1380, 0.0
        %1399 = vadd.xlane.f32.xlu0 %v1398
        %v1400 = vpop.xlane.xlu0 %1399
        %v1401 = vsel %vm481, %v1382, 0.0
        %1402 = vadd.xlane.f32.xlu0 %v1401
        %v1403 = vpop.xlane.xlu0 %1402
        %v1404 = vsel %vm481, %v1384, 0.0
        %1405 = vadd.xlane.f32.xlu0 %v1404
        %v1406 = vpop.xlane.xlu0 %1405
        %v1407 = vsel %vm481, %v1386, 0.0
        %1408 = vadd.xlane.f32.xlu0 %v1407
        %v1409 = vpop.xlane.xlu0 %1408
        %v1410 = vsel %vm481, %v1388, 0.0
        %1411 = vadd.xlane.f32.xlu0 %v1410
        %v1412 = vpop.xlane.xlu0 %1411
        %v1413 = vrcp.pop %v1391
        %v1414 = vrcp.pop %v1394
        %v1415 = vrcp.pop %v1397
        %v1416 = vrcp.pop %v1400
        %v1417 = vrcp.pop %v1403
        %v1418 = vrcp.pop %v1406
        %v1419 = vrcp.pop %v1409
        %v1420 = vrcp.pop %v1412
        %v1421 = vmul.f32 %v1374, %v1413
        %v1422 = vmul.f32 %v1376, %v1414
        %v1423 = vmul.f32 %v1378, %v1415
        %v1424 = vmul.f32 %v1380, %v1416
        %v1425 = vmul.f32 %v1382, %v1417
        %v1426 = vmul.f32 %v1384, %v1418
        %v1427 = vmul.f32 %v1386, %v1419
        %v1428 = vmul.f32 %v1388, %v1420
        %1429 = vrot.lane.b32.xlu0 %v1012, 80
        %v1430 = vpop.permute.xlu0 %1429
        %v1433 = vsel %vm481, %v1421, 0
        %1435 = vmatpush.msra.mxu0 0.0
        %1436 = vmatpush.msra.mxu0 0.0
        %1437 = vmatpush.msra.mxu0 0.0
        %1438 = vmatpush.msra.mxu0 0.0
        %1439 = vmatpush.msra.mxu0 0.0
        %1440 = vmatpush.msra.mxu0 0.0
        %1441 = vmatpush.msra.mxu0 0.0
        %1442 = vmatpush.msra.mxu0 0.0
        %1443 = vmatpush.msra.mxu0 0.0
        %1444 = vmatpush.msra.mxu0 0.0
        %1445 = vmatpush.msra.mxu0 0.0
        %1446 = vmatpush.msra.mxu0 0.0
        %1447 = vmatpush.msra.mxu0 0.0
        %1448 = vmatpush.msra.mxu0 0.0
        %1449 = vmatpush.msra.mxu0 0.0
        %1450 = vmatpush.msra.mxu0 %v1430
        %1451 = vmatmul.f32.gmra.mxu0 %v1433
        %v1452 = vpop.f32.mrf.mxu0
        %v1453 = vadd.f32 0.0, %v1452
        %1454 = vdwg.mxu0
        %1455 = vrot.lane.b32.xlu0 %v1013, 80
        %v1456 = vpop.permute.xlu0 %1455
        %v1459 = vsel %vm481, %v1422, 0
        %1461 = vmatpush.msra.mxu0 0.0
        %1462 = vmatpush.msra.mxu0 0.0
        %1463 = vmatpush.msra.mxu0 0.0
        %1464 = vmatpush.msra.mxu0 0.0
        %1465 = vmatpush.msra.mxu0 0.0
        %1466 = vmatpush.msra.mxu0 0.0
        %1467 = vmatpush.msra.mxu0 0.0
        %1468 = vmatpush.msra.mxu0 0.0
        %1469 = vmatpush.msra.mxu0 0.0
        %1470 = vmatpush.msra.mxu0 0.0
        %1471 = vmatpush.msra.mxu0 0.0
        %1472 = vmatpush.msra.mxu0 0.0
        %1473 = vmatpush.msra.mxu0 0.0
        %1474 = vmatpush.msra.mxu0 0.0
        %1475 = vmatpush.msra.mxu0 0.0
        %1476 = vmatpush.msra.mxu0 %v1456
        %1477 = vmatmul.f32.gmra.mxu0 %v1459
        %v1478 = vpop.f32.mrf.mxu0
        %v1479 = vadd.f32 0.0, %v1478
        %1480 = vdwg.mxu0
        %1481 = vrot.lane.b32.xlu0 %v1014, 80
        %v1482 = vpop.permute.xlu0 %1481
        %v1485 = vsel %vm481, %v1423, 0
        %1487 = vmatpush.msra.mxu0 0.0
        %1488 = vmatpush.msra.mxu0 0.0
        %1489 = vmatpush.msra.mxu0 0.0
        %1490 = vmatpush.msra.mxu0 0.0
        %1491 = vmatpush.msra.mxu0 0.0
        %1492 = vmatpush.msra.mxu0 0.0
        %1493 = vmatpush.msra.mxu0 0.0
        %1494 = vmatpush.msra.mxu0 0.0
        %1495 = vmatpush.msra.mxu0 0.0
        %1496 = vmatpush.msra.mxu0 0.0
        %1497 = vmatpush.msra.mxu0 0.0
        %1498 = vmatpush.msra.mxu0 0.0
        %1499 = vmatpush.msra.mxu0 0.0
        %1500 = vmatpush.msra.mxu0 0.0
        %1501 = vmatpush.msra.mxu0 0.0
        %1502 = vmatpush.msra.mxu0 %v1482
        %1503 = vmatmul.f32.gmra.mxu0 %v1485
        %v1504 = vpop.f32.mrf.mxu0
        %v1505 = vadd.f32 0.0, %v1504
        %1506 = vdwg.mxu0
        %1507 = vrot.lane.b32.xlu0 %v1015, 80
        %v1508 = vpop.permute.xlu0 %1507
        %v1511 = vsel %vm481, %v1424, 0
        %1513 = vmatpush.msra.mxu0 0.0
        %1514 = vmatpush.msra.mxu0 0.0
        %1515 = vmatpush.msra.mxu0 0.0
        %1516 = vmatpush.msra.mxu0 0.0
        %1517 = vmatpush.msra.mxu0 0.0
        %1518 = vmatpush.msra.mxu0 0.0
        %1519 = vmatpush.msra.mxu0 0.0
        %1520 = vmatpush.msra.mxu0 0.0
        %1521 = vmatpush.msra.mxu0 0.0
        %1522 = vmatpush.msra.mxu0 0.0
        %1523 = vmatpush.msra.mxu0 0.0
        %1524 = vmatpush.msra.mxu0 0.0
        %1525 = vmatpush.msra.mxu0 0.0
        %1526 = vmatpush.msra.mxu0 0.0
        %1527 = vmatpush.msra.mxu0 0.0
        %1528 = vmatpush.msra.mxu0 %v1508
        %1529 = vmatmul.f32.gmra.mxu0 %v1511
        %v1530 = vpop.f32.mrf.mxu0
        %v1531 = vadd.f32 0.0, %v1530
        %1532 = vdwg.mxu0
        %1533 = vrot.lane.b32.xlu0 %v1016, 80
        %v1534 = vpop.permute.xlu0 %1533
        %v1537 = vsel %vm481, %v1425, 0
        %1539 = vmatpush.msra.mxu0 0.0
        %1540 = vmatpush.msra.mxu0 0.0
        %1541 = vmatpush.msra.mxu0 0.0
        %1542 = vmatpush.msra.mxu0 0.0
        %1543 = vmatpush.msra.mxu0 0.0
        %1544 = vmatpush.msra.mxu0 0.0
        %1545 = vmatpush.msra.mxu0 0.0
        %1546 = vmatpush.msra.mxu0 0.0
        %1547 = vmatpush.msra.mxu0 0.0
        %1548 = vmatpush.msra.mxu0 0.0
        %1549 = vmatpush.msra.mxu0 0.0
        %1550 = vmatpush.msra.mxu0 0.0
        %1551 = vmatpush.msra.mxu0 0.0
        %1552 = vmatpush.msra.mxu0 0.0
        %1553 = vmatpush.msra.mxu0 0.0
        %1554 = vmatpush.msra.mxu0 %v1534
        %1555 = vmatmul.f32.gmra.mxu0 %v1537
        %v1556 = vpop.f32.mrf.mxu0
        %v1557 = vadd.f32 0.0, %v1556
        %1558 = vdwg.mxu0
        %1559 = vrot.lane.b32.xlu0 %v1017, 80
        %v1560 = vpop.permute.xlu0 %1559
        %v1563 = vsel %vm481, %v1426, 0
        %1565 = vmatpush.msra.mxu0 0.0
        %1566 = vmatpush.msra.mxu0 0.0
        %1567 = vmatpush.msra.mxu0 0.0
        %1568 = vmatpush.msra.mxu0 0.0
        %1569 = vmatpush.msra.mxu0 0.0
        %1570 = vmatpush.msra.mxu0 0.0
        %1571 = vmatpush.msra.mxu0 0.0
        %1572 = vmatpush.msra.mxu0 0.0
        %1573 = vmatpush.msra.mxu0 0.0
        %1574 = vmatpush.msra.mxu0 0.0
        %1575 = vmatpush.msra.mxu0 0.0
        %1576 = vmatpush.msra.mxu0 0.0
        %1577 = vmatpush.msra.mxu0 0.0
        %1578 = vmatpush.msra.mxu0 0.0
        %1579 = vmatpush.msra.mxu0 0.0
        %1580 = vmatpush.msra.mxu0 %v1560
        %1581 = vmatmul.f32.gmra.mxu0 %v1563
        %v1582 = vpop.f32.mrf.mxu0
        %v1583 = vadd.f32 0.0, %v1582
        %1584 = vdwg.mxu0
        %1585 = vrot.lane.b32.xlu0 %v1018, 80
        %v1586 = vpop.permute.xlu0 %1585
        %v1589 = vsel %vm481, %v1427, 0
        %1591 = vmatpush.msra.mxu0 0.0
        %1592 = vmatpush.msra.mxu0 0.0
        %1593 = vmatpush.msra.mxu0 0.0
        %1594 = vmatpush.msra.mxu0 0.0
        %1595 = vmatpush.msra.mxu0 0.0
        %1596 = vmatpush.msra.mxu0 0.0
        %1597 = vmatpush.msra.mxu0 0.0
        %1598 = vmatpush.msra.mxu0 0.0
        %1599 = vmatpush.msra.mxu0 0.0
        %1600 = vmatpush.msra.mxu0 0.0
        %1601 = vmatpush.msra.mxu0 0.0
        %1602 = vmatpush.msra.mxu0 0.0
        %1603 = vmatpush.msra.mxu0 0.0
        %1604 = vmatpush.msra.mxu0 0.0
        %1605 = vmatpush.msra.mxu0 0.0
        %1606 = vmatpush.msra.mxu0 %v1586
        %1607 = vmatmul.f32.gmra.mxu0 %v1589
        %v1608 = vpop.f32.mrf.mxu0
        %v1609 = vadd.f32 0.0, %v1608
        %1610 = vdwg.mxu0
        %1611 = vrot.lane.b32.xlu0 %v1019, 80
        %v1612 = vpop.permute.xlu0 %1611
        %v1615 = vsel %vm481, %v1428, 0
        %1617 = vmatpush.msra.mxu0 0.0
        %1618 = vmatpush.msra.mxu0 0.0
        %1619 = vmatpush.msra.mxu0 0.0
        %1620 = vmatpush.msra.mxu0 0.0
        %1621 = vmatpush.msra.mxu0 0.0
        %1622 = vmatpush.msra.mxu0 0.0
        %1623 = vmatpush.msra.mxu0 0.0
        %1624 = vmatpush.msra.mxu0 0.0
        %1625 = vmatpush.msra.mxu0 0.0
        %1626 = vmatpush.msra.mxu0 0.0
        %1627 = vmatpush.msra.mxu0 0.0
        %1628 = vmatpush.msra.mxu0 0.0
        %1629 = vmatpush.msra.mxu0 0.0
        %1630 = vmatpush.msra.mxu0 0.0
        %1631 = vmatpush.msra.mxu0 0.0
        %1632 = vmatpush.msra.mxu0 %v1612
        %1633 = vmatmul.f32.gmra.mxu0 %v1615
        %v1634 = vpop.f32.mrf.mxu0
        %v1635 = vadd.f32 0.0, %v1634
        %1636 = vdwg.mxu0
        %v1637 = vpack.c.bf16 %v1479, %v1453
        %v1638 = vpack.c.bf16 %v1531, %v1505
        %v1639 = vpack.c.bf16 %v1583, %v1557
        %v1640 = vpack.c.bf16 %v1635, %v1609
        %s1641 = scalar_lea.vmem %s4, 4
        %v1642 = vld [vmem:[%s1641] sm:$0xf]
        %v1644 = vsel %vm481, %v1637, 0
        %v1647 = vsel %vm481, %v1638, 0
        %v1650 = vsel %vm481, %v1639, 0
        %v1653 = vsel %vm481, %v1640, 0
        %vm1655 = vcmask 1043456
        %v1657 = vsel %vm1655, %v1642, 0
        %1659 = vmatpush.bf16.msra.mxu0 0
        %1660 = vmatpush.bf16.msra.mxu0 0
        %1661 = vmatpush.bf16.msra.mxu0 0
        %1662 = vmatpush.bf16.msra.mxu0 0
        %1663 = vmatpush.bf16.msra.mxu0 0
        %1664 = vmatpush.bf16.msra.mxu0 0
        %1665 = vmatpush.bf16.msra.mxu0 0
        %1666 = vmatpush.bf16.msra.mxu0 %v1657
        %1667 = vmatmul.bf16.gmra.mxu0 %v1644
        %v1668 = vpop.f32.mrf.mxu0
        %v1669 = vadd.f32 0.0, %v1668
        %v1670 = vpop.f32.mrf.mxu0
        %v1671 = vadd.f32 0.0, %v1670
        %1672 = vmatmul.bf16.gmra.mxu0 %v1647
        %v1673 = vpop.f32.mrf.mxu0
        %v1674 = vadd.f32 0.0, %v1673
        %v1675 = vpop.f32.mrf.mxu0
        %v1676 = vadd.f32 0.0, %v1675
        %1677 = vmatmul.bf16.gmra.mxu0 %v1650
        %v1678 = vpop.f32.mrf.mxu0
        %v1679 = vadd.f32 0.0, %v1678
        %v1680 = vpop.f32.mrf.mxu0
        %v1681 = vadd.f32 0.0, %v1680
        %1682 = vmatmul.bf16.gmra.mxu0 %v1653
        %v1683 = vpop.f32.mrf.mxu0
        %v1684 = vadd.f32 0.0, %v1683
        %v1685 = vpop.f32.mrf.mxu0
        %v1686 = vadd.f32 0.0, %v1685
        %1687 = vdwg.mxu0
        %v1689 = vsel %vm481, %v999, 0
        %v1692 = vsel %vm481, %v1000, 0
        %v1695 = vsel %vm481, %v1001, 0
        %v1698 = vsel %vm481, %v1002, 0
        %v1701 = vsel %vm1655, %v1003, 0
        %1703 = vmatpush.bf16.msra.mxu0 0
        %1704 = vmatpush.bf16.msra.mxu0 0
        %1705 = vmatpush.bf16.msra.mxu0 0
        %1706 = vmatpush.bf16.msra.mxu0 0
        %1707 = vmatpush.bf16.msra.mxu0 0
        %1708 = vmatpush.bf16.msra.mxu0 0
        %1709 = vmatpush.bf16.msra.mxu0 0
        %1710 = vmatpush.bf16.msra.mxu0 %v1701
        %1711 = vmatmul.bf16.gmra.mxu0 %v1689
        %v1712 = vpop.f32.mrf.mxu0
        %v1713 = vadd.f32 %v1669, %v1712
        %v1714 = vpop.f32.mrf.mxu0
        %v1715 = vadd.f32 %v1671, %v1714
        %1716 = vmatmul.bf16.gmra.mxu0 %v1692
        %v1717 = vpop.f32.mrf.mxu0
        %v1718 = vadd.f32 %v1674, %v1717
        %v1719 = vpop.f32.mrf.mxu0
        %v1720 = vadd.f32 %v1676, %v1719
        %1721 = vmatmul.bf16.gmra.mxu0 %v1695
        %v1722 = vpop.f32.mrf.mxu0
        %v1723 = vadd.f32 %v1679, %v1722
        %v1724 = vpop.f32.mrf.mxu0
        %v1725 = vadd.f32 %v1681, %v1724
        %1726 = vmatmul.bf16.gmra.mxu0 %v1698
        %v1727 = vpop.f32.mrf.mxu0
        %v1728 = vadd.f32 %v1684, %v1727
        %v1729 = vpop.f32.mrf.mxu0
        %v1730 = vadd.f32 %v1686, %v1729
        %1731 = vdwg.mxu0
        %v1732 = vld [vmem:[%s295] sm:$0xff]
        %v1733 = vld [vmem:[%s295 + $0x10] sm:$0xff]
        %v1734 = vld [vmem:[%s295 + $0x20] sm:$0xff]
        %v1735 = vld [vmem:[%s295 + $0x30] sm:$0xff]
        %v1736 = vld [vmem:[%s295 + $0x40] sm:$0xff]
        %v1737 = vld [vmem:[%s295 + $0x50] sm:$0xff]
        %v1738 = vld [vmem:[%s295 + $0x60] sm:$0xff]
        %v1739 = vld [vmem:[%s295 + $0x70] sm:$0xff]
        %v1740 = vld [vmem:[%s290] sm:$0xff]
        %v1741 = vld [vmem:[%s290 + $0x10] sm:$0xff]
        %v1742 = vld [vmem:[%s290 + $0x20] sm:$0xff]
        %v1743 = vld [vmem:[%s290 + $0x30] sm:$0xff]
        %v1744 = vld [vmem:[%s290 + $0x40] sm:$0xff]
        %v1745 = vld [vmem:[%s290 + $0x50] sm:$0xff]
        %v1746 = vld [vmem:[%s290 + $0x60] sm:$0xff]
        %v1747 = vld [vmem:[%s290 + $0x70] sm:$0xff]
        %vm1748 = vcmask 786112
        %v1749 = vsel %vm1748, %v1740, -inf
        %1750 = vmax.xlane.f32.xlu0 %v1749
        %v1751 = vpop.xlane.xlu0 %1750
        %v1752 = vsel %vm1748, %v1741, -inf
        %1753 = vmax.xlane.f32.xlu0 %v1752
        %v1754 = vpop.xlane.xlu0 %1753
        %v1755 = vsel %vm1748, %v1742, -inf
        %1756 = vmax.xlane.f32.xlu0 %v1755
        %v1757 = vpop.xlane.xlu0 %1756
        %v1758 = vsel %vm1748, %v1743, -inf
        %1759 = vmax.xlane.f32.xlu0 %v1758
        %v1760 = vpop.xlane.xlu0 %1759
        %v1761 = vsel %vm1748, %v1744, -inf
        %1762 = vmax.xlane.f32.xlu0 %v1761
        %v1763 = vpop.xlane.xlu0 %1762
        %v1764 = vsel %vm1748, %v1745, -inf
        %1765 = vmax.xlane.f32.xlu0 %v1764
        %v1766 = vpop.xlane.xlu0 %1765
        %v1767 = vsel %vm1748, %v1746, -inf
        %1768 = vmax.xlane.f32.xlu0 %v1767
        %v1769 = vpop.xlane.xlu0 %1768
        %v1770 = vsel %vm1748, %v1747, -inf
        %1771 = vmax.xlane.f32.xlu0 %v1770
        %v1772 = vpop.xlane.xlu0 %1771
        %v1773 = vadd.f32 %v1751, %v355
        %v1774 = vadd.f32 %v1754, %v362
        %v1775 = vadd.f32 %v1757, %v369
        %v1776 = vadd.f32 %v1760, %v376
        %v1777 = vadd.f32 %v1763, %v383
        %v1778 = vadd.f32 %v1766, %v390
        %v1779 = vadd.f32 %v1769, %v397
        %v1780 = vadd.f32 %v1772, %v404
        %1782 = vrot.lane.b32.xlu0 %v1732, 64
        %v1783 = vpop.permute.xlu0 %1782
        %1785 = vrot.lane.b32.xlu0 %v1740, 56
        %v1786 = vpop.permute.xlu0 %1785
        %1795 = vset.pattern.permute.xlu0 0
        %1796 = vperm.xlu0 %1795, %v1773
        %v1797 = vpop.permute.xlu0 %1796
        %1798 = vset.pattern.permute.xlu0 0
        %1799 = vperm.xlu0 %1798, %v1774
        %v1800 = vpop.permute.xlu0 %1799
        %1801 = vset.pattern.permute.xlu0 0
        %1802 = vperm.xlu0 %1801, %v1775
        %v1803 = vpop.permute.xlu0 %1802
        %1804 = vset.pattern.permute.xlu0 0
        %1805 = vperm.xlu0 %1804, %v1776
        %v1806 = vpop.permute.xlu0 %1805
        %1807 = vset.pattern.permute.xlu0 0
        %1808 = vperm.xlu0 %1807, %v1777
        %v1809 = vpop.permute.xlu0 %1808
        %1810 = vset.pattern.permute.xlu0 0
        %1811 = vperm.xlu0 %1810, %v1778
        %v1812 = vpop.permute.xlu0 %1811
        %1813 = vset.pattern.permute.xlu0 0
        %1814 = vperm.xlu0 %1813, %v1779
        %v1815 = vpop.permute.xlu0 %1814
        %1816 = vset.pattern.permute.xlu0 0
        %1817 = vperm.xlu0 %1816, %v1780
        %v1818 = vpop.permute.xlu0 %1817
        %v1819 = vperm.slane %v1797, %v457
        %v1820 = vperm.slane %v1800, %v457
        %v1821 = vperm.slane %v1803, %v457
        %v1822 = vperm.slane %v1806, %v457
        %v1823 = vperm.slane %v1809, %v457
        %v1824 = vperm.slane %v1812, %v457
        %v1825 = vperm.slane %v1815, %v457
        %v1826 = vperm.slane %v1818, %v457
        %v1827 = vsel %vm466, %v1820, %v1819
        %v1828 = vsel %vm468, %v1821, %v1827
        %v1829 = vsel %vm470, %v1822, %v1828
        %v1830 = vsel %vm472, %v1823, %v1829
        %v1831 = vsel %vm474, %v1824, %v1830
        %v1832 = vsel %vm476, %v1825, %v1831
        %v1833 = vsel %vm478, %v1826, %v1832
        %v1835 = vsel %vm481, %v1783, 0
        %v1837 = vsel %vm481, %v1786, 0
        %1839 = vmatpush.xpose.msra.mxu0 0.0
        %1840 = vmatpush.xpose.msra.mxu0 0.0
        %1841 = vmatpush.xpose.msra.mxu0 0.0
        %1842 = vmatpush.xpose.msra.mxu0 0.0
        %1843 = vmatpush.xpose.msra.mxu0 0.0
        %1844 = vmatpush.xpose.msra.mxu0 0.0
        %1845 = vmatpush.xpose.msra.mxu0 0.0
        %1846 = vmatpush.xpose.msra.mxu0 0.0
        %1847 = vmatpush.xpose.msra.mxu0 0.0
        %1848 = vmatpush.xpose.msra.mxu0 0.0
        %1849 = vmatpush.xpose.msra.mxu0 0.0
        %1850 = vmatpush.xpose.msra.mxu0 0.0
        %1851 = vmatpush.xpose.msra.mxu0 0.0
        %1852 = vmatpush.xpose.msra.mxu0 0.0
        %1853 = vmatpush.xpose.msra.mxu0 0.0
        %1854 = vmatpush.xpose.msra.mxu0 %v1837
        %1855 = vmatmul.f32.gmra.mxu0 %v1835
        %v1856 = vpop.f32.mrf.mxu0
        %v1857 = vadd.f32 %v1833, %v1856
        %1858 = vdwg.mxu0
        %1860 = vrot.lane.b32.xlu0 %v1733, 64
        %v1861 = vpop.permute.xlu0 %1860
        %1863 = vrot.lane.b32.xlu0 %v1741, 56
        %v1864 = vpop.permute.xlu0 %1863
        %v1865 = vsel %vm481, %v1861, 0
        %v1867 = vsel %vm481, %v1864, 0
        %1869 = vmatpush.xpose.msra.mxu0 0.0
        %1870 = vmatpush.xpose.msra.mxu0 0.0
        %1871 = vmatpush.xpose.msra.mxu0 0.0
        %1872 = vmatpush.xpose.msra.mxu0 0.0
        %1873 = vmatpush.xpose.msra.mxu0 0.0
        %1874 = vmatpush.xpose.msra.mxu0 0.0
        %1875 = vmatpush.xpose.msra.mxu0 0.0
        %1876 = vmatpush.xpose.msra.mxu0 0.0
        %1877 = vmatpush.xpose.msra.mxu0 0.0
        %1878 = vmatpush.xpose.msra.mxu0 0.0
        %1879 = vmatpush.xpose.msra.mxu0 0.0
        %1880 = vmatpush.xpose.msra.mxu0 0.0
        %1881 = vmatpush.xpose.msra.mxu0 0.0
        %1882 = vmatpush.xpose.msra.mxu0 0.0
        %1883 = vmatpush.xpose.msra.mxu0 0.0
        %1884 = vmatpush.xpose.msra.mxu0 %v1867
        %1885 = vmatmul.f32.gmra.mxu0 %v1865
        %v1886 = vpop.f32.mrf.mxu0
        %v1887 = vadd.f32 %v1833, %v1886
        %1888 = vdwg.mxu0
        %1890 = vrot.lane.b32.xlu0 %v1734, 64
        %v1891 = vpop.permute.xlu0 %1890
        %1893 = vrot.lane.b32.xlu0 %v1742, 56
        %v1894 = vpop.permute.xlu0 %1893
        %v1895 = vsel %vm481, %v1891, 0
        %v1897 = vsel %vm481, %v1894, 0
        %1899 = vmatpush.xpose.msra.mxu0 0.0
        %1900 = vmatpush.xpose.msra.mxu0 0.0
        %1901 = vmatpush.xpose.msra.mxu0 0.0
        %1902 = vmatpush.xpose.msra.mxu0 0.0
        %1903 = vmatpush.xpose.msra.mxu0 0.0
        %1904 = vmatpush.xpose.msra.mxu0 0.0
        %1905 = vmatpush.xpose.msra.mxu0 0.0
        %1906 = vmatpush.xpose.msra.mxu0 0.0
        %1907 = vmatpush.xpose.msra.mxu0 0.0
        %1908 = vmatpush.xpose.msra.mxu0 0.0
        %1909 = vmatpush.xpose.msra.mxu0 0.0
        %1910 = vmatpush.xpose.msra.mxu0 0.0
        %1911 = vmatpush.xpose.msra.mxu0 0.0
        %1912 = vmatpush.xpose.msra.mxu0 0.0
        %1913 = vmatpush.xpose.msra.mxu0 0.0
        %1914 = vmatpush.xpose.msra.mxu0 %v1897
        %1915 = vmatmul.f32.gmra.mxu0 %v1895
        %v1916 = vpop.f32.mrf.mxu0
        %v1917 = vadd.f32 %v1833, %v1916
        %1918 = vdwg.mxu0
        %1920 = vrot.lane.b32.xlu0 %v1735, 64
        %v1921 = vpop.permute.xlu0 %1920
        %1923 = vrot.lane.b32.xlu0 %v1743, 56
        %v1924 = vpop.permute.xlu0 %1923
        %v1925 = vsel %vm481, %v1921, 0
        %v1927 = vsel %vm481, %v1924, 0
        %1929 = vmatpush.xpose.msra.mxu0 0.0
        %1930 = vmatpush.xpose.msra.mxu0 0.0
        %1931 = vmatpush.xpose.msra.mxu0 0.0
        %1932 = vmatpush.xpose.msra.mxu0 0.0
        %1933 = vmatpush.xpose.msra.mxu0 0.0
        %1934 = vmatpush.xpose.msra.mxu0 0.0
        %1935 = vmatpush.xpose.msra.mxu0 0.0
        %1936 = vmatpush.xpose.msra.mxu0 0.0
        %1937 = vmatpush.xpose.msra.mxu0 0.0
        %1938 = vmatpush.xpose.msra.mxu0 0.0
        %1939 = vmatpush.xpose.msra.mxu0 0.0
        %1940 = vmatpush.xpose.msra.mxu0 0.0
        %1941 = vmatpush.xpose.msra.mxu0 0.0
        %1942 = vmatpush.xpose.msra.mxu0 0.0
        %1943 = vmatpush.xpose.msra.mxu0 0.0
        %1944 = vmatpush.xpose.msra.mxu0 %v1927
        %1945 = vmatmul.f32.gmra.mxu0 %v1925
        %v1946 = vpop.f32.mrf.mxu0
        %v1947 = vadd.f32 %v1833, %v1946
        %1948 = vdwg.mxu0
        %1950 = vrot.lane.b32.xlu0 %v1736, 64
        %v1951 = vpop.permute.xlu0 %1950
        %1953 = vrot.lane.b32.xlu0 %v1744, 56
        %v1954 = vpop.permute.xlu0 %1953
        %v1955 = vsel %vm481, %v1951, 0
        %v1957 = vsel %vm481, %v1954, 0
        %1959 = vmatpush.xpose.msra.mxu0 0.0
        %1960 = vmatpush.xpose.msra.mxu0 0.0
        %1961 = vmatpush.xpose.msra.mxu0 0.0
        %1962 = vmatpush.xpose.msra.mxu0 0.0
        %1963 = vmatpush.xpose.msra.mxu0 0.0
        %1964 = vmatpush.xpose.msra.mxu0 0.0
        %1965 = vmatpush.xpose.msra.mxu0 0.0
        %1966 = vmatpush.xpose.msra.mxu0 0.0
        %1967 = vmatpush.xpose.msra.mxu0 0.0
        %1968 = vmatpush.xpose.msra.mxu0 0.0
        %1969 = vmatpush.xpose.msra.mxu0 0.0
        %1970 = vmatpush.xpose.msra.mxu0 0.0
        %1971 = vmatpush.xpose.msra.mxu0 0.0
        %1972 = vmatpush.xpose.msra.mxu0 0.0
        %1973 = vmatpush.xpose.msra.mxu0 0.0
        %1974 = vmatpush.xpose.msra.mxu0 %v1957
        %1975 = vmatmul.f32.gmra.mxu0 %v1955
        %v1976 = vpop.f32.mrf.mxu0
        %v1977 = vadd.f32 %v1833, %v1976
        %1978 = vdwg.mxu0
        %1980 = vrot.lane.b32.xlu0 %v1737, 64
        %v1981 = vpop.permute.xlu0 %1980
        %1983 = vrot.lane.b32.xlu0 %v1745, 56
        %v1984 = vpop.permute.xlu0 %1983
        %v1985 = vsel %vm481, %v1981, 0
        %v1987 = vsel %vm481, %v1984, 0
        %1989 = vmatpush.xpose.msra.mxu0 0.0
        %1990 = vmatpush.xpose.msra.mxu0 0.0
        %1991 = vmatpush.xpose.msra.mxu0 0.0
        %1992 = vmatpush.xpose.msra.mxu0 0.0
        %1993 = vmatpush.xpose.msra.mxu0 0.0
        %1994 = vmatpush.xpose.msra.mxu0 0.0
        %1995 = vmatpush.xpose.msra.mxu0 0.0
        %1996 = vmatpush.xpose.msra.mxu0 0.0
        %1997 = vmatpush.xpose.msra.mxu0 0.0
        %1998 = vmatpush.xpose.msra.mxu0 0.0
        %1999 = vmatpush.xpose.msra.mxu0 0.0
        %2000 = vmatpush.xpose.msra.mxu0 0.0
        %2001 = vmatpush.xpose.msra.mxu0 0.0
        %2002 = vmatpush.xpose.msra.mxu0 0.0
        %2003 = vmatpush.xpose.msra.mxu0 0.0
        %2004 = vmatpush.xpose.msra.mxu0 %v1987
        %2005 = vmatmul.f32.gmra.mxu0 %v1985
        %v2006 = vpop.f32.mrf.mxu0
        %v2007 = vadd.f32 %v1833, %v2006
        %2008 = vdwg.mxu0
        %2010 = vrot.lane.b32.xlu0 %v1738, 64
        %v2011 = vpop.permute.xlu0 %2010
        %2013 = vrot.lane.b32.xlu0 %v1746, 56
        %v2014 = vpop.permute.xlu0 %2013
        %v2015 = vsel %vm481, %v2011, 0
        %v2017 = vsel %vm481, %v2014, 0
        %2019 = vmatpush.xpose.msra.mxu0 0.0
        %2020 = vmatpush.xpose.msra.mxu0 0.0
        %2021 = vmatpush.xpose.msra.mxu0 0.0
        %2022 = vmatpush.xpose.msra.mxu0 0.0
        %2023 = vmatpush.xpose.msra.mxu0 0.0
        %2024 = vmatpush.xpose.msra.mxu0 0.0
        %2025 = vmatpush.xpose.msra.mxu0 0.0
        %2026 = vmatpush.xpose.msra.mxu0 0.0
        %2027 = vmatpush.xpose.msra.mxu0 0.0
        %2028 = vmatpush.xpose.msra.mxu0 0.0
        %2029 = vmatpush.xpose.msra.mxu0 0.0
        %2030 = vmatpush.xpose.msra.mxu0 0.0
        %2031 = vmatpush.xpose.msra.mxu0 0.0
        %2032 = vmatpush.xpose.msra.mxu0 0.0
        %2033 = vmatpush.xpose.msra.mxu0 0.0
        %2034 = vmatpush.xpose.msra.mxu0 %v2017
        %2035 = vmatmul.f32.gmra.mxu0 %v2015
        %v2036 = vpop.f32.mrf.mxu0
        %v2037 = vadd.f32 %v1833, %v2036
        %2038 = vdwg.mxu0
        %2040 = vrot.lane.b32.xlu0 %v1739, 64
        %v2041 = vpop.permute.xlu0 %2040
        %2043 = vrot.lane.b32.xlu0 %v1747, 56
        %v2044 = vpop.permute.xlu0 %2043
        %v2045 = vsel %vm481, %v2041, 0
        %v2047 = vsel %vm481, %v2044, 0
        %2049 = vmatpush.xpose.msra.mxu0 0.0
        %2050 = vmatpush.xpose.msra.mxu0 0.0
        %2051 = vmatpush.xpose.msra.mxu0 0.0
        %2052 = vmatpush.xpose.msra.mxu0 0.0
        %2053 = vmatpush.xpose.msra.mxu0 0.0
        %2054 = vmatpush.xpose.msra.mxu0 0.0
        %2055 = vmatpush.xpose.msra.mxu0 0.0
        %2056 = vmatpush.xpose.msra.mxu0 0.0
        %2057 = vmatpush.xpose.msra.mxu0 0.0
        %2058 = vmatpush.xpose.msra.mxu0 0.0
        %2059 = vmatpush.xpose.msra.mxu0 0.0
        %2060 = vmatpush.xpose.msra.mxu0 0.0
        %2061 = vmatpush.xpose.msra.mxu0 0.0
        %2062 = vmatpush.xpose.msra.mxu0 0.0
        %2063 = vmatpush.xpose.msra.mxu0 0.0
        %2064 = vmatpush.xpose.msra.mxu0 %v2047
        %2065 = vmatmul.f32.gmra.mxu0 %v2045
        %v2066 = vpop.f32.mrf.mxu0
        %v2067 = vadd.f32 %v1833, %v2066
        %2068 = vdwg.mxu0
        %v2069 = vsel %vm481, %v1857, -inf
        %2070 = vmax.xlane.f32.xlu0 %v2069
        %v2071 = vpop.xlane.xlu0 %2070
        %v2072 = vsel %vm481, %v1887, -inf
        %2073 = vmax.xlane.f32.xlu0 %v2072
        %v2074 = vpop.xlane.xlu0 %2073
        %v2075 = vsel %vm481, %v1917, -inf
        %2076 = vmax.xlane.f32.xlu0 %v2075
        %v2077 = vpop.xlane.xlu0 %2076
        %v2078 = vsel %vm481, %v1947, -inf
        %2079 = vmax.xlane.f32.xlu0 %v2078
        %v2080 = vpop.xlane.xlu0 %2079
        %v2081 = vsel %vm481, %v1977, -inf
        %2082 = vmax.xlane.f32.xlu0 %v2081
        %v2083 = vpop.xlane.xlu0 %2082
        %v2084 = vsel %vm481, %v2007, -inf
        %2085 = vmax.xlane.f32.xlu0 %v2084
        %v2086 = vpop.xlane.xlu0 %2085
        %v2087 = vsel %vm481, %v2037, -inf
        %2088 = vmax.xlane.f32.xlu0 %v2087
        %v2089 = vpop.xlane.xlu0 %2088
        %v2090 = vsel %vm481, %v2067, -inf
        %2091 = vmax.xlane.f32.xlu0 %v2090
        %v2092 = vpop.xlane.xlu0 %2091
        %v2093 = vsub.f32 %v1857, %v2071
        %v2094 = vsub.f32 %v1887, %v2074
        %v2095 = vsub.f32 %v1917, %v2077
        %v2096 = vsub.f32 %v1947, %v2080
        %v2097 = vsub.f32 %v1977, %v2083
        %v2098 = vsub.f32 %v2007, %v2086
        %v2099 = vsub.f32 %v2037, %v2089
        %v2100 = vsub.f32 %v2067, %v2092
        %v2101 = vmul.f32 %v2093, 1.442695
        %v2102 = vpow.pop %v2101
        %v2103 = vmul.f32 %v2094, 1.442695
        %v2104 = vpow.pop %v2103
        %v2105 = vmul.f32 %v2095, 1.442695
        %v2106 = vpow.pop %v2105
        %v2107 = vmul.f32 %v2096, 1.442695
        %v2108 = vpow.pop %v2107
        %v2109 = vmul.f32 %v2097, 1.442695
        %v2110 = vpow.pop %v2109
        %v2111 = vmul.f32 %v2098, 1.442695
        %v2112 = vpow.pop %v2111
        %v2113 = vmul.f32 %v2099, 1.442695
        %v2114 = vpow.pop %v2113
        %v2115 = vmul.f32 %v2100, 1.442695
        %v2116 = vpow.pop %v2115
        %v2117 = vsel %vm481, %v2102, 0.0
        %2118 = vadd.xlane.f32.xlu0 %v2117
        %v2119 = vpop.xlane.xlu0 %2118
        %v2120 = vsel %vm481, %v2104, 0.0
        %2121 = vadd.xlane.f32.xlu0 %v2120
        %v2122 = vpop.xlane.xlu0 %2121
        %v2123 = vsel %vm481, %v2106, 0.0
        %2124 = vadd.xlane.f32.xlu0 %v2123
        %v2125 = vpop.xlane.xlu0 %2124
        %v2126 = vsel %vm481, %v2108, 0.0
        %2127 = vadd.xlane.f32.xlu0 %v2126
        %v2128 = vpop.xlane.xlu0 %2127
        %v2129 = vsel %vm481, %v2110, 0.0
        %2130 = vadd.xlane.f32.xlu0 %v2129
        %v2131 = vpop.xlane.xlu0 %2130
        %v2132 = vsel %vm481, %v2112, 0.0
        %2133 = vadd.xlane.f32.xlu0 %v2132
        %v2134 = vpop.xlane.xlu0 %2133
        %v2135 = vsel %vm481, %v2114, 0.0
        %2136 = vadd.xlane.f32.xlu0 %v2135
        %v2137 = vpop.xlane.xlu0 %2136
        %v2138 = vsel %vm481, %v2116, 0.0
        %2139 = vadd.xlane.f32.xlu0 %v2138
        %v2140 = vpop.xlane.xlu0 %2139
        %v2141 = vrcp.pop %v2119
        %v2142 = vrcp.pop %v2122
        %v2143 = vrcp.pop %v2125
        %v2144 = vrcp.pop %v2128
        %v2145 = vrcp.pop %v2131
        %v2146 = vrcp.pop %v2134
        %v2147 = vrcp.pop %v2137
        %v2148 = vrcp.pop %v2140
        %v2149 = vmul.f32 %v2102, %v2141
        %v2150 = vmul.f32 %v2104, %v2142
        %v2151 = vmul.f32 %v2106, %v2143
        %v2152 = vmul.f32 %v2108, %v2144
        %v2153 = vmul.f32 %v2110, %v2145
        %v2154 = vmul.f32 %v2112, %v2146
        %v2155 = vmul.f32 %v2114, %v2147
        %v2156 = vmul.f32 %v2116, %v2148
        %2157 = vrot.lane.b32.xlu0 %v1740, 48
        %v2158 = vpop.permute.xlu0 %2157
        %v2161 = vsel %vm481, %v2149, 0
        %2163 = vmatpush.msra.mxu0 0.0
        %2164 = vmatpush.msra.mxu0 0.0
        %2165 = vmatpush.msra.mxu0 0.0
        %2166 = vmatpush.msra.mxu0 0.0
        %2167 = vmatpush.msra.mxu0 0.0
        %2168 = vmatpush.msra.mxu0 0.0
        %2169 = vmatpush.msra.mxu0 0.0
        %2170 = vmatpush.msra.mxu0 0.0
        %2171 = vmatpush.msra.mxu0 0.0
        %2172 = vmatpush.msra.mxu0 0.0
        %2173 = vmatpush.msra.mxu0 0.0
        %2174 = vmatpush.msra.mxu0 0.0
        %2175 = vmatpush.msra.mxu0 0.0
        %2176 = vmatpush.msra.mxu0 0.0
        %2177 = vmatpush.msra.mxu0 0.0
        %2178 = vmatpush.msra.mxu0 %v2158
        %2179 = vmatmul.f32.gmra.mxu0 %v2161
        %v2180 = vpop.f32.mrf.mxu0
        %v2181 = vadd.f32 0.0, %v2180
        %2182 = vdwg.mxu0
        %2183 = vrot.lane.b32.xlu0 %v1741, 48
        %v2184 = vpop.permute.xlu0 %2183
        %v2187 = vsel %vm481, %v2150, 0
        %2189 = vmatpush.msra.mxu0 0.0
        %2190 = vmatpush.msra.mxu0 0.0
        %2191 = vmatpush.msra.mxu0 0.0
        %2192 = vmatpush.msra.mxu0 0.0
        %2193 = vmatpush.msra.mxu0 0.0
        %2194 = vmatpush.msra.mxu0 0.0
        %2195 = vmatpush.msra.mxu0 0.0
        %2196 = vmatpush.msra.mxu0 0.0
        %2197 = vmatpush.msra.mxu0 0.0
        %2198 = vmatpush.msra.mxu0 0.0
        %2199 = vmatpush.msra.mxu0 0.0
        %2200 = vmatpush.msra.mxu0 0.0
        %2201 = vmatpush.msra.mxu0 0.0
        %2202 = vmatpush.msra.mxu0 0.0
        %2203 = vmatpush.msra.mxu0 0.0
        %2204 = vmatpush.msra.mxu0 %v2184
        %2205 = vmatmul.f32.gmra.mxu0 %v2187
        %v2206 = vpop.f32.mrf.mxu0
        %v2207 = vadd.f32 0.0, %v2206
        %2208 = vdwg.mxu0
        %2209 = vrot.lane.b32.xlu0 %v1742, 48
        %v2210 = vpop.permute.xlu0 %2209
        %v2213 = vsel %vm481, %v2151, 0
        %2215 = vmatpush.msra.mxu0 0.0
        %2216 = vmatpush.msra.mxu0 0.0
        %2217 = vmatpush.msra.mxu0 0.0
        %2218 = vmatpush.msra.mxu0 0.0
        %2219 = vmatpush.msra.mxu0 0.0
        %2220 = vmatpush.msra.mxu0 0.0
        %2221 = vmatpush.msra.mxu0 0.0
        %2222 = vmatpush.msra.mxu0 0.0
        %2223 = vmatpush.msra.mxu0 0.0
        %2224 = vmatpush.msra.mxu0 0.0
        %2225 = vmatpush.msra.mxu0 0.0
        %2226 = vmatpush.msra.mxu0 0.0
        %2227 = vmatpush.msra.mxu0 0.0
        %2228 = vmatpush.msra.mxu0 0.0
        %2229 = vmatpush.msra.mxu0 0.0
        %2230 = vmatpush.msra.mxu0 %v2210
        %2231 = vmatmul.f32.gmra.mxu0 %v2213
        %v2232 = vpop.f32.mrf.mxu0
        %v2233 = vadd.f32 0.0, %v2232
        %2234 = vdwg.mxu0
        %2235 = vrot.lane.b32.xlu0 %v1743, 48
        %v2236 = vpop.permute.xlu0 %2235
        %v2239 = vsel %vm481, %v2152, 0
        %2241 = vmatpush.msra.mxu0 0.0
        %2242 = vmatpush.msra.mxu0 0.0
        %2243 = vmatpush.msra.mxu0 0.0
        %2244 = vmatpush.msra.mxu0 0.0
        %2245 = vmatpush.msra.mxu0 0.0
        %2246 = vmatpush.msra.mxu0 0.0
        %2247 = vmatpush.msra.mxu0 0.0
        %2248 = vmatpush.msra.mxu0 0.0
        %2249 = vmatpush.msra.mxu0 0.0
        %2250 = vmatpush.msra.mxu0 0.0
        %2251 = vmatpush.msra.mxu0 0.0
        %2252 = vmatpush.msra.mxu0 0.0
        %2253 = vmatpush.msra.mxu0 0.0
        %2254 = vmatpush.msra.mxu0 0.0
        %2255 = vmatpush.msra.mxu0 0.0
        %2256 = vmatpush.msra.mxu0 %v2236
        %2257 = vmatmul.f32.gmra.mxu0 %v2239
        %v2258 = vpop.f32.mrf.mxu0
        %v2259 = vadd.f32 0.0, %v2258
        %2260 = vdwg.mxu0
        %2261 = vrot.lane.b32.xlu0 %v1744, 48
        %v2262 = vpop.permute.xlu0 %2261
        %v2265 = vsel %vm481, %v2153, 0
        %2267 = vmatpush.msra.mxu0 0.0
        %2268 = vmatpush.msra.mxu0 0.0
        %2269 = vmatpush.msra.mxu0 0.0
        %2270 = vmatpush.msra.mxu0 0.0
        %2271 = vmatpush.msra.mxu0 0.0
        %2272 = vmatpush.msra.mxu0 0.0
        %2273 = vmatpush.msra.mxu0 0.0
        %2274 = vmatpush.msra.mxu0 0.0
        %2275 = vmatpush.msra.mxu0 0.0
        %2276 = vmatpush.msra.mxu0 0.0
        %2277 = vmatpush.msra.mxu0 0.0
        %2278 = vmatpush.msra.mxu0 0.0
        %2279 = vmatpush.msra.mxu0 0.0
        %2280 = vmatpush.msra.mxu0 0.0
        %2281 = vmatpush.msra.mxu0 0.0
        %2282 = vmatpush.msra.mxu0 %v2262
        %2283 = vmatmul.f32.gmra.mxu0 %v2265
        %v2284 = vpop.f32.mrf.mxu0
        %v2285 = vadd.f32 0.0, %v2284
        %2286 = vdwg.mxu0
        %2287 = vrot.lane.b32.xlu0 %v1745, 48
        %v2288 = vpop.permute.xlu0 %2287
        %v2291 = vsel %vm481, %v2154, 0
        %2293 = vmatpush.msra.mxu0 0.0
        %2294 = vmatpush.msra.mxu0 0.0
        %2295 = vmatpush.msra.mxu0 0.0
        %2296 = vmatpush.msra.mxu0 0.0
        %2297 = vmatpush.msra.mxu0 0.0
        %2298 = vmatpush.msra.mxu0 0.0
        %2299 = vmatpush.msra.mxu0 0.0
        %2300 = vmatpush.msra.mxu0 0.0
        %2301 = vmatpush.msra.mxu0 0.0
        %2302 = vmatpush.msra.mxu0 0.0
        %2303 = vmatpush.msra.mxu0 0.0
        %2304 = vmatpush.msra.mxu0 0.0
        %2305 = vmatpush.msra.mxu0 0.0
        %2306 = vmatpush.msra.mxu0 0.0
        %2307 = vmatpush.msra.mxu0 0.0
        %2308 = vmatpush.msra.mxu0 %v2288
        %2309 = vmatmul.f32.gmra.mxu0 %v2291
        %v2310 = vpop.f32.mrf.mxu0
        %v2311 = vadd.f32 0.0, %v2310
        %2312 = vdwg.mxu0
        %2313 = vrot.lane.b32.xlu0 %v1746, 48
        %v2314 = vpop.permute.xlu0 %2313
        %v2317 = vsel %vm481, %v2155, 0
        %2319 = vmatpush.msra.mxu0 0.0
        %2320 = vmatpush.msra.mxu0 0.0
        %2321 = vmatpush.msra.mxu0 0.0
        %2322 = vmatpush.msra.mxu0 0.0
        %2323 = vmatpush.msra.mxu0 0.0
        %2324 = vmatpush.msra.mxu0 0.0
        %2325 = vmatpush.msra.mxu0 0.0
        %2326 = vmatpush.msra.mxu0 0.0
        %2327 = vmatpush.msra.mxu0 0.0
        %2328 = vmatpush.msra.mxu0 0.0
        %2329 = vmatpush.msra.mxu0 0.0
        %2330 = vmatpush.msra.mxu0 0.0
        %2331 = vmatpush.msra.mxu0 0.0
        %2332 = vmatpush.msra.mxu0 0.0
        %2333 = vmatpush.msra.mxu0 0.0
        %2334 = vmatpush.msra.mxu0 %v2314
        %2335 = vmatmul.f32.gmra.mxu0 %v2317
        %v2336 = vpop.f32.mrf.mxu0
        %v2337 = vadd.f32 0.0, %v2336
        %2338 = vdwg.mxu0
        %2339 = vrot.lane.b32.xlu0 %v1747, 48
        %v2340 = vpop.permute.xlu0 %2339
        %v2343 = vsel %vm481, %v2156, 0
        %2345 = vmatpush.msra.mxu0 0.0
        %2346 = vmatpush.msra.mxu0 0.0
        %2347 = vmatpush.msra.mxu0 0.0
        %2348 = vmatpush.msra.mxu0 0.0
        %2349 = vmatpush.msra.mxu0 0.0
        %2350 = vmatpush.msra.mxu0 0.0
        %2351 = vmatpush.msra.mxu0 0.0
        %2352 = vmatpush.msra.mxu0 0.0
        %2353 = vmatpush.msra.mxu0 0.0
        %2354 = vmatpush.msra.mxu0 0.0
        %2355 = vmatpush.msra.mxu0 0.0
        %2356 = vmatpush.msra.mxu0 0.0
        %2357 = vmatpush.msra.mxu0 0.0
        %2358 = vmatpush.msra.mxu0 0.0
        %2359 = vmatpush.msra.mxu0 0.0
        %2360 = vmatpush.msra.mxu0 %v2340
        %2361 = vmatmul.f32.gmra.mxu0 %v2343
        %v2362 = vpop.f32.mrf.mxu0
        %v2363 = vadd.f32 0.0, %v2362
        %2364 = vdwg.mxu0
        %v2365 = vpack.c.bf16 %v2207, %v2181
        %v2366 = vpack.c.bf16 %v2259, %v2233
        %v2367 = vpack.c.bf16 %v2311, %v2285
        %v2368 = vpack.c.bf16 %v2363, %v2337
        %s2369 = scalar_lea.vmem %s4, 8
        %v2370 = vld [vmem:[%s2369] sm:$0xf]
        %v2372 = vsel %vm481, %v2365, 0
        %v2375 = vsel %vm481, %v2366, 0
        %v2378 = vsel %vm481, %v2367, 0
        %v2381 = vsel %vm481, %v2368, 0
        %v2384 = vsel %vm1655, %v2370, 0
        %2386 = vmatpush.bf16.msra.mxu0 0
        %2387 = vmatpush.bf16.msra.mxu0 0
        %2388 = vmatpush.bf16.msra.mxu0 0
        %2389 = vmatpush.bf16.msra.mxu0 0
        %2390 = vmatpush.bf16.msra.mxu0 0
        %2391 = vmatpush.bf16.msra.mxu0 0
        %2392 = vmatpush.bf16.msra.mxu0 0
        %2393 = vmatpush.bf16.msra.mxu0 %v2384
        %2394 = vmatmul.bf16.gmra.mxu0 %v2372
        %v2395 = vpop.f32.mrf.mxu0
        %v2396 = vadd.f32 0.0, %v2395
        %v2397 = vpop.f32.mrf.mxu0
        %v2398 = vadd.f32 0.0, %v2397
        %2399 = vmatmul.bf16.gmra.mxu0 %v2375
        %v2400 = vpop.f32.mrf.mxu0
        %v2401 = vadd.f32 0.0, %v2400
        %v2402 = vpop.f32.mrf.mxu0
        %v2403 = vadd.f32 0.0, %v2402
        %2404 = vmatmul.bf16.gmra.mxu0 %v2378
        %v2405 = vpop.f32.mrf.mxu0
        %v2406 = vadd.f32 0.0, %v2405
        %v2407 = vpop.f32.mrf.mxu0
        %v2408 = vadd.f32 0.0, %v2407
        %2409 = vmatmul.bf16.gmra.mxu0 %v2381
        %v2410 = vpop.f32.mrf.mxu0
        %v2411 = vadd.f32 0.0, %v2410
        %v2412 = vpop.f32.mrf.mxu0
        %v2413 = vadd.f32 0.0, %v2412
        %2414 = vdwg.mxu0
        %v2415 = vadd.f32 %v1713, %v2396
        %v2416 = vadd.f32 %v1715, %v2398
        %v2417 = vadd.f32 %v1718, %v2401
        %v2418 = vadd.f32 %v1720, %v2403
        %v2419 = vadd.f32 %v1723, %v2406
        %v2420 = vadd.f32 %v1725, %v2408
        %v2421 = vadd.f32 %v1728, %v2411
        %v2422 = vadd.f32 %v1730, %v2413
        %v2423 = vld [vmem:[%s295] sm:$0xff]
        %v2424 = vld [vmem:[%s295 + $0x10] sm:$0xff]
        %v2425 = vld [vmem:[%s295 + $0x20] sm:$0xff]
        %v2426 = vld [vmem:[%s295 + $0x30] sm:$0xff]
        %v2427 = vld [vmem:[%s295 + $0x40] sm:$0xff]
        %v2428 = vld [vmem:[%s295 + $0x50] sm:$0xff]
        %v2429 = vld [vmem:[%s295 + $0x60] sm:$0xff]
        %v2430 = vld [vmem:[%s295 + $0x70] sm:$0xff]
        %v2431 = vld [vmem:[%s290] sm:$0xff]
        %v2432 = vld [vmem:[%s290 + $0x10] sm:$0xff]
        %v2433 = vld [vmem:[%s290 + $0x20] sm:$0xff]
        %v2434 = vld [vmem:[%s290 + $0x30] sm:$0xff]
        %v2435 = vld [vmem:[%s290 + $0x40] sm:$0xff]
        %v2436 = vld [vmem:[%s290 + $0x50] sm:$0xff]
        %v2437 = vld [vmem:[%s290 + $0x60] sm:$0xff]
        %v2438 = vld [vmem:[%s290 + $0x70] sm:$0xff]
        %vm2439 = vcmask 1048512
        %v2440 = vsel %vm2439, %v2431, -inf
        %2441 = vmax.xlane.f32.xlu0 %v2440
        %v2442 = vpop.xlane.xlu0 %2441
        %v2443 = vsel %vm2439, %v2432, -inf
        %2444 = vmax.xlane.f32.xlu0 %v2443
        %v2445 = vpop.xlane.xlu0 %2444
        %v2446 = vsel %vm2439, %v2433, -inf
        %2447 = vmax.xlane.f32.xlu0 %v2446
        %v2448 = vpop.xlane.xlu0 %2447
        %v2449 = vsel %vm2439, %v2434, -inf
        %2450 = vmax.xlane.f32.xlu0 %v2449
        %v2451 = vpop.xlane.xlu0 %2450
        %v2452 = vsel %vm2439, %v2435, -inf
        %2453 = vmax.xlane.f32.xlu0 %v2452
        %v2454 = vpop.xlane.xlu0 %2453
        %v2455 = vsel %vm2439, %v2436, -inf
        %2456 = vmax.xlane.f32.xlu0 %v2455
        %v2457 = vpop.xlane.xlu0 %2456
        %v2458 = vsel %vm2439, %v2437, -inf
        %2459 = vmax.xlane.f32.xlu0 %v2458
        %v2460 = vpop.xlane.xlu0 %2459
        %v2461 = vsel %vm2439, %v2438, -inf
        %2462 = vmax.xlane.f32.xlu0 %v2461
        %v2463 = vpop.xlane.xlu0 %2462
        %v2464 = vadd.f32 %v2442, %v355
        %v2465 = vadd.f32 %v2445, %v362
        %v2466 = vadd.f32 %v2448, %v369
        %v2467 = vadd.f32 %v2451, %v376
        %v2468 = vadd.f32 %v2454, %v383
        %v2469 = vadd.f32 %v2457, %v390
        %v2470 = vadd.f32 %v2460, %v397
        %v2471 = vadd.f32 %v2463, %v404
        %2473 = vrot.lane.b32.xlu0 %v2423, 32
        %v2474 = vpop.permute.xlu0 %2473
        %2476 = vrot.lane.b32.xlu0 %v2431, 24
        %v2477 = vpop.permute.xlu0 %2476
        %2486 = vset.pattern.permute.xlu0 0
        %2487 = vperm.xlu0 %2486, %v2464
        %v2488 = vpop.permute.xlu0 %2487
        %2489 = vset.pattern.permute.xlu0 0
        %2490 = vperm.xlu0 %2489, %v2465
        %v2491 = vpop.permute.xlu0 %2490
        %2492 = vset.pattern.permute.xlu0 0
        %2493 = vperm.xlu0 %2492, %v2466
        %v2494 = vpop.permute.xlu0 %2493
        %2495 = vset.pattern.permute.xlu0 0
        %2496 = vperm.xlu0 %2495, %v2467
        %v2497 = vpop.permute.xlu0 %2496
        %2498 = vset.pattern.permute.xlu0 0
        %2499 = vperm.xlu0 %2498, %v2468
        %v2500 = vpop.permute.xlu0 %2499
        %2501 = vset.pattern.permute.xlu0 0
        %2502 = vperm.xlu0 %2501, %v2469
        %v2503 = vpop.permute.xlu0 %2502
        %2504 = vset.pattern.permute.xlu0 0
        %2505 = vperm.xlu0 %2504, %v2470
        %v2506 = vpop.permute.xlu0 %2505
        %2507 = vset.pattern.permute.xlu0 0
        %2508 = vperm.xlu0 %2507, %v2471
        %v2509 = vpop.permute.xlu0 %2508
        %v2510 = vperm.slane %v2488, %v457
        %v2511 = vperm.slane %v2491, %v457
        %v2512 = vperm.slane %v2494, %v457
        %v2513 = vperm.slane %v2497, %v457
        %v2514 = vperm.slane %v2500, %v457
        %v2515 = vperm.slane %v2503, %v457
        %v2516 = vperm.slane %v2506, %v457
        %v2517 = vperm.slane %v2509, %v457
        %v2518 = vsel %vm466, %v2511, %v2510
        %v2519 = vsel %vm468, %v2512, %v2518
        %v2520 = vsel %vm470, %v2513, %v2519
        %v2521 = vsel %vm472, %v2514, %v2520
        %v2522 = vsel %vm474, %v2515, %v2521
        %v2523 = vsel %vm476, %v2516, %v2522
        %v2524 = vsel %vm478, %v2517, %v2523
        %v2526 = vsel %vm481, %v2474, 0
        %v2528 = vsel %vm481, %v2477, 0
        %2530 = vmatpush.xpose.msra.mxu0 0.0
        %2531 = vmatpush.xpose.msra.mxu0 0.0
        %2532 = vmatpush.xpose.msra.mxu0 0.0
        %2533 = vmatpush.xpose.msra.mxu0 0.0
        %2534 = vmatpush.xpose.msra.mxu0 0.0
        %2535 = vmatpush.xpose.msra.mxu0 0.0
        %2536 = vmatpush.xpose.msra.mxu0 0.0
        %2537 = vmatpush.xpose.msra.mxu0 0.0
        %2538 = vmatpush.xpose.msra.mxu0 0.0
        %2539 = vmatpush.xpose.msra.mxu0 0.0
        %2540 = vmatpush.xpose.msra.mxu0 0.0
        %2541 = vmatpush.xpose.msra.mxu0 0.0
        %2542 = vmatpush.xpose.msra.mxu0 0.0
        %2543 = vmatpush.xpose.msra.mxu0 0.0
        %2544 = vmatpush.xpose.msra.mxu0 0.0
        %2545 = vmatpush.xpose.msra.mxu0 %v2528
        %2546 = vmatmul.f32.gmra.mxu0 %v2526
        %v2547 = vpop.f32.mrf.mxu0
        %v2548 = vadd.f32 %v2524, %v2547
        %2549 = vdwg.mxu0
        %2551 = vrot.lane.b32.xlu0 %v2424, 32
        %v2552 = vpop.permute.xlu0 %2551
        %2554 = vrot.lane.b32.xlu0 %v2432, 24
        %v2555 = vpop.permute.xlu0 %2554
        %v2556 = vsel %vm481, %v2552, 0
        %v2558 = vsel %vm481, %v2555, 0
        %2560 = vmatpush.xpose.msra.mxu0 0.0
        %2561 = vmatpush.xpose.msra.mxu0 0.0
        %2562 = vmatpush.xpose.msra.mxu0 0.0
        %2563 = vmatpush.xpose.msra.mxu0 0.0
        %2564 = vmatpush.xpose.msra.mxu0 0.0
        %2565 = vmatpush.xpose.msra.mxu0 0.0
        %2566 = vmatpush.xpose.msra.mxu0 0.0
        %2567 = vmatpush.xpose.msra.mxu0 0.0
        %2568 = vmatpush.xpose.msra.mxu0 0.0
        %2569 = vmatpush.xpose.msra.mxu0 0.0
        %2570 = vmatpush.xpose.msra.mxu0 0.0
        %2571 = vmatpush.xpose.msra.mxu0 0.0
        %2572 = vmatpush.xpose.msra.mxu0 0.0
        %2573 = vmatpush.xpose.msra.mxu0 0.0
        %2574 = vmatpush.xpose.msra.mxu0 0.0
        %2575 = vmatpush.xpose.msra.mxu0 %v2558
        %2576 = vmatmul.f32.gmra.mxu0 %v2556
        %v2577 = vpop.f32.mrf.mxu0
        %v2578 = vadd.f32 %v2524, %v2577
        %2579 = vdwg.mxu0
        %2581 = vrot.lane.b32.xlu0 %v2425, 32
        %v2582 = vpop.permute.xlu0 %2581
        %2584 = vrot.lane.b32.xlu0 %v2433, 24
        %v2585 = vpop.permute.xlu0 %2584
        %v2586 = vsel %vm481, %v2582, 0
        %v2588 = vsel %vm481, %v2585, 0
        %2590 = vmatpush.xpose.msra.mxu0 0.0
        %2591 = vmatpush.xpose.msra.mxu0 0.0
        %2592 = vmatpush.xpose.msra.mxu0 0.0
        %2593 = vmatpush.xpose.msra.mxu0 0.0
        %2594 = vmatpush.xpose.msra.mxu0 0.0
        %2595 = vmatpush.xpose.msra.mxu0 0.0
        %2596 = vmatpush.xpose.msra.mxu0 0.0
        %2597 = vmatpush.xpose.msra.mxu0 0.0
        %2598 = vmatpush.xpose.msra.mxu0 0.0
        %2599 = vmatpush.xpose.msra.mxu0 0.0
        %2600 = vmatpush.xpose.msra.mxu0 0.0
        %2601 = vmatpush.xpose.msra.mxu0 0.0
        %2602 = vmatpush.xpose.msra.mxu0 0.0
        %2603 = vmatpush.xpose.msra.mxu0 0.0
        %2604 = vmatpush.xpose.msra.mxu0 0.0
        %2605 = vmatpush.xpose.msra.mxu0 %v2588
        %2606 = vmatmul.f32.gmra.mxu0 %v2586
        %v2607 = vpop.f32.mrf.mxu0
        %v2608 = vadd.f32 %v2524, %v2607
        %2609 = vdwg.mxu0
        %2611 = vrot.lane.b32.xlu0 %v2426, 32
        %v2612 = vpop.permute.xlu0 %2611
        %2614 = vrot.lane.b32.xlu0 %v2434, 24
        %v2615 = vpop.permute.xlu0 %2614
        %v2616 = vsel %vm481, %v2612, 0
        %v2618 = vsel %vm481, %v2615, 0
        %2620 = vmatpush.xpose.msra.mxu0 0.0
        %2621 = vmatpush.xpose.msra.mxu0 0.0
        %2622 = vmatpush.xpose.msra.mxu0 0.0
        %2623 = vmatpush.xpose.msra.mxu0 0.0
        %2624 = vmatpush.xpose.msra.mxu0 0.0
        %2625 = vmatpush.xpose.msra.mxu0 0.0
        %2626 = vmatpush.xpose.msra.mxu0 0.0
        %2627 = vmatpush.xpose.msra.mxu0 0.0
        %2628 = vmatpush.xpose.msra.mxu0 0.0
        %2629 = vmatpush.xpose.msra.mxu0 0.0
        %2630 = vmatpush.xpose.msra.mxu0 0.0
        %2631 = vmatpush.xpose.msra.mxu0 0.0
        %2632 = vmatpush.xpose.msra.mxu0 0.0
        %2633 = vmatpush.xpose.msra.mxu0 0.0
        %2634 = vmatpush.xpose.msra.mxu0 0.0
        %2635 = vmatpush.xpose.msra.mxu0 %v2618
        %2636 = vmatmul.f32.gmra.mxu0 %v2616
        %v2637 = vpop.f32.mrf.mxu0
        %v2638 = vadd.f32 %v2524, %v2637
        %2639 = vdwg.mxu0
        %2641 = vrot.lane.b32.xlu0 %v2427, 32
        %v2642 = vpop.permute.xlu0 %2641
        %2644 = vrot.lane.b32.xlu0 %v2435, 24
        %v2645 = vpop.permute.xlu0 %2644
        %v2646 = vsel %vm481, %v2642, 0
        %v2648 = vsel %vm481, %v2645, 0
        %2650 = vmatpush.xpose.msra.mxu0 0.0
        %2651 = vmatpush.xpose.msra.mxu0 0.0
        %2652 = vmatpush.xpose.msra.mxu0 0.0
        %2653 = vmatpush.xpose.msra.mxu0 0.0
        %2654 = vmatpush.xpose.msra.mxu0 0.0
        %2655 = vmatpush.xpose.msra.mxu0 0.0
        %2656 = vmatpush.xpose.msra.mxu0 0.0
        %2657 = vmatpush.xpose.msra.mxu0 0.0
        %2658 = vmatpush.xpose.msra.mxu0 0.0
        %2659 = vmatpush.xpose.msra.mxu0 0.0
        %2660 = vmatpush.xpose.msra.mxu0 0.0
        %2661 = vmatpush.xpose.msra.mxu0 0.0
        %2662 = vmatpush.xpose.msra.mxu0 0.0
        %2663 = vmatpush.xpose.msra.mxu0 0.0
        %2664 = vmatpush.xpose.msra.mxu0 0.0
        %2665 = vmatpush.xpose.msra.mxu0 %v2648
        %2666 = vmatmul.f32.gmra.mxu0 %v2646
        %v2667 = vpop.f32.mrf.mxu0
        %v2668 = vadd.f32 %v2524, %v2667
        %2669 = vdwg.mxu0
        %2671 = vrot.lane.b32.xlu0 %v2428, 32
        %v2672 = vpop.permute.xlu0 %2671
        %2674 = vrot.lane.b32.xlu0 %v2436, 24
        %v2675 = vpop.permute.xlu0 %2674
        %v2676 = vsel %vm481, %v2672, 0
        %v2678 = vsel %vm481, %v2675, 0
        %2680 = vmatpush.xpose.msra.mxu0 0.0
        %2681 = vmatpush.xpose.msra.mxu0 0.0
        %2682 = vmatpush.xpose.msra.mxu0 0.0
        %2683 = vmatpush.xpose.msra.mxu0 0.0
        %2684 = vmatpush.xpose.msra.mxu0 0.0
        %2685 = vmatpush.xpose.msra.mxu0 0.0
        %2686 = vmatpush.xpose.msra.mxu0 0.0
        %2687 = vmatpush.xpose.msra.mxu0 0.0
        %2688 = vmatpush.xpose.msra.mxu0 0.0
        %2689 = vmatpush.xpose.msra.mxu0 0.0
        %2690 = vmatpush.xpose.msra.mxu0 0.0
        %2691 = vmatpush.xpose.msra.mxu0 0.0
        %2692 = vmatpush.xpose.msra.mxu0 0.0
        %2693 = vmatpush.xpose.msra.mxu0 0.0
        %2694 = vmatpush.xpose.msra.mxu0 0.0
        %2695 = vmatpush.xpose.msra.mxu0 %v2678
        %2696 = vmatmul.f32.gmra.mxu0 %v2676
        %v2697 = vpop.f32.mrf.mxu0
        %v2698 = vadd.f32 %v2524, %v2697
        %2699 = vdwg.mxu0
        %2701 = vrot.lane.b32.xlu0 %v2429, 32
        %v2702 = vpop.permute.xlu0 %2701
        %2704 = vrot.lane.b32.xlu0 %v2437, 24
        %v2705 = vpop.permute.xlu0 %2704
        %v2706 = vsel %vm481, %v2702, 0
        %v2708 = vsel %vm481, %v2705, 0
        %2710 = vmatpush.xpose.msra.mxu0 0.0
        %2711 = vmatpush.xpose.msra.mxu0 0.0
        %2712 = vmatpush.xpose.msra.mxu0 0.0
        %2713 = vmatpush.xpose.msra.mxu0 0.0
        %2714 = vmatpush.xpose.msra.mxu0 0.0
        %2715 = vmatpush.xpose.msra.mxu0 0.0
        %2716 = vmatpush.xpose.msra.mxu0 0.0
        %2717 = vmatpush.xpose.msra.mxu0 0.0
        %2718 = vmatpush.xpose.msra.mxu0 0.0
        %2719 = vmatpush.xpose.msra.mxu0 0.0
        %2720 = vmatpush.xpose.msra.mxu0 0.0
        %2721 = vmatpush.xpose.msra.mxu0 0.0
        %2722 = vmatpush.xpose.msra.mxu0 0.0
        %2723 = vmatpush.xpose.msra.mxu0 0.0
        %2724 = vmatpush.xpose.msra.mxu0 0.0
        %2725 = vmatpush.xpose.msra.mxu0 %v2708
        %2726 = vmatmul.f32.gmra.mxu0 %v2706
        %v2727 = vpop.f32.mrf.mxu0
        %v2728 = vadd.f32 %v2524, %v2727
        %2729 = vdwg.mxu0
        %2731 = vrot.lane.b32.xlu0 %v2430, 32
        %v2732 = vpop.permute.xlu0 %2731
        %2734 = vrot.lane.b32.xlu0 %v2438, 24
        %v2735 = vpop.permute.xlu0 %2734
        %v2736 = vsel %vm481, %v2732, 0
        %v2738 = vsel %vm481, %v2735, 0
        %2740 = vmatpush.xpose.msra.mxu0 0.0
        %2741 = vmatpush.xpose.msra.mxu0 0.0
        %2742 = vmatpush.xpose.msra.mxu0 0.0
        %2743 = vmatpush.xpose.msra.mxu0 0.0
        %2744 = vmatpush.xpose.msra.mxu0 0.0
        %2745 = vmatpush.xpose.msra.mxu0 0.0
        %2746 = vmatpush.xpose.msra.mxu0 0.0
        %2747 = vmatpush.xpose.msra.mxu0 0.0
        %2748 = vmatpush.xpose.msra.mxu0 0.0
        %2749 = vmatpush.xpose.msra.mxu0 0.0
        %2750 = vmatpush.xpose.msra.mxu0 0.0
        %2751 = vmatpush.xpose.msra.mxu0 0.0
        %2752 = vmatpush.xpose.msra.mxu0 0.0
        %2753 = vmatpush.xpose.msra.mxu0 0.0
        %2754 = vmatpush.xpose.msra.mxu0 0.0
        %2755 = vmatpush.xpose.msra.mxu0 %v2738
        %2756 = vmatmul.f32.gmra.mxu0 %v2736
        %v2757 = vpop.f32.mrf.mxu0
        %v2758 = vadd.f32 %v2524, %v2757
        %2759 = vdwg.mxu0
        %v2760 = vsel %vm481, %v2548, -inf
        %2761 = vmax.xlane.f32.xlu0 %v2760
        %v2762 = vpop.xlane.xlu0 %2761
        %v2763 = vsel %vm481, %v2578, -inf
        %2764 = vmax.xlane.f32.xlu0 %v2763
        %v2765 = vpop.xlane.xlu0 %2764
        %v2766 = vsel %vm481, %v2608, -inf
        %2767 = vmax.xlane.f32.xlu0 %v2766
        %v2768 = vpop.xlane.xlu0 %2767
        %v2769 = vsel %vm481, %v2638, -inf
        %2770 = vmax.xlane.f32.xlu0 %v2769
        %v2771 = vpop.xlane.xlu0 %2770
        %v2772 = vsel %vm481, %v2668, -inf
        %2773 = vmax.xlane.f32.xlu0 %v2772
        %v2774 = vpop.xlane.xlu0 %2773
        %v2775 = vsel %vm481, %v2698, -inf
        %2776 = vmax.xlane.f32.xlu0 %v2775
        %v2777 = vpop.xlane.xlu0 %2776
        %v2778 = vsel %vm481, %v2728, -inf
        %2779 = vmax.xlane.f32.xlu0 %v2778
        %v2780 = vpop.xlane.xlu0 %2779
        %v2781 = vsel %vm481, %v2758, -inf
        %2782 = vmax.xlane.f32.xlu0 %v2781
        %v2783 = vpop.xlane.xlu0 %2782
        %v2784 = vsub.f32 %v2548, %v2762
        %v2785 = vsub.f32 %v2578, %v2765
        %v2786 = vsub.f32 %v2608, %v2768
        %v2787 = vsub.f32 %v2638, %v2771
        %v2788 = vsub.f32 %v2668, %v2774
        %v2789 = vsub.f32 %v2698, %v2777
        %v2790 = vsub.f32 %v2728, %v2780
        %v2791 = vsub.f32 %v2758, %v2783
        %v2792 = vmul.f32 %v2784, 1.442695
        %v2793 = vpow.pop %v2792
        %v2794 = vmul.f32 %v2785, 1.442695
        %v2795 = vpow.pop %v2794
        %v2796 = vmul.f32 %v2786, 1.442695
        %v2797 = vpow.pop %v2796
        %v2798 = vmul.f32 %v2787, 1.442695
        %v2799 = vpow.pop %v2798
        %v2800 = vmul.f32 %v2788, 1.442695
        %v2801 = vpow.pop %v2800
        %v2802 = vmul.f32 %v2789, 1.442695
        %v2803 = vpow.pop %v2802
        %v2804 = vmul.f32 %v2790, 1.442695
        %v2805 = vpow.pop %v2804
        %v2806 = vmul.f32 %v2791, 1.442695
        %v2807 = vpow.pop %v2806
        %v2808 = vsel %vm481, %v2793, 0.0
        %2809 = vadd.xlane.f32.xlu0 %v2808
        %v2810 = vpop.xlane.xlu0 %2809
        %v2811 = vsel %vm481, %v2795, 0.0
        %2812 = vadd.xlane.f32.xlu0 %v2811
        %v2813 = vpop.xlane.xlu0 %2812
        %v2814 = vsel %vm481, %v2797, 0.0
        %2815 = vadd.xlane.f32.xlu0 %v2814
        %v2816 = vpop.xlane.xlu0 %2815
        %v2817 = vsel %vm481, %v2799, 0.0
        %2818 = vadd.xlane.f32.xlu0 %v2817
        %v2819 = vpop.xlane.xlu0 %2818
        %v2820 = vsel %vm481, %v2801, 0.0
        %2821 = vadd.xlane.f32.xlu0 %v2820
        %v2822 = vpop.xlane.xlu0 %2821
        %v2823 = vsel %vm481, %v2803, 0.0
        %2824 = vadd.xlane.f32.xlu0 %v2823
        %v2825 = vpop.xlane.xlu0 %2824
        %v2826 = vsel %vm481, %v2805, 0.0
        %2827 = vadd.xlane.f32.xlu0 %v2826
        %v2828 = vpop.xlane.xlu0 %2827
        %v2829 = vsel %vm481, %v2807, 0.0
        %2830 = vadd.xlane.f32.xlu0 %v2829
        %v2831 = vpop.xlane.xlu0 %2830
        %v2832 = vrcp.pop %v2810
        %v2833 = vrcp.pop %v2813
        %v2834 = vrcp.pop %v2816
        %v2835 = vrcp.pop %v2819
        %v2836 = vrcp.pop %v2822
        %v2837 = vrcp.pop %v2825
        %v2838 = vrcp.pop %v2828
        %v2839 = vrcp.pop %v2831
        %v2840 = vmul.f32 %v2793, %v2832
        %v2841 = vmul.f32 %v2795, %v2833
        %v2842 = vmul.f32 %v2797, %v2834
        %v2843 = vmul.f32 %v2799, %v2835
        %v2844 = vmul.f32 %v2801, %v2836
        %v2845 = vmul.f32 %v2803, %v2837
        %v2846 = vmul.f32 %v2805, %v2838
        %v2847 = vmul.f32 %v2807, %v2839
        %2848 = vrot.lane.b32.xlu0 %v2431, 16
        %v2849 = vpop.permute.xlu0 %2848
        %v2852 = vsel %vm481, %v2840, 0
        %2854 = vmatpush.msra.mxu0 0.0
        %2855 = vmatpush.msra.mxu0 0.0
        %2856 = vmatpush.msra.mxu0 0.0
        %2857 = vmatpush.msra.mxu0 0.0
        %2858 = vmatpush.msra.mxu0 0.0
        %2859 = vmatpush.msra.mxu0 0.0
        %2860 = vmatpush.msra.mxu0 0.0
        %2861 = vmatpush.msra.mxu0 0.0
        %2862 = vmatpush.msra.mxu0 0.0
        %2863 = vmatpush.msra.mxu0 0.0
        %2864 = vmatpush.msra.mxu0 0.0
        %2865 = vmatpush.msra.mxu0 0.0
        %2866 = vmatpush.msra.mxu0 0.0
        %2867 = vmatpush.msra.mxu0 0.0
        %2868 = vmatpush.msra.mxu0 0.0
        %2869 = vmatpush.msra.mxu0 %v2849
        %2870 = vmatmul.f32.gmra.mxu0 %v2852
        %v2871 = vpop.f32.mrf.mxu0
        %v2872 = vadd.f32 0.0, %v2871
        %2873 = vdwg.mxu0
        %2874 = vrot.lane.b32.xlu0 %v2432, 16
        %v2875 = vpop.permute.xlu0 %2874
        %v2878 = vsel %vm481, %v2841, 0
        %2880 = vmatpush.msra.mxu0 0.0
        %2881 = vmatpush.msra.mxu0 0.0
        %2882 = vmatpush.msra.mxu0 0.0
        %2883 = vmatpush.msra.mxu0 0.0
        %2884 = vmatpush.msra.mxu0 0.0
        %2885 = vmatpush.msra.mxu0 0.0
        %2886 = vmatpush.msra.mxu0 0.0
        %2887 = vmatpush.msra.mxu0 0.0
        %2888 = vmatpush.msra.mxu0 0.0
        %2889 = vmatpush.msra.mxu0 0.0
        %2890 = vmatpush.msra.mxu0 0.0
        %2891 = vmatpush.msra.mxu0 0.0
        %2892 = vmatpush.msra.mxu0 0.0
        %2893 = vmatpush.msra.mxu0 0.0
        %2894 = vmatpush.msra.mxu0 0.0
        %2895 = vmatpush.msra.mxu0 %v2875
        %2896 = vmatmul.f32.gmra.mxu0 %v2878
        %v2897 = vpop.f32.mrf.mxu0
        %v2898 = vadd.f32 0.0, %v2897
        %2899 = vdwg.mxu0
        %2900 = vrot.lane.b32.xlu0 %v2433, 16
        %v2901 = vpop.permute.xlu0 %2900
        %v2904 = vsel %vm481, %v2842, 0
        %2906 = vmatpush.msra.mxu0 0.0
        %2907 = vmatpush.msra.mxu0 0.0
        %2908 = vmatpush.msra.mxu0 0.0
        %2909 = vmatpush.msra.mxu0 0.0
        %2910 = vmatpush.msra.mxu0 0.0
        %2911 = vmatpush.msra.mxu0 0.0
        %2912 = vmatpush.msra.mxu0 0.0
        %2913 = vmatpush.msra.mxu0 0.0
        %2914 = vmatpush.msra.mxu0 0.0
        %2915 = vmatpush.msra.mxu0 0.0
        %2916 = vmatpush.msra.mxu0 0.0
        %2917 = vmatpush.msra.mxu0 0.0
        %2918 = vmatpush.msra.mxu0 0.0
        %2919 = vmatpush.msra.mxu0 0.0
        %2920 = vmatpush.msra.mxu0 0.0
        %2921 = vmatpush.msra.mxu0 %v2901
        %2922 = vmatmul.f32.gmra.mxu0 %v2904
        %v2923 = vpop.f32.mrf.mxu0
        %v2924 = vadd.f32 0.0, %v2923
        %2925 = vdwg.mxu0
        %2926 = vrot.lane.b32.xlu0 %v2434, 16
        %v2927 = vpop.permute.xlu0 %2926
        %v2930 = vsel %vm481, %v2843, 0
        %2932 = vmatpush.msra.mxu0 0.0
        %2933 = vmatpush.msra.mxu0 0.0
        %2934 = vmatpush.msra.mxu0 0.0
        %2935 = vmatpush.msra.mxu0 0.0
        %2936 = vmatpush.msra.mxu0 0.0
        %2937 = vmatpush.msra.mxu0 0.0
        %2938 = vmatpush.msra.mxu0 0.0
        %2939 = vmatpush.msra.mxu0 0.0
        %2940 = vmatpush.msra.mxu0 0.0
        %2941 = vmatpush.msra.mxu0 0.0
        %2942 = vmatpush.msra.mxu0 0.0
        %2943 = vmatpush.msra.mxu0 0.0
        %2944 = vmatpush.msra.mxu0 0.0
        %2945 = vmatpush.msra.mxu0 0.0
        %2946 = vmatpush.msra.mxu0 0.0
        %2947 = vmatpush.msra.mxu0 %v2927
        %2948 = vmatmul.f32.gmra.mxu0 %v2930
        %v2949 = vpop.f32.mrf.mxu0
        %v2950 = vadd.f32 0.0, %v2949
        %2951 = vdwg.mxu0
        %2952 = vrot.lane.b32.xlu0 %v2435, 16
        %v2953 = vpop.permute.xlu0 %2952
        %v2956 = vsel %vm481, %v2844, 0
        %2958 = vmatpush.msra.mxu0 0.0
        %2959 = vmatpush.msra.mxu0 0.0
        %2960 = vmatpush.msra.mxu0 0.0
        %2961 = vmatpush.msra.mxu0 0.0
        %2962 = vmatpush.msra.mxu0 0.0
        %2963 = vmatpush.msra.mxu0 0.0
        %2964 = vmatpush.msra.mxu0 0.0
        %2965 = vmatpush.msra.mxu0 0.0
        %2966 = vmatpush.msra.mxu0 0.0
        %2967 = vmatpush.msra.mxu0 0.0
        %2968 = vmatpush.msra.mxu0 0.0
        %2969 = vmatpush.msra.mxu0 0.0
        %2970 = vmatpush.msra.mxu0 0.0
        %2971 = vmatpush.msra.mxu0 0.0
        %2972 = vmatpush.msra.mxu0 0.0
        %2973 = vmatpush.msra.mxu0 %v2953
        %2974 = vmatmul.f32.gmra.mxu0 %v2956
        %v2975 = vpop.f32.mrf.mxu0
        %v2976 = vadd.f32 0.0, %v2975
        %2977 = vdwg.mxu0
        %2978 = vrot.lane.b32.xlu0 %v2436, 16
        %v2979 = vpop.permute.xlu0 %2978
        %v2982 = vsel %vm481, %v2845, 0
        %2984 = vmatpush.msra.mxu0 0.0
        %2985 = vmatpush.msra.mxu0 0.0
        %2986 = vmatpush.msra.mxu0 0.0
        %2987 = vmatpush.msra.mxu0 0.0
        %2988 = vmatpush.msra.mxu0 0.0
        %2989 = vmatpush.msra.mxu0 0.0
        %2990 = vmatpush.msra.mxu0 0.0
        %2991 = vmatpush.msra.mxu0 0.0
        %2992 = vmatpush.msra.mxu0 0.0
        %2993 = vmatpush.msra.mxu0 0.0
        %2994 = vmatpush.msra.mxu0 0.0
        %2995 = vmatpush.msra.mxu0 0.0
        %2996 = vmatpush.msra.mxu0 0.0
        %2997 = vmatpush.msra.mxu0 0.0
        %2998 = vmatpush.msra.mxu0 0.0
        %2999 = vmatpush.msra.mxu0 %v2979
        %3000 = vmatmul.f32.gmra.mxu0 %v2982
        %v3001 = vpop.f32.mrf.mxu0
        %v3002 = vadd.f32 0.0, %v3001
        %3003 = vdwg.mxu0
        %3004 = vrot.lane.b32.xlu0 %v2437, 16
        %v3005 = vpop.permute.xlu0 %3004
        %v3008 = vsel %vm481, %v2846, 0
        %3010 = vmatpush.msra.mxu0 0.0
        %3011 = vmatpush.msra.mxu0 0.0
        %3012 = vmatpush.msra.mxu0 0.0
        %3013 = vmatpush.msra.mxu0 0.0
        %3014 = vmatpush.msra.mxu0 0.0
        %3015 = vmatpush.msra.mxu0 0.0
        %3016 = vmatpush.msra.mxu0 0.0
        %3017 = vmatpush.msra.mxu0 0.0
        %3018 = vmatpush.msra.mxu0 0.0
        %3019 = vmatpush.msra.mxu0 0.0
        %3020 = vmatpush.msra.mxu0 0.0
        %3021 = vmatpush.msra.mxu0 0.0
        %3022 = vmatpush.msra.mxu0 0.0
        %3023 = vmatpush.msra.mxu0 0.0
        %3024 = vmatpush.msra.mxu0 0.0
        %3025 = vmatpush.msra.mxu0 %v3005
        %3026 = vmatmul.f32.gmra.mxu0 %v3008
        %v3027 = vpop.f32.mrf.mxu0
        %v3028 = vadd.f32 0.0, %v3027
        %3029 = vdwg.mxu0
        %3030 = vrot.lane.b32.xlu0 %v2438, 16
        %v3031 = vpop.permute.xlu0 %3030
        %v3034 = vsel %vm481, %v2847, 0
        %3036 = vmatpush.msra.mxu0 0.0
        %3037 = vmatpush.msra.mxu0 0.0
        %3038 = vmatpush.msra.mxu0 0.0
        %3039 = vmatpush.msra.mxu0 0.0
        %3040 = vmatpush.msra.mxu0 0.0
        %3041 = vmatpush.msra.mxu0 0.0
        %3042 = vmatpush.msra.mxu0 0.0
        %3043 = vmatpush.msra.mxu0 0.0
        %3044 = vmatpush.msra.mxu0 0.0
        %3045 = vmatpush.msra.mxu0 0.0
        %3046 = vmatpush.msra.mxu0 0.0
        %3047 = vmatpush.msra.mxu0 0.0
        %3048 = vmatpush.msra.mxu0 0.0
        %3049 = vmatpush.msra.mxu0 0.0
        %3050 = vmatpush.msra.mxu0 0.0
        %3051 = vmatpush.msra.mxu0 %v3031
        %3052 = vmatmul.f32.gmra.mxu0 %v3034
        %v3053 = vpop.f32.mrf.mxu0
        %v3054 = vadd.f32 0.0, %v3053
        %3055 = vdwg.mxu0
        %v3056 = vpack.c.bf16 %v2898, %v2872
        %v3057 = vpack.c.bf16 %v2950, %v2924
        %v3058 = vpack.c.bf16 %v3002, %v2976
        %v3059 = vpack.c.bf16 %v3054, %v3028
        %s3060 = scalar_lea.vmem %s4, 12
        %v3061 = vld [vmem:[%s3060] sm:$0xf]
        %v3063 = vsel %vm481, %v3056, 0
        %v3066 = vsel %vm481, %v3057, 0
        %v3069 = vsel %vm481, %v3058, 0
        %v3072 = vsel %vm481, %v3059, 0
        %v3075 = vsel %vm1655, %v3061, 0
        %3077 = vmatpush.bf16.msra.mxu0 0
        %3078 = vmatpush.bf16.msra.mxu0 0
        %3079 = vmatpush.bf16.msra.mxu0 0
        %3080 = vmatpush.bf16.msra.mxu0 0
        %3081 = vmatpush.bf16.msra.mxu0 0
        %3082 = vmatpush.bf16.msra.mxu0 0
        %3083 = vmatpush.bf16.msra.mxu0 0
        %3084 = vmatpush.bf16.msra.mxu0 %v3075
        %3085 = vmatmul.bf16.gmra.mxu0 %v3063
        %v3086 = vpop.f32.mrf.mxu0
        %v3087 = vadd.f32 0.0, %v3086
        %v3088 = vpop.f32.mrf.mxu0
        %v3089 = vadd.f32 0.0, %v3088
        %3090 = vmatmul.bf16.gmra.mxu0 %v3066
        %v3091 = vpop.f32.mrf.mxu0
        %v3092 = vadd.f32 0.0, %v3091
        %v3093 = vpop.f32.mrf.mxu0
        %v3094 = vadd.f32 0.0, %v3093
        %3095 = vmatmul.bf16.gmra.mxu0 %v3069
        %v3096 = vpop.f32.mrf.mxu0
        %v3097 = vadd.f32 0.0, %v3096
        %v3098 = vpop.f32.mrf.mxu0
        %v3099 = vadd.f32 0.0, %v3098
        %3100 = vmatmul.bf16.gmra.mxu0 %v3072
        %v3101 = vpop.f32.mrf.mxu0
        %v3102 = vadd.f32 0.0, %v3101
        %v3103 = vpop.f32.mrf.mxu0
        %v3104 = vadd.f32 0.0, %v3103
        %3105 = vdwg.mxu0
        %v3106 = vadd.f32 %v2415, %v3087
        %v3107 = vadd.f32 %v2416, %v3089
        %v3108 = vadd.f32 %v2417, %v3092
        %v3109 = vadd.f32 %v2418, %v3094
        %v3110 = vadd.f32 %v2419, %v3097
        %v3111 = vadd.f32 %v2420, %v3099
        %v3112 = vadd.f32 %v2421, %v3102
        %v3113 = vadd.f32 %v2422, %v3104
        %v3114 = vld [vmem:[%s295 + $0x8] sm:$0xff]
        %v3115 = vld [vmem:[%s295 + $0x18] sm:$0xff]
        %v3116 = vld [vmem:[%s295 + $0x28] sm:$0xff]
        %v3117 = vld [vmem:[%s295 + $0x38] sm:$0xff]
        %v3118 = vld [vmem:[%s295 + $0x48] sm:$0xff]
        %v3119 = vld [vmem:[%s295 + $0x58] sm:$0xff]
        %v3120 = vld [vmem:[%s295 + $0x68] sm:$0xff]
        %v3121 = vld [vmem:[%s295 + $0x78] sm:$0xff]
        %v3122 = vsel %vm323, %v3114, -inf
        %3123 = vmax.xlane.f32.xlu0 %v3122
        %v3124 = vpop.xlane.xlu0 %3123
        %v3125 = vsel %vm323, %v3115, -inf
        %3126 = vmax.xlane.f32.xlu0 %v3125
        %v3127 = vpop.xlane.xlu0 %3126
        %v3128 = vsel %vm323, %v3116, -inf
        %3129 = vmax.xlane.f32.xlu0 %v3128
        %v3130 = vpop.xlane.xlu0 %3129
        %v3131 = vsel %vm323, %v3117, -inf
        %3132 = vmax.xlane.f32.xlu0 %v3131
        %v3133 = vpop.xlane.xlu0 %3132
        %v3134 = vsel %vm323, %v3118, -inf
        %3135 = vmax.xlane.f32.xlu0 %v3134
        %v3136 = vpop.xlane.xlu0 %3135
        %v3137 = vsel %vm323, %v3119, -inf
        %3138 = vmax.xlane.f32.xlu0 %v3137
        %v3139 = vpop.xlane.xlu0 %3138
        %v3140 = vsel %vm323, %v3120, -inf
        %3141 = vmax.xlane.f32.xlu0 %v3140
        %v3142 = vpop.xlane.xlu0 %3141
        %v3143 = vsel %vm323, %v3121, -inf
        %3144 = vmax.xlane.f32.xlu0 %v3143
        %v3145 = vpop.xlane.xlu0 %3144
        %v3147 = vperm.slane %v306, 0
        %v3148 = vlaneseq
        %v3149 = vshrl.u32 %v3148, 7
        %3151 = vset.pattern.permute.xlu0 %v3149
        %3152 = vperm.xlu0 %3151, %v3147
        %v3153 = vpop.permute.xlu0 %3152
        %v3154 = vperm.slane %v306, 1
        %v3155 = vlaneseq
        %v3156 = vshrl.u32 %v3155, 7
        %3158 = vset.pattern.permute.xlu0 %v3156
        %3159 = vperm.xlu0 %3158, %v3154
        %v3160 = vpop.permute.xlu0 %3159
        %v3161 = vperm.slane %v306, 2
        %v3162 = vlaneseq
        %v3163 = vshrl.u32 %v3162, 7
        %3165 = vset.pattern.permute.xlu0 %v3163
        %3166 = vperm.xlu0 %3165, %v3161
        %v3167 = vpop.permute.xlu0 %3166
        %v3168 = vperm.slane %v306, 3
        %v3169 = vlaneseq
        %v3170 = vshrl.u32 %v3169, 7
        %3172 = vset.pattern.permute.xlu0 %v3170
        %3173 = vperm.xlu0 %3172, %v3168
        %v3174 = vpop.permute.xlu0 %3173
        %v3175 = vperm.slane %v306, 4
        %v3176 = vlaneseq
        %v3177 = vshrl.u32 %v3176, 7
        %3179 = vset.pattern.permute.xlu0 %v3177
        %3180 = vperm.xlu0 %3179, %v3175
        %v3181 = vpop.permute.xlu0 %3180
        %v3182 = vperm.slane %v306, 5
        %v3183 = vlaneseq
        %v3184 = vshrl.u32 %v3183, 7
        %3186 = vset.pattern.permute.xlu0 %v3184
        %3187 = vperm.xlu0 %3186, %v3182
        %v3188 = vpop.permute.xlu0 %3187
        %v3189 = vperm.slane %v306, 6
        %v3190 = vlaneseq
        %v3191 = vshrl.u32 %v3190, 7
        %3193 = vset.pattern.permute.xlu0 %v3191
        %3194 = vperm.xlu0 %3193, %v3189
        %v3195 = vpop.permute.xlu0 %3194
        %v3196 = vperm.slane %v306, 7
        %v3197 = vlaneseq
        %v3198 = vshrl.u32 %v3197, 7
        %3200 = vset.pattern.permute.xlu0 %v3198
        %3201 = vperm.xlu0 %3200, %v3196
        %v3202 = vpop.permute.xlu0 %3201
        %v3211 = vadd.f32 %v3124, %v3153
        %v3212 = vadd.f32 %v3127, %v3160
        %v3213 = vadd.f32 %v3130, %v3167
        %v3214 = vadd.f32 %v3133, %v3174
        %v3215 = vadd.f32 %v3136, %v3181
        %v3216 = vadd.f32 %v3139, %v3188
        %v3217 = vadd.f32 %v3142, %v3195
        %v3218 = vadd.f32 %v3145, %v3202
        %3220 = vrot.lane.b32.xlu0 %v3114, 120
        %v3221 = vpop.permute.xlu0 %3220
        %3230 = vset.pattern.permute.xlu0 0
        %3231 = vperm.xlu0 %3230, %v3211
        %v3232 = vpop.permute.xlu0 %3231
        %3233 = vset.pattern.permute.xlu0 0
        %3234 = vperm.xlu0 %3233, %v3212
        %v3235 = vpop.permute.xlu0 %3234
        %3236 = vset.pattern.permute.xlu0 0
        %3237 = vperm.xlu0 %3236, %v3213
        %v3238 = vpop.permute.xlu0 %3237
        %3239 = vset.pattern.permute.xlu0 0
        %3240 = vperm.xlu0 %3239, %v3214
        %v3241 = vpop.permute.xlu0 %3240
        %3242 = vset.pattern.permute.xlu0 0
        %3243 = vperm.xlu0 %3242, %v3215
        %v3244 = vpop.permute.xlu0 %3243
        %3245 = vset.pattern.permute.xlu0 0
        %3246 = vperm.xlu0 %3245, %v3216
        %v3247 = vpop.permute.xlu0 %3246
        %3248 = vset.pattern.permute.xlu0 0
        %3249 = vperm.xlu0 %3248, %v3217
        %v3250 = vpop.permute.xlu0 %3249
        %3251 = vset.pattern.permute.xlu0 0
        %3252 = vperm.xlu0 %3251, %v3218
        %v3253 = vpop.permute.xlu0 %3252
        %v3254 = vperm.slane %v3232, %v457
        %v3255 = vperm.slane %v3235, %v457
        %v3256 = vperm.slane %v3238, %v457
        %v3257 = vperm.slane %v3241, %v457
        %v3258 = vperm.slane %v3244, %v457
        %v3259 = vperm.slane %v3247, %v457
        %v3260 = vperm.slane %v3250, %v457
        %v3261 = vperm.slane %v3253, %v457
        %v3262 = vsel %vm466, %v3255, %v3254
        %v3263 = vsel %vm468, %v3256, %v3262
        %v3264 = vsel %vm470, %v3257, %v3263
        %v3265 = vsel %vm472, %v3258, %v3264
        %v3266 = vsel %vm474, %v3259, %v3265
        %v3267 = vsel %vm476, %v3260, %v3266
        %v3268 = vsel %vm478, %v3261, %v3267
        %v3270 = vsel %vm481, %v3114, 0
        %v3272 = vsel %vm481, %v3221, 0
        %3274 = vmatpush.xpose.msra.mxu0 0.0
        %3275 = vmatpush.xpose.msra.mxu0 0.0
        %3276 = vmatpush.xpose.msra.mxu0 0.0
        %3277 = vmatpush.xpose.msra.mxu0 0.0
        %3278 = vmatpush.xpose.msra.mxu0 0.0
        %3279 = vmatpush.xpose.msra.mxu0 0.0
        %3280 = vmatpush.xpose.msra.mxu0 0.0
        %3281 = vmatpush.xpose.msra.mxu0 0.0
        %3282 = vmatpush.xpose.msra.mxu0 0.0
        %3283 = vmatpush.xpose.msra.mxu0 0.0
        %3284 = vmatpush.xpose.msra.mxu0 0.0
        %3285 = vmatpush.xpose.msra.mxu0 0.0
        %3286 = vmatpush.xpose.msra.mxu0 0.0
        %3287 = vmatpush.xpose.msra.mxu0 0.0
        %3288 = vmatpush.xpose.msra.mxu0 0.0
        %3289 = vmatpush.xpose.msra.mxu0 %v3272
        %3290 = vmatmul.f32.gmra.mxu0 %v3270
        %v3291 = vpop.f32.mrf.mxu0
        %v3292 = vadd.f32 %v3268, %v3291
        %3293 = vdwg.mxu0
        %3295 = vrot.lane.b32.xlu0 %v3115, 120
        %v3296 = vpop.permute.xlu0 %3295
        %v3297 = vsel %vm481, %v3115, 0
        %v3299 = vsel %vm481, %v3296, 0
        %3301 = vmatpush.xpose.msra.mxu0 0.0
        %3302 = vmatpush.xpose.msra.mxu0 0.0
        %3303 = vmatpush.xpose.msra.mxu0 0.0
        %3304 = vmatpush.xpose.msra.mxu0 0.0
        %3305 = vmatpush.xpose.msra.mxu0 0.0
        %3306 = vmatpush.xpose.msra.mxu0 0.0
        %3307 = vmatpush.xpose.msra.mxu0 0.0
        %3308 = vmatpush.xpose.msra.mxu0 0.0
        %3309 = vmatpush.xpose.msra.mxu0 0.0
        %3310 = vmatpush.xpose.msra.mxu0 0.0
        %3311 = vmatpush.xpose.msra.mxu0 0.0
        %3312 = vmatpush.xpose.msra.mxu0 0.0
        %3313 = vmatpush.xpose.msra.mxu0 0.0
        %3314 = vmatpush.xpose.msra.mxu0 0.0
        %3315 = vmatpush.xpose.msra.mxu0 0.0
        %3316 = vmatpush.xpose.msra.mxu0 %v3299
        %3317 = vmatmul.f32.gmra.mxu0 %v3297
        %v3318 = vpop.f32.mrf.mxu0
        %v3319 = vadd.f32 %v3268, %v3318
        %3320 = vdwg.mxu0
        %3322 = vrot.lane.b32.xlu0 %v3116, 120
        %v3323 = vpop.permute.xlu0 %3322
        %v3324 = vsel %vm481, %v3116, 0
        %v3326 = vsel %vm481, %v3323, 0
        %3328 = vmatpush.xpose.msra.mxu0 0.0
        %3329 = vmatpush.xpose.msra.mxu0 0.0
        %3330 = vmatpush.xpose.msra.mxu0 0.0
        %3331 = vmatpush.xpose.msra.mxu0 0.0
        %3332 = vmatpush.xpose.msra.mxu0 0.0
        %3333 = vmatpush.xpose.msra.mxu0 0.0
        %3334 = vmatpush.xpose.msra.mxu0 0.0
        %3335 = vmatpush.xpose.msra.mxu0 0.0
        %3336 = vmatpush.xpose.msra.mxu0 0.0
        %3337 = vmatpush.xpose.msra.mxu0 0.0
        %3338 = vmatpush.xpose.msra.mxu0 0.0
        %3339 = vmatpush.xpose.msra.mxu0 0.0
        %3340 = vmatpush.xpose.msra.mxu0 0.0
        %3341 = vmatpush.xpose.msra.mxu0 0.0
        %3342 = vmatpush.xpose.msra.mxu0 0.0
        %3343 = vmatpush.xpose.msra.mxu0 %v3326
        %3344 = vmatmul.f32.gmra.mxu0 %v3324
        %v3345 = vpop.f32.mrf.mxu0
        %v3346 = vadd.f32 %v3268, %v3345
        %3347 = vdwg.mxu0
        %3349 = vrot.lane.b32.xlu0 %v3117, 120
        %v3350 = vpop.permute.xlu0 %3349
        %v3351 = vsel %vm481, %v3117, 0
        %v3353 = vsel %vm481, %v3350, 0
        %3355 = vmatpush.xpose.msra.mxu0 0.0
        %3356 = vmatpush.xpose.msra.mxu0 0.0
        %3357 = vmatpush.xpose.msra.mxu0 0.0
        %3358 = vmatpush.xpose.msra.mxu0 0.0
        %3359 = vmatpush.xpose.msra.mxu0 0.0
        %3360 = vmatpush.xpose.msra.mxu0 0.0
        %3361 = vmatpush.xpose.msra.mxu0 0.0
        %3362 = vmatpush.xpose.msra.mxu0 0.0
        %3363 = vmatpush.xpose.msra.mxu0 0.0
        %3364 = vmatpush.xpose.msra.mxu0 0.0
        %3365 = vmatpush.xpose.msra.mxu0 0.0
        %3366 = vmatpush.xpose.msra.mxu0 0.0
        %3367 = vmatpush.xpose.msra.mxu0 0.0
        %3368 = vmatpush.xpose.msra.mxu0 0.0
        %3369 = vmatpush.xpose.msra.mxu0 0.0
        %3370 = vmatpush.xpose.msra.mxu0 %v3353
        %3371 = vmatmul.f32.gmra.mxu0 %v3351
        %v3372 = vpop.f32.mrf.mxu0
        %v3373 = vadd.f32 %v3268, %v3372
        %3374 = vdwg.mxu0
        %3376 = vrot.lane.b32.xlu0 %v3118, 120
        %v3377 = vpop.permute.xlu0 %3376
        %v3378 = vsel %vm481, %v3118, 0
        %v3380 = vsel %vm481, %v3377, 0
        %3382 = vmatpush.xpose.msra.mxu0 0.0
        %3383 = vmatpush.xpose.msra.mxu0 0.0
        %3384 = vmatpush.xpose.msra.mxu0 0.0
        %3385 = vmatpush.xpose.msra.mxu0 0.0
        %3386 = vmatpush.xpose.msra.mxu0 0.0
        %3387 = vmatpush.xpose.msra.mxu0 0.0
        %3388 = vmatpush.xpose.msra.mxu0 0.0
        %3389 = vmatpush.xpose.msra.mxu0 0.0
        %3390 = vmatpush.xpose.msra.mxu0 0.0
        %3391 = vmatpush.xpose.msra.mxu0 0.0
        %3392 = vmatpush.xpose.msra.mxu0 0.0
        %3393 = vmatpush.xpose.msra.mxu0 0.0
        %3394 = vmatpush.xpose.msra.mxu0 0.0
        %3395 = vmatpush.xpose.msra.mxu0 0.0
        %3396 = vmatpush.xpose.msra.mxu0 0.0
        %3397 = vmatpush.xpose.msra.mxu0 %v3380
        %3398 = vmatmul.f32.gmra.mxu0 %v3378
        %v3399 = vpop.f32.mrf.mxu0
        %v3400 = vadd.f32 %v3268, %v3399
        %3401 = vdwg.mxu0
        %3403 = vrot.lane.b32.xlu0 %v3119, 120
        %v3404 = vpop.permute.xlu0 %3403
        %v3405 = vsel %vm481, %v3119, 0
        %v3407 = vsel %vm481, %v3404, 0
        %3409 = vmatpush.xpose.msra.mxu0 0.0
        %3410 = vmatpush.xpose.msra.mxu0 0.0
        %3411 = vmatpush.xpose.msra.mxu0 0.0
        %3412 = vmatpush.xpose.msra.mxu0 0.0
        %3413 = vmatpush.xpose.msra.mxu0 0.0
        %3414 = vmatpush.xpose.msra.mxu0 0.0
        %3415 = vmatpush.xpose.msra.mxu0 0.0
        %3416 = vmatpush.xpose.msra.mxu0 0.0
        %3417 = vmatpush.xpose.msra.mxu0 0.0
        %3418 = vmatpush.xpose.msra.mxu0 0.0
        %3419 = vmatpush.xpose.msra.mxu0 0.0
        %3420 = vmatpush.xpose.msra.mxu0 0.0
        %3421 = vmatpush.xpose.msra.mxu0 0.0
        %3422 = vmatpush.xpose.msra.mxu0 0.0
        %3423 = vmatpush.xpose.msra.mxu0 0.0
        %3424 = vmatpush.xpose.msra.mxu0 %v3407
        %3425 = vmatmul.f32.gmra.mxu0 %v3405
        %v3426 = vpop.f32.mrf.mxu0
        %v3427 = vadd.f32 %v3268, %v3426
        %3428 = vdwg.mxu0
        %3430 = vrot.lane.b32.xlu0 %v3120, 120
        %v3431 = vpop.permute.xlu0 %3430
        %v3432 = vsel %vm481, %v3120, 0
        %v3434 = vsel %vm481, %v3431, 0
        %3436 = vmatpush.xpose.msra.mxu0 0.0
        %3437 = vmatpush.xpose.msra.mxu0 0.0
        %3438 = vmatpush.xpose.msra.mxu0 0.0
        %3439 = vmatpush.xpose.msra.mxu0 0.0
        %3440 = vmatpush.xpose.msra.mxu0 0.0
        %3441 = vmatpush.xpose.msra.mxu0 0.0
        %3442 = vmatpush.xpose.msra.mxu0 0.0
        %3443 = vmatpush.xpose.msra.mxu0 0.0
        %3444 = vmatpush.xpose.msra.mxu0 0.0
        %3445 = vmatpush.xpose.msra.mxu0 0.0
        %3446 = vmatpush.xpose.msra.mxu0 0.0
        %3447 = vmatpush.xpose.msra.mxu0 0.0
        %3448 = vmatpush.xpose.msra.mxu0 0.0
        %3449 = vmatpush.xpose.msra.mxu0 0.0
        %3450 = vmatpush.xpose.msra.mxu0 0.0
        %3451 = vmatpush.xpose.msra.mxu0 %v3434
        %3452 = vmatmul.f32.gmra.mxu0 %v3432
        %v3453 = vpop.f32.mrf.mxu0
        %v3454 = vadd.f32 %v3268, %v3453
        %3455 = vdwg.mxu0
        %3457 = vrot.lane.b32.xlu0 %v3121, 120
        %v3458 = vpop.permute.xlu0 %3457
        %v3459 = vsel %vm481, %v3121, 0
        %v3461 = vsel %vm481, %v3458, 0
        %3463 = vmatpush.xpose.msra.mxu0 0.0
        %3464 = vmatpush.xpose.msra.mxu0 0.0
        %3465 = vmatpush.xpose.msra.mxu0 0.0
        %3466 = vmatpush.xpose.msra.mxu0 0.0
        %3467 = vmatpush.xpose.msra.mxu0 0.0
        %3468 = vmatpush.xpose.msra.mxu0 0.0
        %3469 = vmatpush.xpose.msra.mxu0 0.0
        %3470 = vmatpush.xpose.msra.mxu0 0.0
        %3471 = vmatpush.xpose.msra.mxu0 0.0
        %3472 = vmatpush.xpose.msra.mxu0 0.0
        %3473 = vmatpush.xpose.msra.mxu0 0.0
        %3474 = vmatpush.xpose.msra.mxu0 0.0
        %3475 = vmatpush.xpose.msra.mxu0 0.0
        %3476 = vmatpush.xpose.msra.mxu0 0.0
        %3477 = vmatpush.xpose.msra.mxu0 0.0
        %3478 = vmatpush.xpose.msra.mxu0 %v3461
        %3479 = vmatmul.f32.gmra.mxu0 %v3459
        %v3480 = vpop.f32.mrf.mxu0
        %v3481 = vadd.f32 %v3268, %v3480
        %3482 = vdwg.mxu0
        %v3483 = vsel %vm481, %v3292, -inf
        %3484 = vmax.xlane.f32.xlu0 %v3483
        %v3485 = vpop.xlane.xlu0 %3484
        %v3486 = vsel %vm481, %v3319, -inf
        %3487 = vmax.xlane.f32.xlu0 %v3486
        %v3488 = vpop.xlane.xlu0 %3487
        %v3489 = vsel %vm481, %v3346, -inf
        %3490 = vmax.xlane.f32.xlu0 %v3489
        %v3491 = vpop.xlane.xlu0 %3490
        %v3492 = vsel %vm481, %v3373, -inf
        %3493 = vmax.xlane.f32.xlu0 %v3492
        %v3494 = vpop.xlane.xlu0 %3493
        %v3495 = vsel %vm481, %v3400, -inf
        %3496 = vmax.xlane.f32.xlu0 %v3495
        %v3497 = vpop.xlane.xlu0 %3496
        %v3498 = vsel %vm481, %v3427, -inf
        %3499 = vmax.xlane.f32.xlu0 %v3498
        %v3500 = vpop.xlane.xlu0 %3499
        %v3501 = vsel %vm481, %v3454, -inf
        %3502 = vmax.xlane.f32.xlu0 %v3501
        %v3503 = vpop.xlane.xlu0 %3502
        %v3504 = vsel %vm481, %v3481, -inf
        %3505 = vmax.xlane.f32.xlu0 %v3504
        %v3506 = vpop.xlane.xlu0 %3505
        %v3507 = vsub.f32 %v3292, %v3485
        %v3508 = vsub.f32 %v3319, %v3488
        %v3509 = vsub.f32 %v3346, %v3491
        %v3510 = vsub.f32 %v3373, %v3494
        %v3511 = vsub.f32 %v3400, %v3497
        %v3512 = vsub.f32 %v3427, %v3500
        %v3513 = vsub.f32 %v3454, %v3503
        %v3514 = vsub.f32 %v3481, %v3506
        %v3515 = vmul.f32 %v3507, 1.442695
        %v3516 = vpow.pop %v3515
        %v3517 = vmul.f32 %v3508, 1.442695
        %v3518 = vpow.pop %v3517
        %v3519 = vmul.f32 %v3509, 1.442695
        %v3520 = vpow.pop %v3519
        %v3521 = vmul.f32 %v3510, 1.442695
        %v3522 = vpow.pop %v3521
        %v3523 = vmul.f32 %v3511, 1.442695
        %v3524 = vpow.pop %v3523
        %v3525 = vmul.f32 %v3512, 1.442695
        %v3526 = vpow.pop %v3525
        %v3527 = vmul.f32 %v3513, 1.442695
        %v3528 = vpow.pop %v3527
        %v3529 = vmul.f32 %v3514, 1.442695
        %v3530 = vpow.pop %v3529
        %v3531 = vsel %vm481, %v3516, 0.0
        %3532 = vadd.xlane.f32.xlu0 %v3531
        %v3533 = vpop.xlane.xlu0 %3532
        %v3534 = vsel %vm481, %v3518, 0.0
        %3535 = vadd.xlane.f32.xlu0 %v3534
        %v3536 = vpop.xlane.xlu0 %3535
        %v3537 = vsel %vm481, %v3520, 0.0
        %3538 = vadd.xlane.f32.xlu0 %v3537
        %v3539 = vpop.xlane.xlu0 %3538
        %v3540 = vsel %vm481, %v3522, 0.0
        %3541 = vadd.xlane.f32.xlu0 %v3540
        %v3542 = vpop.xlane.xlu0 %3541
        %v3543 = vsel %vm481, %v3524, 0.0
        %3544 = vadd.xlane.f32.xlu0 %v3543
        %v3545 = vpop.xlane.xlu0 %3544
        %v3546 = vsel %vm481, %v3526, 0.0
        %3547 = vadd.xlane.f32.xlu0 %v3546
        %v3548 = vpop.xlane.xlu0 %3547
        %v3549 = vsel %vm481, %v3528, 0.0
        %3550 = vadd.xlane.f32.xlu0 %v3549
        %v3551 = vpop.xlane.xlu0 %3550
        %v3552 = vsel %vm481, %v3530, 0.0
        %3553 = vadd.xlane.f32.xlu0 %v3552
        %v3554 = vpop.xlane.xlu0 %3553
        %v3555 = vrcp.pop %v3533
        %v3556 = vrcp.pop %v3536
        %v3557 = vrcp.pop %v3539
        %v3558 = vrcp.pop %v3542
        %v3559 = vrcp.pop %v3545
        %v3560 = vrcp.pop %v3548
        %v3561 = vrcp.pop %v3551
        %v3562 = vrcp.pop %v3554
        %v3563 = vmul.f32 %v3516, %v3555
        %v3564 = vmul.f32 %v3518, %v3556
        %v3565 = vmul.f32 %v3520, %v3557
        %v3566 = vmul.f32 %v3522, %v3558
        %v3567 = vmul.f32 %v3524, %v3559
        %v3568 = vmul.f32 %v3526, %v3560
        %v3569 = vmul.f32 %v3528, %v3561
        %v3570 = vmul.f32 %v3530, %v3562
        %3571 = vrot.lane.b32.xlu0 %v3114, 112
        %v3572 = vpop.permute.xlu0 %3571
        %v3575 = vsel %vm481, %v3563, 0
        %3577 = vmatpush.msra.mxu0 0.0
        %3578 = vmatpush.msra.mxu0 0.0
        %3579 = vmatpush.msra.mxu0 0.0
        %3580 = vmatpush.msra.mxu0 0.0
        %3581 = vmatpush.msra.mxu0 0.0
        %3582 = vmatpush.msra.mxu0 0.0
        %3583 = vmatpush.msra.mxu0 0.0
        %3584 = vmatpush.msra.mxu0 0.0
        %3585 = vmatpush.msra.mxu0 0.0
        %3586 = vmatpush.msra.mxu0 0.0
        %3587 = vmatpush.msra.mxu0 0.0
        %3588 = vmatpush.msra.mxu0 0.0
        %3589 = vmatpush.msra.mxu0 0.0
        %3590 = vmatpush.msra.mxu0 0.0
        %3591 = vmatpush.msra.mxu0 0.0
        %3592 = vmatpush.msra.mxu0 %v3572
        %3593 = vmatmul.f32.gmra.mxu0 %v3575
        %v3594 = vpop.f32.mrf.mxu0
        %v3595 = vadd.f32 0.0, %v3594
        %3596 = vdwg.mxu0
        %3597 = vrot.lane.b32.xlu0 %v3115, 112
        %v3598 = vpop.permute.xlu0 %3597
        %v3601 = vsel %vm481, %v3564, 0
        %3603 = vmatpush.msra.mxu0 0.0
        %3604 = vmatpush.msra.mxu0 0.0
        %3605 = vmatpush.msra.mxu0 0.0
        %3606 = vmatpush.msra.mxu0 0.0
        %3607 = vmatpush.msra.mxu0 0.0
        %3608 = vmatpush.msra.mxu0 0.0
        %3609 = vmatpush.msra.mxu0 0.0
        %3610 = vmatpush.msra.mxu0 0.0
        %3611 = vmatpush.msra.mxu0 0.0
        %3612 = vmatpush.msra.mxu0 0.0
        %3613 = vmatpush.msra.mxu0 0.0
        %3614 = vmatpush.msra.mxu0 0.0
        %3615 = vmatpush.msra.mxu0 0.0
        %3616 = vmatpush.msra.mxu0 0.0
        %3617 = vmatpush.msra.mxu0 0.0
        %3618 = vmatpush.msra.mxu0 %v3598
        %3619 = vmatmul.f32.gmra.mxu0 %v3601
        %v3620 = vpop.f32.mrf.mxu0
        %v3621 = vadd.f32 0.0, %v3620
        %3622 = vdwg.mxu0
        %3623 = vrot.lane.b32.xlu0 %v3116, 112
        %v3624 = vpop.permute.xlu0 %3623
        %v3627 = vsel %vm481, %v3565, 0
        %3629 = vmatpush.msra.mxu0 0.0
        %3630 = vmatpush.msra.mxu0 0.0
        %3631 = vmatpush.msra.mxu0 0.0
        %3632 = vmatpush.msra.mxu0 0.0
        %3633 = vmatpush.msra.mxu0 0.0
        %3634 = vmatpush.msra.mxu0 0.0
        %3635 = vmatpush.msra.mxu0 0.0
        %3636 = vmatpush.msra.mxu0 0.0
        %3637 = vmatpush.msra.mxu0 0.0
        %3638 = vmatpush.msra.mxu0 0.0
        %3639 = vmatpush.msra.mxu0 0.0
        %3640 = vmatpush.msra.mxu0 0.0
        %3641 = vmatpush.msra.mxu0 0.0
        %3642 = vmatpush.msra.mxu0 0.0
        %3643 = vmatpush.msra.mxu0 0.0
        %3644 = vmatpush.msra.mxu0 %v3624
        %3645 = vmatmul.f32.gmra.mxu0 %v3627
        %v3646 = vpop.f32.mrf.mxu0
        %v3647 = vadd.f32 0.0, %v3646
        %3648 = vdwg.mxu0
        %3649 = vrot.lane.b32.xlu0 %v3117, 112
        %v3650 = vpop.permute.xlu0 %3649
        %v3653 = vsel %vm481, %v3566, 0
        %3655 = vmatpush.msra.mxu0 0.0
        %3656 = vmatpush.msra.mxu0 0.0
        %3657 = vmatpush.msra.mxu0 0.0
        %3658 = vmatpush.msra.mxu0 0.0
        %3659 = vmatpush.msra.mxu0 0.0
        %3660 = vmatpush.msra.mxu0 0.0
        %3661 = vmatpush.msra.mxu0 0.0
        %3662 = vmatpush.msra.mxu0 0.0
        %3663 = vmatpush.msra.mxu0 0.0
        %3664 = vmatpush.msra.mxu0 0.0
        %3665 = vmatpush.msra.mxu0 0.0
        %3666 = vmatpush.msra.mxu0 0.0
        %3667 = vmatpush.msra.mxu0 0.0
        %3668 = vmatpush.msra.mxu0 0.0
        %3669 = vmatpush.msra.mxu0 0.0
        %3670 = vmatpush.msra.mxu0 %v3650
        %3671 = vmatmul.f32.gmra.mxu0 %v3653
        %v3672 = vpop.f32.mrf.mxu0
        %v3673 = vadd.f32 0.0, %v3672
        %3674 = vdwg.mxu0
        %3675 = vrot.lane.b32.xlu0 %v3118, 112
        %v3676 = vpop.permute.xlu0 %3675
        %v3679 = vsel %vm481, %v3567, 0
        %3681 = vmatpush.msra.mxu0 0.0
        %3682 = vmatpush.msra.mxu0 0.0
        %3683 = vmatpush.msra.mxu0 0.0
        %3684 = vmatpush.msra.mxu0 0.0
        %3685 = vmatpush.msra.mxu0 0.0
        %3686 = vmatpush.msra.mxu0 0.0
        %3687 = vmatpush.msra.mxu0 0.0
        %3688 = vmatpush.msra.mxu0 0.0
        %3689 = vmatpush.msra.mxu0 0.0
        %3690 = vmatpush.msra.mxu0 0.0
        %3691 = vmatpush.msra.mxu0 0.0
        %3692 = vmatpush.msra.mxu0 0.0
        %3693 = vmatpush.msra.mxu0 0.0
        %3694 = vmatpush.msra.mxu0 0.0
        %3695 = vmatpush.msra.mxu0 0.0
        %3696 = vmatpush.msra.mxu0 %v3676
        %3697 = vmatmul.f32.gmra.mxu0 %v3679
        %v3698 = vpop.f32.mrf.mxu0
        %v3699 = vadd.f32 0.0, %v3698
        %3700 = vdwg.mxu0
        %3701 = vrot.lane.b32.xlu0 %v3119, 112
        %v3702 = vpop.permute.xlu0 %3701
        %v3705 = vsel %vm481, %v3568, 0
        %3707 = vmatpush.msra.mxu0 0.0
        %3708 = vmatpush.msra.mxu0 0.0
        %3709 = vmatpush.msra.mxu0 0.0
        %3710 = vmatpush.msra.mxu0 0.0
        %3711 = vmatpush.msra.mxu0 0.0
        %3712 = vmatpush.msra.mxu0 0.0
        %3713 = vmatpush.msra.mxu0 0.0
        %3714 = vmatpush.msra.mxu0 0.0
        %3715 = vmatpush.msra.mxu0 0.0
        %3716 = vmatpush.msra.mxu0 0.0
        %3717 = vmatpush.msra.mxu0 0.0
        %3718 = vmatpush.msra.mxu0 0.0
        %3719 = vmatpush.msra.mxu0 0.0
        %3720 = vmatpush.msra.mxu0 0.0
        %3721 = vmatpush.msra.mxu0 0.0
        %3722 = vmatpush.msra.mxu0 %v3702
        %3723 = vmatmul.f32.gmra.mxu0 %v3705
        %v3724 = vpop.f32.mrf.mxu0
        %v3725 = vadd.f32 0.0, %v3724
        %3726 = vdwg.mxu0
        %3727 = vrot.lane.b32.xlu0 %v3120, 112
        %v3728 = vpop.permute.xlu0 %3727
        %v3731 = vsel %vm481, %v3569, 0
        %3733 = vmatpush.msra.mxu0 0.0
        %3734 = vmatpush.msra.mxu0 0.0
        %3735 = vmatpush.msra.mxu0 0.0
        %3736 = vmatpush.msra.mxu0 0.0
        %3737 = vmatpush.msra.mxu0 0.0
        %3738 = vmatpush.msra.mxu0 0.0
        %3739 = vmatpush.msra.mxu0 0.0
        %3740 = vmatpush.msra.mxu0 0.0
        %3741 = vmatpush.msra.mxu0 0.0
        %3742 = vmatpush.msra.mxu0 0.0
        %3743 = vmatpush.msra.mxu0 0.0
        %3744 = vmatpush.msra.mxu0 0.0
        %3745 = vmatpush.msra.mxu0 0.0
        %3746 = vmatpush.msra.mxu0 0.0
        %3747 = vmatpush.msra.mxu0 0.0
        %3748 = vmatpush.msra.mxu0 %v3728
        %3749 = vmatmul.f32.gmra.mxu0 %v3731
        %v3750 = vpop.f32.mrf.mxu0
        %v3751 = vadd.f32 0.0, %v3750
        %3752 = vdwg.mxu0
        %3753 = vrot.lane.b32.xlu0 %v3121, 112
        %v3754 = vpop.permute.xlu0 %3753
        %v3757 = vsel %vm481, %v3570, 0
        %3759 = vmatpush.msra.mxu0 0.0
        %3760 = vmatpush.msra.mxu0 0.0
        %3761 = vmatpush.msra.mxu0 0.0
        %3762 = vmatpush.msra.mxu0 0.0
        %3763 = vmatpush.msra.mxu0 0.0
        %3764 = vmatpush.msra.mxu0 0.0
        %3765 = vmatpush.msra.mxu0 0.0
        %3766 = vmatpush.msra.mxu0 0.0
        %3767 = vmatpush.msra.mxu0 0.0
        %3768 = vmatpush.msra.mxu0 0.0
        %3769 = vmatpush.msra.mxu0 0.0
        %3770 = vmatpush.msra.mxu0 0.0
        %3771 = vmatpush.msra.mxu0 0.0
        %3772 = vmatpush.msra.mxu0 0.0
        %3773 = vmatpush.msra.mxu0 0.0
        %3774 = vmatpush.msra.mxu0 %v3754
        %3775 = vmatmul.f32.gmra.mxu0 %v3757
        %v3776 = vpop.f32.mrf.mxu0
        %v3777 = vadd.f32 0.0, %v3776
        %3778 = vdwg.mxu0
        %v3779 = vpack.c.bf16 %v3621, %v3595
        %v3780 = vpack.c.bf16 %v3673, %v3647
        %v3781 = vpack.c.bf16 %v3725, %v3699
        %v3782 = vpack.c.bf16 %v3777, %v3751
        %s3783 = scalar_lea.vmem %s4, 16
        %v3784 = vld [vmem:[%s3783] sm:$0xf]
        %v3786 = vsel %vm481, %v3779, 0
        %v3789 = vsel %vm481, %v3780, 0
        %v3792 = vsel %vm481, %v3781, 0
        %v3795 = vsel %vm481, %v3782, 0
        %v3798 = vsel %vm1655, %v3784, 0
        %3800 = vmatpush.bf16.msra.mxu0 0
        %3801 = vmatpush.bf16.msra.mxu0 0
        %3802 = vmatpush.bf16.msra.mxu0 0
        %3803 = vmatpush.bf16.msra.mxu0 0
        %3804 = vmatpush.bf16.msra.mxu0 0
        %3805 = vmatpush.bf16.msra.mxu0 0
        %3806 = vmatpush.bf16.msra.mxu0 0
        %3807 = vmatpush.bf16.msra.mxu0 %v3798
        %3808 = vmatmul.bf16.gmra.mxu0 %v3786
        %v3809 = vpop.f32.mrf.mxu0
        %v3810 = vadd.f32 0.0, %v3809
        %v3811 = vpop.f32.mrf.mxu0
        %v3812 = vadd.f32 0.0, %v3811
        %3813 = vmatmul.bf16.gmra.mxu0 %v3789
        %v3814 = vpop.f32.mrf.mxu0
        %v3815 = vadd.f32 0.0, %v3814
        %v3816 = vpop.f32.mrf.mxu0
        %v3817 = vadd.f32 0.0, %v3816
        %3818 = vmatmul.bf16.gmra.mxu0 %v3792
        %v3819 = vpop.f32.mrf.mxu0
        %v3820 = vadd.f32 0.0, %v3819
        %v3821 = vpop.f32.mrf.mxu0
        %v3822 = vadd.f32 0.0, %v3821
        %3823 = vmatmul.bf16.gmra.mxu0 %v3795
        %v3824 = vpop.f32.mrf.mxu0
        %v3825 = vadd.f32 0.0, %v3824
        %v3826 = vpop.f32.mrf.mxu0
        %v3827 = vadd.f32 0.0, %v3826
        %3828 = vdwg.mxu0
        %v3829 = vadd.f32 %v3106, %v3810
        %v3830 = vadd.f32 %v3107, %v3812
        %v3831 = vadd.f32 %v3108, %v3815
        %v3832 = vadd.f32 %v3109, %v3817
        %v3833 = vadd.f32 %v3110, %v3820
        %v3834 = vadd.f32 %v3111, %v3822
        %v3835 = vadd.f32 %v3112, %v3825
        %v3836 = vadd.f32 %v3113, %v3827
        %v3837 = vld [vmem:[%s295 + $0x8] sm:$0xff]
        %v3838 = vld [vmem:[%s295 + $0x18] sm:$0xff]
        %v3839 = vld [vmem:[%s295 + $0x28] sm:$0xff]
        %v3840 = vld [vmem:[%s295 + $0x38] sm:$0xff]
        %v3841 = vld [vmem:[%s295 + $0x48] sm:$0xff]
        %v3842 = vld [vmem:[%s295 + $0x58] sm:$0xff]
        %v3843 = vld [vmem:[%s295 + $0x68] sm:$0xff]
        %v3844 = vld [vmem:[%s295 + $0x78] sm:$0xff]
        %v3845 = vsel %vm1020, %v3837, -inf
        %3846 = vmax.xlane.f32.xlu0 %v3845
        %v3847 = vpop.xlane.xlu0 %3846
        %v3848 = vsel %vm1020, %v3838, -inf
        %3849 = vmax.xlane.f32.xlu0 %v3848
        %v3850 = vpop.xlane.xlu0 %3849
        %v3851 = vsel %vm1020, %v3839, -inf
        %3852 = vmax.xlane.f32.xlu0 %v3851
        %v3853 = vpop.xlane.xlu0 %3852
        %v3854 = vsel %vm1020, %v3840, -inf
        %3855 = vmax.xlane.f32.xlu0 %v3854
        %v3856 = vpop.xlane.xlu0 %3855
        %v3857 = vsel %vm1020, %v3841, -inf
        %3858 = vmax.xlane.f32.xlu0 %v3857
        %v3859 = vpop.xlane.xlu0 %3858
        %v3860 = vsel %vm1020, %v3842, -inf
        %3861 = vmax.xlane.f32.xlu0 %v3860
        %v3862 = vpop.xlane.xlu0 %3861
        %v3863 = vsel %vm1020, %v3843, -inf
        %3864 = vmax.xlane.f32.xlu0 %v3863
        %v3865 = vpop.xlane.xlu0 %3864
        %v3866 = vsel %vm1020, %v3844, -inf
        %3867 = vmax.xlane.f32.xlu0 %v3866
        %v3868 = vpop.xlane.xlu0 %3867
        %v3869 = vadd.f32 %v3847, %v3153
        %v3870 = vadd.f32 %v3850, %v3160
        %v3871 = vadd.f32 %v3853, %v3167
        %v3872 = vadd.f32 %v3856, %v3174
        %v3873 = vadd.f32 %v3859, %v3181
        %v3874 = vadd.f32 %v3862, %v3188
        %v3875 = vadd.f32 %v3865, %v3195
        %v3876 = vadd.f32 %v3868, %v3202
        %3878 = vrot.lane.b32.xlu0 %v3837, 96
        %v3879 = vpop.permute.xlu0 %3878
        %3880 = vrot.lane.b32.xlu0 %v3837, 88
        %v3881 = vpop.permute.xlu0 %3880
        %3890 = vset.pattern.permute.xlu0 0
        %3891 = vperm.xlu0 %3890, %v3869
        %v3892 = vpop.permute.xlu0 %3891
        %3893 = vset.pattern.permute.xlu0 0
        %3894 = vperm.xlu0 %3893, %v3870
        %v3895 = vpop.permute.xlu0 %3894
        %3896 = vset.pattern.permute.xlu0 0
        %3897 = vperm.xlu0 %3896, %v3871
        %v3898 = vpop.permute.xlu0 %3897
        %3899 = vset.pattern.permute.xlu0 0
        %3900 = vperm.xlu0 %3899, %v3872
        %v3901 = vpop.permute.xlu0 %3900
        %3902 = vset.pattern.permute.xlu0 0
        %3903 = vperm.xlu0 %3902, %v3873
        %v3904 = vpop.permute.xlu0 %3903
        %3905 = vset.pattern.permute.xlu0 0
        %3906 = vperm.xlu0 %3905, %v3874
        %v3907 = vpop.permute.xlu0 %3906
        %3908 = vset.pattern.permute.xlu0 0
        %3909 = vperm.xlu0 %3908, %v3875
        %v3910 = vpop.permute.xlu0 %3909
        %3911 = vset.pattern.permute.xlu0 0
        %3912 = vperm.xlu0 %3911, %v3876
        %v3913 = vpop.permute.xlu0 %3912
        %v3914 = vperm.slane %v3892, %v457
        %v3915 = vperm.slane %v3895, %v457
        %v3916 = vperm.slane %v3898, %v457
        %v3917 = vperm.slane %v3901, %v457
        %v3918 = vperm.slane %v3904, %v457
        %v3919 = vperm.slane %v3907, %v457
        %v3920 = vperm.slane %v3910, %v457
        %v3921 = vperm.slane %v3913, %v457
        %v3922 = vsel %vm466, %v3915, %v3914
        %v3923 = vsel %vm468, %v3916, %v3922
        %v3924 = vsel %vm470, %v3917, %v3923
        %v3925 = vsel %vm472, %v3918, %v3924
        %v3926 = vsel %vm474, %v3919, %v3925
        %v3927 = vsel %vm476, %v3920, %v3926
        %v3928 = vsel %vm478, %v3921, %v3927
        %v3930 = vsel %vm481, %v3879, 0
        %v3932 = vsel %vm481, %v3881, 0
        %3934 = vmatpush.xpose.msra.mxu0 0.0
        %3935 = vmatpush.xpose.msra.mxu0 0.0
        %3936 = vmatpush.xpose.msra.mxu0 0.0
        %3937 = vmatpush.xpose.msra.mxu0 0.0
        %3938 = vmatpush.xpose.msra.mxu0 0.0
        %3939 = vmatpush.xpose.msra.mxu0 0.0
        %3940 = vmatpush.xpose.msra.mxu0 0.0
        %3941 = vmatpush.xpose.msra.mxu0 0.0
        %3942 = vmatpush.xpose.msra.mxu0 0.0
        %3943 = vmatpush.xpose.msra.mxu0 0.0
        %3944 = vmatpush.xpose.msra.mxu0 0.0
        %3945 = vmatpush.xpose.msra.mxu0 0.0
        %3946 = vmatpush.xpose.msra.mxu0 0.0
        %3947 = vmatpush.xpose.msra.mxu0 0.0
        %3948 = vmatpush.xpose.msra.mxu0 0.0
        %3949 = vmatpush.xpose.msra.mxu0 %v3932
        %3950 = vmatmul.f32.gmra.mxu0 %v3930
        %v3951 = vpop.f32.mrf.mxu0
        %v3952 = vadd.f32 %v3928, %v3951
        %3953 = vdwg.mxu0
        %3955 = vrot.lane.b32.xlu0 %v3838, 96
        %v3956 = vpop.permute.xlu0 %3955
        %3957 = vrot.lane.b32.xlu0 %v3838, 88
        %v3958 = vpop.permute.xlu0 %3957
        %v3959 = vsel %vm481, %v3956, 0
        %v3961 = vsel %vm481, %v3958, 0
        %3963 = vmatpush.xpose.msra.mxu0 0.0
        %3964 = vmatpush.xpose.msra.mxu0 0.0
        %3965 = vmatpush.xpose.msra.mxu0 0.0
        %3966 = vmatpush.xpose.msra.mxu0 0.0
        %3967 = vmatpush.xpose.msra.mxu0 0.0
        %3968 = vmatpush.xpose.msra.mxu0 0.0
        %3969 = vmatpush.xpose.msra.mxu0 0.0
        %3970 = vmatpush.xpose.msra.mxu0 0.0
        %3971 = vmatpush.xpose.msra.mxu0 0.0
        %3972 = vmatpush.xpose.msra.mxu0 0.0
        %3973 = vmatpush.xpose.msra.mxu0 0.0
        %3974 = vmatpush.xpose.msra.mxu0 0.0
        %3975 = vmatpush.xpose.msra.mxu0 0.0
        %3976 = vmatpush.xpose.msra.mxu0 0.0
        %3977 = vmatpush.xpose.msra.mxu0 0.0
        %3978 = vmatpush.xpose.msra.mxu0 %v3961
        %3979 = vmatmul.f32.gmra.mxu0 %v3959
        %v3980 = vpop.f32.mrf.mxu0
        %v3981 = vadd.f32 %v3928, %v3980
        %3982 = vdwg.mxu0
        %3984 = vrot.lane.b32.xlu0 %v3839, 96
        %v3985 = vpop.permute.xlu0 %3984
        %3986 = vrot.lane.b32.xlu0 %v3839, 88
        %v3987 = vpop.permute.xlu0 %3986
        %v3988 = vsel %vm481, %v3985, 0
        %v3990 = vsel %vm481, %v3987, 0
        %3992 = vmatpush.xpose.msra.mxu0 0.0
        %3993 = vmatpush.xpose.msra.mxu0 0.0
        %3994 = vmatpush.xpose.msra.mxu0 0.0
        %3995 = vmatpush.xpose.msra.mxu0 0.0
        %3996 = vmatpush.xpose.msra.mxu0 0.0
        %3997 = vmatpush.xpose.msra.mxu0 0.0
        %3998 = vmatpush.xpose.msra.mxu0 0.0
        %3999 = vmatpush.xpose.msra.mxu0 0.0
        %4000 = vmatpush.xpose.msra.mxu0 0.0
        %4001 = vmatpush.xpose.msra.mxu0 0.0
        %4002 = vmatpush.xpose.msra.mxu0 0.0
        %4003 = vmatpush.xpose.msra.mxu0 0.0
        %4004 = vmatpush.xpose.msra.mxu0 0.0
        %4005 = vmatpush.xpose.msra.mxu0 0.0
        %4006 = vmatpush.xpose.msra.mxu0 0.0
        %4007 = vmatpush.xpose.msra.mxu0 %v3990
        %4008 = vmatmul.f32.gmra.mxu0 %v3988
        %v4009 = vpop.f32.mrf.mxu0
        %v4010 = vadd.f32 %v3928, %v4009
        %4011 = vdwg.mxu0
        %4013 = vrot.lane.b32.xlu0 %v3840, 96
        %v4014 = vpop.permute.xlu0 %4013
        %4015 = vrot.lane.b32.xlu0 %v3840, 88
        %v4016 = vpop.permute.xlu0 %4015
        %v4017 = vsel %vm481, %v4014, 0
        %v4019 = vsel %vm481, %v4016, 0
        %4021 = vmatpush.xpose.msra.mxu0 0.0
        %4022 = vmatpush.xpose.msra.mxu0 0.0
        %4023 = vmatpush.xpose.msra.mxu0 0.0
        %4024 = vmatpush.xpose.msra.mxu0 0.0
        %4025 = vmatpush.xpose.msra.mxu0 0.0
        %4026 = vmatpush.xpose.msra.mxu0 0.0
        %4027 = vmatpush.xpose.msra.mxu0 0.0
        %4028 = vmatpush.xpose.msra.mxu0 0.0
        %4029 = vmatpush.xpose.msra.mxu0 0.0
        %4030 = vmatpush.xpose.msra.mxu0 0.0
        %4031 = vmatpush.xpose.msra.mxu0 0.0
        %4032 = vmatpush.xpose.msra.mxu0 0.0
        %4033 = vmatpush.xpose.msra.mxu0 0.0
        %4034 = vmatpush.xpose.msra.mxu0 0.0
        %4035 = vmatpush.xpose.msra.mxu0 0.0
        %4036 = vmatpush.xpose.msra.mxu0 %v4019
        %4037 = vmatmul.f32.gmra.mxu0 %v4017
        %v4038 = vpop.f32.mrf.mxu0
        %v4039 = vadd.f32 %v3928, %v4038
        %4040 = vdwg.mxu0
        %4042 = vrot.lane.b32.xlu0 %v3841, 96
        %v4043 = vpop.permute.xlu0 %4042
        %4044 = vrot.lane.b32.xlu0 %v3841, 88
        %v4045 = vpop.permute.xlu0 %4044
        %v4046 = vsel %vm481, %v4043, 0
        %v4048 = vsel %vm481, %v4045, 0
        %4050 = vmatpush.xpose.msra.mxu0 0.0
        %4051 = vmatpush.xpose.msra.mxu0 0.0
        %4052 = vmatpush.xpose.msra.mxu0 0.0
        %4053 = vmatpush.xpose.msra.mxu0 0.0
        %4054 = vmatpush.xpose.msra.mxu0 0.0
        %4055 = vmatpush.xpose.msra.mxu0 0.0
        %4056 = vmatpush.xpose.msra.mxu0 0.0
        %4057 = vmatpush.xpose.msra.mxu0 0.0
        %4058 = vmatpush.xpose.msra.mxu0 0.0
        %4059 = vmatpush.xpose.msra.mxu0 0.0
        %4060 = vmatpush.xpose.msra.mxu0 0.0
        %4061 = vmatpush.xpose.msra.mxu0 0.0
        %4062 = vmatpush.xpose.msra.mxu0 0.0
        %4063 = vmatpush.xpose.msra.mxu0 0.0
        %4064 = vmatpush.xpose.msra.mxu0 0.0
        %4065 = vmatpush.xpose.msra.mxu0 %v4048
        %4066 = vmatmul.f32.gmra.mxu0 %v4046
        %v4067 = vpop.f32.mrf.mxu0
        %v4068 = vadd.f32 %v3928, %v4067
        %4069 = vdwg.mxu0
        %4071 = vrot.lane.b32.xlu0 %v3842, 96
        %v4072 = vpop.permute.xlu0 %4071
        %4073 = vrot.lane.b32.xlu0 %v3842, 88
        %v4074 = vpop.permute.xlu0 %4073
        %v4075 = vsel %vm481, %v4072, 0
        %v4077 = vsel %vm481, %v4074, 0
        %4079 = vmatpush.xpose.msra.mxu0 0.0
        %4080 = vmatpush.xpose.msra.mxu0 0.0
        %4081 = vmatpush.xpose.msra.mxu0 0.0
        %4082 = vmatpush.xpose.msra.mxu0 0.0
        %4083 = vmatpush.xpose.msra.mxu0 0.0
        %4084 = vmatpush.xpose.msra.mxu0 0.0
        %4085 = vmatpush.xpose.msra.mxu0 0.0
        %4086 = vmatpush.xpose.msra.mxu0 0.0
        %4087 = vmatpush.xpose.msra.mxu0 0.0
        %4088 = vmatpush.xpose.msra.mxu0 0.0
        %4089 = vmatpush.xpose.msra.mxu0 0.0
        %4090 = vmatpush.xpose.msra.mxu0 0.0
        %4091 = vmatpush.xpose.msra.mxu0 0.0
        %4092 = vmatpush.xpose.msra.mxu0 0.0
        %4093 = vmatpush.xpose.msra.mxu0 0.0
        %4094 = vmatpush.xpose.msra.mxu0 %v4077
        %4095 = vmatmul.f32.gmra.mxu0 %v4075
        %v4096 = vpop.f32.mrf.mxu0
        %v4097 = vadd.f32 %v3928, %v4096
        %4098 = vdwg.mxu0
        %4100 = vrot.lane.b32.xlu0 %v3843, 96
        %v4101 = vpop.permute.xlu0 %4100
        %4102 = vrot.lane.b32.xlu0 %v3843, 88
        %v4103 = vpop.permute.xlu0 %4102
        %v4104 = vsel %vm481, %v4101, 0
        %v4106 = vsel %vm481, %v4103, 0
        %4108 = vmatpush.xpose.msra.mxu0 0.0
        %4109 = vmatpush.xpose.msra.mxu0 0.0
        %4110 = vmatpush.xpose.msra.mxu0 0.0
        %4111 = vmatpush.xpose.msra.mxu0 0.0
        %4112 = vmatpush.xpose.msra.mxu0 0.0
        %4113 = vmatpush.xpose.msra.mxu0 0.0
        %4114 = vmatpush.xpose.msra.mxu0 0.0
        %4115 = vmatpush.xpose.msra.mxu0 0.0
        %4116 = vmatpush.xpose.msra.mxu0 0.0
        %4117 = vmatpush.xpose.msra.mxu0 0.0
        %4118 = vmatpush.xpose.msra.mxu0 0.0
        %4119 = vmatpush.xpose.msra.mxu0 0.0
        %4120 = vmatpush.xpose.msra.mxu0 0.0
        %4121 = vmatpush.xpose.msra.mxu0 0.0
        %4122 = vmatpush.xpose.msra.mxu0 0.0
        %4123 = vmatpush.xpose.msra.mxu0 %v4106
        %4124 = vmatmul.f32.gmra.mxu0 %v4104
        %v4125 = vpop.f32.mrf.mxu0
        %v4126 = vadd.f32 %v3928, %v4125
        %4127 = vdwg.mxu0
        %4129 = vrot.lane.b32.xlu0 %v3844, 96
        %v4130 = vpop.permute.xlu0 %4129
        %4131 = vrot.lane.b32.xlu0 %v3844, 88
        %v4132 = vpop.permute.xlu0 %4131
        %v4133 = vsel %vm481, %v4130, 0
        %v4135 = vsel %vm481, %v4132, 0
        %4137 = vmatpush.xpose.msra.mxu0 0.0
        %4138 = vmatpush.xpose.msra.mxu0 0.0
        %4139 = vmatpush.xpose.msra.mxu0 0.0
        %4140 = vmatpush.xpose.msra.mxu0 0.0
        %4141 = vmatpush.xpose.msra.mxu0 0.0
        %4142 = vmatpush.xpose.msra.mxu0 0.0
        %4143 = vmatpush.xpose.msra.mxu0 0.0
        %4144 = vmatpush.xpose.msra.mxu0 0.0
        %4145 = vmatpush.xpose.msra.mxu0 0.0
        %4146 = vmatpush.xpose.msra.mxu0 0.0
        %4147 = vmatpush.xpose.msra.mxu0 0.0
        %4148 = vmatpush.xpose.msra.mxu0 0.0
        %4149 = vmatpush.xpose.msra.mxu0 0.0
        %4150 = vmatpush.xpose.msra.mxu0 0.0
        %4151 = vmatpush.xpose.msra.mxu0 0.0
        %4152 = vmatpush.xpose.msra.mxu0 %v4135
        %4153 = vmatmul.f32.gmra.mxu0 %v4133
        %v4154 = vpop.f32.mrf.mxu0
        %v4155 = vadd.f32 %v3928, %v4154
        %4156 = vdwg.mxu0
        %v4157 = vsel %vm481, %v3952, -inf
        %4158 = vmax.xlane.f32.xlu0 %v4157
        %v4159 = vpop.xlane.xlu0 %4158
        %v4160 = vsel %vm481, %v3981, -inf
        %4161 = vmax.xlane.f32.xlu0 %v4160
        %v4162 = vpop.xlane.xlu0 %4161
        %v4163 = vsel %vm481, %v4010, -inf
        %4164 = vmax.xlane.f32.xlu0 %v4163
        %v4165 = vpop.xlane.xlu0 %4164
        %v4166 = vsel %vm481, %v4039, -inf
        %4167 = vmax.xlane.f32.xlu0 %v4166
        %v4168 = vpop.xlane.xlu0 %4167
        %v4169 = vsel %vm481, %v4068, -inf
        %4170 = vmax.xlane.f32.xlu0 %v4169
        %v4171 = vpop.xlane.xlu0 %4170
        %v4172 = vsel %vm481, %v4097, -inf
        %4173 = vmax.xlane.f32.xlu0 %v4172
        %v4174 = vpop.xlane.xlu0 %4173
        %v4175 = vsel %vm481, %v4126, -inf
        %4176 = vmax.xlane.f32.xlu0 %v4175
        %v4177 = vpop.xlane.xlu0 %4176
        %v4178 = vsel %vm481, %v4155, -inf
        %4179 = vmax.xlane.f32.xlu0 %v4178
        %v4180 = vpop.xlane.xlu0 %4179
        %v4181 = vsub.f32 %v3952, %v4159
        %v4182 = vsub.f32 %v3981, %v4162
        %v4183 = vsub.f32 %v4010, %v4165
        %v4184 = vsub.f32 %v4039, %v4168
        %v4185 = vsub.f32 %v4068, %v4171
        %v4186 = vsub.f32 %v4097, %v4174
        %v4187 = vsub.f32 %v4126, %v4177
        %v4188 = vsub.f32 %v4155, %v4180
        %v4189 = vmul.f32 %v4181, 1.442695
        %v4190 = vpow.pop %v4189
        %v4191 = vmul.f32 %v4182, 1.442695
        %v4192 = vpow.pop %v4191
        %v4193 = vmul.f32 %v4183, 1.442695
        %v4194 = vpow.pop %v4193
        %v4195 = vmul.f32 %v4184, 1.442695
        %v4196 = vpow.pop %v4195
        %v4197 = vmul.f32 %v4185, 1.442695
        %v4198 = vpow.pop %v4197
        %v4199 = vmul.f32 %v4186, 1.442695
        %v4200 = vpow.pop %v4199
        %v4201 = vmul.f32 %v4187, 1.442695
        %v4202 = vpow.pop %v4201
        %v4203 = vmul.f32 %v4188, 1.442695
        %v4204 = vpow.pop %v4203
        %v4205 = vsel %vm481, %v4190, 0.0
        %4206 = vadd.xlane.f32.xlu0 %v4205
        %v4207 = vpop.xlane.xlu0 %4206
        %v4208 = vsel %vm481, %v4192, 0.0
        %4209 = vadd.xlane.f32.xlu0 %v4208
        %v4210 = vpop.xlane.xlu0 %4209
        %v4211 = vsel %vm481, %v4194, 0.0
        %4212 = vadd.xlane.f32.xlu0 %v4211
        %v4213 = vpop.xlane.xlu0 %4212
        %v4214 = vsel %vm481, %v4196, 0.0
        %4215 = vadd.xlane.f32.xlu0 %v4214
        %v4216 = vpop.xlane.xlu0 %4215
        %v4217 = vsel %vm481, %v4198, 0.0
        %4218 = vadd.xlane.f32.xlu0 %v4217
        %v4219 = vpop.xlane.xlu0 %4218
        %v4220 = vsel %vm481, %v4200, 0.0
        %4221 = vadd.xlane.f32.xlu0 %v4220
        %v4222 = vpop.xlane.xlu0 %4221
        %v4223 = vsel %vm481, %v4202, 0.0
        %4224 = vadd.xlane.f32.xlu0 %v4223
        %v4225 = vpop.xlane.xlu0 %4224
        %v4226 = vsel %vm481, %v4204, 0.0
        %4227 = vadd.xlane.f32.xlu0 %v4226
        %v4228 = vpop.xlane.xlu0 %4227
        %v4229 = vrcp.pop %v4207
        %v4230 = vrcp.pop %v4210
        %v4231 = vrcp.pop %v4213
        %v4232 = vrcp.pop %v4216
        %v4233 = vrcp.pop %v4219
        %v4234 = vrcp.pop %v4222
        %v4235 = vrcp.pop %v4225
        %v4236 = vrcp.pop %v4228
        %v4237 = vmul.f32 %v4190, %v4229
        %v4238 = vmul.f32 %v4192, %v4230
        %v4239 = vmul.f32 %v4194, %v4231
        %v4240 = vmul.f32 %v4196, %v4232
        %v4241 = vmul.f32 %v4198, %v4233
        %v4242 = vmul.f32 %v4200, %v4234
        %v4243 = vmul.f32 %v4202, %v4235
        %v4244 = vmul.f32 %v4204, %v4236
        %4245 = vrot.lane.b32.xlu0 %v3837, 80
        %v4246 = vpop.permute.xlu0 %4245
        %v4249 = vsel %vm481, %v4237, 0
        %4251 = vmatpush.msra.mxu0 0.0
        %4252 = vmatpush.msra.mxu0 0.0
        %4253 = vmatpush.msra.mxu0 0.0
        %4254 = vmatpush.msra.mxu0 0.0
        %4255 = vmatpush.msra.mxu0 0.0
        %4256 = vmatpush.msra.mxu0 0.0
        %4257 = vmatpush.msra.mxu0 0.0
        %4258 = vmatpush.msra.mxu0 0.0
        %4259 = vmatpush.msra.mxu0 0.0
        %4260 = vmatpush.msra.mxu0 0.0
        %4261 = vmatpush.msra.mxu0 0.0
        %4262 = vmatpush.msra.mxu0 0.0
        %4263 = vmatpush.msra.mxu0 0.0
        %4264 = vmatpush.msra.mxu0 0.0
        %4265 = vmatpush.msra.mxu0 0.0
        %4266 = vmatpush.msra.mxu0 %v4246
        %4267 = vmatmul.f32.gmra.mxu0 %v4249
        %v4268 = vpop.f32.mrf.mxu0
        %v4269 = vadd.f32 0.0, %v4268
        %4270 = vdwg.mxu0
        %4271 = vrot.lane.b32.xlu0 %v3838, 80
        %v4272 = vpop.permute.xlu0 %4271
        %v4275 = vsel %vm481, %v4238, 0
        %4277 = vmatpush.msra.mxu0 0.0
        %4278 = vmatpush.msra.mxu0 0.0
        %4279 = vmatpush.msra.mxu0 0.0
        %4280 = vmatpush.msra.mxu0 0.0
        %4281 = vmatpush.msra.mxu0 0.0
        %4282 = vmatpush.msra.mxu0 0.0
        %4283 = vmatpush.msra.mxu0 0.0
        %4284 = vmatpush.msra.mxu0 0.0
        %4285 = vmatpush.msra.mxu0 0.0
        %4286 = vmatpush.msra.mxu0 0.0
        %4287 = vmatpush.msra.mxu0 0.0
        %4288 = vmatpush.msra.mxu0 0.0
        %4289 = vmatpush.msra.mxu0 0.0
        %4290 = vmatpush.msra.mxu0 0.0
        %4291 = vmatpush.msra.mxu0 0.0
        %4292 = vmatpush.msra.mxu0 %v4272
        %4293 = vmatmul.f32.gmra.mxu0 %v4275
        %v4294 = vpop.f32.mrf.mxu0
        %v4295 = vadd.f32 0.0, %v4294
        %4296 = vdwg.mxu0
        %4297 = vrot.lane.b32.xlu0 %v3839, 80
        %v4298 = vpop.permute.xlu0 %4297
        %v4301 = vsel %vm481, %v4239, 0
        %4303 = vmatpush.msra.mxu0 0.0
        %4304 = vmatpush.msra.mxu0 0.0
        %4305 = vmatpush.msra.mxu0 0.0
        %4306 = vmatpush.msra.mxu0 0.0
        %4307 = vmatpush.msra.mxu0 0.0
        %4308 = vmatpush.msra.mxu0 0.0
        %4309 = vmatpush.msra.mxu0 0.0
        %4310 = vmatpush.msra.mxu0 0.0
        %4311 = vmatpush.msra.mxu0 0.0
        %4312 = vmatpush.msra.mxu0 0.0
        %4313 = vmatpush.msra.mxu0 0.0
        %4314 = vmatpush.msra.mxu0 0.0
        %4315 = vmatpush.msra.mxu0 0.0
        %4316 = vmatpush.msra.mxu0 0.0
        %4317 = vmatpush.msra.mxu0 0.0
        %4318 = vmatpush.msra.mxu0 %v4298
        %4319 = vmatmul.f32.gmra.mxu0 %v4301
        %v4320 = vpop.f32.mrf.mxu0
        %v4321 = vadd.f32 0.0, %v4320
        %4322 = vdwg.mxu0
        %4323 = vrot.lane.b32.xlu0 %v3840, 80
        %v4324 = vpop.permute.xlu0 %4323
        %v4327 = vsel %vm481, %v4240, 0
        %4329 = vmatpush.msra.mxu0 0.0
        %4330 = vmatpush.msra.mxu0 0.0
        %4331 = vmatpush.msra.mxu0 0.0
        %4332 = vmatpush.msra.mxu0 0.0
        %4333 = vmatpush.msra.mxu0 0.0
        %4334 = vmatpush.msra.mxu0 0.0
        %4335 = vmatpush.msra.mxu0 0.0
        %4336 = vmatpush.msra.mxu0 0.0
        %4337 = vmatpush.msra.mxu0 0.0
        %4338 = vmatpush.msra.mxu0 0.0
        %4339 = vmatpush.msra.mxu0 0.0
        %4340 = vmatpush.msra.mxu0 0.0
        %4341 = vmatpush.msra.mxu0 0.0
        %4342 = vmatpush.msra.mxu0 0.0
        %4343 = vmatpush.msra.mxu0 0.0
        %4344 = vmatpush.msra.mxu0 %v4324
        %4345 = vmatmul.f32.gmra.mxu0 %v4327
        %v4346 = vpop.f32.mrf.mxu0
        %v4347 = vadd.f32 0.0, %v4346
        %4348 = vdwg.mxu0
        %4349 = vrot.lane.b32.xlu0 %v3841, 80
        %v4350 = vpop.permute.xlu0 %4349
        %v4353 = vsel %vm481, %v4241, 0
        %4355 = vmatpush.msra.mxu0 0.0
        %4356 = vmatpush.msra.mxu0 0.0
        %4357 = vmatpush.msra.mxu0 0.0
        %4358 = vmatpush.msra.mxu0 0.0
        %4359 = vmatpush.msra.mxu0 0.0
        %4360 = vmatpush.msra.mxu0 0.0
        %4361 = vmatpush.msra.mxu0 0.0
        %4362 = vmatpush.msra.mxu0 0.0
        %4363 = vmatpush.msra.mxu0 0.0
        %4364 = vmatpush.msra.mxu0 0.0
        %4365 = vmatpush.msra.mxu0 0.0
        %4366 = vmatpush.msra.mxu0 0.0
        %4367 = vmatpush.msra.mxu0 0.0
        %4368 = vmatpush.msra.mxu0 0.0
        %4369 = vmatpush.msra.mxu0 0.0
        %4370 = vmatpush.msra.mxu0 %v4350
        %4371 = vmatmul.f32.gmra.mxu0 %v4353
        %v4372 = vpop.f32.mrf.mxu0
        %v4373 = vadd.f32 0.0, %v4372
        %4374 = vdwg.mxu0
        %4375 = vrot.lane.b32.xlu0 %v3842, 80
        %v4376 = vpop.permute.xlu0 %4375
        %v4379 = vsel %vm481, %v4242, 0
        %4381 = vmatpush.msra.mxu0 0.0
        %4382 = vmatpush.msra.mxu0 0.0
        %4383 = vmatpush.msra.mxu0 0.0
        %4384 = vmatpush.msra.mxu0 0.0
        %4385 = vmatpush.msra.mxu0 0.0
        %4386 = vmatpush.msra.mxu0 0.0
        %4387 = vmatpush.msra.mxu0 0.0
        %4388 = vmatpush.msra.mxu0 0.0
        %4389 = vmatpush.msra.mxu0 0.0
        %4390 = vmatpush.msra.mxu0 0.0
        %4391 = vmatpush.msra.mxu0 0.0
        %4392 = vmatpush.msra.mxu0 0.0
        %4393 = vmatpush.msra.mxu0 0.0
        %4394 = vmatpush.msra.mxu0 0.0
        %4395 = vmatpush.msra.mxu0 0.0
        %4396 = vmatpush.msra.mxu0 %v4376
        %4397 = vmatmul.f32.gmra.mxu0 %v4379
        %v4398 = vpop.f32.mrf.mxu0
        %v4399 = vadd.f32 0.0, %v4398
        %4400 = vdwg.mxu0
        %4401 = vrot.lane.b32.xlu0 %v3843, 80
        %v4402 = vpop.permute.xlu0 %4401
        %v4405 = vsel %vm481, %v4243, 0
        %4407 = vmatpush.msra.mxu0 0.0
        %4408 = vmatpush.msra.mxu0 0.0
        %4409 = vmatpush.msra.mxu0 0.0
        %4410 = vmatpush.msra.mxu0 0.0
        %4411 = vmatpush.msra.mxu0 0.0
        %4412 = vmatpush.msra.mxu0 0.0
        %4413 = vmatpush.msra.mxu0 0.0
        %4414 = vmatpush.msra.mxu0 0.0
        %4415 = vmatpush.msra.mxu0 0.0
        %4416 = vmatpush.msra.mxu0 0.0
        %4417 = vmatpush.msra.mxu0 0.0
        %4418 = vmatpush.msra.mxu0 0.0
        %4419 = vmatpush.msra.mxu0 0.0
        %4420 = vmatpush.msra.mxu0 0.0
        %4421 = vmatpush.msra.mxu0 0.0
        %4422 = vmatpush.msra.mxu0 %v4402
        %4423 = vmatmul.f32.gmra.mxu0 %v4405
        %v4424 = vpop.f32.mrf.mxu0
        %v4425 = vadd.f32 0.0, %v4424
        %4426 = vdwg.mxu0
        %4427 = vrot.lane.b32.xlu0 %v3844, 80
        %v4428 = vpop.permute.xlu0 %4427
        %v4431 = vsel %vm481, %v4244, 0
        %4433 = vmatpush.msra.mxu0 0.0
        %4434 = vmatpush.msra.mxu0 0.0
        %4435 = vmatpush.msra.mxu0 0.0
        %4436 = vmatpush.msra.mxu0 0.0
        %4437 = vmatpush.msra.mxu0 0.0
        %4438 = vmatpush.msra.mxu0 0.0
        %4439 = vmatpush.msra.mxu0 0.0
        %4440 = vmatpush.msra.mxu0 0.0
        %4441 = vmatpush.msra.mxu0 0.0
        %4442 = vmatpush.msra.mxu0 0.0
        %4443 = vmatpush.msra.mxu0 0.0
        %4444 = vmatpush.msra.mxu0 0.0
        %4445 = vmatpush.msra.mxu0 0.0
        %4446 = vmatpush.msra.mxu0 0.0
        %4447 = vmatpush.msra.mxu0 0.0
        %4448 = vmatpush.msra.mxu0 %v4428
        %4449 = vmatmul.f32.gmra.mxu0 %v4431
        %v4450 = vpop.f32.mrf.mxu0
        %v4451 = vadd.f32 0.0, %v4450
        %4452 = vdwg.mxu0
        %v4453 = vpack.c.bf16 %v4295, %v4269
        %v4454 = vpack.c.bf16 %v4347, %v4321
        %v4455 = vpack.c.bf16 %v4399, %v4373
        %v4456 = vpack.c.bf16 %v4451, %v4425
        %s4457 = scalar_lea.vmem %s4, 20
        %v4458 = vld [vmem:[%s4457] sm:$0xf]
        %v4460 = vsel %vm481, %v4453, 0
        %v4463 = vsel %vm481, %v4454, 0
        %v4466 = vsel %vm481, %v4455, 0
        %v4469 = vsel %vm481, %v4456, 0
        %v4472 = vsel %vm1655, %v4458, 0
        %4474 = vmatpush.bf16.msra.mxu0 0
        %4475 = vmatpush.bf16.msra.mxu0 0
        %4476 = vmatpush.bf16.msra.mxu0 0
        %4477 = vmatpush.bf16.msra.mxu0 0
        %4478 = vmatpush.bf16.msra.mxu0 0
        %4479 = vmatpush.bf16.msra.mxu0 0
        %4480 = vmatpush.bf16.msra.mxu0 0
        %4481 = vmatpush.bf16.msra.mxu0 %v4472
        %4482 = vmatmul.bf16.gmra.mxu0 %v4460
        %v4483 = vpop.f32.mrf.mxu0
        %v4484 = vadd.f32 0.0, %v4483
        %v4485 = vpop.f32.mrf.mxu0
        %v4486 = vadd.f32 0.0, %v4485
        %4487 = vmatmul.bf16.gmra.mxu0 %v4463
        %v4488 = vpop.f32.mrf.mxu0
        %v4489 = vadd.f32 0.0, %v4488
        %v4490 = vpop.f32.mrf.mxu0
        %v4491 = vadd.f32 0.0, %v4490
        %4492 = vmatmul.bf16.gmra.mxu0 %v4466
        %v4493 = vpop.f32.mrf.mxu0
        %v4494 = vadd.f32 0.0, %v4493
        %v4495 = vpop.f32.mrf.mxu0
        %v4496 = vadd.f32 0.0, %v4495
        %4497 = vmatmul.bf16.gmra.mxu0 %v4469
        %v4498 = vpop.f32.mrf.mxu0
        %v4499 = vadd.f32 0.0, %v4498
        %v4500 = vpop.f32.mrf.mxu0
        %v4501 = vadd.f32 0.0, %v4500
        %4502 = vdwg.mxu0
        %v4503 = vadd.f32 %v3829, %v4484
        %v4504 = vadd.f32 %v3830, %v4486
        %v4505 = vadd.f32 %v3831, %v4489
        %v4506 = vadd.f32 %v3832, %v4491
        %v4507 = vadd.f32 %v3833, %v4494
        %v4508 = vadd.f32 %v3834, %v4496
        %v4509 = vadd.f32 %v3835, %v4499
        %v4510 = vadd.f32 %v3836, %v4501
        %v4511 = vld [vmem:[%s295 + $0x8] sm:$0xff]
        %v4512 = vld [vmem:[%s295 + $0x18] sm:$0xff]
        %v4513 = vld [vmem:[%s295 + $0x28] sm:$0xff]
        %v4514 = vld [vmem:[%s295 + $0x38] sm:$0xff]
        %v4515 = vld [vmem:[%s295 + $0x48] sm:$0xff]
        %v4516 = vld [vmem:[%s295 + $0x58] sm:$0xff]
        %v4517 = vld [vmem:[%s295 + $0x68] sm:$0xff]
        %v4518 = vld [vmem:[%s295 + $0x78] sm:$0xff]
        %v4519 = vsel %vm1748, %v4511, -inf
        %4520 = vmax.xlane.f32.xlu0 %v4519
        %v4521 = vpop.xlane.xlu0 %4520
        %v4522 = vsel %vm1748, %v4512, -inf
        %4523 = vmax.xlane.f32.xlu0 %v4522
        %v4524 = vpop.xlane.xlu0 %4523
        %v4525 = vsel %vm1748, %v4513, -inf
        %4526 = vmax.xlane.f32.xlu0 %v4525
        %v4527 = vpop.xlane.xlu0 %4526
        %v4528 = vsel %vm1748, %v4514, -inf
        %4529 = vmax.xlane.f32.xlu0 %v4528
        %v4530 = vpop.xlane.xlu0 %4529
        %v4531 = vsel %vm1748, %v4515, -inf
        %4532 = vmax.xlane.f32.xlu0 %v4531
        %v4533 = vpop.xlane.xlu0 %4532
        %v4534 = vsel %vm1748, %v4516, -inf
        %4535 = vmax.xlane.f32.xlu0 %v4534
        %v4536 = vpop.xlane.xlu0 %4535
        %v4537 = vsel %vm1748, %v4517, -inf
        %4538 = vmax.xlane.f32.xlu0 %v4537
        %v4539 = vpop.xlane.xlu0 %4538
        %v4540 = vsel %vm1748, %v4518, -inf
        %4541 = vmax.xlane.f32.xlu0 %v4540
        %v4542 = vpop.xlane.xlu0 %4541
        %v4543 = vadd.f32 %v4521, %v3153
        %v4544 = vadd.f32 %v4524, %v3160
        %v4545 = vadd.f32 %v4527, %v3167
        %v4546 = vadd.f32 %v4530, %v3174
        %v4547 = vadd.f32 %v4533, %v3181
        %v4548 = vadd.f32 %v4536, %v3188
        %v4549 = vadd.f32 %v4539, %v3195
        %v4550 = vadd.f32 %v4542, %v3202
        %4552 = vrot.lane.b32.xlu0 %v4511, 64
        %v4553 = vpop.permute.xlu0 %4552
        %4554 = vrot.lane.b32.xlu0 %v4511, 56
        %v4555 = vpop.permute.xlu0 %4554
        %4564 = vset.pattern.permute.xlu0 0
        %4565 = vperm.xlu0 %4564, %v4543
        %v4566 = vpop.permute.xlu0 %4565
        %4567 = vset.pattern.permute.xlu0 0
        %4568 = vperm.xlu0 %4567, %v4544
        %v4569 = vpop.permute.xlu0 %4568
        %4570 = vset.pattern.permute.xlu0 0
        %4571 = vperm.xlu0 %4570, %v4545
        %v4572 = vpop.permute.xlu0 %4571
        %4573 = vset.pattern.permute.xlu0 0
        %4574 = vperm.xlu0 %4573, %v4546
        %v4575 = vpop.permute.xlu0 %4574
        %4576 = vset.pattern.permute.xlu0 0
        %4577 = vperm.xlu0 %4576, %v4547
        %v4578 = vpop.permute.xlu0 %4577
        %4579 = vset.pattern.permute.xlu0 0
        %4580 = vperm.xlu0 %4579, %v4548
        %v4581 = vpop.permute.xlu0 %4580
        %4582 = vset.pattern.permute.xlu0 0
        %4583 = vperm.xlu0 %4582, %v4549
        %v4584 = vpop.permute.xlu0 %4583
        %4585 = vset.pattern.permute.xlu0 0
        %4586 = vperm.xlu0 %4585, %v4550
        %v4587 = vpop.permute.xlu0 %4586
        %v4588 = vperm.slane %v4566, %v457
        %v4589 = vperm.slane %v4569, %v457
        %v4590 = vperm.slane %v4572, %v457
        %v4591 = vperm.slane %v4575, %v457
        %v4592 = vperm.slane %v4578, %v457
        %v4593 = vperm.slane %v4581, %v457
        %v4594 = vperm.slane %v4584, %v457
        %v4595 = vperm.slane %v4587, %v457
        %v4596 = vsel %vm466, %v4589, %v4588
        %v4597 = vsel %vm468, %v4590, %v4596
        %v4598 = vsel %vm470, %v4591, %v4597
        %v4599 = vsel %vm472, %v4592, %v4598
        %v4600 = vsel %vm474, %v4593, %v4599
        %v4601 = vsel %vm476, %v4594, %v4600
        %v4602 = vsel %vm478, %v4595, %v4601
        %v4604 = vsel %vm481, %v4553, 0
        %v4606 = vsel %vm481, %v4555, 0
        %4608 = vmatpush.xpose.msra.mxu0 0.0
        %4609 = vmatpush.xpose.msra.mxu0 0.0
        %4610 = vmatpush.xpose.msra.mxu0 0.0
        %4611 = vmatpush.xpose.msra.mxu0 0.0
        %4612 = vmatpush.xpose.msra.mxu0 0.0
        %4613 = vmatpush.xpose.msra.mxu0 0.0
        %4614 = vmatpush.xpose.msra.mxu0 0.0
        %4615 = vmatpush.xpose.msra.mxu0 0.0
        %4616 = vmatpush.xpose.msra.mxu0 0.0
        %4617 = vmatpush.xpose.msra.mxu0 0.0
        %4618 = vmatpush.xpose.msra.mxu0 0.0
        %4619 = vmatpush.xpose.msra.mxu0 0.0
        %4620 = vmatpush.xpose.msra.mxu0 0.0
        %4621 = vmatpush.xpose.msra.mxu0 0.0
        %4622 = vmatpush.xpose.msra.mxu0 0.0
        %4623 = vmatpush.xpose.msra.mxu0 %v4606
        %4624 = vmatmul.f32.gmra.mxu0 %v4604
        %v4625 = vpop.f32.mrf.mxu0
        %v4626 = vadd.f32 %v4602, %v4625
        %4627 = vdwg.mxu0
        %4629 = vrot.lane.b32.xlu0 %v4512, 64
        %v4630 = vpop.permute.xlu0 %4629
        %4631 = vrot.lane.b32.xlu0 %v4512, 56
        %v4632 = vpop.permute.xlu0 %4631
        %v4633 = vsel %vm481, %v4630, 0
        %v4635 = vsel %vm481, %v4632, 0
        %4637 = vmatpush.xpose.msra.mxu0 0.0
        %4638 = vmatpush.xpose.msra.mxu0 0.0
        %4639 = vmatpush.xpose.msra.mxu0 0.0
        %4640 = vmatpush.xpose.msra.mxu0 0.0
        %4641 = vmatpush.xpose.msra.mxu0 0.0
        %4642 = vmatpush.xpose.msra.mxu0 0.0
        %4643 = vmatpush.xpose.msra.mxu0 0.0
        %4644 = vmatpush.xpose.msra.mxu0 0.0
        %4645 = vmatpush.xpose.msra.mxu0 0.0
        %4646 = vmatpush.xpose.msra.mxu0 0.0
        %4647 = vmatpush.xpose.msra.mxu0 0.0
        %4648 = vmatpush.xpose.msra.mxu0 0.0
        %4649 = vmatpush.xpose.msra.mxu0 0.0
        %4650 = vmatpush.xpose.msra.mxu0 0.0
        %4651 = vmatpush.xpose.msra.mxu0 0.0
        %4652 = vmatpush.xpose.msra.mxu0 %v4635
        %4653 = vmatmul.f32.gmra.mxu0 %v4633
        %v4654 = vpop.f32.mrf.mxu0
        %v4655 = vadd.f32 %v4602, %v4654
        %4656 = vdwg.mxu0
        %4658 = vrot.lane.b32.xlu0 %v4513, 64
        %v4659 = vpop.permute.xlu0 %4658
        %4660 = vrot.lane.b32.xlu0 %v4513, 56
        %v4661 = vpop.permute.xlu0 %4660
        %v4662 = vsel %vm481, %v4659, 0
        %v4664 = vsel %vm481, %v4661, 0
        %4666 = vmatpush.xpose.msra.mxu0 0.0
        %4667 = vmatpush.xpose.msra.mxu0 0.0
        %4668 = vmatpush.xpose.msra.mxu0 0.0
        %4669 = vmatpush.xpose.msra.mxu0 0.0
        %4670 = vmatpush.xpose.msra.mxu0 0.0
        %4671 = vmatpush.xpose.msra.mxu0 0.0
        %4672 = vmatpush.xpose.msra.mxu0 0.0
        %4673 = vmatpush.xpose.msra.mxu0 0.0
        %4674 = vmatpush.xpose.msra.mxu0 0.0
        %4675 = vmatpush.xpose.msra.mxu0 0.0
        %4676 = vmatpush.xpose.msra.mxu0 0.0
        %4677 = vmatpush.xpose.msra.mxu0 0.0
        %4678 = vmatpush.xpose.msra.mxu0 0.0
        %4679 = vmatpush.xpose.msra.mxu0 0.0
        %4680 = vmatpush.xpose.msra.mxu0 0.0
        %4681 = vmatpush.xpose.msra.mxu0 %v4664
        %4682 = vmatmul.f32.gmra.mxu0 %v4662
        %v4683 = vpop.f32.mrf.mxu0
        %v4684 = vadd.f32 %v4602, %v4683
        %4685 = vdwg.mxu0
        %4687 = vrot.lane.b32.xlu0 %v4514, 64
        %v4688 = vpop.permute.xlu0 %4687
        %4689 = vrot.lane.b32.xlu0 %v4514, 56
        %v4690 = vpop.permute.xlu0 %4689
        %v4691 = vsel %vm481, %v4688, 0
        %v4693 = vsel %vm481, %v4690, 0
        %4695 = vmatpush.xpose.msra.mxu0 0.0
        %4696 = vmatpush.xpose.msra.mxu0 0.0
        %4697 = vmatpush.xpose.msra.mxu0 0.0
        %4698 = vmatpush.xpose.msra.mxu0 0.0
        %4699 = vmatpush.xpose.msra.mxu0 0.0
        %4700 = vmatpush.xpose.msra.mxu0 0.0
        %4701 = vmatpush.xpose.msra.mxu0 0.0
        %4702 = vmatpush.xpose.msra.mxu0 0.0
        %4703 = vmatpush.xpose.msra.mxu0 0.0
        %4704 = vmatpush.xpose.msra.mxu0 0.0
        %4705 = vmatpush.xpose.msra.mxu0 0.0
        %4706 = vmatpush.xpose.msra.mxu0 0.0
        %4707 = vmatpush.xpose.msra.mxu0 0.0
        %4708 = vmatpush.xpose.msra.mxu0 0.0
        %4709 = vmatpush.xpose.msra.mxu0 0.0
        %4710 = vmatpush.xpose.msra.mxu0 %v4693
        %4711 = vmatmul.f32.gmra.mxu0 %v4691
        %v4712 = vpop.f32.mrf.mxu0
        %v4713 = vadd.f32 %v4602, %v4712
        %4714 = vdwg.mxu0
        %4716 = vrot.lane.b32.xlu0 %v4515, 64
        %v4717 = vpop.permute.xlu0 %4716
        %4718 = vrot.lane.b32.xlu0 %v4515, 56
        %v4719 = vpop.permute.xlu0 %4718
        %v4720 = vsel %vm481, %v4717, 0
        %v4722 = vsel %vm481, %v4719, 0
        %4724 = vmatpush.xpose.msra.mxu0 0.0
        %4725 = vmatpush.xpose.msra.mxu0 0.0
        %4726 = vmatpush.xpose.msra.mxu0 0.0
        %4727 = vmatpush.xpose.msra.mxu0 0.0
        %4728 = vmatpush.xpose.msra.mxu0 0.0
        %4729 = vmatpush.xpose.msra.mxu0 0.0
        %4730 = vmatpush.xpose.msra.mxu0 0.0
        %4731 = vmatpush.xpose.msra.mxu0 0.0
        %4732 = vmatpush.xpose.msra.mxu0 0.0
        %4733 = vmatpush.xpose.msra.mxu0 0.0
        %4734 = vmatpush.xpose.msra.mxu0 0.0
        %4735 = vmatpush.xpose.msra.mxu0 0.0
        %4736 = vmatpush.xpose.msra.mxu0 0.0
        %4737 = vmatpush.xpose.msra.mxu0 0.0
        %4738 = vmatpush.xpose.msra.mxu0 0.0
        %4739 = vmatpush.xpose.msra.mxu0 %v4722
        %4740 = vmatmul.f32.gmra.mxu0 %v4720
        %v4741 = vpop.f32.mrf.mxu0
        %v4742 = vadd.f32 %v4602, %v4741
        %4743 = vdwg.mxu0
        %4745 = vrot.lane.b32.xlu0 %v4516, 64
        %v4746 = vpop.permute.xlu0 %4745
        %4747 = vrot.lane.b32.xlu0 %v4516, 56
        %v4748 = vpop.permute.xlu0 %4747
        %v4749 = vsel %vm481, %v4746, 0
        %v4751 = vsel %vm481, %v4748, 0
        %4753 = vmatpush.xpose.msra.mxu0 0.0
        %4754 = vmatpush.xpose.msra.mxu0 0.0
        %4755 = vmatpush.xpose.msra.mxu0 0.0
        %4756 = vmatpush.xpose.msra.mxu0 0.0
        %4757 = vmatpush.xpose.msra.mxu0 0.0
        %4758 = vmatpush.xpose.msra.mxu0 0.0
        %4759 = vmatpush.xpose.msra.mxu0 0.0
        %4760 = vmatpush.xpose.msra.mxu0 0.0
        %4761 = vmatpush.xpose.msra.mxu0 0.0
        %4762 = vmatpush.xpose.msra.mxu0 0.0
        %4763 = vmatpush.xpose.msra.mxu0 0.0
        %4764 = vmatpush.xpose.msra.mxu0 0.0
        %4765 = vmatpush.xpose.msra.mxu0 0.0
        %4766 = vmatpush.xpose.msra.mxu0 0.0
        %4767 = vmatpush.xpose.msra.mxu0 0.0
        %4768 = vmatpush.xpose.msra.mxu0 %v4751
        %4769 = vmatmul.f32.gmra.mxu0 %v4749
        %v4770 = vpop.f32.mrf.mxu0
        %v4771 = vadd.f32 %v4602, %v4770
        %4772 = vdwg.mxu0
        %4774 = vrot.lane.b32.xlu0 %v4517, 64
        %v4775 = vpop.permute.xlu0 %4774
        %4776 = vrot.lane.b32.xlu0 %v4517, 56
        %v4777 = vpop.permute.xlu0 %4776
        %v4778 = vsel %vm481, %v4775, 0
        %v4780 = vsel %vm481, %v4777, 0
        %4782 = vmatpush.xpose.msra.mxu0 0.0
        %4783 = vmatpush.xpose.msra.mxu0 0.0
        %4784 = vmatpush.xpose.msra.mxu0 0.0
        %4785 = vmatpush.xpose.msra.mxu0 0.0
        %4786 = vmatpush.xpose.msra.mxu0 0.0
        %4787 = vmatpush.xpose.msra.mxu0 0.0
        %4788 = vmatpush.xpose.msra.mxu0 0.0
        %4789 = vmatpush.xpose.msra.mxu0 0.0
        %4790 = vmatpush.xpose.msra.mxu0 0.0
        %4791 = vmatpush.xpose.msra.mxu0 0.0
        %4792 = vmatpush.xpose.msra.mxu0 0.0
        %4793 = vmatpush.xpose.msra.mxu0 0.0
        %4794 = vmatpush.xpose.msra.mxu0 0.0
        %4795 = vmatpush.xpose.msra.mxu0 0.0
        %4796 = vmatpush.xpose.msra.mxu0 0.0
        %4797 = vmatpush.xpose.msra.mxu0 %v4780
        %4798 = vmatmul.f32.gmra.mxu0 %v4778
        %v4799 = vpop.f32.mrf.mxu0
        %v4800 = vadd.f32 %v4602, %v4799
        %4801 = vdwg.mxu0
        %4803 = vrot.lane.b32.xlu0 %v4518, 64
        %v4804 = vpop.permute.xlu0 %4803
        %4805 = vrot.lane.b32.xlu0 %v4518, 56
        %v4806 = vpop.permute.xlu0 %4805
        %v4807 = vsel %vm481, %v4804, 0
        %v4809 = vsel %vm481, %v4806, 0
        %4811 = vmatpush.xpose.msra.mxu0 0.0
        %4812 = vmatpush.xpose.msra.mxu0 0.0
        %4813 = vmatpush.xpose.msra.mxu0 0.0
        %4814 = vmatpush.xpose.msra.mxu0 0.0
        %4815 = vmatpush.xpose.msra.mxu0 0.0
        %4816 = vmatpush.xpose.msra.mxu0 0.0
        %4817 = vmatpush.xpose.msra.mxu0 0.0
        %4818 = vmatpush.xpose.msra.mxu0 0.0
        %4819 = vmatpush.xpose.msra.mxu0 0.0
        %4820 = vmatpush.xpose.msra.mxu0 0.0
        %4821 = vmatpush.xpose.msra.mxu0 0.0
        %4822 = vmatpush.xpose.msra.mxu0 0.0
        %4823 = vmatpush.xpose.msra.mxu0 0.0
        %4824 = vmatpush.xpose.msra.mxu0 0.0
        %4825 = vmatpush.xpose.msra.mxu0 0.0
        %4826 = vmatpush.xpose.msra.mxu0 %v4809
        %4827 = vmatmul.f32.gmra.mxu0 %v4807
        %v4828 = vpop.f32.mrf.mxu0
        %v4829 = vadd.f32 %v4602, %v4828
        %4830 = vdwg.mxu0
        %v4831 = vsel %vm481, %v4626, -inf
        %4832 = vmax.xlane.f32.xlu0 %v4831
        %v4833 = vpop.xlane.xlu0 %4832
        %v4834 = vsel %vm481, %v4655, -inf
        %4835 = vmax.xlane.f32.xlu0 %v4834
        %v4836 = vpop.xlane.xlu0 %4835
        %v4837 = vsel %vm481, %v4684, -inf
        %4838 = vmax.xlane.f32.xlu0 %v4837
        %v4839 = vpop.xlane.xlu0 %4838
        %v4840 = vsel %vm481, %v4713, -inf
        %4841 = vmax.xlane.f32.xlu0 %v4840
        %v4842 = vpop.xlane.xlu0 %4841
        %v4843 = vsel %vm481, %v4742, -inf
        %4844 = vmax.xlane.f32.xlu0 %v4843
        %v4845 = vpop.xlane.xlu0 %4844
        %v4846 = vsel %vm481, %v4771, -inf
        %4847 = vmax.xlane.f32.xlu0 %v4846
        %v4848 = vpop.xlane.xlu0 %4847
        %v4849 = vsel %vm481, %v4800, -inf
        %4850 = vmax.xlane.f32.xlu0 %v4849
        %v4851 = vpop.xlane.xlu0 %4850
        %v4852 = vsel %vm481, %v4829, -inf
        %4853 = vmax.xlane.f32.xlu0 %v4852
        %v4854 = vpop.xlane.xlu0 %4853
        %v4855 = vsub.f32 %v4626, %v4833
        %v4856 = vsub.f32 %v4655, %v4836
        %v4857 = vsub.f32 %v4684, %v4839
        %v4858 = vsub.f32 %v4713, %v4842
        %v4859 = vsub.f32 %v4742, %v4845
        %v4860 = vsub.f32 %v4771, %v4848
        %v4861 = vsub.f32 %v4800, %v4851
        %v4862 = vsub.f32 %v4829, %v4854
        %v4863 = vmul.f32 %v4855, 1.442695
        %v4864 = vpow.pop %v4863
        %v4865 = vmul.f32 %v4856, 1.442695
        %v4866 = vpow.pop %v4865
        %v4867 = vmul.f32 %v4857, 1.442695
        %v4868 = vpow.pop %v4867
        %v4869 = vmul.f32 %v4858, 1.442695
        %v4870 = vpow.pop %v4869
        %v4871 = vmul.f32 %v4859, 1.442695
        %v4872 = vpow.pop %v4871
        %v4873 = vmul.f32 %v4860, 1.442695
        %v4874 = vpow.pop %v4873
        %v4875 = vmul.f32 %v4861, 1.442695
        %v4876 = vpow.pop %v4875
        %v4877 = vmul.f32 %v4862, 1.442695
        %v4878 = vpow.pop %v4877
        %v4879 = vsel %vm481, %v4864, 0.0
        %4880 = vadd.xlane.f32.xlu0 %v4879
        %v4881 = vpop.xlane.xlu0 %4880
        %v4882 = vsel %vm481, %v4866, 0.0
        %4883 = vadd.xlane.f32.xlu0 %v4882
        %v4884 = vpop.xlane.xlu0 %4883
        %v4885 = vsel %vm481, %v4868, 0.0
        %4886 = vadd.xlane.f32.xlu0 %v4885
        %v4887 = vpop.xlane.xlu0 %4886
        %v4888 = vsel %vm481, %v4870, 0.0
        %4889 = vadd.xlane.f32.xlu0 %v4888
        %v4890 = vpop.xlane.xlu0 %4889
        %v4891 = vsel %vm481, %v4872, 0.0
        %4892 = vadd.xlane.f32.xlu0 %v4891
        %v4893 = vpop.xlane.xlu0 %4892
        %v4894 = vsel %vm481, %v4874, 0.0
        %4895 = vadd.xlane.f32.xlu0 %v4894
        %v4896 = vpop.xlane.xlu0 %4895
        %v4897 = vsel %vm481, %v4876, 0.0
        %4898 = vadd.xlane.f32.xlu0 %v4897
        %v4899 = vpop.xlane.xlu0 %4898
        %v4900 = vsel %vm481, %v4878, 0.0
        %4901 = vadd.xlane.f32.xlu0 %v4900
        %v4902 = vpop.xlane.xlu0 %4901
        %v4903 = vrcp.pop %v4881
        %v4904 = vrcp.pop %v4884
        %v4905 = vrcp.pop %v4887
        %v4906 = vrcp.pop %v4890
        %v4907 = vrcp.pop %v4893
        %v4908 = vrcp.pop %v4896
        %v4909 = vrcp.pop %v4899
        %v4910 = vrcp.pop %v4902
        %v4911 = vmul.f32 %v4864, %v4903
        %v4912 = vmul.f32 %v4866, %v4904
        %v4913 = vmul.f32 %v4868, %v4905
        %v4914 = vmul.f32 %v4870, %v4906
        %v4915 = vmul.f32 %v4872, %v4907
        %v4916 = vmul.f32 %v4874, %v4908
        %v4917 = vmul.f32 %v4876, %v4909
        %v4918 = vmul.f32 %v4878, %v4910
        %4919 = vrot.lane.b32.xlu0 %v4511, 48
        %v4920 = vpop.permute.xlu0 %4919
        %v4923 = vsel %vm481, %v4911, 0
        %4925 = vmatpush.msra.mxu0 0.0
        %4926 = vmatpush.msra.mxu0 0.0
        %4927 = vmatpush.msra.mxu0 0.0
        %4928 = vmatpush.msra.mxu0 0.0
        %4929 = vmatpush.msra.mxu0 0.0
        %4930 = vmatpush.msra.mxu0 0.0
        %4931 = vmatpush.msra.mxu0 0.0
        %4932 = vmatpush.msra.mxu0 0.0
        %4933 = vmatpush.msra.mxu0 0.0
        %4934 = vmatpush.msra.mxu0 0.0
        %4935 = vmatpush.msra.mxu0 0.0
        %4936 = vmatpush.msra.mxu0 0.0
        %4937 = vmatpush.msra.mxu0 0.0
        %4938 = vmatpush.msra.mxu0 0.0
        %4939 = vmatpush.msra.mxu0 0.0
        %4940 = vmatpush.msra.mxu0 %v4920
        %4941 = vmatmul.f32.gmra.mxu0 %v4923
        %v4942 = vpop.f32.mrf.mxu0
        %v4943 = vadd.f32 0.0, %v4942
        %4944 = vdwg.mxu0
        %4945 = vrot.lane.b32.xlu0 %v4512, 48
        %v4946 = vpop.permute.xlu0 %4945
        %v4949 = vsel %vm481, %v4912, 0
        %4951 = vmatpush.msra.mxu0 0.0
        %4952 = vmatpush.msra.mxu0 0.0
        %4953 = vmatpush.msra.mxu0 0.0
        %4954 = vmatpush.msra.mxu0 0.0
        %4955 = vmatpush.msra.mxu0 0.0
        %4956 = vmatpush.msra.mxu0 0.0
        %4957 = vmatpush.msra.mxu0 0.0
        %4958 = vmatpush.msra.mxu0 0.0
        %4959 = vmatpush.msra.mxu0 0.0
        %4960 = vmatpush.msra.mxu0 0.0
        %4961 = vmatpush.msra.mxu0 0.0
        %4962 = vmatpush.msra.mxu0 0.0
        %4963 = vmatpush.msra.mxu0 0.0
        %4964 = vmatpush.msra.mxu0 0.0
        %4965 = vmatpush.msra.mxu0 0.0
        %4966 = vmatpush.msra.mxu0 %v4946
        %4967 = vmatmul.f32.gmra.mxu0 %v4949
        %v4968 = vpop.f32.mrf.mxu0
        %v4969 = vadd.f32 0.0, %v4968
        %4970 = vdwg.mxu0
        %4971 = vrot.lane.b32.xlu0 %v4513, 48
        %v4972 = vpop.permute.xlu0 %4971
        %v4975 = vsel %vm481, %v4913, 0
        %4977 = vmatpush.msra.mxu0 0.0
        %4978 = vmatpush.msra.mxu0 0.0
        %4979 = vmatpush.msra.mxu0 0.0
        %4980 = vmatpush.msra.mxu0 0.0
        %4981 = vmatpush.msra.mxu0 0.0
        %4982 = vmatpush.msra.mxu0 0.0
        %4983 = vmatpush.msra.mxu0 0.0
        %4984 = vmatpush.msra.mxu0 0.0
        %4985 = vmatpush.msra.mxu0 0.0
        %4986 = vmatpush.msra.mxu0 0.0
        %4987 = vmatpush.msra.mxu0 0.0
        %4988 = vmatpush.msra.mxu0 0.0
        %4989 = vmatpush.msra.mxu0 0.0
        %4990 = vmatpush.msra.mxu0 0.0
        %4991 = vmatpush.msra.mxu0 0.0
        %4992 = vmatpush.msra.mxu0 %v4972
        %4993 = vmatmul.f32.gmra.mxu0 %v4975
        %v4994 = vpop.f32.mrf.mxu0
        %v4995 = vadd.f32 0.0, %v4994
        %4996 = vdwg.mxu0
        %4997 = vrot.lane.b32.xlu0 %v4514, 48
        %v4998 = vpop.permute.xlu0 %4997
        %v5001 = vsel %vm481, %v4914, 0
        %5003 = vmatpush.msra.mxu0 0.0
        %5004 = vmatpush.msra.mxu0 0.0
        %5005 = vmatpush.msra.mxu0 0.0
        %5006 = vmatpush.msra.mxu0 0.0
        %5007 = vmatpush.msra.mxu0 0.0
        %5008 = vmatpush.msra.mxu0 0.0
        %5009 = vmatpush.msra.mxu0 0.0
        %5010 = vmatpush.msra.mxu0 0.0
        %5011 = vmatpush.msra.mxu0 0.0
        %5012 = vmatpush.msra.mxu0 0.0
        %5013 = vmatpush.msra.mxu0 0.0
        %5014 = vmatpush.msra.mxu0 0.0
        %5015 = vmatpush.msra.mxu0 0.0
        %5016 = vmatpush.msra.mxu0 0.0
        %5017 = vmatpush.msra.mxu0 0.0
        %5018 = vmatpush.msra.mxu0 %v4998
        %5019 = vmatmul.f32.gmra.mxu0 %v5001
        %v5020 = vpop.f32.mrf.mxu0
        %v5021 = vadd.f32 0.0, %v5020
        %5022 = vdwg.mxu0
        %5023 = vrot.lane.b32.xlu0 %v4515, 48
        %v5024 = vpop.permute.xlu0 %5023
        %v5027 = vsel %vm481, %v4915, 0
        %5029 = vmatpush.msra.mxu0 0.0
        %5030 = vmatpush.msra.mxu0 0.0
        %5031 = vmatpush.msra.mxu0 0.0
        %5032 = vmatpush.msra.mxu0 0.0
        %5033 = vmatpush.msra.mxu0 0.0
        %5034 = vmatpush.msra.mxu0 0.0
        %5035 = vmatpush.msra.mxu0 0.0
        %5036 = vmatpush.msra.mxu0 0.0
        %5037 = vmatpush.msra.mxu0 0.0
        %5038 = vmatpush.msra.mxu0 0.0
        %5039 = vmatpush.msra.mxu0 0.0
        %5040 = vmatpush.msra.mxu0 0.0
        %5041 = vmatpush.msra.mxu0 0.0
        %5042 = vmatpush.msra.mxu0 0.0
        %5043 = vmatpush.msra.mxu0 0.0
        %5044 = vmatpush.msra.mxu0 %v5024
        %5045 = vmatmul.f32.gmra.mxu0 %v5027
        %v5046 = vpop.f32.mrf.mxu0
        %v5047 = vadd.f32 0.0, %v5046
        %5048 = vdwg.mxu0
        %5049 = vrot.lane.b32.xlu0 %v4516, 48
        %v5050 = vpop.permute.xlu0 %5049
        %v5053 = vsel %vm481, %v4916, 0
        %5055 = vmatpush.msra.mxu0 0.0
        %5056 = vmatpush.msra.mxu0 0.0
        %5057 = vmatpush.msra.mxu0 0.0
        %5058 = vmatpush.msra.mxu0 0.0
        %5059 = vmatpush.msra.mxu0 0.0
        %5060 = vmatpush.msra.mxu0 0.0
        %5061 = vmatpush.msra.mxu0 0.0
        %5062 = vmatpush.msra.mxu0 0.0
        %5063 = vmatpush.msra.mxu0 0.0
        %5064 = vmatpush.msra.mxu0 0.0
        %5065 = vmatpush.msra.mxu0 0.0
        %5066 = vmatpush.msra.mxu0 0.0
        %5067 = vmatpush.msra.mxu0 0.0
        %5068 = vmatpush.msra.mxu0 0.0
        %5069 = vmatpush.msra.mxu0 0.0
        %5070 = vmatpush.msra.mxu0 %v5050
        %5071 = vmatmul.f32.gmra.mxu0 %v5053
        %v5072 = vpop.f32.mrf.mxu0
        %v5073 = vadd.f32 0.0, %v5072
        %5074 = vdwg.mxu0
        %5075 = vrot.lane.b32.xlu0 %v4517, 48
        %v5076 = vpop.permute.xlu0 %5075
        %v5079 = vsel %vm481, %v4917, 0
        %5081 = vmatpush.msra.mxu0 0.0
        %5082 = vmatpush.msra.mxu0 0.0
        %5083 = vmatpush.msra.mxu0 0.0
        %5084 = vmatpush.msra.mxu0 0.0
        %5085 = vmatpush.msra.mxu0 0.0
        %5086 = vmatpush.msra.mxu0 0.0
        %5087 = vmatpush.msra.mxu0 0.0
        %5088 = vmatpush.msra.mxu0 0.0
        %5089 = vmatpush.msra.mxu0 0.0
        %5090 = vmatpush.msra.mxu0 0.0
        %5091 = vmatpush.msra.mxu0 0.0
        %5092 = vmatpush.msra.mxu0 0.0
        %5093 = vmatpush.msra.mxu0 0.0
        %5094 = vmatpush.msra.mxu0 0.0
        %5095 = vmatpush.msra.mxu0 0.0
        %5096 = vmatpush.msra.mxu0 %v5076
        %5097 = vmatmul.f32.gmra.mxu0 %v5079
        %v5098 = vpop.f32.mrf.mxu0
        %v5099 = vadd.f32 0.0, %v5098
        %5100 = vdwg.mxu0
        %5101 = vrot.lane.b32.xlu0 %v4518, 48
        %v5102 = vpop.permute.xlu0 %5101
        %v5105 = vsel %vm481, %v4918, 0
        %5107 = vmatpush.msra.mxu0 0.0
        %5108 = vmatpush.msra.mxu0 0.0
        %5109 = vmatpush.msra.mxu0 0.0
        %5110 = vmatpush.msra.mxu0 0.0
        %5111 = vmatpush.msra.mxu0 0.0
        %5112 = vmatpush.msra.mxu0 0.0
        %5113 = vmatpush.msra.mxu0 0.0
        %5114 = vmatpush.msra.mxu0 0.0
        %5115 = vmatpush.msra.mxu0 0.0
        %5116 = vmatpush.msra.mxu0 0.0
        %5117 = vmatpush.msra.mxu0 0.0
        %5118 = vmatpush.msra.mxu0 0.0
        %5119 = vmatpush.msra.mxu0 0.0
        %5120 = vmatpush.msra.mxu0 0.0
        %5121 = vmatpush.msra.mxu0 0.0
        %5122 = vmatpush.msra.mxu0 %v5102
        %5123 = vmatmul.f32.gmra.mxu0 %v5105
        %v5124 = vpop.f32.mrf.mxu0
        %v5125 = vadd.f32 0.0, %v5124
        %5126 = vdwg.mxu0
        %v5127 = vpack.c.bf16 %v4969, %v4943
        %v5128 = vpack.c.bf16 %v5021, %v4995
        %v5129 = vpack.c.bf16 %v5073, %v5047
        %v5130 = vpack.c.bf16 %v5125, %v5099
        %s5131 = scalar_lea.vmem %s4, 24
        %v5132 = vld [vmem:[%s5131] sm:$0xf]
        %v5134 = vsel %vm481, %v5127, 0
        %v5137 = vsel %vm481, %v5128, 0
        %v5140 = vsel %vm481, %v5129, 0
        %v5143 = vsel %vm481, %v5130, 0
        %v5146 = vsel %vm1655, %v5132, 0
        %5148 = vmatpush.bf16.msra.mxu0 0
        %5149 = vmatpush.bf16.msra.mxu0 0
        %5150 = vmatpush.bf16.msra.mxu0 0
        %5151 = vmatpush.bf16.msra.mxu0 0
        %5152 = vmatpush.bf16.msra.mxu0 0
        %5153 = vmatpush.bf16.msra.mxu0 0
        %5154 = vmatpush.bf16.msra.mxu0 0
        %5155 = vmatpush.bf16.msra.mxu0 %v5146
        %5156 = vmatmul.bf16.gmra.mxu0 %v5134
        %v5157 = vpop.f32.mrf.mxu0
        %v5158 = vadd.f32 0.0, %v5157
        %v5159 = vpop.f32.mrf.mxu0
        %v5160 = vadd.f32 0.0, %v5159
        %5161 = vmatmul.bf16.gmra.mxu0 %v5137
        %v5162 = vpop.f32.mrf.mxu0
        %v5163 = vadd.f32 0.0, %v5162
        %v5164 = vpop.f32.mrf.mxu0
        %v5165 = vadd.f32 0.0, %v5164
        %5166 = vmatmul.bf16.gmra.mxu0 %v5140
        %v5167 = vpop.f32.mrf.mxu0
        %v5168 = vadd.f32 0.0, %v5167
        %v5169 = vpop.f32.mrf.mxu0
        %v5170 = vadd.f32 0.0, %v5169
        %5171 = vmatmul.bf16.gmra.mxu0 %v5143
        %v5172 = vpop.f32.mrf.mxu0
        %v5173 = vadd.f32 0.0, %v5172
        %v5174 = vpop.f32.mrf.mxu0
        %v5175 = vadd.f32 0.0, %v5174
        %5176 = vdwg.mxu0
        %v5177 = vadd.f32 %v4503, %v5158
        %v5178 = vadd.f32 %v4504, %v5160
        %v5179 = vadd.f32 %v4505, %v5163
        %v5180 = vadd.f32 %v4506, %v5165
        %v5181 = vadd.f32 %v4507, %v5168
        %v5182 = vadd.f32 %v4508, %v5170
        %v5183 = vadd.f32 %v4509, %v5173
        %v5184 = vadd.f32 %v4510, %v5175
        %v5185 = vld [vmem:[%s295 + $0x8] sm:$0xff]
        %v5186 = vld [vmem:[%s295 + $0x18] sm:$0xff]
        %v5187 = vld [vmem:[%s295 + $0x28] sm:$0xff]
        %v5188 = vld [vmem:[%s295 + $0x38] sm:$0xff]
        %v5189 = vld [vmem:[%s295 + $0x48] sm:$0xff]
        %v5190 = vld [vmem:[%s295 + $0x58] sm:$0xff]
        %v5191 = vld [vmem:[%s295 + $0x68] sm:$0xff]
        %v5192 = vld [vmem:[%s295 + $0x78] sm:$0xff]
        %v5193 = vsel %vm2439, %v5185, -inf
        %5194 = vmax.xlane.f32.xlu0 %v5193
        %v5195 = vpop.xlane.xlu0 %5194
        %v5196 = vsel %vm2439, %v5186, -inf
        %5197 = vmax.xlane.f32.xlu0 %v5196
        %v5198 = vpop.xlane.xlu0 %5197
        %v5199 = vsel %vm2439, %v5187, -inf
        %5200 = vmax.xlane.f32.xlu0 %v5199
        %v5201 = vpop.xlane.xlu0 %5200
        %v5202 = vsel %vm2439, %v5188, -inf
        %5203 = vmax.xlane.f32.xlu0 %v5202
        %v5204 = vpop.xlane.xlu0 %5203
        %v5205 = vsel %vm2439, %v5189, -inf
        %5206 = vmax.xlane.f32.xlu0 %v5205
        %v5207 = vpop.xlane.xlu0 %5206
        %v5208 = vsel %vm2439, %v5190, -inf
        %5209 = vmax.xlane.f32.xlu0 %v5208
        %v5210 = vpop.xlane.xlu0 %5209
        %v5211 = vsel %vm2439, %v5191, -inf
        %5212 = vmax.xlane.f32.xlu0 %v5211
        %v5213 = vpop.xlane.xlu0 %5212
        %v5214 = vsel %vm2439, %v5192, -inf
        %5215 = vmax.xlane.f32.xlu0 %v5214
        %v5216 = vpop.xlane.xlu0 %5215
        %v5217 = vadd.f32 %v5195, %v3153
        %v5218 = vadd.f32 %v5198, %v3160
        %v5219 = vadd.f32 %v5201, %v3167
        %v5220 = vadd.f32 %v5204, %v3174
        %v5221 = vadd.f32 %v5207, %v3181
        %v5222 = vadd.f32 %v5210, %v3188
        %v5223 = vadd.f32 %v5213, %v3195
        %v5224 = vadd.f32 %v5216, %v3202
        %5226 = vrot.lane.b32.xlu0 %v5185, 32
        %v5227 = vpop.permute.xlu0 %5226
        %5228 = vrot.lane.b32.xlu0 %v5185, 24
        %v5229 = vpop.permute.xlu0 %5228
        %5238 = vset.pattern.permute.xlu0 0
        %5239 = vperm.xlu0 %5238, %v5217
        %v5240 = vpop.permute.xlu0 %5239
        %5241 = vset.pattern.permute.xlu0 0
        %5242 = vperm.xlu0 %5241, %v5218
        %v5243 = vpop.permute.xlu0 %5242
        %5244 = vset.pattern.permute.xlu0 0
        %5245 = vperm.xlu0 %5244, %v5219
        %v5246 = vpop.permute.xlu0 %5245
        %5247 = vset.pattern.permute.xlu0 0
        %5248 = vperm.xlu0 %5247, %v5220
        %v5249 = vpop.permute.xlu0 %5248
        %5250 = vset.pattern.permute.xlu0 0
        %5251 = vperm.xlu0 %5250, %v5221
        %v5252 = vpop.permute.xlu0 %5251
        %5253 = vset.pattern.permute.xlu0 0
        %5254 = vperm.xlu0 %5253, %v5222
        %v5255 = vpop.permute.xlu0 %5254
        %5256 = vset.pattern.permute.xlu0 0
        %5257 = vperm.xlu0 %5256, %v5223
        %v5258 = vpop.permute.xlu0 %5257
        %5259 = vset.pattern.permute.xlu0 0
        %5260 = vperm.xlu0 %5259, %v5224
        %v5261 = vpop.permute.xlu0 %5260
        %v5262 = vperm.slane %v5240, %v457
        %v5263 = vperm.slane %v5243, %v457
        %v5264 = vperm.slane %v5246, %v457
        %v5265 = vperm.slane %v5249, %v457
        %v5266 = vperm.slane %v5252, %v457
        %v5267 = vperm.slane %v5255, %v457
        %v5268 = vperm.slane %v5258, %v457
        %v5269 = vperm.slane %v5261, %v457
        %v5270 = vsel %vm466, %v5263, %v5262
        %v5271 = vsel %vm468, %v5264, %v5270
        %v5272 = vsel %vm470, %v5265, %v5271
        %v5273 = vsel %vm472, %v5266, %v5272
        %v5274 = vsel %vm474, %v5267, %v5273
        %v5275 = vsel %vm476, %v5268, %v5274
        %v5276 = vsel %vm478, %v5269, %v5275
        %v5278 = vsel %vm481, %v5227, 0
        %v5280 = vsel %vm481, %v5229, 0
        %5282 = vmatpush.xpose.msra.mxu0 0.0
        %5283 = vmatpush.xpose.msra.mxu0 0.0
        %5284 = vmatpush.xpose.msra.mxu0 0.0
        %5285 = vmatpush.xpose.msra.mxu0 0.0
        %5286 = vmatpush.xpose.msra.mxu0 0.0
        %5287 = vmatpush.xpose.msra.mxu0 0.0
        %5288 = vmatpush.xpose.msra.mxu0 0.0
        %5289 = vmatpush.xpose.msra.mxu0 0.0
        %5290 = vmatpush.xpose.msra.mxu0 0.0
        %5291 = vmatpush.xpose.msra.mxu0 0.0
        %5292 = vmatpush.xpose.msra.mxu0 0.0
        %5293 = vmatpush.xpose.msra.mxu0 0.0
        %5294 = vmatpush.xpose.msra.mxu0 0.0
        %5295 = vmatpush.xpose.msra.mxu0 0.0
        %5296 = vmatpush.xpose.msra.mxu0 0.0
        %5297 = vmatpush.xpose.msra.mxu0 %v5280
        %5298 = vmatmul.f32.gmra.mxu0 %v5278
        %v5299 = vpop.f32.mrf.mxu0
        %v5300 = vadd.f32 %v5276, %v5299
        %5301 = vdwg.mxu0
        %5303 = vrot.lane.b32.xlu0 %v5186, 32
        %v5304 = vpop.permute.xlu0 %5303
        %5305 = vrot.lane.b32.xlu0 %v5186, 24
        %v5306 = vpop.permute.xlu0 %5305
        %v5307 = vsel %vm481, %v5304, 0
        %v5309 = vsel %vm481, %v5306, 0
        %5311 = vmatpush.xpose.msra.mxu0 0.0
        %5312 = vmatpush.xpose.msra.mxu0 0.0
        %5313 = vmatpush.xpose.msra.mxu0 0.0
        %5314 = vmatpush.xpose.msra.mxu0 0.0
        %5315 = vmatpush.xpose.msra.mxu0 0.0
        %5316 = vmatpush.xpose.msra.mxu0 0.0
        %5317 = vmatpush.xpose.msra.mxu0 0.0
        %5318 = vmatpush.xpose.msra.mxu0 0.0
        %5319 = vmatpush.xpose.msra.mxu0 0.0
        %5320 = vmatpush.xpose.msra.mxu0 0.0
        %5321 = vmatpush.xpose.msra.mxu0 0.0
        %5322 = vmatpush.xpose.msra.mxu0 0.0
        %5323 = vmatpush.xpose.msra.mxu0 0.0
        %5324 = vmatpush.xpose.msra.mxu0 0.0
        %5325 = vmatpush.xpose.msra.mxu0 0.0
        %5326 = vmatpush.xpose.msra.mxu0 %v5309
        %5327 = vmatmul.f32.gmra.mxu0 %v5307
        %v5328 = vpop.f32.mrf.mxu0
        %v5329 = vadd.f32 %v5276, %v5328
        %5330 = vdwg.mxu0
        %5332 = vrot.lane.b32.xlu0 %v5187, 32
        %v5333 = vpop.permute.xlu0 %5332
        %5334 = vrot.lane.b32.xlu0 %v5187, 24
        %v5335 = vpop.permute.xlu0 %5334
        %v5336 = vsel %vm481, %v5333, 0
        %v5338 = vsel %vm481, %v5335, 0
        %5340 = vmatpush.xpose.msra.mxu0 0.0
        %5341 = vmatpush.xpose.msra.mxu0 0.0
        %5342 = vmatpush.xpose.msra.mxu0 0.0
        %5343 = vmatpush.xpose.msra.mxu0 0.0
        %5344 = vmatpush.xpose.msra.mxu0 0.0
        %5345 = vmatpush.xpose.msra.mxu0 0.0
        %5346 = vmatpush.xpose.msra.mxu0 0.0
        %5347 = vmatpush.xpose.msra.mxu0 0.0
        %5348 = vmatpush.xpose.msra.mxu0 0.0
        %5349 = vmatpush.xpose.msra.mxu0 0.0
        %5350 = vmatpush.xpose.msra.mxu0 0.0
        %5351 = vmatpush.xpose.msra.mxu0 0.0
        %5352 = vmatpush.xpose.msra.mxu0 0.0
        %5353 = vmatpush.xpose.msra.mxu0 0.0
        %5354 = vmatpush.xpose.msra.mxu0 0.0
        %5355 = vmatpush.xpose.msra.mxu0 %v5338
        %5356 = vmatmul.f32.gmra.mxu0 %v5336
        %v5357 = vpop.f32.mrf.mxu0
        %v5358 = vadd.f32 %v5276, %v5357
        %5359 = vdwg.mxu0
        %5361 = vrot.lane.b32.xlu0 %v5188, 32
        %v5362 = vpop.permute.xlu0 %5361
        %5363 = vrot.lane.b32.xlu0 %v5188, 24
        %v5364 = vpop.permute.xlu0 %5363
        %v5365 = vsel %vm481, %v5362, 0
        %v5367 = vsel %vm481, %v5364, 0
        %5369 = vmatpush.xpose.msra.mxu0 0.0
        %5370 = vmatpush.xpose.msra.mxu0 0.0
        %5371 = vmatpush.xpose.msra.mxu0 0.0
        %5372 = vmatpush.xpose.msra.mxu0 0.0
        %5373 = vmatpush.xpose.msra.mxu0 0.0
        %5374 = vmatpush.xpose.msra.mxu0 0.0
        %5375 = vmatpush.xpose.msra.mxu0 0.0
        %5376 = vmatpush.xpose.msra.mxu0 0.0
        %5377 = vmatpush.xpose.msra.mxu0 0.0
        %5378 = vmatpush.xpose.msra.mxu0 0.0
        %5379 = vmatpush.xpose.msra.mxu0 0.0
        %5380 = vmatpush.xpose.msra.mxu0 0.0
        %5381 = vmatpush.xpose.msra.mxu0 0.0
        %5382 = vmatpush.xpose.msra.mxu0 0.0
        %5383 = vmatpush.xpose.msra.mxu0 0.0
        %5384 = vmatpush.xpose.msra.mxu0 %v5367
        %5385 = vmatmul.f32.gmra.mxu0 %v5365
        %v5386 = vpop.f32.mrf.mxu0
        %v5387 = vadd.f32 %v5276, %v5386
        %5388 = vdwg.mxu0
        %5390 = vrot.lane.b32.xlu0 %v5189, 32
        %v5391 = vpop.permute.xlu0 %5390
        %5392 = vrot.lane.b32.xlu0 %v5189, 24
        %v5393 = vpop.permute.xlu0 %5392
        %v5394 = vsel %vm481, %v5391, 0
        %v5396 = vsel %vm481, %v5393, 0
        %5398 = vmatpush.xpose.msra.mxu0 0.0
        %5399 = vmatpush.xpose.msra.mxu0 0.0
        %5400 = vmatpush.xpose.msra.mxu0 0.0
        %5401 = vmatpush.xpose.msra.mxu0 0.0
        %5402 = vmatpush.xpose.msra.mxu0 0.0
        %5403 = vmatpush.xpose.msra.mxu0 0.0
        %5404 = vmatpush.xpose.msra.mxu0 0.0
        %5405 = vmatpush.xpose.msra.mxu0 0.0
        %5406 = vmatpush.xpose.msra.mxu0 0.0
        %5407 = vmatpush.xpose.msra.mxu0 0.0
        %5408 = vmatpush.xpose.msra.mxu0 0.0
        %5409 = vmatpush.xpose.msra.mxu0 0.0
        %5410 = vmatpush.xpose.msra.mxu0 0.0
        %5411 = vmatpush.xpose.msra.mxu0 0.0
        %5412 = vmatpush.xpose.msra.mxu0 0.0
        %5413 = vmatpush.xpose.msra.mxu0 %v5396
        %5414 = vmatmul.f32.gmra.mxu0 %v5394
        %v5415 = vpop.f32.mrf.mxu0
        %v5416 = vadd.f32 %v5276, %v5415
        %5417 = vdwg.mxu0
        %5419 = vrot.lane.b32.xlu0 %v5190, 32
        %v5420 = vpop.permute.xlu0 %5419
        %5421 = vrot.lane.b32.xlu0 %v5190, 24
        %v5422 = vpop.permute.xlu0 %5421
        %v5423 = vsel %vm481, %v5420, 0
        %v5425 = vsel %vm481, %v5422, 0
        %5427 = vmatpush.xpose.msra.mxu0 0.0
        %5428 = vmatpush.xpose.msra.mxu0 0.0
        %5429 = vmatpush.xpose.msra.mxu0 0.0
        %5430 = vmatpush.xpose.msra.mxu0 0.0
        %5431 = vmatpush.xpose.msra.mxu0 0.0
        %5432 = vmatpush.xpose.msra.mxu0 0.0
        %5433 = vmatpush.xpose.msra.mxu0 0.0
        %5434 = vmatpush.xpose.msra.mxu0 0.0
        %5435 = vmatpush.xpose.msra.mxu0 0.0
        %5436 = vmatpush.xpose.msra.mxu0 0.0
        %5437 = vmatpush.xpose.msra.mxu0 0.0
        %5438 = vmatpush.xpose.msra.mxu0 0.0
        %5439 = vmatpush.xpose.msra.mxu0 0.0
        %5440 = vmatpush.xpose.msra.mxu0 0.0
        %5441 = vmatpush.xpose.msra.mxu0 0.0
        %5442 = vmatpush.xpose.msra.mxu0 %v5425
        %5443 = vmatmul.f32.gmra.mxu0 %v5423
        %v5444 = vpop.f32.mrf.mxu0
        %v5445 = vadd.f32 %v5276, %v5444
        %5446 = vdwg.mxu0
        %5448 = vrot.lane.b32.xlu0 %v5191, 32
        %v5449 = vpop.permute.xlu0 %5448
        %5450 = vrot.lane.b32.xlu0 %v5191, 24
        %v5451 = vpop.permute.xlu0 %5450
        %v5452 = vsel %vm481, %v5449, 0
        %v5454 = vsel %vm481, %v5451, 0
        %5456 = vmatpush.xpose.msra.mxu0 0.0
        %5457 = vmatpush.xpose.msra.mxu0 0.0
        %5458 = vmatpush.xpose.msra.mxu0 0.0
        %5459 = vmatpush.xpose.msra.mxu0 0.0
        %5460 = vmatpush.xpose.msra.mxu0 0.0
        %5461 = vmatpush.xpose.msra.mxu0 0.0
        %5462 = vmatpush.xpose.msra.mxu0 0.0
        %5463 = vmatpush.xpose.msra.mxu0 0.0
        %5464 = vmatpush.xpose.msra.mxu0 0.0
        %5465 = vmatpush.xpose.msra.mxu0 0.0
        %5466 = vmatpush.xpose.msra.mxu0 0.0
        %5467 = vmatpush.xpose.msra.mxu0 0.0
        %5468 = vmatpush.xpose.msra.mxu0 0.0
        %5469 = vmatpush.xpose.msra.mxu0 0.0
        %5470 = vmatpush.xpose.msra.mxu0 0.0
        %5471 = vmatpush.xpose.msra.mxu0 %v5454
        %5472 = vmatmul.f32.gmra.mxu0 %v5452
        %v5473 = vpop.f32.mrf.mxu0
        %v5474 = vadd.f32 %v5276, %v5473
        %5475 = vdwg.mxu0
        %5477 = vrot.lane.b32.xlu0 %v5192, 32
        %v5478 = vpop.permute.xlu0 %5477
        %5479 = vrot.lane.b32.xlu0 %v5192, 24
        %v5480 = vpop.permute.xlu0 %5479
        %v5481 = vsel %vm481, %v5478, 0
        %v5483 = vsel %vm481, %v5480, 0
        %5485 = vmatpush.xpose.msra.mxu0 0.0
        %5486 = vmatpush.xpose.msra.mxu0 0.0
        %5487 = vmatpush.xpose.msra.mxu0 0.0
        %5488 = vmatpush.xpose.msra.mxu0 0.0
        %5489 = vmatpush.xpose.msra.mxu0 0.0
        %5490 = vmatpush.xpose.msra.mxu0 0.0
        %5491 = vmatpush.xpose.msra.mxu0 0.0
        %5492 = vmatpush.xpose.msra.mxu0 0.0
        %5493 = vmatpush.xpose.msra.mxu0 0.0
        %5494 = vmatpush.xpose.msra.mxu0 0.0
        %5495 = vmatpush.xpose.msra.mxu0 0.0
        %5496 = vmatpush.xpose.msra.mxu0 0.0
        %5497 = vmatpush.xpose.msra.mxu0 0.0
        %5498 = vmatpush.xpose.msra.mxu0 0.0
        %5499 = vmatpush.xpose.msra.mxu0 0.0
        %5500 = vmatpush.xpose.msra.mxu0 %v5483
        %5501 = vmatmul.f32.gmra.mxu0 %v5481
        %v5502 = vpop.f32.mrf.mxu0
        %v5503 = vadd.f32 %v5276, %v5502
        %5504 = vdwg.mxu0
        %v5505 = vsel %vm481, %v5300, -inf
        %5506 = vmax.xlane.f32.xlu0 %v5505
        %v5507 = vpop.xlane.xlu0 %5506
        %v5508 = vsel %vm481, %v5329, -inf
        %5509 = vmax.xlane.f32.xlu0 %v5508
        %v5510 = vpop.xlane.xlu0 %5509
        %v5511 = vsel %vm481, %v5358, -inf
        %5512 = vmax.xlane.f32.xlu0 %v5511
        %v5513 = vpop.xlane.xlu0 %5512
        %v5514 = vsel %vm481, %v5387, -inf
        %5515 = vmax.xlane.f32.xlu0 %v5514
        %v5516 = vpop.xlane.xlu0 %5515
        %v5517 = vsel %vm481, %v5416, -inf
        %5518 = vmax.xlane.f32.xlu0 %v5517
        %v5519 = vpop.xlane.xlu0 %5518
        %v5520 = vsel %vm481, %v5445, -inf
        %5521 = vmax.xlane.f32.xlu0 %v5520
        %v5522 = vpop.xlane.xlu0 %5521
        %v5523 = vsel %vm481, %v5474, -inf
        %5524 = vmax.xlane.f32.xlu0 %v5523
        %v5525 = vpop.xlane.xlu0 %5524
        %v5526 = vsel %vm481, %v5503, -inf
        %5527 = vmax.xlane.f32.xlu0 %v5526
        %v5528 = vpop.xlane.xlu0 %5527
        %v5529 = vsub.f32 %v5300, %v5507
        %v5530 = vsub.f32 %v5329, %v5510
        %v5531 = vsub.f32 %v5358, %v5513
        %v5532 = vsub.f32 %v5387, %v5516
        %v5533 = vsub.f32 %v5416, %v5519
        %v5534 = vsub.f32 %v5445, %v5522
        %v5535 = vsub.f32 %v5474, %v5525
        %v5536 = vsub.f32 %v5503, %v5528
        %v5537 = vmul.f32 %v5529, 1.442695
        %v5538 = vpow.pop %v5537
        %v5539 = vmul.f32 %v5530, 1.442695
        %v5540 = vpow.pop %v5539
        %v5541 = vmul.f32 %v5531, 1.442695
        %v5542 = vpow.pop %v5541
        %v5543 = vmul.f32 %v5532, 1.442695
        %v5544 = vpow.pop %v5543
        %v5545 = vmul.f32 %v5533, 1.442695
        %v5546 = vpow.pop %v5545
        %v5547 = vmul.f32 %v5534, 1.442695
        %v5548 = vpow.pop %v5547
        %v5549 = vmul.f32 %v5535, 1.442695
        %v5550 = vpow.pop %v5549
        %v5551 = vmul.f32 %v5536, 1.442695
        %v5552 = vpow.pop %v5551
        %v5553 = vsel %vm481, %v5538, 0.0
        %5554 = vadd.xlane.f32.xlu0 %v5553
        %v5555 = vpop.xlane.xlu0 %5554
        %v5556 = vsel %vm481, %v5540, 0.0
        %5557 = vadd.xlane.f32.xlu0 %v5556
        %v5558 = vpop.xlane.xlu0 %5557
        %v5559 = vsel %vm481, %v5542, 0.0
        %5560 = vadd.xlane.f32.xlu0 %v5559
        %v5561 = vpop.xlane.xlu0 %5560
        %v5562 = vsel %vm481, %v5544, 0.0
        %5563 = vadd.xlane.f32.xlu0 %v5562
        %v5564 = vpop.xlane.xlu0 %5563
        %v5565 = vsel %vm481, %v5546, 0.0
        %5566 = vadd.xlane.f32.xlu0 %v5565
        %v5567 = vpop.xlane.xlu0 %5566
        %v5568 = vsel %vm481, %v5548, 0.0
        %5569 = vadd.xlane.f32.xlu0 %v5568
        %v5570 = vpop.xlane.xlu0 %5569
        %v5571 = vsel %vm481, %v5550, 0.0
        %5572 = vadd.xlane.f32.xlu0 %v5571
        %v5573 = vpop.xlane.xlu0 %5572
        %v5574 = vsel %vm481, %v5552, 0.0
        %5575 = vadd.xlane.f32.xlu0 %v5574
        %v5576 = vpop.xlane.xlu0 %5575
        %v5577 = vrcp.pop %v5555
        %v5578 = vrcp.pop %v5558
        %v5579 = vrcp.pop %v5561
        %v5580 = vrcp.pop %v5564
        %v5581 = vrcp.pop %v5567
        %v5582 = vrcp.pop %v5570
        %v5583 = vrcp.pop %v5573
        %v5584 = vrcp.pop %v5576
        %v5585 = vmul.f32 %v5538, %v5577
        %v5586 = vmul.f32 %v5540, %v5578
        %v5587 = vmul.f32 %v5542, %v5579
        %v5588 = vmul.f32 %v5544, %v5580
        %v5589 = vmul.f32 %v5546, %v5581
        %v5590 = vmul.f32 %v5548, %v5582
        %v5591 = vmul.f32 %v5550, %v5583
        %v5592 = vmul.f32 %v5552, %v5584
        %5593 = vrot.lane.b32.xlu0 %v5185, 16
        %v5594 = vpop.permute.xlu0 %5593
        %v5597 = vsel %vm481, %v5585, 0
        %5599 = vmatpush.msra.mxu0 0.0
        %5600 = vmatpush.msra.mxu0 0.0
        %5601 = vmatpush.msra.mxu0 0.0
        %5602 = vmatpush.msra.mxu0 0.0
        %5603 = vmatpush.msra.mxu0 0.0
        %5604 = vmatpush.msra.mxu0 0.0
        %5605 = vmatpush.msra.mxu0 0.0
        %5606 = vmatpush.msra.mxu0 0.0
        %5607 = vmatpush.msra.mxu0 0.0
        %5608 = vmatpush.msra.mxu0 0.0
        %5609 = vmatpush.msra.mxu0 0.0
        %5610 = vmatpush.msra.mxu0 0.0
        %5611 = vmatpush.msra.mxu0 0.0
        %5612 = vmatpush.msra.mxu0 0.0
        %5613 = vmatpush.msra.mxu0 0.0
        %5614 = vmatpush.msra.mxu0 %v5594
        %5615 = vmatmul.f32.gmra.mxu0 %v5597
        %v5616 = vpop.f32.mrf.mxu0
        %v5617 = vadd.f32 0.0, %v5616
        %5618 = vdwg.mxu0
        %5619 = vrot.lane.b32.xlu0 %v5186, 16
        %v5620 = vpop.permute.xlu0 %5619
        %v5623 = vsel %vm481, %v5586, 0
        %5625 = vmatpush.msra.mxu0 0.0
        %5626 = vmatpush.msra.mxu0 0.0
        %5627 = vmatpush.msra.mxu0 0.0
        %5628 = vmatpush.msra.mxu0 0.0
        %5629 = vmatpush.msra.mxu0 0.0
        %5630 = vmatpush.msra.mxu0 0.0
        %5631 = vmatpush.msra.mxu0 0.0
        %5632 = vmatpush.msra.mxu0 0.0
        %5633 = vmatpush.msra.mxu0 0.0
        %5634 = vmatpush.msra.mxu0 0.0
        %5635 = vmatpush.msra.mxu0 0.0
        %5636 = vmatpush.msra.mxu0 0.0
        %5637 = vmatpush.msra.mxu0 0.0
        %5638 = vmatpush.msra.mxu0 0.0
        %5639 = vmatpush.msra.mxu0 0.0
        %5640 = vmatpush.msra.mxu0 %v5620
        %5641 = vmatmul.f32.gmra.mxu0 %v5623
        %v5642 = vpop.f32.mrf.mxu0
        %v5643 = vadd.f32 0.0, %v5642
        %5644 = vdwg.mxu0
        %5645 = vrot.lane.b32.xlu0 %v5187, 16
        %v5646 = vpop.permute.xlu0 %5645
        %v5649 = vsel %vm481, %v5587, 0
        %5651 = vmatpush.msra.mxu0 0.0
        %5652 = vmatpush.msra.mxu0 0.0
        %5653 = vmatpush.msra.mxu0 0.0
        %5654 = vmatpush.msra.mxu0 0.0
        %5655 = vmatpush.msra.mxu0 0.0
        %5656 = vmatpush.msra.mxu0 0.0
        %5657 = vmatpush.msra.mxu0 0.0
        %5658 = vmatpush.msra.mxu0 0.0
        %5659 = vmatpush.msra.mxu0 0.0
        %5660 = vmatpush.msra.mxu0 0.0
        %5661 = vmatpush.msra.mxu0 0.0
        %5662 = vmatpush.msra.mxu0 0.0
        %5663 = vmatpush.msra.mxu0 0.0
        %5664 = vmatpush.msra.mxu0 0.0
        %5665 = vmatpush.msra.mxu0 0.0
        %5666 = vmatpush.msra.mxu0 %v5646
        %5667 = vmatmul.f32.gmra.mxu0 %v5649
        %v5668 = vpop.f32.mrf.mxu0
        %v5669 = vadd.f32 0.0, %v5668
        %5670 = vdwg.mxu0
        %5671 = vrot.lane.b32.xlu0 %v5188, 16
        %v5672 = vpop.permute.xlu0 %5671
        %v5675 = vsel %vm481, %v5588, 0
        %5677 = vmatpush.msra.mxu0 0.0
        %5678 = vmatpush.msra.mxu0 0.0
        %5679 = vmatpush.msra.mxu0 0.0
        %5680 = vmatpush.msra.mxu0 0.0
        %5681 = vmatpush.msra.mxu0 0.0
        %5682 = vmatpush.msra.mxu0 0.0
        %5683 = vmatpush.msra.mxu0 0.0
        %5684 = vmatpush.msra.mxu0 0.0
        %5685 = vmatpush.msra.mxu0 0.0
        %5686 = vmatpush.msra.mxu0 0.0
        %5687 = vmatpush.msra.mxu0 0.0
        %5688 = vmatpush.msra.mxu0 0.0
        %5689 = vmatpush.msra.mxu0 0.0
        %5690 = vmatpush.msra.mxu0 0.0
        %5691 = vmatpush.msra.mxu0 0.0
        %5692 = vmatpush.msra.mxu0 %v5672
        %5693 = vmatmul.f32.gmra.mxu0 %v5675
        %v5694 = vpop.f32.mrf.mxu0
        %v5695 = vadd.f32 0.0, %v5694
        %5696 = vdwg.mxu0
        %5697 = vrot.lane.b32.xlu0 %v5189, 16
        %v5698 = vpop.permute.xlu0 %5697
        %v5701 = vsel %vm481, %v5589, 0
        %5703 = vmatpush.msra.mxu0 0.0
        %5704 = vmatpush.msra.mxu0 0.0
        %5705 = vmatpush.msra.mxu0 0.0
        %5706 = vmatpush.msra.mxu0 0.0
        %5707 = vmatpush.msra.mxu0 0.0
        %5708 = vmatpush.msra.mxu0 0.0
        %5709 = vmatpush.msra.mxu0 0.0
        %5710 = vmatpush.msra.mxu0 0.0
        %5711 = vmatpush.msra.mxu0 0.0
        %5712 = vmatpush.msra.mxu0 0.0
        %5713 = vmatpush.msra.mxu0 0.0
        %5714 = vmatpush.msra.mxu0 0.0
        %5715 = vmatpush.msra.mxu0 0.0
        %5716 = vmatpush.msra.mxu0 0.0
        %5717 = vmatpush.msra.mxu0 0.0
        %5718 = vmatpush.msra.mxu0 %v5698
        %5719 = vmatmul.f32.gmra.mxu0 %v5701
        %v5720 = vpop.f32.mrf.mxu0
        %v5721 = vadd.f32 0.0, %v5720
        %5722 = vdwg.mxu0
        %5723 = vrot.lane.b32.xlu0 %v5190, 16
        %v5724 = vpop.permute.xlu0 %5723
        %v5727 = vsel %vm481, %v5590, 0
        %5729 = vmatpush.msra.mxu0 0.0
        %5730 = vmatpush.msra.mxu0 0.0
        %5731 = vmatpush.msra.mxu0 0.0
        %5732 = vmatpush.msra.mxu0 0.0
        %5733 = vmatpush.msra.mxu0 0.0
        %5734 = vmatpush.msra.mxu0 0.0
        %5735 = vmatpush.msra.mxu0 0.0
        %5736 = vmatpush.msra.mxu0 0.0
        %5737 = vmatpush.msra.mxu0 0.0
        %5738 = vmatpush.msra.mxu0 0.0
        %5739 = vmatpush.msra.mxu0 0.0
        %5740 = vmatpush.msra.mxu0 0.0
        %5741 = vmatpush.msra.mxu0 0.0
        %5742 = vmatpush.msra.mxu0 0.0
        %5743 = vmatpush.msra.mxu0 0.0
        %5744 = vmatpush.msra.mxu0 %v5724
        %5745 = vmatmul.f32.gmra.mxu0 %v5727
        %v5746 = vpop.f32.mrf.mxu0
        %v5747 = vadd.f32 0.0, %v5746
        %5748 = vdwg.mxu0
        %5749 = vrot.lane.b32.xlu0 %v5191, 16
        %v5750 = vpop.permute.xlu0 %5749
        %v5753 = vsel %vm481, %v5591, 0
        %5755 = vmatpush.msra.mxu0 0.0
        %5756 = vmatpush.msra.mxu0 0.0
        %5757 = vmatpush.msra.mxu0 0.0
        %5758 = vmatpush.msra.mxu0 0.0
        %5759 = vmatpush.msra.mxu0 0.0
        %5760 = vmatpush.msra.mxu0 0.0
        %5761 = vmatpush.msra.mxu0 0.0
        %5762 = vmatpush.msra.mxu0 0.0
        %5763 = vmatpush.msra.mxu0 0.0
        %5764 = vmatpush.msra.mxu0 0.0
        %5765 = vmatpush.msra.mxu0 0.0
        %5766 = vmatpush.msra.mxu0 0.0
        %5767 = vmatpush.msra.mxu0 0.0
        %5768 = vmatpush.msra.mxu0 0.0
        %5769 = vmatpush.msra.mxu0 0.0
        %5770 = vmatpush.msra.mxu0 %v5750
        %5771 = vmatmul.f32.gmra.mxu0 %v5753
        %v5772 = vpop.f32.mrf.mxu0
        %v5773 = vadd.f32 0.0, %v5772
        %5774 = vdwg.mxu0
        %5775 = vrot.lane.b32.xlu0 %v5192, 16
        %v5776 = vpop.permute.xlu0 %5775
        %v5779 = vsel %vm481, %v5592, 0
        %5781 = vmatpush.msra.mxu0 0.0
        %5782 = vmatpush.msra.mxu0 0.0
        %5783 = vmatpush.msra.mxu0 0.0
        %5784 = vmatpush.msra.mxu0 0.0
        %5785 = vmatpush.msra.mxu0 0.0
        %5786 = vmatpush.msra.mxu0 0.0
        %5787 = vmatpush.msra.mxu0 0.0
        %5788 = vmatpush.msra.mxu0 0.0
        %5789 = vmatpush.msra.mxu0 0.0
        %5790 = vmatpush.msra.mxu0 0.0
        %5791 = vmatpush.msra.mxu0 0.0
        %5792 = vmatpush.msra.mxu0 0.0
        %5793 = vmatpush.msra.mxu0 0.0
        %5794 = vmatpush.msra.mxu0 0.0
        %5795 = vmatpush.msra.mxu0 0.0
        %5796 = vmatpush.msra.mxu0 %v5776
        %5797 = vmatmul.f32.gmra.mxu0 %v5779
        %v5798 = vpop.f32.mrf.mxu0
        %v5799 = vadd.f32 0.0, %v5798
        %5800 = vdwg.mxu0
        %v5801 = vpack.c.bf16 %v5643, %v5617
        %v5802 = vpack.c.bf16 %v5695, %v5669
        %v5803 = vpack.c.bf16 %v5747, %v5721
        %v5804 = vpack.c.bf16 %v5799, %v5773
        %s5805 = scalar_lea.vmem %s4, 28
        %v5806 = vld [vmem:[%s5805] sm:$0xf]
        %v5808 = vsel %vm481, %v5801, 0
        %v5811 = vsel %vm481, %v5802, 0
        %v5814 = vsel %vm481, %v5803, 0
        %v5817 = vsel %vm481, %v5804, 0
        %v5820 = vsel %vm1655, %v5806, 0
        %5822 = vmatpush.bf16.msra.mxu0 0
        %5823 = vmatpush.bf16.msra.mxu0 0
        %5824 = vmatpush.bf16.msra.mxu0 0
        %5825 = vmatpush.bf16.msra.mxu0 0
        %5826 = vmatpush.bf16.msra.mxu0 0
        %5827 = vmatpush.bf16.msra.mxu0 0
        %5828 = vmatpush.bf16.msra.mxu0 0
        %5829 = vmatpush.bf16.msra.mxu0 %v5820
        %5830 = vmatmul.bf16.gmra.mxu0 %v5808
        %v5831 = vpop.f32.mrf.mxu0
        %v5832 = vadd.f32 0.0, %v5831
        %v5833 = vpop.f32.mrf.mxu0
        %v5834 = vadd.f32 0.0, %v5833
        %5835 = vmatmul.bf16.gmra.mxu0 %v5811
        %v5836 = vpop.f32.mrf.mxu0
        %v5837 = vadd.f32 0.0, %v5836
        %v5838 = vpop.f32.mrf.mxu0
        %v5839 = vadd.f32 0.0, %v5838
        %5840 = vmatmul.bf16.gmra.mxu0 %v5814
        %v5841 = vpop.f32.mrf.mxu0
        %v5842 = vadd.f32 0.0, %v5841
        %v5843 = vpop.f32.mrf.mxu0
        %v5844 = vadd.f32 0.0, %v5843
        %5845 = vmatmul.bf16.gmra.mxu0 %v5817
        %v5846 = vpop.f32.mrf.mxu0
        %v5847 = vadd.f32 0.0, %v5846
        %v5848 = vpop.f32.mrf.mxu0
        %v5849 = vadd.f32 0.0, %v5848
        %5850 = vdwg.mxu0
        %v5851 = vadd.f32 %v5177, %v5832
        %v5852 = vadd.f32 %v5178, %v5834
        %v5853 = vadd.f32 %v5179, %v5837
        %v5854 = vadd.f32 %v5180, %v5839
        %v5855 = vadd.f32 %v5181, %v5842
        %v5856 = vadd.f32 %v5182, %v5844
        %v5857 = vadd.f32 %v5183, %v5847
        %v5858 = vadd.f32 %v5184, %v5849
        %v5859 = vld [vmem:[%s5] sm:$0x1]
        %v5861 = vperm.slane %v5859, 0
        %v5863 = vadd.f32 %v5851, %v5861
        %v5865 = vrot.slane %v5863, 1
        %v5866 = vrot.slane %v5863, 2
        %v5867 = vrot.slane %v5863, 3
        %v5868 = vrot.slane %v5863, 4
        %v5869 = vrot.slane %v5863, 5
        %v5870 = vrot.slane %v5863, 6
        %v5871 = vrot.slane %v5863, 7
        %vm5879 = vcmask 253952
        %5880 = vst.msk [vmem:[%s285] sm:$0x1] %vm5879, %v5863
        %5881 = vst.msk [vmem:[%s285 + $0x8] sm:$0x1] %vm5879, %v5865
        %5882 = vst.msk [vmem:[%s285 + $0x10] sm:$0x1] %vm5879, %v5866
        %5883 = vst.msk [vmem:[%s285 + $0x18] sm:$0x1] %vm5879, %v5867
        %5884 = vst.msk [vmem:[%s285 + $0x20] sm:$0x1] %vm5879, %v5868
        %5885 = vst.msk [vmem:[%s285 + $0x28] sm:$0x1] %vm5879, %v5869
        %5886 = vst.msk [vmem:[%s285 + $0x30] sm:$0x1] %vm5879, %v5870
        %5887 = vst.msk [vmem:[%s285 + $0x38] sm:$0x1] %vm5879, %v5871
        %v5888 = vadd.f32 %v5852, %v5861
        %v5890 = vrot.slane %v5888, 1
        %v5891 = vrot.slane %v5888, 2
        %v5892 = vrot.slane %v5888, 3
        %v5893 = vrot.slane %v5888, 4
        %v5894 = vrot.slane %v5888, 5
        %v5895 = vrot.slane %v5888, 6
        %v5896 = vrot.slane %v5888, 7
        %5904 = vst.msk [vmem:[%s285 + $0x1] sm:$0x1] %vm5879, %v5888
        %5905 = vst.msk [vmem:[%s285 + $0x9] sm:$0x1] %vm5879, %v5890
        %5906 = vst.msk [vmem:[%s285 + $0x11] sm:$0x1] %vm5879, %v5891
        %5907 = vst.msk [vmem:[%s285 + $0x19] sm:$0x1] %vm5879, %v5892
        %5908 = vst.msk [vmem:[%s285 + $0x21] sm:$0x1] %vm5879, %v5893
        %5909 = vst.msk [vmem:[%s285 + $0x29] sm:$0x1] %vm5879, %v5894
        %5910 = vst.msk [vmem:[%s285 + $0x31] sm:$0x1] %vm5879, %v5895
        %5911 = vst.msk [vmem:[%s285 + $0x39] sm:$0x1] %vm5879, %v5896
        %v5912 = vadd.f32 %v5853, %v5861
        %v5914 = vrot.slane %v5912, 1
        %v5915 = vrot.slane %v5912, 2
        %v5916 = vrot.slane %v5912, 3
        %v5917 = vrot.slane %v5912, 4
        %v5918 = vrot.slane %v5912, 5
        %v5919 = vrot.slane %v5912, 6
        %v5920 = vrot.slane %v5912, 7
        %5928 = vst.msk [vmem:[%s285 + $0x2] sm:$0x1] %vm5879, %v5912
        %5929 = vst.msk [vmem:[%s285 + $0xa] sm:$0x1] %vm5879, %v5914
        %5930 = vst.msk [vmem:[%s285 + $0x12] sm:$0x1] %vm5879, %v5915
        %5931 = vst.msk [vmem:[%s285 + $0x1a] sm:$0x1] %vm5879, %v5916
        %5932 = vst.msk [vmem:[%s285 + $0x22] sm:$0x1] %vm5879, %v5917
        %5933 = vst.msk [vmem:[%s285 + $0x2a] sm:$0x1] %vm5879, %v5918
        %5934 = vst.msk [vmem:[%s285 + $0x32] sm:$0x1] %vm5879, %v5919
        %5935 = vst.msk [vmem:[%s285 + $0x3a] sm:$0x1] %vm5879, %v5920
        %v5936 = vadd.f32 %v5854, %v5861
        %v5938 = vrot.slane %v5936, 1
        %v5939 = vrot.slane %v5936, 2
        %v5940 = vrot.slane %v5936, 3
        %v5941 = vrot.slane %v5936, 4
        %v5942 = vrot.slane %v5936, 5
        %v5943 = vrot.slane %v5936, 6
        %v5944 = vrot.slane %v5936, 7
        %5952 = vst.msk [vmem:[%s285 + $0x3] sm:$0x1] %vm5879, %v5936
        %5953 = vst.msk [vmem:[%s285 + $0xb] sm:$0x1] %vm5879, %v5938
        %5954 = vst.msk [vmem:[%s285 + $0x13] sm:$0x1] %vm5879, %v5939
        %5955 = vst.msk [vmem:[%s285 + $0x1b] sm:$0x1] %vm5879, %v5940
        %5956 = vst.msk [vmem:[%s285 + $0x23] sm:$0x1] %vm5879, %v5941
        %5957 = vst.msk [vmem:[%s285 + $0x2b] sm:$0x1] %vm5879, %v5942
        %5958 = vst.msk [vmem:[%s285 + $0x33] sm:$0x1] %vm5879, %v5943
        %5959 = vst.msk [vmem:[%s285 + $0x3b] sm:$0x1] %vm5879, %v5944
        %v5960 = vadd.f32 %v5855, %v5861
        %v5962 = vrot.slane %v5960, 1
        %v5963 = vrot.slane %v5960, 2
        %v5964 = vrot.slane %v5960, 3
        %v5965 = vrot.slane %v5960, 4
        %v5966 = vrot.slane %v5960, 5
        %v5967 = vrot.slane %v5960, 6
        %v5968 = vrot.slane %v5960, 7
        %5976 = vst.msk [vmem:[%s285 + $0x4] sm:$0x1] %vm5879, %v5960
        %5977 = vst.msk [vmem:[%s285 + $0xc] sm:$0x1] %vm5879, %v5962
        %5978 = vst.msk [vmem:[%s285 + $0x14] sm:$0x1] %vm5879, %v5963
        %5979 = vst.msk [vmem:[%s285 + $0x1c] sm:$0x1] %vm5879, %v5964
        %5980 = vst.msk [vmem:[%s285 + $0x24] sm:$0x1] %vm5879, %v5965
        %5981 = vst.msk [vmem:[%s285 + $0x2c] sm:$0x1] %vm5879, %v5966
        %5982 = vst.msk [vmem:[%s285 + $0x34] sm:$0x1] %vm5879, %v5967
        %5983 = vst.msk [vmem:[%s285 + $0x3c] sm:$0x1] %vm5879, %v5968
        %v5984 = vadd.f32 %v5856, %v5861
        %v5986 = vrot.slane %v5984, 1
        %v5987 = vrot.slane %v5984, 2
        %v5988 = vrot.slane %v5984, 3
        %v5989 = vrot.slane %v5984, 4
        %v5990 = vrot.slane %v5984, 5
        %v5991 = vrot.slane %v5984, 6
        %v5992 = vrot.slane %v5984, 7
        %6000 = vst.msk [vmem:[%s285 + $0x5] sm:$0x1] %vm5879, %v5984
        %6001 = vst.msk [vmem:[%s285 + $0xd] sm:$0x1] %vm5879, %v5986
        %6002 = vst.msk [vmem:[%s285 + $0x15] sm:$0x1] %vm5879, %v5987
        %6003 = vst.msk [vmem:[%s285 + $0x1d] sm:$0x1] %vm5879, %v5988
        %6004 = vst.msk [vmem:[%s285 + $0x25] sm:$0x1] %vm5879, %v5989
        %6005 = vst.msk [vmem:[%s285 + $0x2d] sm:$0x1] %vm5879, %v5990
        %6006 = vst.msk [vmem:[%s285 + $0x35] sm:$0x1] %vm5879, %v5991
        %6007 = vst.msk [vmem:[%s285 + $0x3d] sm:$0x1] %vm5879, %v5992
        %v6008 = vadd.f32 %v5857, %v5861
        %v6010 = vrot.slane %v6008, 1
        %v6011 = vrot.slane %v6008, 2
        %v6012 = vrot.slane %v6008, 3
        %v6013 = vrot.slane %v6008, 4
        %v6014 = vrot.slane %v6008, 5
        %v6015 = vrot.slane %v6008, 6
        %v6016 = vrot.slane %v6008, 7
        %6024 = vst.msk [vmem:[%s285 + $0x6] sm:$0x1] %vm5879, %v6008
        %6025 = vst.msk [vmem:[%s285 + $0xe] sm:$0x1] %vm5879, %v6010
        %6026 = vst.msk [vmem:[%s285 + $0x16] sm:$0x1] %vm5879, %v6011
        %6027 = vst.msk [vmem:[%s285 + $0x1e] sm:$0x1] %vm5879, %v6012
        %6028 = vst.msk [vmem:[%s285 + $0x26] sm:$0x1] %vm5879, %v6013
        %6029 = vst.msk [vmem:[%s285 + $0x2e] sm:$0x1] %vm5879, %v6014
        %6030 = vst.msk [vmem:[%s285 + $0x36] sm:$0x1] %vm5879, %v6015
        %6031 = vst.msk [vmem:[%s285 + $0x3e] sm:$0x1] %vm5879, %v6016
        %v6032 = vadd.f32 %v5858, %v5861
        %v6034 = vrot.slane %v6032, 1
        %v6035 = vrot.slane %v6032, 2
        %v6036 = vrot.slane %v6032, 3
        %v6037 = vrot.slane %v6032, 4
        %v6038 = vrot.slane %v6032, 5
        %v6039 = vrot.slane %v6032, 6
        %v6040 = vrot.slane %v6032, 7
        %6048 = vst.msk [vmem:[%s285 + $0x7] sm:$0x1] %vm5879, %v6032
        %6049 = vst.msk [vmem:[%s285 + $0xf] sm:$0x1] %vm5879, %v6034
        %6050 = vst.msk [vmem:[%s285 + $0x17] sm:$0x1] %vm5879, %v6035
        %6051 = vst.msk [vmem:[%s285 + $0x1f] sm:$0x1] %vm5879, %v6036
        %6052 = vst.msk [vmem:[%s285 + $0x27] sm:$0x1] %vm5879, %v6037
        %6053 = vst.msk [vmem:[%s285 + $0x2f] sm:$0x1] %vm5879, %v6038
        %6054 = vst.msk [vmem:[%s285 + $0x37] sm:$0x1] %vm5879, %v6039
        %6055 = vst.msk [vmem:[%s285 + $0x3f] sm:$0x1] %vm5879, %v6040
        %s6056 = sand.u32 %s174, 1
        %s6057 = scalar_lea.sflag [#allocation3], %s6056
        %s6058 = sand.u32 %s174, 1
        %s6059 = smul.addr %s6058, 64
        %s6060 = scalar_lea.vmem [#allocation2], %s6059
        // Predicated region
        $region45: #{triplet_attention_ungated.3} parent=43 // pred_check
          %p6061 = pneg %p184
        $region46: #{triplet_attention_ungated.3} parent=43 // pred_check_branch
          %6063 = sbr.rel (%p6061) target = $region48
        $region47: #{triplet_attention_ungated.3} parent=43 // pred_region
          %6065 = vsyncadd %s6057, 0
          %s6066 = smul.addr %s20, 8
          %s6067 = smul.addr %s6066, 8
          %s6068 = scalar_lea.hbm %s6, %s6067
          %s6069 = sshll.u32 %s6060, 4
          %s6070 = int_to_ptr.vmem [resolvable:$true] %s6069
          %s6071 = sshll.u32 %s6068, 4
          %s6072 = int_to_ptr.hbm [resolvable:$true] %s6071
          %6077 = dma.vmem_to_hbm [thread:$0]  %s6070, 1024, %s6072, %s6057, 128, 128, 8
        $region48: #{triplet_attention_ungated.3} parent=43 // pred_fallthru
          _
      $region44: #{triplet_attention_ungated.3} parent=5 // pred_fallthru
        _
      %p6078 = scmp.le.s32.totalorder 2, %s15
      // Predicated region
      $region49: #{triplet_attention_ungated.3} parent=5 // pred_check
        %p6079 = pneg %p6078
      $region50: #{triplet_attention_ungated.3} parent=5 // pred_check_branch
        %6081 = sbr.rel (%p6079) target = $region52
      $region51: #{triplet_attention_ungated.3} parent=5 // pred_region
        %s6082 = ssub.s32 %s15, 2
        // Predicated region
        $region53: #{triplet_attention_ungated.3} parent=51 // pred_check
          %p6083 = pneg %p190
        $region54: #{triplet_attention_ungated.3} parent=51 // pred_check_branch
          %6085 = sbr.rel (%p6083) target = $region56
        $region55: #{triplet_attention_ungated.3} parent=51 // pred_region
          %s6086 = sand.u32 %s175, 1
          %s6087 = scalar_lea.sflag [#allocation3], %s6086
          %s6088 = sand.u32 %s175, 1
          %s6089 = smul.addr %s6088, 64
          %s6090 = scalar_lea.vmem [#allocation2], %s6089
          %6092 = dma.done %s6087, 1024
        $region56: #{triplet_attention_ungated.3} parent=51 // pred_fallthru
          _
      $region52: #{triplet_attention_ungated.3} parent=5 // pred_fallthru
        _
    $region6: #{triplet_attention_ungated.3} parent=1 // loop_footer
      %s19 = sadd.s32 1, %s15
    $region7: #{triplet_attention_ungated.3} parent=1 // loop_footer_branch
      %14 = sbr.rel target = $region3
    $region8: #{triplet_attention_ungated.3} parent=1 // loop_exit
      _
    %6093 = vsyncpa [#allocation3], 1
    %s6094 = scalar_lea.sflag [#allocation3], 1
    %6095 = vsyncpa %s6094, 1

</llo_original>
